<compile_context>
chip_gen: v6e
topology: v6e:2x2x1
jax: 0.10.0
libtpu: 0.0.40
codegen_flags: <defaults>
</compile_context>

<pallas_src>
import functools
import math

import jax
import jax.numpy as jnp
from jax.experimental import pallas as pl
from jax.experimental.pallas import tpu as pltpu

NEG_SLOPE = 0.01          # torch.nn.LeakyReLU default negative_slope
LANE = 128
SUBLANE = 8
TAIL_MAX_SPATIAL = 8      # conv levels with input spatial <= this are fused


def _round_up(x, m):
    return (x + m - 1) // m * m


def _vmem_limit_bytes():
    """Generation-aware VMEM budget (v7x: 64 MiB physical, v5e/v6e: 128 MiB)."""
    try:
        cap = int(pltpu.get_tpu_info().vmem_capacity_bytes)
    except Exception:
        cap = 64 * 1024 * 1024
    return max(32 * 1024 * 1024, min(cap * 3 // 4, 96 * 1024 * 1024))


# --------------------- conv 3x3 stride-2 ("big" levels) --------------------- #
def _conv3x3_s2_kernel(x00, x01, x10, x11, w_ref, b_ref, o_ref, *, ho, wo):
    """num_k == 1 specialization: one batch element, full Cin.

    x{ph}{pw}: (Mi, Cip) bf16 flattened stride-2 parity planes of the padded
               activation, Mi = (Ho+2)*(Wo+1).
    w_ref:     (9, Cip, Cop) bf16 tap weight matrices.
    b_ref:     (1, Cop) f32.
    o_ref:     (Mo, Cop) bf16, Mo = Ho*(Wo+1) (one junk column per row).
    """
    planes = ((x00, x01), (x10, x11))
    wp1 = wo + 1
    mo = ho * wp1
    acc = None
    for kh in range(3):
        for kw in range(3):
            src = planes[kh % 2][kw % 2]
            start = (kh // 2) * wp1 + (kw // 2)           # static offset
            tap = src[pl.ds(start, mo), :]                # contiguous (Mo, Cip)
            d = jnp.dot(tap, w_ref[kh * 3 + kw],
                        preferred_element_type=jnp.float32)
            acc = d if acc is None else acc + d           # chained accumulation
    y = acc + b_ref[...]                                  # f32 bias
    y = jnp.where(y >= 0.0, y, NEG_SLOPE * y)             # LeakyReLU(0.01)
    o_ref[...] = y.astype(o_ref.dtype)


def _conv3x3_s2_kernel_ktiled(x00, x01, x10, x11, w_ref, b_ref, o_ref, acc_ref,
                              *, ho, wo, num_k):
    """Fallback for very large cip: Cin tiled over the grid with f32 scratch."""
    kc = pl.program_id(1)
    planes = ((x00, x01), (x10, x11))
    wp1 = wo + 1
    mo = ho * wp1
    part = None
    for kh in range(3):
        for kw in range(3):
            src = planes[kh % 2][kw % 2]
            start = (kh // 2) * wp1 + (kw // 2)
            tap = src[pl.ds(start, mo), :]
            d = jnp.dot(tap, w_ref[kh * 3 + kw],
                        preferred_element_type=jnp.float32)
            part = d if part is None else part + d

    @pl.when(kc == 0)
    def _():
        acc_ref[...] = part

    @pl.when(kc > 0)
    def _():
        acc_ref[...] += part

    @pl.when(kc == num_k - 1)
    def _():
        y = acc_ref[...] + b_ref[...]
        y = jnp.where(y >= 0.0, y, NEG_SLOPE * y)
        o_ref[...] = y.astype(o_ref.dtype)


def conv3x3_s2_lrelu(x_bf16, w9, b2):
    """Conv2d(k=3, s=2, p=1) + LeakyReLU for a "big" level.

    x_bf16: (N, H, W, Cip) bf16, channels padded to a lane multiple.
    w9:     (9, Cip, Cop)  bf16 tap matrices.
    b2:     (1, Cop)       f32.
    Returns (N, H//2, W//2, Cop) bf16.
    """
    n, h, w, cip = x_bf16.shape
    cop = w9.shape[-1]
    ho, wo = h // 2, w // 2
    wp1 = wo + 1
    mo = ho * wp1                    # output rows incl. 1 junk column per row
    mi = (ho + 2) * wp1              # parity-plane rows (+1 zero guard row)

    # Pad + split into the four stride-2 parity planes (single ~1x HBM pass);
    # flatten spatial so all 9 taps are contiguous slabs inside the kernel.
    xp = jnp.pad(x_bf16, ((0, 0), (1, 1), (1, 1), (0, 0)))
    flats = []
    for ph in (0, 1):
        for pw in (0, 1):
            t = xp[:, ph::2, pw::2, :]                        # (N, Ho+1, Wo+1, Cip)
            t = jnp.pad(t, ((0, 0), (0, 1), (0, 0), (0, 0)))  # guard row
            flats.append(t.reshape(n, mi, cip))

    vmem_limit = _vmem_limit_bytes()
    budget = vmem_limit - 8 * 1024 * 1024

    def vmem_est(tk):
        plane_in = 4 * mi * tk * 2
        weights = 9 * tk * cop * 2
        out = mo * cop * 2
        acc = mo * cop * 4 if tk < cip else 0
        return 2 * (plane_in + weights) + 2 * out + acc      # double-buffered I/O

    tk = cip                                                  # prefer weights resident
    if vmem_est(tk) > budget:
        for cand in (1024, 512, 256, 128):
            if cand < cip and cip % cand == 0 and vmem_est(cand) <= budget:
                tk = cand
                break
        else:
            tk = 128 if cip % 128 == 0 else cip
    num_k = cip // tk

    flops = 2 * 9 * n * mo * cip * cop
    bytes_accessed = (4 * n * mi * cip * 2 + 9 * cip * cop * 2
                      + cop * 4 + n * mo * cop * 2)

    if num_k == 1:
        kernel = functools.partial(_conv3x3_s2_kernel, ho=ho, wo=wo)
        x_spec = pl.BlockSpec((None, mi, cip), lambda i: (i, 0, 0))
        y = pl.pallas_call(
            kernel,
            out_shape=jax.ShapeDtypeStruct((n, mo, cop), jnp.bfloat16),
            grid_spec=pltpu.PrefetchScalarGridSpec(
                num_scalar_prefetch=0,
                grid=(n,),
                in_specs=[x_spec, x_spec, x_spec, x_spec,
                          pl.BlockSpec((9, cip, cop), lambda i: (0, 0, 0)),
                          pl.BlockSpec((1, cop), lambda i: (0, 0))],
                out_specs=pl.BlockSpec((None, mo, cop), lambda i: (i, 0, 0))),
            compiler_params=pltpu.CompilerParams(
                dimension_semantics=("parallel",),
                vmem_limit_bytes=vmem_limit),
            cost_estimate=pl.CostEstimate(flops=flops, transcendentals=0,
                                          bytes_accessed=bytes_accessed),
        )(flats[0], flats[1], flats[2], flats[3], w9, b2)
    else:
        # TODO(synk): keep the weight slab VMEM-resident (in-kernel K loop /
        # emit_pipeline) instead of riding the grid, so it is not re-fetched
        # once per batch element.  Only reached for very large cip*spatial.
        kernel = functools.partial(_conv3x3_s2_kernel_ktiled,
                                   ho=ho, wo=wo, num_k=num_k)
        x_spec = pl.BlockSpec((None, mi, tk), lambda i, k: (i, 0, k))
        y = pl.pallas_call(
            kernel,
            out_shape=jax.ShapeDtypeStruct((n, mo, cop), jnp.bfloat16),
            grid_spec=pltpu.PrefetchScalarGridSpec(
                num_scalar_prefetch=0,
                grid=(n, num_k),
                in_specs=[x_spec, x_spec, x_spec, x_spec,
                          pl.BlockSpec((9, tk, cop), lambda i, k: (0, k, 0)),
                          pl.BlockSpec((1, cop), lambda i, k: (0, 0))],
                out_specs=pl.BlockSpec((None, mo, cop), lambda i, k: (i, 0, 0)),
                scratch_shapes=[pltpu.VMEM((mo, cop), jnp.float32)]),
            compiler_params=pltpu.CompilerParams(
                dimension_semantics=("parallel", "arbitrary"),
                vmem_limit_bytes=vmem_limit),
            cost_estimate=pl.CostEstimate(flops=flops, transcendentals=0,
                                          bytes_accessed=bytes_accessed),
        )(flats[0], flats[1], flats[2], flats[3], w9, b2)

    # (N, Ho*(Wo+1), Cop) -> drop the junk column -> (N, Ho, Wo, Cop)
    return y.reshape(n, ho, wp1, cop)[:, :, :wo, :]


# ------------- fused tail: small-spatial convs + EqualLinear --------------- #
def _fused_tail_kernel(*args, levels):
    """All conv levels with small spatial + EqualLinear, VMEM-resident.

    args = (x_ref, w0, b0, ..., w_{L-1}, b_{L-1}, wl, bl, o_ref).
    x_ref: (S0, Nb, C) bf16 spatial-major: one (Nb, C) slab per spatial
    position, so each 3x3 tap is a single leading-axis index (no strided
    reads).  Taps hitting the zero padding are simply skipped.
    """
    x_ref = args[0]
    o_ref = args[-1]
    params = args[1:-1]
    nconv = (len(params) - 2) // 2

    hi0, wi0 = levels[0]
    xs = [x_ref[p] for p in range(hi0 * wi0)]             # (Nb, Cin) bf16 slabs
    for li in range(nconv):
        w9_ref = params[2 * li]
        b_ref = params[2 * li + 1]
        hi, wi = levels[li]
        ho, wo = hi // 2, wi // 2
        taps = {}
        ys = []
        for oh in range(ho):
            for ow in range(wo):
                acc = None
                for kh in range(3):
                    ih = 2 * oh - 1 + kh
                    if ih < 0 or ih >= hi:
                        continue
                    for kw in range(3):
                        iw = 2 * ow - 1 + kw
                        if iw < 0 or iw >= wi:
                            continue
                        t = kh * 3 + kw
                        if t not in taps:
                            taps[t] = w9_ref[t]            # (Cin, Cop) bf16
                        d = jnp.dot(xs[ih * wi + iw], taps[t],
                                    preferred_element_type=jnp.float32)
                        acc = d if acc is None else acc + d
                y = acc + b_ref[...]
                y = jnp.where(y >= 0.0, y, NEG_SLOPE * y)
                ys.append(y.astype(jnp.bfloat16))
        xs = ys                                            # spatial halved

    # After the last conv level spatial is 1x1 -> EqualLinear epilogue.
    wl_ref = params[-2]
    bl_ref = params[-1]
    z = jnp.dot(xs[0], wl_ref[...], preferred_element_type=jnp.float32) + bl_ref[...]
    o_ref[...] = z


def fused_tail_forward(x_nhwc, tail_convs, tail_levels, wl, bl, n):
    """Run the remaining small-spatial conv levels + EqualLinear in ONE call."""
    _, hs, ws, c_in = x_nhwc.shape
    s0 = hs * ws
    cop = wl.shape[1]
    assert (hs, ws) == tuple(tail_levels[0])

    tile_nb = min(256, _round_up(n, SUBLANE))
    nb = _round_up(n, tile_nb)

    # Spatial-major layout (S0, Nb, C): trivially small XLA glue.
    x_sm = jnp.transpose(x_nhwc, (1, 2, 0, 3)).reshape(s0, n, c_in)
    x_sm = jnp.pad(x_sm, ((0, 0), (0, nb - n), (0, 0)))

    flat_params = []
    in_specs = [pl.BlockSpec((s0, tile_nb, c_in), lambda i: (0, i, 0))]
    for w9, b2 in tail_convs:
        flat_params.append(w9)
        in_specs.append(pl.BlockSpec(w9.shape, lambda i: (0, 0, 0)))
        flat_params.append(b2)
        in_specs.append(pl.BlockSpec(b2.shape, lambda i: (0, 0)))
    flat_params.append(wl)
    in_specs.append(pl.BlockSpec(wl.shape, lambda i: (0, 0)))
    flat_params.append(bl)
    in_specs.append(pl.BlockSpec(bl.shape, lambda i: (0, 0)))

    flops = 0
    bytes_accessed = s0 * nb * c_in * 2 + nb * cop * 4
    ci = c_in
    for hi, wi in tail_levels:
        flops += 2 * 9 * (hi // 2) * (wi // 2) * nb * ci * cop
        bytes_accessed += 9 * ci * cop * 2 + cop * 4
        ci = cop
    flops += 2 * nb * ci * cop
    bytes_accessed += ci * cop * 2 + cop * 4

    kernel = functools.partial(_fused_tail_kernel, levels=tuple(tail_levels))
    y = pl.pallas_call(
        kernel,
        out_shape=jax.ShapeDtypeStruct((nb, cop), jnp.float32),
        grid_spec=pltpu.PrefetchScalarGridSpec(
            num_scalar_prefetch=0,
            grid=(nb // tile_nb,),
            in_specs=in_specs,
            out_specs=pl.BlockSpec((tile_nb, cop), lambda i: (i, 0))),
        compiler_params=pltpu.CompilerParams(
            dimension_semantics=("parallel",),
            vmem_limit_bytes=_vmem_limit_bytes()),
        cost_estimate=pl.CostEstimate(flops=flops, transcendentals=0,
                                      bytes_accessed=bytes_accessed),
    )(x_sm, *flat_params)
    return y[:n]


# --------------------------- params & forward ------------------------------ #
def init_params(key, in_c, out_c, spatial):
    """Raw (PyTorch-layout) parameters."""
    num_pools = int(math.log2(spatial))
    convs = []
    cin = in_c
    k = key
    for _ in range(num_pools):
        k, k1, k2 = jax.random.split(k, 3)
        w = jax.random.normal(k1, (out_c, cin, 3, 3), jnp.float32) * 0.1   # OIHW
        b = jax.random.normal(k2, (out_c,), jnp.float32) * 0.1
        convs.append((w, b))
        cin = out_c
    # EqualLinear(out_c, out_c, lr_mul=1): weight ~ randn, bias = 0
    k, k1 = jax.random.split(k)
    w_lin = jax.random.normal(k1, (out_c, out_c), jnp.float32)
    b_lin = jnp.zeros((out_c,), jnp.float32)
    return {"convs": convs, "linear": (w_lin, b_lin)}


def prepare_params(params, out_c):
    """Hoisted one-time weight preprocessing (not in the forward path)."""
    cop = _round_up(out_c, LANE)
    convs = []
    for w, b in params["convs"]:
        cin = w.shape[1]
        cip = _round_up(cin, LANE)
        # OIHW -> (KH,KW,Cin,Cout) -> (9, Cin, Cout), channel-padded, bf16.
        w9 = jnp.transpose(w, (2, 3, 1, 0)).reshape(9, cin, out_c)
        w9 = jnp.pad(w9, ((0, 0), (0, cip - cin), (0, cop - out_c)))
        b2 = jnp.pad(b, (0, cop - out_c)).reshape(1, cop)
        convs.append((w9.astype(jnp.bfloat16), b2.astype(jnp.float32)))
    w_lin, b_lin = params["linear"]
    scale = 1.0 / math.sqrt(out_c)                 # EqualLinear scale, lr_mul=1
    wl = (w_lin * scale).T                         # (in, out)
    wl = jnp.pad(wl, ((0, cop - out_c), (0, cop - out_c))).astype(jnp.bfloat16)
    bl = jnp.pad(b_lin, (0, cop - out_c)).reshape(1, cop).astype(jnp.float32)
    return {"convs": convs, "linear": (wl, bl)}


def gradual_style_block_forward(x_nchw, prepared, out_c):
    n, in_c, spatial, _ = x_nchw.shape
    cip0 = _round_up(in_c, LANE)
    convs = prepared["convs"]
    n_levels = len(convs)
    assert n_levels >= 1, "spatial must be >= 2"

    # NCHW -> NHWC, channels padded into lanes, bf16 MXU operands.
    x = jnp.transpose(x_nchw, (0, 2, 3, 1))
    x = jnp.pad(x, ((0, 0), (0, 0), (0, 0), (0, cip0 - in_c))).astype(jnp.bfloat16)

    # Split: "big" parity-plane conv levels, then one fused small-spatial tail.
    tail_start = 0
    while tail_start < n_levels and spatial // (2 ** tail_start) > TAIL_MAX_SPATIAL:
        tail_start += 1

    for li in range(tail_start):
        w9, b2 = convs[li]
        x = conv3x3_s2_lrelu(x, w9, b2)             # stride-2 conv + LeakyReLU

    tail_levels = [(spatial // (2 ** li),) * 2 for li in range(tail_start, n_levels)]
    wl, bl = prepared["linear"]
    y = fused_tail_forward(x, convs[tail_start:], tail_levels, wl, bl, n)
    return y[:, :out_c]


# ------------------------------- reference --------------------------------- #
def _reference_forward(x_nchw, params, out_c):
    """Pure-JAX reference with matching numerics (bf16 MXU inputs, f32 acc)."""
    x = jnp.transpose(x_nchw, (0, 2, 3, 1)).astype(jnp.bfloat16)
    for w, b in params["convs"]:
        n, h, wd, cin = x.shape
        ho, wo = h // 2, wd // 2
        xp = jnp.pad(x, ((0, 0), (1, 1), (1, 1), (0, 0)))
        cols = [xp[:, kh:kh + 2 * ho:2, kw:kw + 2 * wo:2, :]
                for kh in range(3) for kw in range(3)]
        patches = jnp.concatenate(cols, axis=-1).reshape(n * ho * wo, 9 * cin)
        w2 = jnp.transpose(w, (2, 3, 1, 0)).reshape(9 * cin, out_c).astype(jnp.bfloat16)
        y = jnp.dot(patches, w2, preferred_element_type=jnp.float32) + b[None, :]
        y = jnp.where(y >= 0.0, y, NEG_SLOPE * y)
        x = y.reshape(n, ho, wo, out_c).astype(jnp.bfloat16)
    x = x.reshape(-1, out_c)
    w_lin, b_lin = params["linear"]
    scale = 1.0 / math.sqrt(out_c)
    wl = (w_lin * scale).T.astype(jnp.bfloat16)
    return jnp.dot(x, wl, preferred_element_type=jnp.float32) + b_lin[None, :]


if __name__ == "__main__":
    in_c, out_c, spatial = 4, 8, 16
    batch = 2

    key = jax.random.PRNGKey(0)
    kx, kp = jax.random.split(key)
    x = jax.random.normal(kx, (batch, in_c, spatial, spatial), jnp.float32)  # NCHW
    params = init_params(kp, in_c, out_c, spatial)
    prepared = prepare_params(params, out_c)       # hoisted weight preprocessing

    fwd = jax.jit(functools.partial(gradual_style_block_forward, out_c=out_c))
    out = jax.block_until_ready(fwd(x, prepared))
    assert out.shape == (batch, out_c), out.shape

    ref = jax.block_until_ready(_reference_forward(x, params, out_c))
    assert jnp.allclose(out, ref, atol=2e-2, rtol=2e-2), "mismatch vs reference"

    print("KERNEL_OK")
</pallas_src>

<mosaic_0001>
module attributes {stable_mosaic.version = 11 : i64} {
  func.func @_conv3x3_s2_kernel(%arg0: i32, %arg1: memref<1x90x128xbf16, #tpu.memory_space<vmem>>, %arg2: memref<1x90x128xbf16, #tpu.memory_space<vmem>>, %arg3: memref<1x90x128xbf16, #tpu.memory_space<vmem>>, %arg4: memref<1x90x128xbf16, #tpu.memory_space<vmem>>, %arg5: memref<9x128x128xbf16, #tpu.memory_space<vmem>>, %arg6: memref<1x128xf32, #tpu.memory_space<vmem>>, %arg7: memref<1x72x128xbf16, #tpu.memory_space<vmem>>) attributes {dimension_semantics = [#tpu.dimension_semantics<parallel>], iteration_bounds = array<i64: 2>, scalar_prefetch = 0 : i64, scratch_operands = 0 : i64, tpu.core_type = #tpu.core_type<tc>, window_params = [{transform_indices = @transform_0, window_bounds = array<i64: 1, 90, 128>}, {transform_indices = @transform_1, window_bounds = array<i64: 1, 90, 128>}, {transform_indices = @transform_2, window_bounds = array<i64: 1, 90, 128>}, {transform_indices = @transform_3, window_bounds = array<i64: 1, 90, 128>}, {pipeline_mode = #tpu.pipeline_mode<synchronous>, transform_indices = @transform_4, window_bounds = array<i64: 9, 128, 128>}, {pipeline_mode = #tpu.pipeline_mode<synchronous>, transform_indices = @transform_5, window_bounds = array<i64: 1, 128>}, {transform_indices = @transform_6, window_bounds = array<i64: 1, 72, 128>}]} {
    %c0 = arith.constant 0 : index
    %c0_0 = arith.constant 0 : index
    %c0_1 = arith.constant 0 : index
    %0 = vector.load %arg1[%c0, %c0_0, %c0_1] : memref<1x90x128xbf16, #tpu.memory_space<vmem>>, vector<1x72x128xbf16>
    %1 = vector.shape_cast %0 : vector<1x72x128xbf16> to vector<72x128xbf16>
    %c0_2 = arith.constant 0 : index
    %c0_3 = arith.constant 0 : index
    %c0_4 = arith.constant 0 : index
    %2 = vector.load %arg5[%c0_2, %c0_3, %c0_4] : memref<9x128x128xbf16, #tpu.memory_space<vmem>>, vector<1x128x128xbf16>
    %3 = vector.shape_cast %2 : vector<1x128x128xbf16> to vector<128x128xbf16>
    %cst = arith.constant dense<0.000000e+00> : vector<72x128xf32>
    %4 = tpu.matmul %1, %3, %cst {dimension_numbers = #tpu.dot_dimension_numbers<[1], [0], [0], [1], [0, 0, 1, 1], [], []>} : vector<72x128xbf16>, vector<128x128xbf16>, vector<72x128xf32> -> vector<72x128xf32>
    %c0_5 = arith.constant 0 : index
    %c0_6 = arith.constant 0 : index
    %c0_7 = arith.constant 0 : index
    %5 = vector.load %arg2[%c0_5, %c0_6, %c0_7] : memref<1x90x128xbf16, #tpu.memory_space<vmem>>, vector<1x72x128xbf16>
    %6 = vector.shape_cast %5 : vector<1x72x128xbf16> to vector<72x128xbf16>
    %c1 = arith.constant 1 : index
    %c0_8 = arith.constant 0 : index
    %c0_9 = arith.constant 0 : index
    %7 = vector.load %arg5[%c1, %c0_8, %c0_9] : memref<9x128x128xbf16, #tpu.memory_space<vmem>>, vector<1x128x128xbf16>
    %8 = vector.shape_cast %7 : vector<1x128x128xbf16> to vector<128x128xbf16>
    %cst_10 = arith.constant dense<0.000000e+00> : vector<72x128xf32>
    %9 = tpu.matmul %6, %8, %cst_10 {dimension_numbers = #tpu.dot_dimension_numbers<[1], [0], [0], [1], [0, 0, 1, 1], [], []>} : vector<72x128xbf16>, vector<128x128xbf16>, vector<72x128xf32> -> vector<72x128xf32>
    %10 = arith.addf %4, %9 : vector<72x128xf32>
    %c0_11 = arith.constant 0 : index
    %c1_12 = arith.constant 1 : index
    %c0_13 = arith.constant 0 : index
    %11 = vector.load %arg1[%c0_11, %c1_12, %c0_13] : memref<1x90x128xbf16, #tpu.memory_space<vmem>>, vector<1x72x128xbf16>
    %12 = vector.shape_cast %11 : vector<1x72x128xbf16> to vector<72x128xbf16>
    %c2 = arith.constant 2 : index
    %c0_14 = arith.constant 0 : index
    %c0_15 = arith.constant 0 : index
    %13 = vector.load %arg5[%c2, %c0_14, %c0_15] : memref<9x128x128xbf16, #tpu.memory_space<vmem>>, vector<1x128x128xbf16>
    %14 = vector.shape_cast %13 : vector<1x128x128xbf16> to vector<128x128xbf16>
    %cst_16 = arith.constant dense<0.000000e+00> : vector<72x128xf32>
    %15 = tpu.matmul %12, %14, %cst_16 {dimension_numbers = #tpu.dot_dimension_numbers<[1], [0], [0], [1], [0, 0, 1, 1], [], []>} : vector<72x128xbf16>, vector<128x128xbf16>, vector<72x128xf32> -> vector<72x128xf32>
    %16 = arith.addf %10, %15 : vector<72x128xf32>
    %c0_17 = arith.constant 0 : index
    %c0_18 = arith.constant 0 : index
    %c0_19 = arith.constant 0 : index
    %17 = vector.load %arg3[%c0_17, %c0_18, %c0_19] : memref<1x90x128xbf16, #tpu.memory_space<vmem>>, vector<1x72x128xbf16>
    %18 = vector.shape_cast %17 : vector<1x72x128xbf16> to vector<72x128xbf16>
    %c3 = arith.constant 3 : index
    %c0_20 = arith.constant 0 : index
    %c0_21 = arith.constant 0 : index
    %19 = vector.load %arg5[%c3, %c0_20, %c0_21] : memref<9x128x128xbf16, #tpu.memory_space<vmem>>, vector<1x128x128xbf16>
    %20 = vector.shape_cast %19 : vector<1x128x128xbf16> to vector<128x128xbf16>
    %cst_22 = arith.constant dense<0.000000e+00> : vector<72x128xf32>
    %21 = tpu.matmul %18, %20, %cst_22 {dimension_numbers = #tpu.dot_dimension_numbers<[1], [0], [0], [1], [0, 0, 1, 1], [], []>} : vector<72x128xbf16>, vector<128x128xbf16>, vector<72x128xf32> -> vector<72x128xf32>
    %22 = arith.addf %16, %21 : vector<72x128xf32>
    %c0_23 = arith.constant 0 : index
    %c0_24 = arith.constant 0 : index
    %c0_25 = arith.constant 0 : index
    %23 = vector.load %arg4[%c0_23, %c0_24, %c0_25] : memref<1x90x128xbf16, #tpu.memory_space<vmem>>, vector<1x72x128xbf16>
    %24 = vector.shape_cast %23 : vector<1x72x128xbf16> to vector<72x128xbf16>
    %c4 = arith.constant 4 : index
    %c0_26 = arith.constant 0 : index
    %c0_27 = arith.constant 0 : index
    %25 = vector.load %arg5[%c4, %c0_26, %c0_27] : memref<9x128x128xbf16, #tpu.memory_space<vmem>>, vector<1x128x128xbf16>
    %26 = vector.shape_cast %25 : vector<1x128x128xbf16> to vector<128x128xbf16>
    %cst_28 = arith.constant dense<0.000000e+00> : vector<72x128xf32>
    %27 = tpu.matmul %24, %26, %cst_28 {dimension_numbers = #tpu.dot_dimension_numbers<[1], [0], [0], [1], [0, 0, 1, 1], [], []>} : vector<72x128xbf16>, vector<128x128xbf16>, vector<72x128xf32> -> vector<72x128xf32>
    %28 = arith.addf %22, %27 : vector<72x128xf32>
    %c0_29 = arith.constant 0 : index
    %c1_30 = arith.constant 1 : index
    %c0_31 = arith.constant 0 : index
    %29 = vector.load %arg3[%c0_29, %c1_30, %c0_31] : memref<1x90x128xbf16, #tpu.memory_space<vmem>>, vector<1x72x128xbf16>
    %30 = vector.shape_cast %29 : vector<1x72x128xbf16> to vector<72x128xbf16>
    %c5 = arith.constant 5 : index
    %c0_32 = arith.constant 0 : index
    %c0_33 = arith.constant 0 : index
    %31 = vector.load %arg5[%c5, %c0_32, %c0_33] : memref<9x128x128xbf16, #tpu.memory_space<vmem>>, vector<1x128x128xbf16>
    %32 = vector.shape_cast %31 : vector<1x128x128xbf16> to vector<128x128xbf16>
    %cst_34 = arith.constant dense<0.000000e+00> : vector<72x128xf32>
    %33 = tpu.matmul %30, %32, %cst_34 {dimension_numbers = #tpu.dot_dimension_numbers<[1], [0], [0], [1], [0, 0, 1, 1], [], []>} : vector<72x128xbf16>, vector<128x128xbf16>, vector<72x128xf32> -> vector<72x128xf32>
    %34 = arith.addf %28, %33 : vector<72x128xf32>
    %c0_35 = arith.constant 0 : index
    %c9 = arith.constant 9 : index
    %c0_36 = arith.constant 0 : index
    %35 = vector.load %arg1[%c0_35, %c9, %c0_36] : memref<1x90x128xbf16, #tpu.memory_space<vmem>>, vector<1x72x128xbf16>
    %36 = vector.shape_cast %35 : vector<1x72x128xbf16> to vector<72x128xbf16>
    %c6 = arith.constant 6 : index
    %c0_37 = arith.constant 0 : index
    %c0_38 = arith.constant 0 : index
    %37 = vector.load %arg5[%c6, %c0_37, %c0_38] : memref<9x128x128xbf16, #tpu.memory_space<vmem>>, vector<1x128x128xbf16>
    %38 = vector.shape_cast %37 : vector<1x128x128xbf16> to vector<128x128xbf16>
    %cst_39 = arith.constant dense<0.000000e+00> : vector<72x128xf32>
    %39 = tpu.matmul %36, %38, %cst_39 {dimension_numbers = #tpu.dot_dimension_numbers<[1], [0], [0], [1], [0, 0, 1, 1], [], []>} : vector<72x128xbf16>, vector<128x128xbf16>, vector<72x128xf32> -> vector<72x128xf32>
    %40 = arith.addf %34, %39 : vector<72x128xf32>
    %c0_40 = arith.constant 0 : index
    %c9_41 = arith.constant 9 : index
    %c0_42 = arith.constant 0 : index
    %41 = vector.load %arg2[%c0_40, %c9_41, %c0_42] : memref<1x90x128xbf16, #tpu.memory_space<vmem>>, vector<1x72x128xbf16>
    %42 = vector.shape_cast %41 : vector<1x72x128xbf16> to vector<72x128xbf16>
    %c7 = arith.constant 7 : index
    %c0_43 = arith.constant 0 : index
    %c0_44 = arith.constant 0 : index
    %43 = vector.load %arg5[%c7, %c0_43, %c0_44] : memref<9x128x128xbf16, #tpu.memory_space<vmem>>, vector<1x128x128xbf16>
    %44 = vector.shape_cast %43 : vector<1x128x128xbf16> to vector<128x128xbf16>
    %cst_45 = arith.constant dense<0.000000e+00> : vector<72x128xf32>
    %45 = tpu.matmul %42, %44, %cst_45 {dimension_numbers = #tpu.dot_dimension_numbers<[1], [0], [0], [1], [0, 0, 1, 1], [], []>} : vector<72x128xbf16>, vector<128x128xbf16>, vector<72x128xf32> -> vector<72x128xf32>
    %46 = arith.addf %40, %45 : vector<72x128xf32>
    %c0_46 = arith.constant 0 : index
    %c10 = arith.constant 10 : index
    %c0_47 = arith.constant 0 : index
    %47 = vector.load %arg1[%c0_46, %c10, %c0_47] : memref<1x90x128xbf16, #tpu.memory_space<vmem>>, vector<1x72x128xbf16>
    %48 = vector.shape_cast %47 : vector<1x72x128xbf16> to vector<72x128xbf16>
    %c8 = arith.constant 8 : index
    %c0_48 = arith.constant 0 : index
    %c0_49 = arith.constant 0 : index
    %49 = vector.load %arg5[%c8, %c0_48, %c0_49] : memref<9x128x128xbf16, #tpu.memory_space<vmem>>, vector<1x128x128xbf16>
    %50 = vector.shape_cast %49 : vector<1x128x128xbf16> to vector<128x128xbf16>
    %cst_50 = arith.constant dense<0.000000e+00> : vector<72x128xf32>
    %51 = tpu.matmul %48, %50, %cst_50 {dimension_numbers = #tpu.dot_dimension_numbers<[1], [0], [0], [1], [0, 0, 1, 1], [], []>} : vector<72x128xbf16>, vector<128x128xbf16>, vector<72x128xf32> -> vector<72x128xf32>
    %52 = arith.addf %46, %51 : vector<72x128xf32>
    %c0_51 = arith.constant 0 : index
    %c0_52 = arith.constant 0 : index
    %53 = vector.load %arg6[%c0_51, %c0_52] : memref<1x128xf32, #tpu.memory_space<vmem>>, vector<1x128xf32>
    %54 = vector.broadcast %53 : vector<1x128xf32> to vector<72x128xf32>
    %55 = arith.addf %52, %54 : vector<72x128xf32>
    %cst_53 = arith.constant 0.000000e+00 : f32
    %56 = vector.broadcast %cst_53 : f32 to vector<72x128xf32>
    %57 = arith.cmpf oge, %55, %56 : vector<72x128xf32>
    %cst_54 = arith.constant 0.00999999977 : f32
    %58 = vector.broadcast %cst_54 : f32 to vector<72x128xf32>
    %59 = arith.mulf %58, %55 : vector<72x128xf32>
    %60 = arith.select %57, %55, %59 : vector<72x128xi1>, vector<72x128xf32>
    %61 = arith.truncf %60 : vector<72x128xf32> to vector<72x128xbf16>
    %c0_55 = arith.constant 0 : index
    %c0_56 = arith.constant 0 : index
    %c0_57 = arith.constant 0 : index
    %62 = vector.load %arg7[%c0_55, %c0_56, %c0_57] : memref<1x72x128xbf16, #tpu.memory_space<vmem>>, vector<1x72x128xbf16>
    %63 = vector.shape_cast %62 : vector<1x72x128xbf16> to vector<72x128xbf16>
    %64 = vector.shape_cast %61 : vector<72x128xbf16> to vector<1x72x128xbf16>
    tpu.vector_store %arg7[%c0_55, %c0_56, %c0_57], %64 {strides = array<i32>} : memref<1x72x128xbf16, #tpu.memory_space<vmem>>, vector<1x72x128xbf16>,
    return
  }
  func.func @transform_0(%arg0: i32) -> (i32, i32, i32) {
    %c0_i32 = arith.constant 0 : i32
    %c0_i32_0 = arith.constant 0 : i32
    %c0_i32_1 = arith.constant 0 : i32
    return %arg0, %c0_i32, %c0_i32_0 : i32, i32, i32
  }
  func.func @transform_1(%arg0: i32) -> (i32, i32, i32) {
    %c0_i32 = arith.constant 0 : i32
    %c0_i32_0 = arith.constant 0 : i32
    %c0_i32_1 = arith.constant 0 : i32
    return %arg0, %c0_i32, %c0_i32_0 : i32, i32, i32
  }
  func.func @transform_2(%arg0: i32) -> (i32, i32, i32) {
    %c0_i32 = arith.constant 0 : i32
    %c0_i32_0 = arith.constant 0 : i32
    %c0_i32_1 = arith.constant 0 : i32
    return %arg0, %c0_i32, %c0_i32_0 : i32, i32, i32
  }
  func.func @transform_3(%arg0: i32) -> (i32, i32, i32) {
    %c0_i32 = arith.constant 0 : i32
    %c0_i32_0 = arith.constant 0 : i32
    %c0_i32_1 = arith.constant 0 : i32
    return %arg0, %c0_i32, %c0_i32_0 : i32, i32, i32
  }
  func.func @transform_4(%arg0: i32) -> (i32, i32, i32) {
    %c0_i32 = arith.constant 0 : i32
    %c0_i32_0 = arith.constant 0 : i32
    %c0_i32_1 = arith.constant 0 : i32
    %c0_i32_2 = arith.constant 0 : i32
    return %c0_i32, %c0_i32_0, %c0_i32_1 : i32, i32, i32
  }
  func.func @transform_5(%arg0: i32) -> (i32, i32) {
    %c0_i32 = arith.constant 0 : i32
    %c0_i32_0 = arith.constant 0 : i32
    %c0_i32_1 = arith.constant 0 : i32
    return %c0_i32, %c0_i32_0 : i32, i32
  }
  func.func @transform_6(%arg0: i32) -> (i32, i32, i32) {
    %c0_i32 = arith.constant 0 : i32
    %c0_i32_0 = arith.constant 0 : i32
    %c0_i32_1 = arith.constant 0 : i32
    return %arg0, %c0_i32, %c0_i32_0 : i32, i32, i32
  }
}

module attributes {stable_mosaic.version = 11 : i64} {
  func.func @_fused_tail_kernel(%arg0: i32, %arg1: memref<64x8x128xbf16, #tpu.memory_space<vmem>>, %arg2: memref<9x128x128xbf16, #tpu.memory_space<vmem>>, %arg3: memref<1x128xf32, #tpu.memory_space<vmem>>, %arg4: memref<9x128x128xbf16, #tpu.memory_space<vmem>>, %arg5: memref<1x128xf32, #tpu.memory_space<vmem>>, %arg6: memref<9x128x128xbf16, #tpu.memory_space<vmem>>, %arg7: memref<1x128xf32, #tpu.memory_space<vmem>>, %arg8: memref<128x128xbf16, #tpu.memory_space<vmem>>, %arg9: memref<1x128xf32, #tpu.memory_space<vmem>>, %arg10: memref<8x128xf32, #tpu.memory_space<vmem>>) attributes {dimension_semantics = [#tpu.dimension_semantics<parallel>], iteration_bounds = array<i64: 1>, scalar_prefetch = 0 : i64, scratch_operands = 0 : i64, tpu.core_type = #tpu.core_type<tc>, window_params = [{transform_indices = @transform_0, window_bounds = array<i64: 64, 8, 128>}, {pipeline_mode = #tpu.pipeline_mode<synchronous>, transform_indices = @transform_1, window_bounds = array<i64: 9, 128, 128>}, {pipeline_mode = #tpu.pipeline_mode<synchronous>, transform_indices = @transform_2, window_bounds = array<i64: 1, 128>}, {pipeline_mode = #tpu.pipeline_mode<synchronous>, transform_indices = @transform_3, window_bounds = array<i64: 9, 128, 128>}, {pipeline_mode = #tpu.pipeline_mode<synchronous>, transform_indices = @transform_4, window_bounds = array<i64: 1, 128>}, {pipeline_mode = #tpu.pipeline_mode<synchronous>, transform_indices = @transform_5, window_bounds = array<i64: 9, 128, 128>}, {pipeline_mode = #tpu.pipeline_mode<synchronous>, transform_indices = @transform_6, window_bounds = array<i64: 1, 128>}, {pipeline_mode = #tpu.pipeline_mode<synchronous>, transform_indices = @transform_7, window_bounds = array<i64: 128, 128>}, {pipeline_mode = #tpu.pipeline_mode<synchronous>, transform_indices = @transform_8, window_bounds = array<i64: 1, 128>}, {transform_indices = @transform_9, window_bounds = array<i64: 8, 128>}]} {
    %c0 = arith.constant 0 : index
    %c0_0 = arith.constant 0 : index
    %c0_1 = arith.constant 0 : index
    %0 = vector.load %arg1[%c0, %c0_0, %c0_1] : memref<64x8x128xbf16, #tpu.memory_space<vmem>>, vector<1x8x128xbf16>
    %1 = vector.shape_cast %0 : vector<1x8x128xbf16> to vector<8x128xbf16>
    %c1 = arith.constant 1 : index
    %c0_2 = arith.constant 0 : index
    %c0_3 = arith.constant 0 : index
    %2 = vector.load %arg1[%c1, %c0_2, %c0_3] : memref<64x8x128xbf16, #tpu.memory_space<vmem>>, vector<1x8x128xbf16>
    %3 = vector.shape_cast %2 : vector<1x8x128xbf16> to vector<8x128xbf16>
    %c2 = arith.constant 2 : index
    %c0_4 = arith.constant 0 : index
    %c0_5 = arith.constant 0 : index
    %4 = vector.load %arg1[%c2, %c0_4, %c0_5] : memref<64x8x128xbf16, #tpu.memory_space<vmem>>, vector<1x8x128xbf16>
    %5 = vector.shape_cast %4 : vector<1x8x128xbf16> to vector<8x128xbf16>
    %c3 = arith.constant 3 : index
    %c0_6 = arith.constant 0 : index
    %c0_7 = arith.constant 0 : index
    %6 = vector.load %arg1[%c3, %c0_6, %c0_7] : memref<64x8x128xbf16, #tpu.memory_space<vmem>>, vector<1x8x128xbf16>
    %7 = vector.shape_cast %6 : vector<1x8x128xbf16> to vector<8x128xbf16>
    %c4 = arith.constant 4 : index
    %c0_8 = arith.constant 0 : index
    %c0_9 = arith.constant 0 : index
    %8 = vector.load %arg1[%c4, %c0_8, %c0_9] : memref<64x8x128xbf16, #tpu.memory_space<vmem>>, vector<1x8x128xbf16>
    %9 = vector.shape_cast %8 : vector<1x8x128xbf16> to vector<8x128xbf16>
    %c5 = arith.constant 5 : index
    %c0_10 = arith.constant 0 : index
    %c0_11 = arith.constant 0 : index
    %10 = vector.load %arg1[%c5, %c0_10, %c0_11] : memref<64x8x128xbf16, #tpu.memory_space<vmem>>, vector<1x8x128xbf16>
    %11 = vector.shape_cast %10 : vector<1x8x128xbf16> to vector<8x128xbf16>
    %c6 = arith.constant 6 : index
    %c0_12 = arith.constant 0 : index
    %c0_13 = arith.constant 0 : index
    %12 = vector.load %arg1[%c6, %c0_12, %c0_13] : memref<64x8x128xbf16, #tpu.memory_space<vmem>>, vector<1x8x128xbf16>
    %13 = vector.shape_cast %12 : vector<1x8x128xbf16> to vector<8x128xbf16>
    %c7 = arith.constant 7 : index
    %c0_14 = arith.constant 0 : index
    %c0_15 = arith.constant 0 : index
    %14 = vector.load %arg1[%c7, %c0_14, %c0_15] : memref<64x8x128xbf16, #tpu.memory_space<vmem>>, vector<1x8x128xbf16>
    %15 = vector.shape_cast %14 : vector<1x8x128xbf16> to vector<8x128xbf16>
    %c8 = arith.constant 8 : index
    %c0_16 = arith.constant 0 : index
    %c0_17 = arith.constant 0 : index
    %16 = vector.load %arg1[%c8, %c0_16, %c0_17] : memref<64x8x128xbf16, #tpu.memory_space<vmem>>, vector<1x8x128xbf16>
    %17 = vector.shape_cast %16 : vector<1x8x128xbf16> to vector<8x128xbf16>
    %c9 = arith.constant 9 : index
    %c0_18 = arith.constant 0 : index
    %c0_19 = arith.constant 0 : index
    %18 = vector.load %arg1[%c9, %c0_18, %c0_19] : memref<64x8x128xbf16, #tpu.memory_space<vmem>>, vector<1x8x128xbf16>
    %19 = vector.shape_cast %18 : vector<1x8x128xbf16> to vector<8x128xbf16>
    %c10 = arith.constant 10 : index
    %c0_20 = arith.constant 0 : index
    %c0_21 = arith.constant 0 : index
    %20 = vector.load %arg1[%c10, %c0_20, %c0_21] : memref<64x8x128xbf16, #tpu.memory_space<vmem>>, vector<1x8x128xbf16>
    %21 = vector.shape_cast %20 : vector<1x8x128xbf16> to vector<8x128xbf16>
    %c11 = arith.constant 11 : index
    %c0_22 = arith.constant 0 : index
    %c0_23 = arith.constant 0 : index
    %22 = vector.load %arg1[%c11, %c0_22, %c0_23] : memref<64x8x128xbf16, #tpu.memory_space<vmem>>, vector<1x8x128xbf16>
    %23 = vector.shape_cast %22 : vector<1x8x128xbf16> to vector<8x128xbf16>
    %c12 = arith.constant 12 : index
    %c0_24 = arith.constant 0 : index
    %c0_25 = arith.constant 0 : index
    %24 = vector.load %arg1[%c12, %c0_24, %c0_25] : memref<64x8x128xbf16, #tpu.memory_space<vmem>>, vector<1x8x128xbf16>
    %25 = vector.shape_cast %24 : vector<1x8x128xbf16> to vector<8x128xbf16>
    %c13 = arith.constant 13 : index
    %c0_26 = arith.constant 0 : index
    %c0_27 = arith.constant 0 : index
    %26 = vector.load %arg1[%c13, %c0_26, %c0_27] : memref<64x8x128xbf16, #tpu.memory_space<vmem>>, vector<1x8x128xbf16>
    %27 = vector.shape_cast %26 : vector<1x8x128xbf16> to vector<8x128xbf16>
    %c14 = arith.constant 14 : index
    %c0_28 = arith.constant 0 : index
    %c0_29 = arith.constant 0 : index
    %28 = vector.load %arg1[%c14, %c0_28, %c0_29] : memref<64x8x128xbf16, #tpu.memory_space<vmem>>, vector<1x8x128xbf16>
    %29 = vector.shape_cast %28 : vector<1x8x128xbf16> to vector<8x128xbf16>
    %c15 = arith.constant 15 : index
    %c0_30 = arith.constant 0 : index
    %c0_31 = arith.constant 0 : index
    %30 = vector.load %arg1[%c15, %c0_30, %c0_31] : memref<64x8x128xbf16, #tpu.memory_space<vmem>>, vector<1x8x128xbf16>
    %31 = vector.shape_cast %30 : vector<1x8x128xbf16> to vector<8x128xbf16>
    %c16 = arith.constant 16 : index
    %c0_32 = arith.constant 0 : index
    %c0_33 = arith.constant 0 : index
    %32 = vector.load %arg1[%c16, %c0_32, %c0_33] : memref<64x8x128xbf16, #tpu.memory_space<vmem>>, vector<1x8x128xbf16>
    %33 = vector.shape_cast %32 : vector<1x8x128xbf16> to vector<8x128xbf16>
    %c17 = arith.constant 17 : index
    %c0_34 = arith.constant 0 : index
    %c0_35 = arith.constant 0 : index
    %34 = vector.load %arg1[%c17, %c0_34, %c0_35] : memref<64x8x128xbf16, #tpu.memory_space<vmem>>, vector<1x8x128xbf16>
    %35 = vector.shape_cast %34 : vector<1x8x128xbf16> to vector<8x128xbf16>
    %c18 = arith.constant 18 : index
    %c0_36 = arith.constant 0 : index
    %c0_37 = arith.constant 0 : index
    %36 = vector.load %arg1[%c18, %c0_36, %c0_37] : memref<64x8x128xbf16, #tpu.memory_space<vmem>>, vector<1x8x128xbf16>
    %37 = vector.shape_cast %36 : vector<1x8x128xbf16> to vector<8x128xbf16>
    %c19 = arith.constant 19 : index
    %c0_38 = arith.constant 0 : index
    %c0_39 = arith.constant 0 : index
    %38 = vector.load %arg1[%c19, %c0_38, %c0_39] : memref<64x8x128xbf16, #tpu.memory_space<vmem>>, vector<1x8x128xbf16>
    %39 = vector.shape_cast %38 : vector<1x8x128xbf16> to vector<8x128xbf16>
    %c20 = arith.constant 20 : index
    %c0_40 = arith.constant 0 : index
    %c0_41 = arith.constant 0 : index
    %40 = vector.load %arg1[%c20, %c0_40, %c0_41] : memref<64x8x128xbf16, #tpu.memory_space<vmem>>, vector<1x8x128xbf16>
    %41 = vector.shape_cast %40 : vector<1x8x128xbf16> to vector<8x128xbf16>
    %c21 = arith.constant 21 : index
    %c0_42 = arith.constant 0 : index
    %c0_43 = arith.constant 0 : index
    %42 = vector.load %arg1[%c21, %c0_42, %c0_43] : memref<64x8x128xbf16, #tpu.memory_space<vmem>>, vector<1x8x128xbf16>
    %43 = vector.shape_cast %42 : vector<1x8x128xbf16> to vector<8x128xbf16>
    %c22 = arith.constant 22 : index
    %c0_44 = arith.constant 0 : index
    %c0_45 = arith.constant 0 : index
    %44 = vector.load %arg1[%c22, %c0_44, %c0_45] : memref<64x8x128xbf16, #tpu.memory_space<vmem>>, vector<1x8x128xbf16>
    %45 = vector.shape_cast %44 : vector<1x8x128xbf16> to vector<8x128xbf16>
    %c23 = arith.constant 23 : index
    %c0_46 = arith.constant 0 : index
    %c0_47 = arith.constant 0 : index
    %46 = vector.load %arg1[%c23, %c0_46, %c0_47] : memref<64x8x128xbf16, #tpu.memory_space<vmem>>, vector<1x8x128xbf16>
    %47 = vector.shape_cast %46 : vector<1x8x128xbf16> to vector<8x128xbf16>
    %c24 = arith.constant 24 : index
    %c0_48 = arith.constant 0 : index
    %c0_49 = arith.constant 0 : index
    %48 = vector.load %arg1[%c24, %c0_48, %c0_49] : memref<64x8x128xbf16, #tpu.memory_space<vmem>>, vector<1x8x128xbf16>
    %49 = vector.shape_cast %48 : vector<1x8x128xbf16> to vector<8x128xbf16>
    %c25 = arith.constant 25 : index
    %c0_50 = arith.constant 0 : index
    %c0_51 = arith.constant 0 : index
    %50 = vector.load %arg1[%c25, %c0_50, %c0_51] : memref<64x8x128xbf16, #tpu.memory_space<vmem>>, vector<1x8x128xbf16>
    %51 = vector.shape_cast %50 : vector<1x8x128xbf16> to vector<8x128xbf16>
    %c26 = arith.constant 26 : index
    %c0_52 = arith.constant 0 : index
    %c0_53 = arith.constant 0 : index
    %52 = vector.load %arg1[%c26, %c0_52, %c0_53] : memref<64x8x128xbf16, #tpu.memory_space<vmem>>, vector<1x8x128xbf16>
    %53 = vector.shape_cast %52 : vector<1x8x128xbf16> to vector<8x128xbf16>
    %c27 = arith.constant 27 : index
    %c0_54 = arith.constant 0 : index
    %c0_55 = arith.constant 0 : index
    %54 = vector.load %arg1[%c27, %c0_54, %c0_55] : memref<64x8x128xbf16, #tpu.memory_space<vmem>>, vector<1x8x128xbf16>
    %55 = vector.shape_cast %54 : vector<1x8x128xbf16> to vector<8x128xbf16>
    %c28 = arith.constant 28 : index
    %c0_56 = arith.constant 0 : index
    %c0_57 = arith.constant 0 : index
    %56 = vector.load %arg1[%c28, %c0_56, %c0_57] : memref<64x8x128xbf16, #tpu.memory_space<vmem>>, vector<1x8x128xbf16>
    %57 = vector.shape_cast %56 : vector<1x8x128xbf16> to vector<8x128xbf16>
    %c29 = arith.constant 29 : index
    %c0_58 = arith.constant 0 : index
    %c0_59 = arith.constant 0 : index
    %58 = vector.load %arg1[%c29, %c0_58, %c0_59] : memref<64x8x128xbf16, #tpu.memory_space<vmem>>, vector<1x8x128xbf16>
    %59 = vector.shape_cast %58 : vector<1x8x128xbf16> to vector<8x128xbf16>
    %c30 = arith.constant 30 : index
    %c0_60 = arith.constant 0 : index
    %c0_61 = arith.constant 0 : index
    %60 = vector.load %arg1[%c30, %c0_60, %c0_61] : memref<64x8x128xbf16, #tpu.memory_space<vmem>>, vector<1x8x128xbf16>
    %61 = vector.shape_cast %60 : vector<1x8x128xbf16> to vector<8x128xbf16>
    %c31 = arith.constant 31 : index
    %c0_62 = arith.constant 0 : index
    %c0_63 = arith.constant 0 : index
    %62 = vector.load %arg1[%c31, %c0_62, %c0_63] : memref<64x8x128xbf16, #tpu.memory_space<vmem>>, vector<1x8x128xbf16>
    %63 = vector.shape_cast %62 : vector<1x8x128xbf16> to vector<8x128xbf16>
    %c32 = arith.constant 32 : index
    %c0_64 = arith.constant 0 : index
    %c0_65 = arith.constant 0 : index
    %64 = vector.load %arg1[%c32, %c0_64, %c0_65] : memref<64x8x128xbf16, #tpu.memory_space<vmem>>, vector<1x8x128xbf16>
    %65 = vector.shape_cast %64 : vector<1x8x128xbf16> to vector<8x128xbf16>
    %c33 = arith.constant 33 : index
    %c0_66 = arith.constant 0 : index
    %c0_67 = arith.constant 0 : index
    %66 = vector.load %arg1[%c33, %c0_66, %c0_67] : memref<64x8x128xbf16, #tpu.memory_space<vmem>>, vector<1x8x128xbf16>
    %67 = vector.shape_cast %66 : vector<1x8x128xbf16> to vector<8x128xbf16>
    %c34 = arith.constant 34 : index
    %c0_68 = arith.constant 0 : index
    %c0_69 = arith.constant 0 : index
    %68 = vector.load %arg1[%c34, %c0_68, %c0_69] : memref<64x8x128xbf16, #tpu.memory_space<vmem>>, vector<1x8x128xbf16>
    %69 = vector.shape_cast %68 : vector<1x8x128xbf16> to vector<8x128xbf16>
    %c35 = arith.constant 35 : index
    %c0_70 = arith.constant 0 : index
    %c0_71 = arith.constant 0 : index
    %70 = vector.load %arg1[%c35, %c0_70, %c0_71] : memref<64x8x128xbf16, #tpu.memory_space<vmem>>, vector<1x8x128xbf16>
    %71 = vector.shape_cast %70 : vector<1x8x128xbf16> to vector<8x128xbf16>
    %c36 = arith.constant 36 : index
    %c0_72 = arith.constant 0 : index
    %c0_73 = arith.constant 0 : index
    %72 = vector.load %arg1[%c36, %c0_72, %c0_73] : memref<64x8x128xbf16, #tpu.memory_space<vmem>>, vector<1x8x128xbf16>
    %73 = vector.shape_cast %72 : vector<1x8x128xbf16> to vector<8x128xbf16>
    %c37 = arith.constant 37 : index
    %c0_74 = arith.constant 0 : index
    %c0_75 = arith.constant 0 : index
    %74 = vector.load %arg1[%c37, %c0_74, %c0_75] : memref<64x8x128xbf16, #tpu.memory_space<vmem>>, vector<1x8x128xbf16>
    %75 = vector.shape_cast %74 : vector<1x8x128xbf16> to vector<8x128xbf16>
    %c38 = arith.constant 38 : index
    %c0_76 = arith.constant 0 : index
    %c0_77 = arith.constant 0 : index
    %76 = vector.load %arg1[%c38, %c0_76, %c0_77] : memref<64x8x128xbf16, #tpu.memory_space<vmem>>, vector<1x8x128xbf16>
    %77 = vector.shape_cast %76 : vector<1x8x128xbf16> to vector<8x128xbf16>
    %c39 = arith.constant 39 : index
    %c0_78 = arith.constant 0 : index
    %c0_79 = arith.constant 0 : index
    %78 = vector.load %arg1[%c39, %c0_78, %c0_79] : memref<64x8x128xbf16, #tpu.memory_space<vmem>>, vector<1x8x128xbf16>
    %79 = vector.shape_cast %78 : vector<1x8x128xbf16> to vector<8x128xbf16>
    %c40 = arith.constant 40 : index
    %c0_80 = arith.constant 0 : index
    %c0_81 = arith.constant 0 : index
    %80 = vector.load %arg1[%c40, %c0_80, %c0_81] : memref<64x8x128xbf16, #tpu.memory_space<vmem>>, vector<1x8x128xbf16>
    %81 = vector.shape_cast %80 : vector<1x8x128xbf16> to vector<8x128xbf16>
    %c41 = arith.constant 41 : index
    %c0_82 = arith.constant 0 : index
    %c0_83 = arith.constant 0 : index
    %82 = vector.load %arg1[%c41, %c0_82, %c0_83] : memref<64x8x128xbf16, #tpu.memory_space<vmem>>, vector<1x8x128xbf16>
    %83 = vector.shape_cast %82 : vector<1x8x128xbf16> to vector<8x128xbf16>
    %c42 = arith.constant 42 : index
    %c0_84 = arith.constant 0 : index
    %c0_85 = arith.constant 0 : index
    %84 = vector.load %arg1[%c42, %c0_84, %c0_85] : memref<64x8x128xbf16, #tpu.memory_space<vmem>>, vector<1x8x128xbf16>
    %85 = vector.shape_cast %84 : vector<1x8x128xbf16> to vector<8x128xbf16>
    %c43 = arith.constant 43 : index
    %c0_86 = arith.constant 0 : index
    %c0_87 = arith.constant 0 : index
    %86 = vector.load %arg1[%c43, %c0_86, %c0_87] : memref<64x8x128xbf16, #tpu.memory_space<vmem>>, vector<1x8x128xbf16>
    %87 = vector.shape_cast %86 : vector<1x8x128xbf16> to vector<8x128xbf16>
    %c44 = arith.constant 44 : index
    %c0_88 = arith.constant 0 : index
    %c0_89 = arith.constant 0 : index
    %88 = vector.load %arg1[%c44, %c0_88, %c0_89] : memref<64x8x128xbf16, #tpu.memory_space<vmem>>, vector<1x8x128xbf16>
    %89 = vector.shape_cast %88 : vector<1x8x128xbf16> to vector<8x128xbf16>
    %c45 = arith.constant 45 : index
    %c0_90 = arith.constant 0 : index
    %c0_91 = arith.constant 0 : index
    %90 = vector.load %arg1[%c45, %c0_90, %c0_91] : memref<64x8x128xbf16, #tpu.memory_space<vmem>>, vector<1x8x128xbf16>
    %91 = vector.shape_cast %90 : vector<1x8x128xbf16> to vector<8x128xbf16>
    %c46 = arith.constant 46 : index
    %c0_92 = arith.constant 0 : index
    %c0_93 = arith.constant 0 : index
    %92 = vector.load %arg1[%c46, %c0_92, %c0_93] : memref<64x8x128xbf16, #tpu.memory_space<vmem>>, vector<1x8x128xbf16>
    %93 = vector.shape_cast %92 : vector<1x8x128xbf16> to vector<8x128xbf16>
    %c47 = arith.constant 47 : index
    %c0_94 = arith.constant 0 : index
    %c0_95 = arith.constant 0 : index
    %94 = vector.load %arg1[%c47, %c0_94, %c0_95] : memref<64x8x128xbf16, #tpu.memory_space<vmem>>, vector<1x8x128xbf16>
    %95 = vector.shape_cast %94 : vector<1x8x128xbf16> to vector<8x128xbf16>
    %c48 = arith.constant 48 : index
    %c0_96 = arith.constant 0 : index
    %c0_97 = arith.constant 0 : index
    %96 = vector.load %arg1[%c48, %c0_96, %c0_97] : memref<64x8x128xbf16, #tpu.memory_space<vmem>>, vector<1x8x128xbf16>
    %97 = vector.shape_cast %96 : vector<1x8x128xbf16> to vector<8x128xbf16>
    %c49 = arith.constant 49 : index
    %c0_98 = arith.constant 0 : index
    %c0_99 = arith.constant 0 : index
    %98 = vector.load %arg1[%c49, %c0_98, %c0_99] : memref<64x8x128xbf16, #tpu.memory_space<vmem>>, vector<1x8x128xbf16>
    %99 = vector.shape_cast %98 : vector<1x8x128xbf16> to vector<8x128xbf16>
    %c50 = arith.constant 50 : index
    %c0_100 = arith.constant 0 : index
    %c0_101 = arith.constant 0 : index
    %100 = vector.load %arg1[%c50, %c0_100, %c0_101] : memref<64x8x128xbf16, #tpu.memory_space<vmem>>, vector<1x8x128xbf16>
    %101 = vector.shape_cast %100 : vector<1x8x128xbf16> to vector<8x128xbf16>
    %c51 = arith.constant 51 : index
    %c0_102 = arith.constant 0 : index
    %c0_103 = arith.constant 0 : index
    %102 = vector.load %arg1[%c51, %c0_102, %c0_103] : memref<64x8x128xbf16, #tpu.memory_space<vmem>>, vector<1x8x128xbf16>
    %103 = vector.shape_cast %102 : vector<1x8x128xbf16> to vector<8x128xbf16>
    %c52 = arith.constant 52 : index
    %c0_104 = arith.constant 0 : index
    %c0_105 = arith.constant 0 : index
    %104 = vector.load %arg1[%c52, %c0_104, %c0_105] : memref<64x8x128xbf16, #tpu.memory_space<vmem>>, vector<1x8x128xbf16>
    %105 = vector.shape_cast %104 : vector<1x8x128xbf16> to vector<8x128xbf16>
    %c53 = arith.constant 53 : index
    %c0_106 = arith.constant 0 : index
    %c0_107 = arith.constant 0 : index
    %106 = vector.load %arg1[%c53, %c0_106, %c0_107] : memref<64x8x128xbf16, #tpu.memory_space<vmem>>, vector<1x8x128xbf16>
    %107 = vector.shape_cast %106 : vector<1x8x128xbf16> to vector<8x128xbf16>
    %c54 = arith.constant 54 : index
    %c0_108 = arith.constant 0 : index
    %c0_109 = arith.constant 0 : index
    %108 = vector.load %arg1[%c54, %c0_108, %c0_109] : memref<64x8x128xbf16, #tpu.memory_space<vmem>>, vector<1x8x128xbf16>
    %109 = vector.shape_cast %108 : vector<1x8x128xbf16> to vector<8x128xbf16>
    %c55 = arith.constant 55 : index
    %c0_110 = arith.constant 0 : index
    %c0_111 = arith.constant 0 : index
    %110 = vector.load %arg1[%c55, %c0_110, %c0_111] : memref<64x8x128xbf16, #tpu.memory_space<vmem>>, vector<1x8x128xbf16>
    %111 = vector.shape_cast %110 : vector<1x8x128xbf16> to vector<8x128xbf16>
    %c56 = arith.constant 56 : index
    %c0_112 = arith.constant 0 : index
    %c0_113 = arith.constant 0 : index
    %112 = vector.load %arg1[%c56, %c0_112, %c0_113] : memref<64x8x128xbf16, #tpu.memory_space<vmem>>, vector<1x8x128xbf16>
    %113 = vector.shape_cast %112 : vector<1x8x128xbf16> to vector<8x128xbf16>
    %c57 = arith.constant 57 : index
    %c0_114 = arith.constant 0 : index
    %c0_115 = arith.constant 0 : index
    %114 = vector.load %arg1[%c57, %c0_114, %c0_115] : memref<64x8x128xbf16, #tpu.memory_space<vmem>>, vector<1x8x128xbf16>
    %115 = vector.shape_cast %114 : vector<1x8x128xbf16> to vector<8x128xbf16>
    %c58 = arith.constant 58 : index
    %c0_116 = arith.constant 0 : index
    %c0_117 = arith.constant 0 : index
    %116 = vector.load %arg1[%c58, %c0_116, %c0_117] : memref<64x8x128xbf16, #tpu.memory_space<vmem>>, vector<1x8x128xbf16>
    %117 = vector.shape_cast %116 : vector<1x8x128xbf16> to vector<8x128xbf16>
    %c59 = arith.constant 59 : index
    %c0_118 = arith.constant 0 : index
    %c0_119 = arith.constant 0 : index
    %118 = vector.load %arg1[%c59, %c0_118, %c0_119] : memref<64x8x128xbf16, #tpu.memory_space<vmem>>, vector<1x8x128xbf16>
    %119 = vector.shape_cast %118 : vector<1x8x128xbf16> to vector<8x128xbf16>
    %c60 = arith.constant 60 : index
    %c0_120 = arith.constant 0 : index
    %c0_121 = arith.constant 0 : index
    %120 = vector.load %arg1[%c60, %c0_120, %c0_121] : memref<64x8x128xbf16, #tpu.memory_space<vmem>>, vector<1x8x128xbf16>
    %121 = vector.shape_cast %120 : vector<1x8x128xbf16> to vector<8x128xbf16>
    %c61 = arith.constant 61 : index
    %c0_122 = arith.constant 0 : index
    %c0_123 = arith.constant 0 : index
    %122 = vector.load %arg1[%c61, %c0_122, %c0_123] : memref<64x8x128xbf16, #tpu.memory_space<vmem>>, vector<1x8x128xbf16>
    %123 = vector.shape_cast %122 : vector<1x8x128xbf16> to vector<8x128xbf16>
    %c62 = arith.constant 62 : index
    %c0_124 = arith.constant 0 : index
    %c0_125 = arith.constant 0 : index
    %124 = vector.load %arg1[%c62, %c0_124, %c0_125] : memref<64x8x128xbf16, #tpu.memory_space<vmem>>, vector<1x8x128xbf16>
    %125 = vector.shape_cast %124 : vector<1x8x128xbf16> to vector<8x128xbf16>
    %c63 = arith.constant 63 : index
    %c0_126 = arith.constant 0 : index
    %c0_127 = arith.constant 0 : index
    %126 = vector.load %arg1[%c63, %c0_126, %c0_127] : memref<64x8x128xbf16, #tpu.memory_space<vmem>>, vector<1x8x128xbf16>
    %127 = vector.shape_cast %126 : vector<1x8x128xbf16> to vector<8x128xbf16>
    %c4_128 = arith.constant 4 : index
    %c0_129 = arith.constant 0 : index
    %c0_130 = arith.constant 0 : index
    %128 = vector.load %arg2[%c4_128, %c0_129, %c0_130] : memref<9x128x128xbf16, #tpu.memory_space<vmem>>, vector<1x128x128xbf16>
    %129 = vector.shape_cast %128 : vector<1x128x128xbf16> to vector<128x128xbf16>
    %cst = arith.constant dense<0.000000e+00> : vector<8x128xf32>
    %130 = tpu.matmul %1, %129, %cst {dimension_numbers = #tpu.dot_dimension_numbers<[1], [0], [0], [1], [0, 0, 1, 1], [], []>} : vector<8x128xbf16>, vector<128x128xbf16>, vector<8x128xf32> -> vector<8x128xf32>
    %c5_131 = arith.constant 5 : index
    %c0_132 = arith.constant 0 : index
    %c0_133 = arith.constant 0 : index
    %131 = vector.load %arg2[%c5_131, %c0_132, %c0_133] : memref<9x128x128xbf16, #tpu.memory_space<vmem>>, vector<1x128x128xbf16>
    %132 = vector.shape_cast %131 : vector<1x128x128xbf16> to vector<128x128xbf16>
    %cst_134 = arith.constant dense<0.000000e+00> : vector<8x128xf32>
    %133 = tpu.matmul %3, %132, %cst_134 {dimension_numbers = #tpu.dot_dimension_numbers<[1], [0], [0], [1], [0, 0, 1, 1], [], []>} : vector<8x128xbf16>, vector<128x128xbf16>, vector<8x128xf32> -> vector<8x128xf32>
    %134 = arith.addf %130, %133 : vector<8x128xf32>
    %c7_135 = arith.constant 7 : index
    %c0_136 = arith.constant 0 : index
    %c0_137 = arith.constant 0 : index
    %135 = vector.load %arg2[%c7_135, %c0_136, %c0_137] : memref<9x128x128xbf16, #tpu.memory_space<vmem>>, vector<1x128x128xbf16>
    %136 = vector.shape_cast %135 : vector<1x128x128xbf16> to vector<128x128xbf16>
    %cst_138 = arith.constant dense<0.000000e+00> : vector<8x128xf32>
    %137 = tpu.matmul %17, %136, %cst_138 {dimension_numbers = #tpu.dot_dimension_numbers<[1], [0], [0], [1], [0, 0, 1, 1], [], []>} : vector<8x128xbf16>, vector<128x128xbf16>, vector<8x128xf32> -> vector<8x128xf32>
    %138 = arith.addf %134, %137 : vector<8x128xf32>
    %c8_139 = arith.constant 8 : index
    %c0_140 = arith.constant 0 : index
    %c0_141 = arith.constant 0 : index
    %139 = vector.load %arg2[%c8_139, %c0_140, %c0_141] : memref<9x128x128xbf16, #tpu.memory_space<vmem>>, vector<1x128x128xbf16>
    %140 = vector.shape_cast %139 : vector<1x128x128xbf16> to vector<128x128xbf16>
    %cst_142 = arith.constant dense<0.000000e+00> : vector<8x128xf32>
    %141 = tpu.matmul %19, %140, %cst_142 {dimension_numbers = #tpu.dot_dimension_numbers<[1], [0], [0], [1], [0, 0, 1, 1], [], []>} : vector<8x128xbf16>, vector<128x128xbf16>, vector<8x128xf32> -> vector<8x128xf32>
    %142 = arith.addf %138, %141 : vector<8x128xf32>
    %c0_143 = arith.constant 0 : index
    %c0_144 = arith.constant 0 : index
    %143 = vector.load %arg3[%c0_143, %c0_144] : memref<1x128xf32, #tpu.memory_space<vmem>>, vector<1x128xf32>
    %144 = vector.broadcast %143 : vector<1x128xf32> to vector<8x128xf32>
    %145 = arith.addf %142, %144 : vector<8x128xf32>
    %cst_145 = arith.constant 0.000000e+00 : f32
    %146 = vector.broadcast %cst_145 : f32 to vector<8x128xf32>
    %147 = arith.cmpf oge, %145, %146 : vector<8x128xf32>
    %cst_146 = arith.constant 0.00999999977 : f32
    %148 = vector.broadcast %cst_146 : f32 to vector<8x128xf32>
    %149 = arith.mulf %148, %145 : vector<8x128xf32>
    %150 = arith.select %147, %145, %149 : vector<8x128xi1>, vector<8x128xf32>
    %151 = arith.truncf %150 : vector<8x128xf32> to vector<8x128xbf16>
    %c3_147 = arith.constant 3 : index
    %c0_148 = arith.constant 0 : index
    %c0_149 = arith.constant 0 : index
    %152 = vector.load %arg2[%c3_147, %c0_148, %c0_149] : memref<9x128x128xbf16, #tpu.memory_space<vmem>>, vector<1x128x128xbf16>
    %153 = vector.shape_cast %152 : vector<1x128x128xbf16> to vector<128x128xbf16>
    %cst_150 = arith.constant dense<0.000000e+00> : vector<8x128xf32>
    %154 = tpu.matmul %3, %153, %cst_150 {dimension_numbers = #tpu.dot_dimension_numbers<[1], [0], [0], [1], [0, 0, 1, 1], [], []>} : vector<8x128xbf16>, vector<128x128xbf16>, vector<8x128xf32> -> vector<8x128xf32>
    %cst_151 = arith.constant dense<0.000000e+00> : vector<8x128xf32>
    %155 = tpu.matmul %5, %129, %cst_151 {dimension_numbers = #tpu.dot_dimension_numbers<[1], [0], [0], [1], [0, 0, 1, 1], [], []>} : vector<8x128xbf16>, vector<128x128xbf16>, vector<8x128xf32> -> vector<8x128xf32>
    %156 = arith.addf %154, %155 : vector<8x128xf32>
    %cst_152 = arith.constant dense<0.000000e+00> : vector<8x128xf32>
    %157 = tpu.matmul %7, %132, %cst_152 {dimension_numbers = #tpu.dot_dimension_numbers<[1], [0], [0], [1], [0, 0, 1, 1], [], []>} : vector<8x128xbf16>, vector<128x128xbf16>, vector<8x128xf32> -> vector<8x128xf32>
    %158 = arith.addf %156, %157 : vector<8x128xf32>
    %c6_153 = arith.constant 6 : index
    %c0_154 = arith.constant 0 : index
    %c0_155 = arith.constant 0 : index
    %159 = vector.load %arg2[%c6_153, %c0_154, %c0_155] : memref<9x128x128xbf16, #tpu.memory_space<vmem>>, vector<1x128x128xbf16>
    %160 = vector.shape_cast %159 : vector<1x128x128xbf16> to vector<128x128xbf16>
    %cst_156 = arith.constant dense<0.000000e+00> : vector<8x128xf32>
    %161 = tpu.matmul %19, %160, %cst_156 {dimension_numbers = #tpu.dot_dimension_numbers<[1], [0], [0], [1], [0, 0, 1, 1], [], []>} : vector<8x128xbf16>, vector<128x128xbf16>, vector<8x128xf32> -> vector<8x128xf32>
    %162 = arith.addf %158, %161 : vector<8x128xf32>
    %cst_157 = arith.constant dense<0.000000e+00> : vector<8x128xf32>
    %163 = tpu.matmul %21, %136, %cst_157 {dimension_numbers = #tpu.dot_dimension_numbers<[1], [0], [0], [1], [0, 0, 1, 1], [], []>} : vector<8x128xbf16>, vector<128x128xbf16>, vector<8x128xf32> -> vector<8x128xf32>
    %164 = arith.addf %162, %163 : vector<8x128xf32>
    %cst_158 = arith.constant dense<0.000000e+00> : vector<8x128xf32>
    %165 = tpu.matmul %23, %140, %cst_158 {dimension_numbers = #tpu.dot_dimension_numbers<[1], [0], [0], [1], [0, 0, 1, 1], [], []>} : vector<8x128xbf16>, vector<128x128xbf16>, vector<8x128xf32> -> vector<8x128xf32>
    %166 = arith.addf %164, %165 : vector<8x128xf32>
    %c0_159 = arith.constant 0 : index
    %c0_160 = arith.constant 0 : index
    %167 = vector.load %arg3[%c0_159, %c0_160] : memref<1x128xf32, #tpu.memory_space<vmem>>, vector<1x128xf32>
    %168 = vector.broadcast %167 : vector<1x128xf32> to vector<8x128xf32>
    %169 = arith.addf %166, %168 : vector<8x128xf32>
    %cst_161 = arith.constant 0.000000e+00 : f32
    %170 = vector.broadcast %cst_161 : f32 to vector<8x128xf32>
    %171 = arith.cmpf oge, %169, %170 : vector<8x128xf32>
    %cst_162 = arith.constant 0.00999999977 : f32
    %172 = vector.broadcast %cst_162 : f32 to vector<8x128xf32>
    %173 = arith.mulf %172, %169 : vector<8x128xf32>
    %174 = arith.select %171, %169, %173 : vector<8x128xi1>, vector<8x128xf32>
    %175 = arith.truncf %174 : vector<8x128xf32> to vector<8x128xbf16>
    %cst_163 = arith.constant dense<0.000000e+00> : vector<8x128xf32>
    %176 = tpu.matmul %7, %153, %cst_163 {dimension_numbers = #tpu.dot_dimension_numbers<[1], [0], [0], [1], [0, 0, 1, 1], [], []>} : vector<8x128xbf16>, vector<128x128xbf16>, vector<8x128xf32> -> vector<8x128xf32>
    %cst_164 = arith.constant dense<0.000000e+00> : vector<8x128xf32>
    %177 = tpu.matmul %9, %129, %cst_164 {dimension_numbers = #tpu.dot_dimension_numbers<[1], [0], [0], [1], [0, 0, 1, 1], [], []>} : vector<8x128xbf16>, vector<128x128xbf16>, vector<8x128xf32> -> vector<8x128xf32>
    %178 = arith.addf %176, %177 : vector<8x128xf32>
    %cst_165 = arith.constant dense<0.000000e+00> : vector<8x128xf32>
    %179 = tpu.matmul %11, %132, %cst_165 {dimension_numbers = #tpu.dot_dimension_numbers<[1], [0], [0], [1], [0, 0, 1, 1], [], []>} : vector<8x128xbf16>, vector<128x128xbf16>, vector<8x128xf32> -> vector<8x128xf32>
    %180 = arith.addf %178, %179 : vector<8x128xf32>
    %cst_166 = arith.constant dense<0.000000e+00> : vector<8x128xf32>
    %181 = tpu.matmul %23, %160, %cst_166 {dimension_numbers = #tpu.dot_dimension_numbers<[1], [0], [0], [1], [0, 0, 1, 1], [], []>} : vector<8x128xbf16>, vector<128x128xbf16>, vector<8x128xf32> -> vector<8x128xf32>
    %182 = arith.addf %180, %181 : vector<8x128xf32>
    %cst_167 = arith.constant dense<0.000000e+00> : vector<8x128xf32>
    %183 = tpu.matmul %25, %136, %cst_167 {dimension_numbers = #tpu.dot_dimension_numbers<[1], [0], [0], [1], [0, 0, 1, 1], [], []>} : vector<8x128xbf16>, vector<128x128xbf16>, vector<8x128xf32> -> vector<8x128xf32>
    %184 = arith.addf %182, %183 : vector<8x128xf32>
    %cst_168 = arith.constant dense<0.000000e+00> : vector<8x128xf32>
    %185 = tpu.matmul %27, %140, %cst_168 {dimension_numbers = #tpu.dot_dimension_numbers<[1], [0], [0], [1], [0, 0, 1, 1], [], []>} : vector<8x128xbf16>, vector<128x128xbf16>, vector<8x128xf32> -> vector<8x128xf32>
    %186 = arith.addf %184, %185 : vector<8x128xf32>
    %c0_169 = arith.constant 0 : index
    %c0_170 = arith.constant 0 : index
    %187 = vector.load %arg3[%c0_169, %c0_170] : memref<1x128xf32, #tpu.memory_space<vmem>>, vector<1x128xf32>
    %188 = vector.broadcast %187 : vector<1x128xf32> to vector<8x128xf32>
    %189 = arith.addf %186, %188 : vector<8x128xf32>
    %cst_171 = arith.constant 0.000000e+00 : f32
    %190 = vector.broadcast %cst_171 : f32 to vector<8x128xf32>
    %191 = arith.cmpf oge, %189, %190 : vector<8x128xf32>
    %cst_172 = arith.constant 0.00999999977 : f32
    %192 = vector.broadcast %cst_172 : f32 to vector<8x128xf32>
    %193 = arith.mulf %192, %189 : vector<8x128xf32>
    %194 = arith.select %191, %189, %193 : vector<8x128xi1>, vector<8x128xf32>
    %195 = arith.truncf %194 : vector<8x128xf32> to vector<8x128xbf16>
    %cst_173 = arith.constant dense<0.000000e+00> : vector<8x128xf32>
    %196 = tpu.matmul %11, %153, %cst_173 {dimension_numbers = #tpu.dot_dimension_numbers<[1], [0], [0], [1], [0, 0, 1, 1], [], []>} : vector<8x128xbf16>, vector<128x128xbf16>, vector<8x128xf32> -> vector<8x128xf32>
    %cst_174 = arith.constant dense<0.000000e+00> : vector<8x128xf32>
    %197 = tpu.matmul %13, %129, %cst_174 {dimension_numbers = #tpu.dot_dimension_numbers<[1], [0], [0], [1], [0, 0, 1, 1], [], []>} : vector<8x128xbf16>, vector<128x128xbf16>, vector<8x128xf32> -> vector<8x128xf32>
    %198 = arith.addf %196, %197 : vector<8x128xf32>
    %cst_175 = arith.constant dense<0.000000e+00> : vector<8x128xf32>
    %199 = tpu.matmul %15, %132, %cst_175 {dimension_numbers = #tpu.dot_dimension_numbers<[1], [0], [0], [1], [0, 0, 1, 1], [], []>} : vector<8x128xbf16>, vector<128x128xbf16>, vector<8x128xf32> -> vector<8x128xf32>
    %200 = arith.addf %198, %199 : vector<8x128xf32>
    %cst_176 = arith.constant dense<0.000000e+00> : vector<8x128xf32>
    %201 = tpu.matmul %27, %160, %cst_176 {dimension_numbers = #tpu.dot_dimension_numbers<[1], [0], [0], [1], [0, 0, 1, 1], [], []>} : vector<8x128xbf16>, vector<128x128xbf16>, vector<8x128xf32> -> vector<8x128xf32>
    %202 = arith.addf %200, %201 : vector<8x128xf32>
    %cst_177 = arith.constant dense<0.000000e+00> : vector<8x128xf32>
    %203 = tpu.matmul %29, %136, %cst_177 {dimension_numbers = #tpu.dot_dimension_numbers<[1], [0], [0], [1], [0, 0, 1, 1], [], []>} : vector<8x128xbf16>, vector<128x128xbf16>, vector<8x128xf32> -> vector<8x128xf32>
    %204 = arith.addf %202, %203 : vector<8x128xf32>
    %cst_178 = arith.constant dense<0.000000e+00> : vector<8x128xf32>
    %205 = tpu.matmul %31, %140, %cst_178 {dimension_numbers = #tpu.dot_dimension_numbers<[1], [0], [0], [1], [0, 0, 1, 1], [], []>} : vector<8x128xbf16>, vector<128x128xbf16>, vector<8x128xf32> -> vector<8x128xf32>
    %206 = arith.addf %204, %205 : vector<8x128xf32>
    %c0_179 = arith.constant 0 : index
    %c0_180 = arith.constant 0 : index
    %207 = vector.load %arg3[%c0_179, %c0_180] : memref<1x128xf32, #tpu.memory_space<vmem>>, vector<1x128xf32>
    %208 = vector.broadcast %207 : vector<1x128xf32> to vector<8x128xf32>
    %209 = arith.addf %206, %208 : vector<8x128xf32>
    %cst_181 = arith.constant 0.000000e+00 : f32
    %210 = vector.broadcast %cst_181 : f32 to vector<8x128xf32>
    %211 = arith.cmpf oge, %209, %210 : vector<8x128xf32>
    %cst_182 = arith.constant 0.00999999977 : f32
    %212 = vector.broadcast %cst_182 : f32 to vector<8x128xf32>
    %213 = arith.mulf %212, %209 : vector<8x128xf32>
    %214 = arith.select %211, %209, %213 : vector<8x128xi1>, vector<8x128xf32>
    %215 = arith.truncf %214 : vector<8x128xf32> to vector<8x128xbf16>
    %c1_183 = arith.constant 1 : index
    %c0_184 = arith.constant 0 : index
    %c0_185 = arith.constant 0 : index
    %216 = vector.load %arg2[%c1_183, %c0_184, %c0_185] : memref<9x128x128xbf16, #tpu.memory_space<vmem>>, vector<1x128x128xbf16>
    %217 = vector.shape_cast %216 : vector<1x128x128xbf16> to vector<128x128xbf16>
    %cst_186 = arith.constant dense<0.000000e+00> : vector<8x128xf32>
    %218 = tpu.matmul %17, %217, %cst_186 {dimension_numbers = #tpu.dot_dimension_numbers<[1], [0], [0], [1], [0, 0, 1, 1], [], []>} : vector<8x128xbf16>, vector<128x128xbf16>, vector<8x128xf32> -> vector<8x128xf32>
    %c2_187 = arith.constant 2 : index
    %c0_188 = arith.constant 0 : index
    %c0_189 = arith.constant 0 : index
    %219 = vector.load %arg2[%c2_187, %c0_188, %c0_189] : memref<9x128x128xbf16, #tpu.memory_space<vmem>>, vector<1x128x128xbf16>
    %220 = vector.shape_cast %219 : vector<1x128x128xbf16> to vector<128x128xbf16>
    %cst_190 = arith.constant dense<0.000000e+00> : vector<8x128xf32>
    %221 = tpu.matmul %19, %220, %cst_190 {dimension_numbers = #tpu.dot_dimension_numbers<[1], [0], [0], [1], [0, 0, 1, 1], [], []>} : vector<8x128xbf16>, vector<128x128xbf16>, vector<8x128xf32> -> vector<8x128xf32>
    %222 = arith.addf %218, %221 : vector<8x128xf32>
    %cst_191 = arith.constant dense<0.000000e+00> : vector<8x128xf32>
    %223 = tpu.matmul %33, %129, %cst_191 {dimension_numbers = #tpu.dot_dimension_numbers<[1], [0], [0], [1], [0, 0, 1, 1], [], []>} : vector<8x128xbf16>, vector<128x128xbf16>, vector<8x128xf32> -> vector<8x128xf32>
    %224 = arith.addf %222, %223 : vector<8x128xf32>
    %cst_192 = arith.constant dense<0.000000e+00> : vector<8x128xf32>
    %225 = tpu.matmul %35, %132, %cst_192 {dimension_numbers = #tpu.dot_dimension_numbers<[1], [0], [0], [1], [0, 0, 1, 1], [], []>} : vector<8x128xbf16>, vector<128x128xbf16>, vector<8x128xf32> -> vector<8x128xf32>
    %226 = arith.addf %224, %225 : vector<8x128xf32>
    %cst_193 = arith.constant dense<0.000000e+00> : vector<8x128xf32>
    %227 = tpu.matmul %49, %136, %cst_193 {dimension_numbers = #tpu.dot_dimension_numbers<[1], [0], [0], [1], [0, 0, 1, 1], [], []>} : vector<8x128xbf16>, vector<128x128xbf16>, vector<8x128xf32> -> vector<8x128xf32>
    %228 = arith.addf %226, %227 : vector<8x128xf32>
    %cst_194 = arith.constant dense<0.000000e+00> : vector<8x128xf32>
    %229 = tpu.matmul %51, %140, %cst_194 {dimension_numbers = #tpu.dot_dimension_numbers<[1], [0], [0], [1], [0, 0, 1, 1], [], []>} : vector<8x128xbf16>, vector<128x128xbf16>, vector<8x128xf32> -> vector<8x128xf32>
    %230 = arith.addf %228, %229 : vector<8x128xf32>
    %c0_195 = arith.constant 0 : index
    %c0_196 = arith.constant 0 : index
    %231 = vector.load %arg3[%c0_195, %c0_196] : memref<1x128xf32, #tpu.memory_space<vmem>>, vector<1x128xf32>
    %232 = vector.broadcast %231 : vector<1x128xf32> to vector<8x128xf32>
    %233 = arith.addf %230, %232 : vector<8x128xf32>
    %cst_197 = arith.constant 0.000000e+00 : f32
    %234 = vector.broadcast %cst_197 : f32 to vector<8x128xf32>
    %235 = arith.cmpf oge, %233, %234 : vector<8x128xf32>
    %cst_198 = arith.constant 0.00999999977 : f32
    %236 = vector.broadcast %cst_198 : f32 to vector<8x128xf32>
    %237 = arith.mulf %236, %233 : vector<8x128xf32>
    %238 = arith.select %235, %233, %237 : vector<8x128xi1>, vector<8x128xf32>
    %239 = arith.truncf %238 : vector<8x128xf32> to vector<8x128xbf16>
    %c0_199 = arith.constant 0 : index
    %c0_200 = arith.constant 0 : index
    %c0_201 = arith.constant 0 : index
    %240 = vector.load %arg2[%c0_199, %c0_200, %c0_201] : memref<9x128x128xbf16, #tpu.memory_space<vmem>>, vector<1x128x128xbf16>
    %241 = vector.shape_cast %240 : vector<1x128x128xbf16> to vector<128x128xbf16>
    %cst_202 = arith.constant dense<0.000000e+00> : vector<8x128xf32>
    %242 = tpu.matmul %19, %241, %cst_202 {dimension_numbers = #tpu.dot_dimension_numbers<[1], [0], [0], [1], [0, 0, 1, 1], [], []>} : vector<8x128xbf16>, vector<128x128xbf16>, vector<8x128xf32> -> vector<8x128xf32>
    %cst_203 = arith.constant dense<0.000000e+00> : vector<8x128xf32>
    %243 = tpu.matmul %21, %217, %cst_203 {dimension_numbers = #tpu.dot_dimension_numbers<[1], [0], [0], [1], [0, 0, 1, 1], [], []>} : vector<8x128xbf16>, vector<128x128xbf16>, vector<8x128xf32> -> vector<8x128xf32>
    %244 = arith.addf %242, %243 : vector<8x128xf32>
    %cst_204 = arith.constant dense<0.000000e+00> : vector<8x128xf32>
    %245 = tpu.matmul %23, %220, %cst_204 {dimension_numbers = #tpu.dot_dimension_numbers<[1], [0], [0], [1], [0, 0, 1, 1], [], []>} : vector<8x128xbf16>, vector<128x128xbf16>, vector<8x128xf32> -> vector<8x128xf32>
    %246 = arith.addf %244, %245 : vector<8x128xf32>
    %cst_205 = arith.constant dense<0.000000e+00> : vector<8x128xf32>
    %247 = tpu.matmul %35, %153, %cst_205 {dimension_numbers = #tpu.dot_dimension_numbers<[1], [0], [0], [1], [0, 0, 1, 1], [], []>} : vector<8x128xbf16>, vector<128x128xbf16>, vector<8x128xf32> -> vector<8x128xf32>
    %248 = arith.addf %246, %247 : vector<8x128xf32>
    %cst_206 = arith.constant dense<0.000000e+00> : vector<8x128xf32>
    %249 = tpu.matmul %37, %129, %cst_206 {dimension_numbers = #tpu.dot_dimension_numbers<[1], [0], [0], [1], [0, 0, 1, 1], [], []>} : vector<8x128xbf16>, vector<128x128xbf16>, vector<8x128xf32> -> vector<8x128xf32>
    %250 = arith.addf %248, %249 : vector<8x128xf32>
    %cst_207 = arith.constant dense<0.000000e+00> : vector<8x128xf32>
    %251 = tpu.matmul %39, %132, %cst_207 {dimension_numbers = #tpu.dot_dimension_numbers<[1], [0], [0], [1], [0, 0, 1, 1], [], []>} : vector<8x128xbf16>, vector<128x128xbf16>, vector<8x128xf32> -> vector<8x128xf32>
    %252 = arith.addf %250, %251 : vector<8x128xf32>
    %cst_208 = arith.constant dense<0.000000e+00> : vector<8x128xf32>
    %253 = tpu.matmul %51, %160, %cst_208 {dimension_numbers = #tpu.dot_dimension_numbers<[1], [0], [0], [1], [0, 0, 1, 1], [], []>} : vector<8x128xbf16>, vector<128x128xbf16>, vector<8x128xf32> -> vector<8x128xf32>
    %254 = arith.addf %252, %253 : vector<8x128xf32>
    %cst_209 = arith.constant dense<0.000000e+00> : vector<8x128xf32>
    %255 = tpu.matmul %53, %136, %cst_209 {dimension_numbers = #tpu.dot_dimension_numbers<[1], [0], [0], [1], [0, 0, 1, 1], [], []>} : vector<8x128xbf16>, vector<128x128xbf16>, vector<8x128xf32> -> vector<8x128xf32>
    %256 = arith.addf %254, %255 : vector<8x128xf32>
    %cst_210 = arith.constant dense<0.000000e+00> : vector<8x128xf32>
    %257 = tpu.matmul %55, %140, %cst_210 {dimension_numbers = #tpu.dot_dimension_numbers<[1], [0], [0], [1], [0, 0, 1, 1], [], []>} : vector<8x128xbf16>, vector<128x128xbf16>, vector<8x128xf32> -> vector<8x128xf32>
    %258 = arith.addf %256, %257 : vector<8x128xf32>
    %c0_211 = arith.constant 0 : index
    %c0_212 = arith.constant 0 : index
    %259 = vector.load %arg3[%c0_211, %c0_212] : memref<1x128xf32, #tpu.memory_space<vmem>>, vector<1x128xf32>
    %260 = vector.broadcast %259 : vector<1x128xf32> to vector<8x128xf32>
    %261 = arith.addf %258, %260 : vector<8x128xf32>
    %cst_213 = arith.constant 0.000000e+00 : f32
    %262 = vector.broadcast %cst_213 : f32 to vector<8x128xf32>
    %263 = arith.cmpf oge, %261, %262 : vector<8x128xf32>
    %cst_214 = arith.constant 0.00999999977 : f32
    %264 = vector.broadcast %cst_214 : f32 to vector<8x128xf32>
    %265 = arith.mulf %264, %261 : vector<8x128xf32>
    %266 = arith.select %263, %261, %265 : vector<8x128xi1>, vector<8x128xf32>
    %267 = arith.truncf %266 : vector<8x128xf32> to vector<8x128xbf16>
    %cst_215 = arith.constant dense<0.000000e+00> : vector<8x128xf32>
    %268 = tpu.matmul %23, %241, %cst_215 {dimension_numbers = #tpu.dot_dimension_numbers<[1], [0], [0], [1], [0, 0, 1, 1], [], []>} : vector<8x128xbf16>, vector<128x128xbf16>, vector<8x128xf32> -> vector<8x128xf32>
    %cst_216 = arith.constant dense<0.000000e+00> : vector<8x128xf32>
    %269 = tpu.matmul %25, %217, %cst_216 {dimension_numbers = #tpu.dot_dimension_numbers<[1], [0], [0], [1], [0, 0, 1, 1], [], []>} : vector<8x128xbf16>, vector<128x128xbf16>, vector<8x128xf32> -> vector<8x128xf32>
    %270 = arith.addf %268, %269 : vector<8x128xf32>
    %cst_217 = arith.constant dense<0.000000e+00> : vector<8x128xf32>
    %271 = tpu.matmul %27, %220, %cst_217 {dimension_numbers = #tpu.dot_dimension_numbers<[1], [0], [0], [1], [0, 0, 1, 1], [], []>} : vector<8x128xbf16>, vector<128x128xbf16>, vector<8x128xf32> -> vector<8x128xf32>
    %272 = arith.addf %270, %271 : vector<8x128xf32>
    %cst_218 = arith.constant dense<0.000000e+00> : vector<8x128xf32>
    %273 = tpu.matmul %39, %153, %cst_218 {dimension_numbers = #tpu.dot_dimension_numbers<[1], [0], [0], [1], [0, 0, 1, 1], [], []>} : vector<8x128xbf16>, vector<128x128xbf16>, vector<8x128xf32> -> vector<8x128xf32>
    %274 = arith.addf %272, %273 : vector<8x128xf32>
    %cst_219 = arith.constant dense<0.000000e+00> : vector<8x128xf32>
    %275 = tpu.matmul %41, %129, %cst_219 {dimension_numbers = #tpu.dot_dimension_numbers<[1], [0], [0], [1], [0, 0, 1, 1], [], []>} : vector<8x128xbf16>, vector<128x128xbf16>, vector<8x128xf32> -> vector<8x128xf32>
    %276 = arith.addf %274, %275 : vector<8x128xf32>
    %cst_220 = arith.constant dense<0.000000e+00> : vector<8x128xf32>
    %277 = tpu.matmul %43, %132, %cst_220 {dimension_numbers = #tpu.dot_dimension_numbers<[1], [0], [0], [1], [0, 0, 1, 1], [], []>} : vector<8x128xbf16>, vector<128x128xbf16>, vector<8x128xf32> -> vector<8x128xf32>
    %278 = arith.addf %276, %277 : vector<8x128xf32>
    %cst_221 = arith.constant dense<0.000000e+00> : vector<8x128xf32>
    %279 = tpu.matmul %55, %160, %cst_221 {dimension_numbers = #tpu.dot_dimension_numbers<[1], [0], [0], [1], [0, 0, 1, 1], [], []>} : vector<8x128xbf16>, vector<128x128xbf16>, vector<8x128xf32> -> vector<8x128xf32>
    %280 = arith.addf %278, %279 : vector<8x128xf32>
    %cst_222 = arith.constant dense<0.000000e+00> : vector<8x128xf32>
    %281 = tpu.matmul %57, %136, %cst_222 {dimension_numbers = #tpu.dot_dimension_numbers<[1], [0], [0], [1], [0, 0, 1, 1], [], []>} : vector<8x128xbf16>, vector<128x128xbf16>, vector<8x128xf32> -> vector<8x128xf32>
    %282 = arith.addf %280, %281 : vector<8x128xf32>
    %cst_223 = arith.constant dense<0.000000e+00> : vector<8x128xf32>
    %283 = tpu.matmul %59, %140, %cst_223 {dimension_numbers = #tpu.dot_dimension_numbers<[1], [0], [0], [1], [0, 0, 1, 1], [], []>} : vector<8x128xbf16>, vector<128x128xbf16>, vector<8x128xf32> -> vector<8x128xf32>
    %284 = arith.addf %282, %283 : vector<8x128xf32>
    %c0_224 = arith.constant 0 : index
    %c0_225 = arith.constant 0 : index
    %285 = vector.load %arg3[%c0_224, %c0_225] : memref<1x128xf32, #tpu.memory_space<vmem>>, vector<1x128xf32>
    %286 = vector.broadcast %285 : vector<1x128xf32> to vector<8x128xf32>
    %287 = arith.addf %284, %286 : vector<8x128xf32>
    %cst_226 = arith.constant 0.000000e+00 : f32
    %288 = vector.broadcast %cst_226 : f32 to vector<8x128xf32>
    %289 = arith.cmpf oge, %287, %288 : vector<8x128xf32>
    %cst_227 = arith.constant 0.00999999977 : f32
    %290 = vector.broadcast %cst_227 : f32 to vector<8x128xf32>
    %291 = arith.mulf %290, %287 : vector<8x128xf32>
    %292 = arith.select %289, %287, %291 : vector<8x128xi1>, vector<8x128xf32>
    %293 = arith.truncf %292 : vector<8x128xf32> to vector<8x128xbf16>
    %cst_228 = arith.constant dense<0.000000e+00> : vector<8x128xf32>
    %294 = tpu.matmul %27, %241, %cst_228 {dimension_numbers = #tpu.dot_dimension_numbers<[1], [0], [0], [1], [0, 0, 1, 1], [], []>} : vector<8x128xbf16>, vector<128x128xbf16>, vector<8x128xf32> -> vector<8x128xf32>
    %cst_229 = arith.constant dense<0.000000e+00> : vector<8x128xf32>
    %295 = tpu.matmul %29, %217, %cst_229 {dimension_numbers = #tpu.dot_dimension_numbers<[1], [0], [0], [1], [0, 0, 1, 1], [], []>} : vector<8x128xbf16>, vector<128x128xbf16>, vector<8x128xf32> -> vector<8x128xf32>
    %296 = arith.addf %294, %295 : vector<8x128xf32>
    %cst_230 = arith.constant dense<0.000000e+00> : vector<8x128xf32>
    %297 = tpu.matmul %31, %220, %cst_230 {dimension_numbers = #tpu.dot_dimension_numbers<[1], [0], [0], [1], [0, 0, 1, 1], [], []>} : vector<8x128xbf16>, vector<128x128xbf16>, vector<8x128xf32> -> vector<8x128xf32>
    %298 = arith.addf %296, %297 : vector<8x128xf32>
    %cst_231 = arith.constant dense<0.000000e+00> : vector<8x128xf32>
    %299 = tpu.matmul %43, %153, %cst_231 {dimension_numbers = #tpu.dot_dimension_numbers<[1], [0], [0], [1], [0, 0, 1, 1], [], []>} : vector<8x128xbf16>, vector<128x128xbf16>, vector<8x128xf32> -> vector<8x128xf32>
    %300 = arith.addf %298, %299 : vector<8x128xf32>
    %cst_232 = arith.constant dense<0.000000e+00> : vector<8x128xf32>
    %301 = tpu.matmul %45, %129, %cst_232 {dimension_numbers = #tpu.dot_dimension_numbers<[1], [0], [0], [1], [0, 0, 1, 1], [], []>} : vector<8x128xbf16>, vector<128x128xbf16>, vector<8x128xf32> -> vector<8x128xf32>
    %302 = arith.addf %300, %301 : vector<8x128xf32>
    %cst_233 = arith.constant dense<0.000000e+00> : vector<8x128xf32>
    %303 = tpu.matmul %47, %132, %cst_233 {dimension_numbers = #tpu.dot_dimension_numbers<[1], [0], [0], [1], [0, 0, 1, 1], [], []>} : vector<8x128xbf16>, vector<128x128xbf16>, vector<8x128xf32> -> vector<8x128xf32>
    %304 = arith.addf %302, %303 : vector<8x128xf32>
    %cst_234 = arith.constant dense<0.000000e+00> : vector<8x128xf32>
    %305 = tpu.matmul %59, %160, %cst_234 {dimension_numbers = #tpu.dot_dimension_numbers<[1], [0], [0], [1], [0, 0, 1, 1], [], []>} : vector<8x128xbf16>, vector<128x128xbf16>, vector<8x128xf32> -> vector<8x128xf32>
    %306 = arith.addf %304, %305 : vector<8x128xf32>
    %cst_235 = arith.constant dense<0.000000e+00> : vector<8x128xf32>
    %307 = tpu.matmul %61, %136, %cst_235 {dimension_numbers = #tpu.dot_dimension_numbers<[1], [0], [0], [1], [0, 0, 1, 1], [], []>} : vector<8x128xbf16>, vector<128x128xbf16>, vector<8x128xf32> -> vector<8x128xf32>
    %308 = arith.addf %306, %307 : vector<8x128xf32>
    %cst_236 = arith.constant dense<0.000000e+00> : vector<8x128xf32>
    %309 = tpu.matmul %63, %140, %cst_236 {dimension_numbers = #tpu.dot_dimension_numbers<[1], [0], [0], [1], [0, 0, 1, 1], [], []>} : vector<8x128xbf16>, vector<128x128xbf16>, vector<8x128xf32> -> vector<8x128xf32>
    %310 = arith.addf %308, %309 : vector<8x128xf32>
    %c0_237 = arith.constant 0 : index
    %c0_238 = arith.constant 0 : index
    %311 = vector.load %arg3[%c0_237, %c0_238] : memref<1x128xf32, #tpu.memory_space<vmem>>, vector<1x128xf32>
    %312 = vector.broadcast %311 : vector<1x128xf32> to vector<8x128xf32>
    %313 = arith.addf %310, %312 : vector<8x128xf32>
    %cst_239 = arith.constant 0.000000e+00 : f32
    %314 = vector.broadcast %cst_239 : f32 to vector<8x128xf32>
    %315 = arith.cmpf oge, %313, %314 : vector<8x128xf32>
    %cst_240 = arith.constant 0.00999999977 : f32
    %316 = vector.broadcast %cst_240 : f32 to vector<8x128xf32>
    %317 = arith.mulf %316, %313 : vector<8x128xf32>
    %318 = arith.select %315, %313, %317 : vector<8x128xi1>, vector<8x128xf32>
    %319 = arith.truncf %318 : vector<8x128xf32> to vector<8x128xbf16>
    %cst_241 = arith.constant dense<0.000000e+00> : vector<8x128xf32>
    %320 = tpu.matmul %49, %217, %cst_241 {dimension_numbers = #tpu.dot_dimension_numbers<[1], [0], [0], [1], [0, 0, 1, 1], [], []>} : vector<8x128xbf16>, vector<128x128xbf16>, vector<8x128xf32> -> vector<8x128xf32>
    %cst_242 = arith.constant dense<0.000000e+00> : vector<8x128xf32>
    %321 = tpu.matmul %51, %220, %cst_242 {dimension_numbers = #tpu.dot_dimension_numbers<[1], [0], [0], [1], [0, 0, 1, 1], [], []>} : vector<8x128xbf16>, vector<128x128xbf16>, vector<8x128xf32> -> vector<8x128xf32>
    %322 = arith.addf %320, %321 : vector<8x128xf32>
    %cst_243 = arith.constant dense<0.000000e+00> : vector<8x128xf32>
    %323 = tpu.matmul %65, %129, %cst_243 {dimension_numbers = #tpu.dot_dimension_numbers<[1], [0], [0], [1], [0, 0, 1, 1], [], []>} : vector<8x128xbf16>, vector<128x128xbf16>, vector<8x128xf32> -> vector<8x128xf32>
    %324 = arith.addf %322, %323 : vector<8x128xf32>
    %cst_244 = arith.constant dense<0.000000e+00> : vector<8x128xf32>
    %325 = tpu.matmul %67, %132, %cst_244 {dimension_numbers = #tpu.dot_dimension_numbers<[1], [0], [0], [1], [0, 0, 1, 1], [], []>} : vector<8x128xbf16>, vector<128x128xbf16>, vector<8x128xf32> -> vector<8x128xf32>
    %326 = arith.addf %324, %325 : vector<8x128xf32>
    %cst_245 = arith.constant dense<0.000000e+00> : vector<8x128xf32>
    %327 = tpu.matmul %81, %136, %cst_245 {dimension_numbers = #tpu.dot_dimension_numbers<[1], [0], [0], [1], [0, 0, 1, 1], [], []>} : vector<8x128xbf16>, vector<128x128xbf16>, vector<8x128xf32> -> vector<8x128xf32>
    %328 = arith.addf %326, %327 : vector<8x128xf32>
    %cst_246 = arith.constant dense<0.000000e+00> : vector<8x128xf32>
    %329 = tpu.matmul %83, %140, %cst_246 {dimension_numbers = #tpu.dot_dimension_numbers<[1], [0], [0], [1], [0, 0, 1, 1], [], []>} : vector<8x128xbf16>, vector<128x128xbf16>, vector<8x128xf32> -> vector<8x128xf32>
    %330 = arith.addf %328, %329 : vector<8x128xf32>
    %c0_247 = arith.constant 0 : index
    %c0_248 = arith.constant 0 : index
    %331 = vector.load %arg3[%c0_247, %c0_248] : memref<1x128xf32, #tpu.memory_space<vmem>>, vector<1x128xf32>
    %332 = vector.broadcast %331 : vector<1x128xf32> to vector<8x128xf32>
    %333 = arith.addf %330, %332 : vector<8x128xf32>
    %cst_249 = arith.constant 0.000000e+00 : f32
    %334 = vector.broadcast %cst_249 : f32 to vector<8x128xf32>
    %335 = arith.cmpf oge, %333, %334 : vector<8x128xf32>
    %cst_250 = arith.constant 0.00999999977 : f32
    %336 = vector.broadcast %cst_250 : f32 to vector<8x128xf32>
    %337 = arith.mulf %336, %333 : vector<8x128xf32>
    %338 = arith.select %335, %333, %337 : vector<8x128xi1>, vector<8x128xf32>
    %339 = arith.truncf %338 : vector<8x128xf32> to vector<8x128xbf16>
    %cst_251 = arith.constant dense<0.000000e+00> : vector<8x128xf32>
    %340 = tpu.matmul %51, %241, %cst_251 {dimension_numbers = #tpu.dot_dimension_numbers<[1], [0], [0], [1], [0, 0, 1, 1], [], []>} : vector<8x128xbf16>, vector<128x128xbf16>, vector<8x128xf32> -> vector<8x128xf32>
    %cst_252 = arith.constant dense<0.000000e+00> : vector<8x128xf32>
    %341 = tpu.matmul %53, %217, %cst_252 {dimension_numbers = #tpu.dot_dimension_numbers<[1], [0], [0], [1], [0, 0, 1, 1], [], []>} : vector<8x128xbf16>, vector<128x128xbf16>, vector<8x128xf32> -> vector<8x128xf32>
    %342 = arith.addf %340, %341 : vector<8x128xf32>
    %cst_253 = arith.constant dense<0.000000e+00> : vector<8x128xf32>
    %343 = tpu.matmul %55, %220, %cst_253 {dimension_numbers = #tpu.dot_dimension_numbers<[1], [0], [0], [1], [0, 0, 1, 1], [], []>} : vector<8x128xbf16>, vector<128x128xbf16>, vector<8x128xf32> -> vector<8x128xf32>
    %344 = arith.addf %342, %343 : vector<8x128xf32>
    %cst_254 = arith.constant dense<0.000000e+00> : vector<8x128xf32>
    %345 = tpu.matmul %67, %153, %cst_254 {dimension_numbers = #tpu.dot_dimension_numbers<[1], [0], [0], [1], [0, 0, 1, 1], [], []>} : vector<8x128xbf16>, vector<128x128xbf16>, vector<8x128xf32> -> vector<8x128xf32>
    %346 = arith.addf %344, %345 : vector<8x128xf32>
    %cst_255 = arith.constant dense<0.000000e+00> : vector<8x128xf32>
    %347 = tpu.matmul %69, %129, %cst_255 {dimension_numbers = #tpu.dot_dimension_numbers<[1], [0], [0], [1], [0, 0, 1, 1], [], []>} : vector<8x128xbf16>, vector<128x128xbf16>, vector<8x128xf32> -> vector<8x128xf32>
    %348 = arith.addf %346, %347 : vector<8x128xf32>
    %cst_256 = arith.constant dense<0.000000e+00> : vector<8x128xf32>
    %349 = tpu.matmul %71, %132, %cst_256 {dimension_numbers = #tpu.dot_dimension_numbers<[1], [0], [0], [1], [0, 0, 1, 1], [], []>} : vector<8x128xbf16>, vector<128x128xbf16>, vector<8x128xf32> -> vector<8x128xf32>
    %350 = arith.addf %348, %349 : vector<8x128xf32>
    %cst_257 = arith.constant dense<0.000000e+00> : vector<8x128xf32>
    %351 = tpu.matmul %83, %160, %cst_257 {dimension_numbers = #tpu.dot_dimension_numbers<[1], [0], [0], [1], [0, 0, 1, 1], [], []>} : vector<8x128xbf16>, vector<128x128xbf16>, vector<8x128xf32> -> vector<8x128xf32>
    %352 = arith.addf %350, %351 : vector<8x128xf32>
    %cst_258 = arith.constant dense<0.000000e+00> : vector<8x128xf32>
    %353 = tpu.matmul %85, %136, %cst_258 {dimension_numbers = #tpu.dot_dimension_numbers<[1], [0], [0], [1], [0, 0, 1, 1], [], []>} : vector<8x128xbf16>, vector<128x128xbf16>, vector<8x128xf32> -> vector<8x128xf32>
    %354 = arith.addf %352, %353 : vector<8x128xf32>
    %cst_259 = arith.constant dense<0.000000e+00> : vector<8x128xf32>
    %355 = tpu.matmul %87, %140, %cst_259 {dimension_numbers = #tpu.dot_dimension_numbers<[1], [0], [0], [1], [0, 0, 1, 1], [], []>} : vector<8x128xbf16>, vector<128x128xbf16>, vector<8x128xf32> -> vector<8x128xf32>
    %356 = arith.addf %354, %355 : vector<8x128xf32>
    %c0_260 = arith.constant 0 : index
    %c0_261 = arith.constant 0 : index
    %357 = vector.load %arg3[%c0_260, %c0_261] : memref<1x128xf32, #tpu.memory_space<vmem>>, vector<1x128xf32>
    %358 = vector.broadcast %357 : vector<1x128xf32> to vector<8x128xf32>
    %359 = arith.addf %356, %358 : vector<8x128xf32>
    %cst_262 = arith.constant 0.000000e+00 : f32
    %360 = vector.broadcast %cst_262 : f32 to vector<8x128xf32>
    %361 = arith.cmpf oge, %359, %360 : vector<8x128xf32>
    %cst_263 = arith.constant 0.00999999977 : f32
    %362 = vector.broadcast %cst_263 : f32 to vector<8x128xf32>
    %363 = arith.mulf %362, %359 : vector<8x128xf32>
    %364 = arith.select %361, %359, %363 : vector<8x128xi1>, vector<8x128xf32>
    %365 = arith.truncf %364 : vector<8x128xf32> to vector<8x128xbf16>
    %cst_264 = arith.constant dense<0.000000e+00> : vector<8x128xf32>
    %366 = tpu.matmul %55, %241, %cst_264 {dimension_numbers = #tpu.dot_dimension_numbers<[1], [0], [0], [1], [0, 0, 1, 1], [], []>} : vector<8x128xbf16>, vector<128x128xbf16>, vector<8x128xf32> -> vector<8x128xf32>
    %cst_265 = arith.constant dense<0.000000e+00> : vector<8x128xf32>
    %367 = tpu.matmul %57, %217, %cst_265 {dimension_numbers = #tpu.dot_dimension_numbers<[1], [0], [0], [1], [0, 0, 1, 1], [], []>} : vector<8x128xbf16>, vector<128x128xbf16>, vector<8x128xf32> -> vector<8x128xf32>
    %368 = arith.addf %366, %367 : vector<8x128xf32>
    %cst_266 = arith.constant dense<0.000000e+00> : vector<8x128xf32>
    %369 = tpu.matmul %59, %220, %cst_266 {dimension_numbers = #tpu.dot_dimension_numbers<[1], [0], [0], [1], [0, 0, 1, 1], [], []>} : vector<8x128xbf16>, vector<128x128xbf16>, vector<8x128xf32> -> vector<8x128xf32>
    %370 = arith.addf %368, %369 : vector<8x128xf32>
    %cst_267 = arith.constant dense<0.000000e+00> : vector<8x128xf32>
    %371 = tpu.matmul %71, %153, %cst_267 {dimension_numbers = #tpu.dot_dimension_numbers<[1], [0], [0], [1], [0, 0, 1, 1], [], []>} : vector<8x128xbf16>, vector<128x128xbf16>, vector<8x128xf32> -> vector<8x128xf32>
    %372 = arith.addf %370, %371 : vector<8x128xf32>
    %cst_268 = arith.constant dense<0.000000e+00> : vector<8x128xf32>
    %373 = tpu.matmul %73, %129, %cst_268 {dimension_numbers = #tpu.dot_dimension_numbers<[1], [0], [0], [1], [0, 0, 1, 1], [], []>} : vector<8x128xbf16>, vector<128x128xbf16>, vector<8x128xf32> -> vector<8x128xf32>
    %374 = arith.addf %372, %373 : vector<8x128xf32>
    %cst_269 = arith.constant dense<0.000000e+00> : vector<8x128xf32>
    %375 = tpu.matmul %75, %132, %cst_269 {dimension_numbers = #tpu.dot_dimension_numbers<[1], [0], [0], [1], [0, 0, 1, 1], [], []>} : vector<8x128xbf16>, vector<128x128xbf16>, vector<8x128xf32> -> vector<8x128xf32>
    %376 = arith.addf %374, %375 : vector<8x128xf32>
    %cst_270 = arith.constant dense<0.000000e+00> : vector<8x128xf32>
    %377 = tpu.matmul %87, %160, %cst_270 {dimension_numbers = #tpu.dot_dimension_numbers<[1], [0], [0], [1], [0, 0, 1, 1], [], []>} : vector<8x128xbf16>, vector<128x128xbf16>, vector<8x128xf32> -> vector<8x128xf32>
    %378 = arith.addf %376, %377 : vector<8x128xf32>
    %cst_271 = arith.constant dense<0.000000e+00> : vector<8x128xf32>
    %379 = tpu.matmul %89, %136, %cst_271 {dimension_numbers = #tpu.dot_dimension_numbers<[1], [0], [0], [1], [0, 0, 1, 1], [], []>} : vector<8x128xbf16>, vector<128x128xbf16>, vector<8x128xf32> -> vector<8x128xf32>
    %380 = arith.addf %378, %379 : vector<8x128xf32>
    %cst_272 = arith.constant dense<0.000000e+00> : vector<8x128xf32>
    %381 = tpu.matmul %91, %140, %cst_272 {dimension_numbers = #tpu.dot_dimension_numbers<[1], [0], [0], [1], [0, 0, 1, 1], [], []>} : vector<8x128xbf16>, vector<128x128xbf16>, vector<8x128xf32> -> vector<8x128xf32>
    %382 = arith.addf %380, %381 : vector<8x128xf32>
    %c0_273 = arith.constant 0 : index
    %c0_274 = arith.constant 0 : index
    %383 = vector.load %arg3[%c0_273, %c0_274] : memref<1x128xf32, #tpu.memory_space<vmem>>, vector<1x128xf32>
    %384 = vector.broadcast %383 : vector<1x128xf32> to vector<8x128xf32>
    %385 = arith.addf %382, %384 : vector<8x128xf32>
    %cst_275 = arith.constant 0.000000e+00 : f32
    %386 = vector.broadcast %cst_275 : f32 to vector<8x128xf32>
    %387 = arith.cmpf oge, %385, %386 : vector<8x128xf32>
    %cst_276 = arith.constant 0.00999999977 : f32
    %388 = vector.broadcast %cst_276 : f32 to vector<8x128xf32>
    %389 = arith.mulf %388, %385 : vector<8x128xf32>
    %390 = arith.select %387, %385, %389 : vector<8x128xi1>, vector<8x128xf32>
    %391 = arith.truncf %390 : vector<8x128xf32> to vector<8x128xbf16>
    %cst_277 = arith.constant dense<0.000000e+00> : vector<8x128xf32>
    %392 = tpu.matmul %59, %241, %cst_277 {dimension_numbers = #tpu.dot_dimension_numbers<[1], [0], [0], [1], [0, 0, 1, 1], [], []>} : vector<8x128xbf16>, vector<128x128xbf16>, vector<8x128xf32> -> vector<8x128xf32>
    %cst_278 = arith.constant dense<0.000000e+00> : vector<8x128xf32>
    %393 = tpu.matmul %61, %217, %cst_278 {dimension_numbers = #tpu.dot_dimension_numbers<[1], [0], [0], [1], [0, 0, 1, 1], [], []>} : vector<8x128xbf16>, vector<128x128xbf16>, vector<8x128xf32> -> vector<8x128xf32>
    %394 = arith.addf %392, %393 : vector<8x128xf32>
    %cst_279 = arith.constant dense<0.000000e+00> : vector<8x128xf32>
    %395 = tpu.matmul %63, %220, %cst_279 {dimension_numbers = #tpu.dot_dimension_numbers<[1], [0], [0], [1], [0, 0, 1, 1], [], []>} : vector<8x128xbf16>, vector<128x128xbf16>, vector<8x128xf32> -> vector<8x128xf32>
    %396 = arith.addf %394, %395 : vector<8x128xf32>
    %cst_280 = arith.constant dense<0.000000e+00> : vector<8x128xf32>
    %397 = tpu.matmul %75, %153, %cst_280 {dimension_numbers = #tpu.dot_dimension_numbers<[1], [0], [0], [1], [0, 0, 1, 1], [], []>} : vector<8x128xbf16>, vector<128x128xbf16>, vector<8x128xf32> -> vector<8x128xf32>
    %398 = arith.addf %396, %397 : vector<8x128xf32>
    %cst_281 = arith.constant dense<0.000000e+00> : vector<8x128xf32>
    %399 = tpu.matmul %77, %129, %cst_281 {dimension_numbers = #tpu.dot_dimension_numbers<[1], [0], [0], [1], [0, 0, 1, 1], [], []>} : vector<8x128xbf16>, vector<128x128xbf16>, vector<8x128xf32> -> vector<8x128xf32>
    %400 = arith.addf %398, %399 : vector<8x128xf32>
    %cst_282 = arith.constant dense<0.000000e+00> : vector<8x128xf32>
    %401 = tpu.matmul %79, %132, %cst_282 {dimension_numbers = #tpu.dot_dimension_numbers<[1], [0], [0], [1], [0, 0, 1, 1], [], []>} : vector<8x128xbf16>, vector<128x128xbf16>, vector<8x128xf32> -> vector<8x128xf32>
    %402 = arith.addf %400, %401 : vector<8x128xf32>
    %cst_283 = arith.constant dense<0.000000e+00> : vector<8x128xf32>
    %403 = tpu.matmul %91, %160, %cst_283 {dimension_numbers = #tpu.dot_dimension_numbers<[1], [0], [0], [1], [0, 0, 1, 1], [], []>} : vector<8x128xbf16>, vector<128x128xbf16>, vector<8x128xf32> -> vector<8x128xf32>
    %404 = arith.addf %402, %403 : vector<8x128xf32>
    %cst_284 = arith.constant dense<0.000000e+00> : vector<8x128xf32>
    %405 = tpu.matmul %93, %136, %cst_284 {dimension_numbers = #tpu.dot_dimension_numbers<[1], [0], [0], [1], [0, 0, 1, 1], [], []>} : vector<8x128xbf16>, vector<128x128xbf16>, vector<8x128xf32> -> vector<8x128xf32>
    %406 = arith.addf %404, %405 : vector<8x128xf32>
    %cst_285 = arith.constant dense<0.000000e+00> : vector<8x128xf32>
    %407 = tpu.matmul %95, %140, %cst_285 {dimension_numbers = #tpu.dot_dimension_numbers<[1], [0], [0], [1], [0, 0, 1, 1], [], []>} : vector<8x128xbf16>, vector<128x128xbf16>, vector<8x128xf32> -> vector<8x128xf32>
    %408 = arith.addf %406, %407 : vector<8x128xf32>
    %c0_286 = arith.constant 0 : index
    %c0_287 = arith.constant 0 : index
    %409 = vector.load %arg3[%c0_286, %c0_287] : memref<1x128xf32, #tpu.memory_space<vmem>>, vector<1x128xf32>
    %410 = vector.broadcast %409 : vector<1x128xf32> to vector<8x128xf32>
    %411 = arith.addf %408, %410 : vector<8x128xf32>
    %cst_288 = arith.constant 0.000000e+00 : f32
    %412 = vector.broadcast %cst_288 : f32 to vector<8x128xf32>
    %413 = arith.cmpf oge, %411, %412 : vector<8x128xf32>
    %cst_289 = arith.constant 0.00999999977 : f32
    %414 = vector.broadcast %cst_289 : f32 to vector<8x128xf32>
    %415 = arith.mulf %414, %411 : vector<8x128xf32>
    %416 = arith.select %413, %411, %415 : vector<8x128xi1>, vector<8x128xf32>
    %417 = arith.truncf %416 : vector<8x128xf32> to vector<8x128xbf16>
    %cst_290 = arith.constant dense<0.000000e+00> : vector<8x128xf32>
    %418 = tpu.matmul %81, %217, %cst_290 {dimension_numbers = #tpu.dot_dimension_numbers<[1], [0], [0], [1], [0, 0, 1, 1], [], []>} : vector<8x128xbf16>, vector<128x128xbf16>, vector<8x128xf32> -> vector<8x128xf32>
    %cst_291 = arith.constant dense<0.000000e+00> : vector<8x128xf32>
    %419 = tpu.matmul %83, %220, %cst_291 {dimension_numbers = #tpu.dot_dimension_numbers<[1], [0], [0], [1], [0, 0, 1, 1], [], []>} : vector<8x128xbf16>, vector<128x128xbf16>, vector<8x128xf32> -> vector<8x128xf32>
    %420 = arith.addf %418, %419 : vector<8x128xf32>
    %cst_292 = arith.constant dense<0.000000e+00> : vector<8x128xf32>
    %421 = tpu.matmul %97, %129, %cst_292 {dimension_numbers = #tpu.dot_dimension_numbers<[1], [0], [0], [1], [0, 0, 1, 1], [], []>} : vector<8x128xbf16>, vector<128x128xbf16>, vector<8x128xf32> -> vector<8x128xf32>
    %422 = arith.addf %420, %421 : vector<8x128xf32>
    %cst_293 = arith.constant dense<0.000000e+00> : vector<8x128xf32>
    %423 = tpu.matmul %99, %132, %cst_293 {dimension_numbers = #tpu.dot_dimension_numbers<[1], [0], [0], [1], [0, 0, 1, 1], [], []>} : vector<8x128xbf16>, vector<128x128xbf16>, vector<8x128xf32> -> vector<8x128xf32>
    %424 = arith.addf %422, %423 : vector<8x128xf32>
    %cst_294 = arith.constant dense<0.000000e+00> : vector<8x128xf32>
    %425 = tpu.matmul %113, %136, %cst_294 {dimension_numbers = #tpu.dot_dimension_numbers<[1], [0], [0], [1], [0, 0, 1, 1], [], []>} : vector<8x128xbf16>, vector<128x128xbf16>, vector<8x128xf32> -> vector<8x128xf32>
    %426 = arith.addf %424, %425 : vector<8x128xf32>
    %cst_295 = arith.constant dense<0.000000e+00> : vector<8x128xf32>
    %427 = tpu.matmul %115, %140, %cst_295 {dimension_numbers = #tpu.dot_dimension_numbers<[1], [0], [0], [1], [0, 0, 1, 1], [], []>} : vector<8x128xbf16>, vector<128x128xbf16>, vector<8x128xf32> -> vector<8x128xf32>
    %428 = arith.addf %426, %427 : vector<8x128xf32>
    %c0_296 = arith.constant 0 : index
    %c0_297 = arith.constant 0 : index
    %429 = vector.load %arg3[%c0_296, %c0_297] : memref<1x128xf32, #tpu.memory_space<vmem>>, vector<1x128xf32>
    %430 = vector.broadcast %429 : vector<1x128xf32> to vector<8x128xf32>
    %431 = arith.addf %428, %430 : vector<8x128xf32>
    %cst_298 = arith.constant 0.000000e+00 : f32
    %432 = vector.broadcast %cst_298 : f32 to vector<8x128xf32>
    %433 = arith.cmpf oge, %431, %432 : vector<8x128xf32>
    %cst_299 = arith.constant 0.00999999977 : f32
    %434 = vector.broadcast %cst_299 : f32 to vector<8x128xf32>
    %435 = arith.mulf %434, %431 : vector<8x128xf32>
    %436 = arith.select %433, %431, %435 : vector<8x128xi1>, vector<8x128xf32>
    %437 = arith.truncf %436 : vector<8x128xf32> to vector<8x128xbf16>
    %cst_300 = arith.constant dense<0.000000e+00> : vector<8x128xf32>
    %438 = tpu.matmul %83, %241, %cst_300 {dimension_numbers = #tpu.dot_dimension_numbers<[1], [0], [0], [1], [0, 0, 1, 1], [], []>} : vector<8x128xbf16>, vector<128x128xbf16>, vector<8x128xf32> -> vector<8x128xf32>
    %cst_301 = arith.constant dense<0.000000e+00> : vector<8x128xf32>
    %439 = tpu.matmul %85, %217, %cst_301 {dimension_numbers = #tpu.dot_dimension_numbers<[1], [0], [0], [1], [0, 0, 1, 1], [], []>} : vector<8x128xbf16>, vector<128x128xbf16>, vector<8x128xf32> -> vector<8x128xf32>
    %440 = arith.addf %438, %439 : vector<8x128xf32>
    %cst_302 = arith.constant dense<0.000000e+00> : vector<8x128xf32>
    %441 = tpu.matmul %87, %220, %cst_302 {dimension_numbers = #tpu.dot_dimension_numbers<[1], [0], [0], [1], [0, 0, 1, 1], [], []>} : vector<8x128xbf16>, vector<128x128xbf16>, vector<8x128xf32> -> vector<8x128xf32>
    %442 = arith.addf %440, %441 : vector<8x128xf32>
    %cst_303 = arith.constant dense<0.000000e+00> : vector<8x128xf32>
    %443 = tpu.matmul %99, %153, %cst_303 {dimension_numbers = #tpu.dot_dimension_numbers<[1], [0], [0], [1], [0, 0, 1, 1], [], []>} : vector<8x128xbf16>, vector<128x128xbf16>, vector<8x128xf32> -> vector<8x128xf32>
    %444 = arith.addf %442, %443 : vector<8x128xf32>
    %cst_304 = arith.constant dense<0.000000e+00> : vector<8x128xf32>
    %445 = tpu.matmul %101, %129, %cst_304 {dimension_numbers = #tpu.dot_dimension_numbers<[1], [0], [0], [1], [0, 0, 1, 1], [], []>} : vector<8x128xbf16>, vector<128x128xbf16>, vector<8x128xf32> -> vector<8x128xf32>
    %446 = arith.addf %444, %445 : vector<8x128xf32>
    %cst_305 = arith.constant dense<0.000000e+00> : vector<8x128xf32>
    %447 = tpu.matmul %103, %132, %cst_305 {dimension_numbers = #tpu.dot_dimension_numbers<[1], [0], [0], [1], [0, 0, 1, 1], [], []>} : vector<8x128xbf16>, vector<128x128xbf16>, vector<8x128xf32> -> vector<8x128xf32>
    %448 = arith.addf %446, %447 : vector<8x128xf32>
    %cst_306 = arith.constant dense<0.000000e+00> : vector<8x128xf32>
    %449 = tpu.matmul %115, %160, %cst_306 {dimension_numbers = #tpu.dot_dimension_numbers<[1], [0], [0], [1], [0, 0, 1, 1], [], []>} : vector<8x128xbf16>, vector<128x128xbf16>, vector<8x128xf32> -> vector<8x128xf32>
    %450 = arith.addf %448, %449 : vector<8x128xf32>
    %cst_307 = arith.constant dense<0.000000e+00> : vector<8x128xf32>
    %451 = tpu.matmul %117, %136, %cst_307 {dimension_numbers = #tpu.dot_dimension_numbers<[1], [0], [0], [1], [0, 0, 1, 1], [], []>} : vector<8x128xbf16>, vector<128x128xbf16>, vector<8x128xf32> -> vector<8x128xf32>
    %452 = arith.addf %450, %451 : vector<8x128xf32>
    %cst_308 = arith.constant dense<0.000000e+00> : vector<8x128xf32>
    %453 = tpu.matmul %119, %140, %cst_308 {dimension_numbers = #tpu.dot_dimension_numbers<[1], [0], [0], [1], [0, 0, 1, 1], [], []>} : vector<8x128xbf16>, vector<128x128xbf16>, vector<8x128xf32> -> vector<8x128xf32>
    %454 = arith.addf %452, %453 : vector<8x128xf32>
    %c0_309 = arith.constant 0 : index
    %c0_310 = arith.constant 0 : index
    %455 = vector.load %arg3[%c0_309, %c0_310] : memref<1x128xf32, #tpu.memory_space<vmem>>, vector<1x128xf32>
    %456 = vector.broadcast %455 : vector<1x128xf32> to vector<8x128xf32>
    %457 = arith.addf %454, %456 : vector<8x128xf32>
    %cst_311 = arith.constant 0.000000e+00 : f32
    %458 = vector.broadcast %cst_311 : f32 to vector<8x128xf32>
    %459 = arith.cmpf oge, %457, %458 : vector<8x128xf32>
    %cst_312 = arith.constant 0.00999999977 : f32
    %460 = vector.broadcast %cst_312 : f32 to vector<8x128xf32>
    %461 = arith.mulf %460, %457 : vector<8x128xf32>
    %462 = arith.select %459, %457, %461 : vector<8x128xi1>, vector<8x128xf32>
    %463 = arith.truncf %462 : vector<8x128xf32> to vector<8x128xbf16>
    %cst_313 = arith.constant dense<0.000000e+00> : vector<8x128xf32>
    %464 = tpu.matmul %87, %241, %cst_313 {dimension_numbers = #tpu.dot_dimension_numbers<[1], [0], [0], [1], [0, 0, 1, 1], [], []>} : vector<8x128xbf16>, vector<128x128xbf16>, vector<8x128xf32> -> vector<8x128xf32>
    %cst_314 = arith.constant dense<0.000000e+00> : vector<8x128xf32>
    %465 = tpu.matmul %89, %217, %cst_314 {dimension_numbers = #tpu.dot_dimension_numbers<[1], [0], [0], [1], [0, 0, 1, 1], [], []>} : vector<8x128xbf16>, vector<128x128xbf16>, vector<8x128xf32> -> vector<8x128xf32>
    %466 = arith.addf %464, %465 : vector<8x128xf32>
    %cst_315 = arith.constant dense<0.000000e+00> : vector<8x128xf32>
    %467 = tpu.matmul %91, %220, %cst_315 {dimension_numbers = #tpu.dot_dimension_numbers<[1], [0], [0], [1], [0, 0, 1, 1], [], []>} : vector<8x128xbf16>, vector<128x128xbf16>, vector<8x128xf32> -> vector<8x128xf32>
    %468 = arith.addf %466, %467 : vector<8x128xf32>
    %cst_316 = arith.constant dense<0.000000e+00> : vector<8x128xf32>
    %469 = tpu.matmul %103, %153, %cst_316 {dimension_numbers = #tpu.dot_dimension_numbers<[1], [0], [0], [1], [0, 0, 1, 1], [], []>} : vector<8x128xbf16>, vector<128x128xbf16>, vector<8x128xf32> -> vector<8x128xf32>
    %470 = arith.addf %468, %469 : vector<8x128xf32>
    %cst_317 = arith.constant dense<0.000000e+00> : vector<8x128xf32>
    %471 = tpu.matmul %105, %129, %cst_317 {dimension_numbers = #tpu.dot_dimension_numbers<[1], [0], [0], [1], [0, 0, 1, 1], [], []>} : vector<8x128xbf16>, vector<128x128xbf16>, vector<8x128xf32> -> vector<8x128xf32>
    %472 = arith.addf %470, %471 : vector<8x128xf32>
    %cst_318 = arith.constant dense<0.000000e+00> : vector<8x128xf32>
    %473 = tpu.matmul %107, %132, %cst_318 {dimension_numbers = #tpu.dot_dimension_numbers<[1], [0], [0], [1], [0, 0, 1, 1], [], []>} : vector<8x128xbf16>, vector<128x128xbf16>, vector<8x128xf32> -> vector<8x128xf32>
    %474 = arith.addf %472, %473 : vector<8x128xf32>
    %cst_319 = arith.constant dense<0.000000e+00> : vector<8x128xf32>
    %475 = tpu.matmul %119, %160, %cst_319 {dimension_numbers = #tpu.dot_dimension_numbers<[1], [0], [0], [1], [0, 0, 1, 1], [], []>} : vector<8x128xbf16>, vector<128x128xbf16>, vector<8x128xf32> -> vector<8x128xf32>
    %476 = arith.addf %474, %475 : vector<8x128xf32>
    %cst_320 = arith.constant dense<0.000000e+00> : vector<8x128xf32>
    %477 = tpu.matmul %121, %136, %cst_320 {dimension_numbers = #tpu.dot_dimension_numbers<[1], [0], [0], [1], [0, 0, 1, 1], [], []>} : vector<8x128xbf16>, vector<128x128xbf16>, vector<8x128xf32> -> vector<8x128xf32>
    %478 = arith.addf %476, %477 : vector<8x128xf32>
    %cst_321 = arith.constant dense<0.000000e+00> : vector<8x128xf32>
    %479 = tpu.matmul %123, %140, %cst_321 {dimension_numbers = #tpu.dot_dimension_numbers<[1], [0], [0], [1], [0, 0, 1, 1], [], []>} : vector<8x128xbf16>, vector<128x128xbf16>, vector<8x128xf32> -> vector<8x128xf32>
    %480 = arith.addf %478, %479 : vector<8x128xf32>
    %c0_322 = arith.constant 0 : index
    %c0_323 = arith.constant 0 : index
    %481 = vector.load %arg3[%c0_322, %c0_323] : memref<1x128xf32, #tpu.memory_space<vmem>>, vector<1x128xf32>
    %482 = vector.broadcast %481 : vector<1x128xf32> to vector<8x128xf32>
    %483 = arith.addf %480, %482 : vector<8x128xf32>
    %cst_324 = arith.constant 0.000000e+00 : f32
    %484 = vector.broadcast %cst_324 : f32 to vector<8x128xf32>
    %485 = arith.cmpf oge, %483, %484 : vector<8x128xf32>
    %cst_325 = arith.constant 0.00999999977 : f32
    %486 = vector.broadcast %cst_325 : f32 to vector<8x128xf32>
    %487 = arith.mulf %486, %483 : vector<8x128xf32>
    %488 = arith.select %485, %483, %487 : vector<8x128xi1>, vector<8x128xf32>
    %489 = arith.truncf %488 : vector<8x128xf32> to vector<8x128xbf16>
    %cst_326 = arith.constant dense<0.000000e+00> : vector<8x128xf32>
    %490 = tpu.matmul %91, %241, %cst_326 {dimension_numbers = #tpu.dot_dimension_numbers<[1], [0], [0], [1], [0, 0, 1, 1], [], []>} : vector<8x128xbf16>, vector<128x128xbf16>, vector<8x128xf32> -> vector<8x128xf32>
    %cst_327 = arith.constant dense<0.000000e+00> : vector<8x128xf32>
    %491 = tpu.matmul %93, %217, %cst_327 {dimension_numbers = #tpu.dot_dimension_numbers<[1], [0], [0], [1], [0, 0, 1, 1], [], []>} : vector<8x128xbf16>, vector<128x128xbf16>, vector<8x128xf32> -> vector<8x128xf32>
    %492 = arith.addf %490, %491 : vector<8x128xf32>
    %cst_328 = arith.constant dense<0.000000e+00> : vector<8x128xf32>
    %493 = tpu.matmul %95, %220, %cst_328 {dimension_numbers = #tpu.dot_dimension_numbers<[1], [0], [0], [1], [0, 0, 1, 1], [], []>} : vector<8x128xbf16>, vector<128x128xbf16>, vector<8x128xf32> -> vector<8x128xf32>
    %494 = arith.addf %492, %493 : vector<8x128xf32>
    %cst_329 = arith.constant dense<0.000000e+00> : vector<8x128xf32>
    %495 = tpu.matmul %107, %153, %cst_329 {dimension_numbers = #tpu.dot_dimension_numbers<[1], [0], [0], [1], [0, 0, 1, 1], [], []>} : vector<8x128xbf16>, vector<128x128xbf16>, vector<8x128xf32> -> vector<8x128xf32>
    %496 = arith.addf %494, %495 : vector<8x128xf32>
    %cst_330 = arith.constant dense<0.000000e+00> : vector<8x128xf32>
    %497 = tpu.matmul %109, %129, %cst_330 {dimension_numbers = #tpu.dot_dimension_numbers<[1], [0], [0], [1], [0, 0, 1, 1], [], []>} : vector<8x128xbf16>, vector<128x128xbf16>, vector<8x128xf32> -> vector<8x128xf32>
    %498 = arith.addf %496, %497 : vector<8x128xf32>
    %cst_331 = arith.constant dense<0.000000e+00> : vector<8x128xf32>
    %499 = tpu.matmul %111, %132, %cst_331 {dimension_numbers = #tpu.dot_dimension_numbers<[1], [0], [0], [1], [0, 0, 1, 1], [], []>} : vector<8x128xbf16>, vector<128x128xbf16>, vector<8x128xf32> -> vector<8x128xf32>
    %500 = arith.addf %498, %499 : vector<8x128xf32>
    %cst_332 = arith.constant dense<0.000000e+00> : vector<8x128xf32>
    %501 = tpu.matmul %123, %160, %cst_332 {dimension_numbers = #tpu.dot_dimension_numbers<[1], [0], [0], [1], [0, 0, 1, 1], [], []>} : vector<8x128xbf16>, vector<128x128xbf16>, vector<8x128xf32> -> vector<8x128xf32>
    %502 = arith.addf %500, %501 : vector<8x128xf32>
    %cst_333 = arith.constant dense<0.000000e+00> : vector<8x128xf32>
    %503 = tpu.matmul %125, %136, %cst_333 {dimension_numbers = #tpu.dot_dimension_numbers<[1], [0], [0], [1], [0, 0, 1, 1], [], []>} : vector<8x128xbf16>, vector<128x128xbf16>, vector<8x128xf32> -> vector<8x128xf32>
    %504 = arith.addf %502, %503 : vector<8x128xf32>
    %cst_334 = arith.constant dense<0.000000e+00> : vector<8x128xf32>
    %505 = tpu.matmul %127, %140, %cst_334 {dimension_numbers = #tpu.dot_dimension_numbers<[1], [0], [0], [1], [0, 0, 1, 1], [], []>} : vector<8x128xbf16>, vector<128x128xbf16>, vector<8x128xf32> -> vector<8x128xf32>
    %506 = arith.addf %504, %505 : vector<8x128xf32>
    %c0_335 = arith.constant 0 : index
    %c0_336 = arith.constant 0 : index
    %507 = vector.load %arg3[%c0_335, %c0_336] : memref<1x128xf32, #tpu.memory_space<vmem>>, vector<1x128xf32>
    %508 = vector.broadcast %507 : vector<1x128xf32> to vector<8x128xf32>
    %509 = arith.addf %506, %508 : vector<8x128xf32>
    %cst_337 = arith.constant 0.000000e+00 : f32
    %510 = vector.broadcast %cst_337 : f32 to vector<8x128xf32>
    %511 = arith.cmpf oge, %509, %510 : vector<8x128xf32>
    %cst_338 = arith.constant 0.00999999977 : f32
    %512 = vector.broadcast %cst_338 : f32 to vector<8x128xf32>
    %513 = arith.mulf %512, %509 : vector<8x128xf32>
    %514 = arith.select %511, %509, %513 : vector<8x128xi1>, vector<8x128xf32>
    %515 = arith.truncf %514 : vector<8x128xf32> to vector<8x128xbf16>
    %c4_339 = arith.constant 4 : index
    %c0_340 = arith.constant 0 : index
    %c0_341 = arith.constant 0 : index
    %516 = vector.load %arg4[%c4_339, %c0_340, %c0_341] : memref<9x128x128xbf16, #tpu.memory_space<vmem>>, vector<1x128x128xbf16>
    %517 = vector.shape_cast %516 : vector<1x128x128xbf16> to vector<128x128xbf16>
    %cst_342 = arith.constant dense<0.000000e+00> : vector<8x128xf32>
    %518 = tpu.matmul %151, %517, %cst_342 {dimension_numbers = #tpu.dot_dimension_numbers<[1], [0], [0], [1], [0, 0, 1, 1], [], []>} : vector<8x128xbf16>, vector<128x128xbf16>, vector<8x128xf32> -> vector<8x128xf32>
    %c5_343 = arith.constant 5 : index
    %c0_344 = arith.constant 0 : index
    %c0_345 = arith.constant 0 : index
    %519 = vector.load %arg4[%c5_343, %c0_344, %c0_345] : memref<9x128x128xbf16, #tpu.memory_space<vmem>>, vector<1x128x128xbf16>
    %520 = vector.shape_cast %519 : vector<1x128x128xbf16> to vector<128x128xbf16>
    %cst_346 = arith.constant dense<0.000000e+00> : vector<8x128xf32>
    %521 = tpu.matmul %175, %520, %cst_346 {dimension_numbers = #tpu.dot_dimension_numbers<[1], [0], [0], [1], [0, 0, 1, 1], [], []>} : vector<8x128xbf16>, vector<128x128xbf16>, vector<8x128xf32> -> vector<8x128xf32>
    %522 = arith.addf %518, %521 : vector<8x128xf32>
    %c7_347 = arith.constant 7 : index
    %c0_348 = arith.constant 0 : index
    %c0_349 = arith.constant 0 : index
    %523 = vector.load %arg4[%c7_347, %c0_348, %c0_349] : memref<9x128x128xbf16, #tpu.memory_space<vmem>>, vector<1x128x128xbf16>
    %524 = vector.shape_cast %523 : vector<1x128x128xbf16> to vector<128x128xbf16>
    %cst_350 = arith.constant dense<0.000000e+00> : vector<8x128xf32>
    %525 = tpu.matmul %239, %524, %cst_350 {dimension_numbers = #tpu.dot_dimension_numbers<[1], [0], [0], [1], [0, 0, 1, 1], [], []>} : vector<8x128xbf16>, vector<128x128xbf16>, vector<8x128xf32> -> vector<8x128xf32>
    %526 = arith.addf %522, %525 : vector<8x128xf32>
    %c8_351 = arith.constant 8 : index
    %c0_352 = arith.constant 0 : index
    %c0_353 = arith.constant 0 : index
    %527 = vector.load %arg4[%c8_351, %c0_352, %c0_353] : memref<9x128x128xbf16, #tpu.memory_space<vmem>>, vector<1x128x128xbf16>
    %528 = vector.shape_cast %527 : vector<1x128x128xbf16> to vector<128x128xbf16>
    %cst_354 = arith.constant dense<0.000000e+00> : vector<8x128xf32>
    %529 = tpu.matmul %267, %528, %cst_354 {dimension_numbers = #tpu.dot_dimension_numbers<[1], [0], [0], [1], [0, 0, 1, 1], [], []>} : vector<8x128xbf16>, vector<128x128xbf16>, vector<8x128xf32> -> vector<8x128xf32>
    %530 = arith.addf %526, %529 : vector<8x128xf32>
    %c0_355 = arith.constant 0 : index
    %c0_356 = arith.constant 0 : index
    %531 = vector.load %arg5[%c0_355, %c0_356] : memref<1x128xf32, #tpu.memory_space<vmem>>, vector<1x128xf32>
    %532 = vector.broadcast %531 : vector<1x128xf32> to vector<8x128xf32>
    %533 = arith.addf %530, %532 : vector<8x128xf32>
    %cst_357 = arith.constant 0.000000e+00 : f32
    %534 = vector.broadcast %cst_357 : f32 to vector<8x128xf32>
    %535 = arith.cmpf oge, %533, %534 : vector<8x128xf32>
    %cst_358 = arith.constant 0.00999999977 : f32
    %536 = vector.broadcast %cst_358 : f32 to vector<8x128xf32>
    %537 = arith.mulf %536, %533 : vector<8x128xf32>
    %538 = arith.select %535, %533, %537 : vector<8x128xi1>, vector<8x128xf32>
    %539 = arith.truncf %538 : vector<8x128xf32> to vector<8x128xbf16>
    %c3_359 = arith.constant 3 : index
    %c0_360 = arith.constant 0 : index
    %c0_361 = arith.constant 0 : index
    %540 = vector.load %arg4[%c3_359, %c0_360, %c0_361] : memref<9x128x128xbf16, #tpu.memory_space<vmem>>, vector<1x128x128xbf16>
    %541 = vector.shape_cast %540 : vector<1x128x128xbf16> to vector<128x128xbf16>
    %cst_362 = arith.constant dense<0.000000e+00> : vector<8x128xf32>
    %542 = tpu.matmul %175, %541, %cst_362 {dimension_numbers = #tpu.dot_dimension_numbers<[1], [0], [0], [1], [0, 0, 1, 1], [], []>} : vector<8x128xbf16>, vector<128x128xbf16>, vector<8x128xf32> -> vector<8x128xf32>
    %cst_363 = arith.constant dense<0.000000e+00> : vector<8x128xf32>
    %543 = tpu.matmul %195, %517, %cst_363 {dimension_numbers = #tpu.dot_dimension_numbers<[1], [0], [0], [1], [0, 0, 1, 1], [], []>} : vector<8x128xbf16>, vector<128x128xbf16>, vector<8x128xf32> -> vector<8x128xf32>
    %544 = arith.addf %542, %543 : vector<8x128xf32>
    %cst_364 = arith.constant dense<0.000000e+00> : vector<8x128xf32>
    %545 = tpu.matmul %215, %520, %cst_364 {dimension_numbers = #tpu.dot_dimension_numbers<[1], [0], [0], [1], [0, 0, 1, 1], [], []>} : vector<8x128xbf16>, vector<128x128xbf16>, vector<8x128xf32> -> vector<8x128xf32>
    %546 = arith.addf %544, %545 : vector<8x128xf32>
    %c6_365 = arith.constant 6 : index
    %c0_366 = arith.constant 0 : index
    %c0_367 = arith.constant 0 : index
    %547 = vector.load %arg4[%c6_365, %c0_366, %c0_367] : memref<9x128x128xbf16, #tpu.memory_space<vmem>>, vector<1x128x128xbf16>
    %548 = vector.shape_cast %547 : vector<1x128x128xbf16> to vector<128x128xbf16>
    %cst_368 = arith.constant dense<0.000000e+00> : vector<8x128xf32>
    %549 = tpu.matmul %267, %548, %cst_368 {dimension_numbers = #tpu.dot_dimension_numbers<[1], [0], [0], [1], [0, 0, 1, 1], [], []>} : vector<8x128xbf16>, vector<128x128xbf16>, vector<8x128xf32> -> vector<8x128xf32>
    %550 = arith.addf %546, %549 : vector<8x128xf32>
    %cst_369 = arith.constant dense<0.000000e+00> : vector<8x128xf32>
    %551 = tpu.matmul %293, %524, %cst_369 {dimension_numbers = #tpu.dot_dimension_numbers<[1], [0], [0], [1], [0, 0, 1, 1], [], []>} : vector<8x128xbf16>, vector<128x128xbf16>, vector<8x128xf32> -> vector<8x128xf32>
    %552 = arith.addf %550, %551 : vector<8x128xf32>
    %cst_370 = arith.constant dense<0.000000e+00> : vector<8x128xf32>
    %553 = tpu.matmul %319, %528, %cst_370 {dimension_numbers = #tpu.dot_dimension_numbers<[1], [0], [0], [1], [0, 0, 1, 1], [], []>} : vector<8x128xbf16>, vector<128x128xbf16>, vector<8x128xf32> -> vector<8x128xf32>
    %554 = arith.addf %552, %553 : vector<8x128xf32>
    %c0_371 = arith.constant 0 : index
    %c0_372 = arith.constant 0 : index
    %555 = vector.load %arg5[%c0_371, %c0_372] : memref<1x128xf32, #tpu.memory_space<vmem>>, vector<1x128xf32>
    %556 = vector.broadcast %555 : vector<1x128xf32> to vector<8x128xf32>
    %557 = arith.addf %554, %556 : vector<8x128xf32>
    %cst_373 = arith.constant 0.000000e+00 : f32
    %558 = vector.broadcast %cst_373 : f32 to vector<8x128xf32>
    %559 = arith.cmpf oge, %557, %558 : vector<8x128xf32>
    %cst_374 = arith.constant 0.00999999977 : f32
    %560 = vector.broadcast %cst_374 : f32 to vector<8x128xf32>
    %561 = arith.mulf %560, %557 : vector<8x128xf32>
    %562 = arith.select %559, %557, %561 : vector<8x128xi1>, vector<8x128xf32>
    %563 = arith.truncf %562 : vector<8x128xf32> to vector<8x128xbf16>
    %c1_375 = arith.constant 1 : index
    %c0_376 = arith.constant 0 : index
    %c0_377 = arith.constant 0 : index
    %564 = vector.load %arg4[%c1_375, %c0_376, %c0_377] : memref<9x128x128xbf16, #tpu.memory_space<vmem>>, vector<1x128x128xbf16>
    %565 = vector.shape_cast %564 : vector<1x128x128xbf16> to vector<128x128xbf16>
    %cst_378 = arith.constant dense<0.000000e+00> : vector<8x128xf32>
    %566 = tpu.matmul %239, %565, %cst_378 {dimension_numbers = #tpu.dot_dimension_numbers<[1], [0], [0], [1], [0, 0, 1, 1], [], []>} : vector<8x128xbf16>, vector<128x128xbf16>, vector<8x128xf32> -> vector<8x128xf32>
    %c2_379 = arith.constant 2 : index
    %c0_380 = arith.constant 0 : index
    %c0_381 = arith.constant 0 : index
    %567 = vector.load %arg4[%c2_379, %c0_380, %c0_381] : memref<9x128x128xbf16, #tpu.memory_space<vmem>>, vector<1x128x128xbf16>
    %568 = vector.shape_cast %567 : vector<1x128x128xbf16> to vector<128x128xbf16>
    %cst_382 = arith.constant dense<0.000000e+00> : vector<8x128xf32>
    %569 = tpu.matmul %267, %568, %cst_382 {dimension_numbers = #tpu.dot_dimension_numbers<[1], [0], [0], [1], [0, 0, 1, 1], [], []>} : vector<8x128xbf16>, vector<128x128xbf16>, vector<8x128xf32> -> vector<8x128xf32>
    %570 = arith.addf %566, %569 : vector<8x128xf32>
    %cst_383 = arith.constant dense<0.000000e+00> : vector<8x128xf32>
    %571 = tpu.matmul %339, %517, %cst_383 {dimension_numbers = #tpu.dot_dimension_numbers<[1], [0], [0], [1], [0, 0, 1, 1], [], []>} : vector<8x128xbf16>, vector<128x128xbf16>, vector<8x128xf32> -> vector<8x128xf32>
    %572 = arith.addf %570, %571 : vector<8x128xf32>
    %cst_384 = arith.constant dense<0.000000e+00> : vector<8x128xf32>
    %573 = tpu.matmul %365, %520, %cst_384 {dimension_numbers = #tpu.dot_dimension_numbers<[1], [0], [0], [1], [0, 0, 1, 1], [], []>} : vector<8x128xbf16>, vector<128x128xbf16>, vector<8x128xf32> -> vector<8x128xf32>
    %574 = arith.addf %572, %573 : vector<8x128xf32>
    %cst_385 = arith.constant dense<0.000000e+00> : vector<8x128xf32>
    %575 = tpu.matmul %437, %524, %cst_385 {dimension_numbers = #tpu.dot_dimension_numbers<[1], [0], [0], [1], [0, 0, 1, 1], [], []>} : vector<8x128xbf16>, vector<128x128xbf16>, vector<8x128xf32> -> vector<8x128xf32>
    %576 = arith.addf %574, %575 : vector<8x128xf32>
    %cst_386 = arith.constant dense<0.000000e+00> : vector<8x128xf32>
    %577 = tpu.matmul %463, %528, %cst_386 {dimension_numbers = #tpu.dot_dimension_numbers<[1], [0], [0], [1], [0, 0, 1, 1], [], []>} : vector<8x128xbf16>, vector<128x128xbf16>, vector<8x128xf32> -> vector<8x128xf32>
    %578 = arith.addf %576, %577 : vector<8x128xf32>
    %c0_387 = arith.constant 0 : index
    %c0_388 = arith.constant 0 : index
    %579 = vector.load %arg5[%c0_387, %c0_388] : memref<1x128xf32, #tpu.memory_space<vmem>>, vector<1x128xf32>
    %580 = vector.broadcast %579 : vector<1x128xf32> to vector<8x128xf32>
    %581 = arith.addf %578, %580 : vector<8x128xf32>
    %cst_389 = arith.constant 0.000000e+00 : f32
    %582 = vector.broadcast %cst_389 : f32 to vector<8x128xf32>
    %583 = arith.cmpf oge, %581, %582 : vector<8x128xf32>
    %cst_390 = arith.constant 0.00999999977 : f32
    %584 = vector.broadcast %cst_390 : f32 to vector<8x128xf32>
    %585 = arith.mulf %584, %581 : vector<8x128xf32>
    %586 = arith.select %583, %581, %585 : vector<8x128xi1>, vector<8x128xf32>
    %587 = arith.truncf %586 : vector<8x128xf32> to vector<8x128xbf16>
    %c0_391 = arith.constant 0 : index
    %c0_392 = arith.constant 0 : index
    %c0_393 = arith.constant 0 : index
    %588 = vector.load %arg4[%c0_391, %c0_392, %c0_393] : memref<9x128x128xbf16, #tpu.memory_space<vmem>>, vector<1x128x128xbf16>
    %589 = vector.shape_cast %588 : vector<1x128x128xbf16> to vector<128x128xbf16>
    %cst_394 = arith.constant dense<0.000000e+00> : vector<8x128xf32>
    %590 = tpu.matmul %267, %589, %cst_394 {dimension_numbers = #tpu.dot_dimension_numbers<[1], [0], [0], [1], [0, 0, 1, 1], [], []>} : vector<8x128xbf16>, vector<128x128xbf16>, vector<8x128xf32> -> vector<8x128xf32>
    %cst_395 = arith.constant dense<0.000000e+00> : vector<8x128xf32>
    %591 = tpu.matmul %293, %565, %cst_395 {dimension_numbers = #tpu.dot_dimension_numbers<[1], [0], [0], [1], [0, 0, 1, 1], [], []>} : vector<8x128xbf16>, vector<128x128xbf16>, vector<8x128xf32> -> vector<8x128xf32>
    %592 = arith.addf %590, %591 : vector<8x128xf32>
    %cst_396 = arith.constant dense<0.000000e+00> : vector<8x128xf32>
    %593 = tpu.matmul %319, %568, %cst_396 {dimension_numbers = #tpu.dot_dimension_numbers<[1], [0], [0], [1], [0, 0, 1, 1], [], []>} : vector<8x128xbf16>, vector<128x128xbf16>, vector<8x128xf32> -> vector<8x128xf32>
    %594 = arith.addf %592, %593 : vector<8x128xf32>
    %cst_397 = arith.constant dense<0.000000e+00> : vector<8x128xf32>
    %595 = tpu.matmul %365, %541, %cst_397 {dimension_numbers = #tpu.dot_dimension_numbers<[1], [0], [0], [1], [0, 0, 1, 1], [], []>} : vector<8x128xbf16>, vector<128x128xbf16>, vector<8x128xf32> -> vector<8x128xf32>
    %596 = arith.addf %594, %595 : vector<8x128xf32>
    %cst_398 = arith.constant dense<0.000000e+00> : vector<8x128xf32>
    %597 = tpu.matmul %391, %517, %cst_398 {dimension_numbers = #tpu.dot_dimension_numbers<[1], [0], [0], [1], [0, 0, 1, 1], [], []>} : vector<8x128xbf16>, vector<128x128xbf16>, vector<8x128xf32> -> vector<8x128xf32>
    %598 = arith.addf %596, %597 : vector<8x128xf32>
    %cst_399 = arith.constant dense<0.000000e+00> : vector<8x128xf32>
    %599 = tpu.matmul %417, %520, %cst_399 {dimension_numbers = #tpu.dot_dimension_numbers<[1], [0], [0], [1], [0, 0, 1, 1], [], []>} : vector<8x128xbf16>, vector<128x128xbf16>, vector<8x128xf32> -> vector<8x128xf32>
    %600 = arith.addf %598, %599 : vector<8x128xf32>
    %cst_400 = arith.constant dense<0.000000e+00> : vector<8x128xf32>
    %601 = tpu.matmul %463, %548, %cst_400 {dimension_numbers = #tpu.dot_dimension_numbers<[1], [0], [0], [1], [0, 0, 1, 1], [], []>} : vector<8x128xbf16>, vector<128x128xbf16>, vector<8x128xf32> -> vector<8x128xf32>
    %602 = arith.addf %600, %601 : vector<8x128xf32>
    %cst_401 = arith.constant dense<0.000000e+00> : vector<8x128xf32>
    %603 = tpu.matmul %489, %524, %cst_401 {dimension_numbers = #tpu.dot_dimension_numbers<[1], [0], [0], [1], [0, 0, 1, 1], [], []>} : vector<8x128xbf16>, vector<128x128xbf16>, vector<8x128xf32> -> vector<8x128xf32>
    %604 = arith.addf %602, %603 : vector<8x128xf32>
    %cst_402 = arith.constant dense<0.000000e+00> : vector<8x128xf32>
    %605 = tpu.matmul %515, %528, %cst_402 {dimension_numbers = #tpu.dot_dimension_numbers<[1], [0], [0], [1], [0, 0, 1, 1], [], []>} : vector<8x128xbf16>, vector<128x128xbf16>, vector<8x128xf32> -> vector<8x128xf32>
    %606 = arith.addf %604, %605 : vector<8x128xf32>
    %c0_403 = arith.constant 0 : index
    %c0_404 = arith.constant 0 : index
    %607 = vector.load %arg5[%c0_403, %c0_404] : memref<1x128xf32, #tpu.memory_space<vmem>>, vector<1x128xf32>
    %608 = vector.broadcast %607 : vector<1x128xf32> to vector<8x128xf32>
    %609 = arith.addf %606, %608 : vector<8x128xf32>
    %cst_405 = arith.constant 0.000000e+00 : f32
    %610 = vector.broadcast %cst_405 : f32 to vector<8x128xf32>
    %611 = arith.cmpf oge, %609, %610 : vector<8x128xf32>
    %cst_406 = arith.constant 0.00999999977 : f32
    %612 = vector.broadcast %cst_406 : f32 to vector<8x128xf32>
    %613 = arith.mulf %612, %609 : vector<8x128xf32>
    %614 = arith.select %611, %609, %613 : vector<8x128xi1>, vector<8x128xf32>
    %615 = arith.truncf %614 : vector<8x128xf32> to vector<8x128xbf16>
    %c4_407 = arith.constant 4 : index
    %c0_408 = arith.constant 0 : index
    %c0_409 = arith.constant 0 : index
    %616 = vector.load %arg6[%c4_407, %c0_408, %c0_409] : memref<9x128x128xbf16, #tpu.memory_space<vmem>>, vector<1x128x128xbf16>
    %617 = vector.shape_cast %616 : vector<1x128x128xbf16> to vector<128x128xbf16>
    %cst_410 = arith.constant dense<0.000000e+00> : vector<8x128xf32>
    %618 = tpu.matmul %539, %617, %cst_410 {dimension_numbers = #tpu.dot_dimension_numbers<[1], [0], [0], [1], [0, 0, 1, 1], [], []>} : vector<8x128xbf16>, vector<128x128xbf16>, vector<8x128xf32> -> vector<8x128xf32>
    %c5_411 = arith.constant 5 : index
    %c0_412 = arith.constant 0 : index
    %c0_413 = arith.constant 0 : index
    %619 = vector.load %arg6[%c5_411, %c0_412, %c0_413] : memref<9x128x128xbf16, #tpu.memory_space<vmem>>, vector<1x128x128xbf16>
    %620 = vector.shape_cast %619 : vector<1x128x128xbf16> to vector<128x128xbf16>
    %cst_414 = arith.constant dense<0.000000e+00> : vector<8x128xf32>
    %621 = tpu.matmul %563, %620, %cst_414 {dimension_numbers = #tpu.dot_dimension_numbers<[1], [0], [0], [1], [0, 0, 1, 1], [], []>} : vector<8x128xbf16>, vector<128x128xbf16>, vector<8x128xf32> -> vector<8x128xf32>
    %622 = arith.addf %618, %621 : vector<8x128xf32>
    %c7_415 = arith.constant 7 : index
    %c0_416 = arith.constant 0 : index
    %c0_417 = arith.constant 0 : index
    %623 = vector.load %arg6[%c7_415, %c0_416, %c0_417] : memref<9x128x128xbf16, #tpu.memory_space<vmem>>, vector<1x128x128xbf16>
    %624 = vector.shape_cast %623 : vector<1x128x128xbf16> to vector<128x128xbf16>
    %cst_418 = arith.constant dense<0.000000e+00> : vector<8x128xf32>
    %625 = tpu.matmul %587, %624, %cst_418 {dimension_numbers = #tpu.dot_dimension_numbers<[1], [0], [0], [1], [0, 0, 1, 1], [], []>} : vector<8x128xbf16>, vector<128x128xbf16>, vector<8x128xf32> -> vector<8x128xf32>
    %626 = arith.addf %622, %625 : vector<8x128xf32>
    %c8_419 = arith.constant 8 : index
    %c0_420 = arith.constant 0 : index
    %c0_421 = arith.constant 0 : index
    %627 = vector.load %arg6[%c8_419, %c0_420, %c0_421] : memref<9x128x128xbf16, #tpu.memory_space<vmem>>, vector<1x128x128xbf16>
    %628 = vector.shape_cast %627 : vector<1x128x128xbf16> to vector<128x128xbf16>
    %cst_422 = arith.constant dense<0.000000e+00> : vector<8x128xf32>
    %629 = tpu.matmul %615, %628, %cst_422 {dimension_numbers = #tpu.dot_dimension_numbers<[1], [0], [0], [1], [0, 0, 1, 1], [], []>} : vector<8x128xbf16>, vector<128x128xbf16>, vector<8x128xf32> -> vector<8x128xf32>
    %630 = arith.addf %626, %629 : vector<8x128xf32>
    %c0_423 = arith.constant 0 : index
    %c0_424 = arith.constant 0 : index
    %631 = vector.load %arg7[%c0_423, %c0_424] : memref<1x128xf32, #tpu.memory_space<vmem>>, vector<1x128xf32>
    %632 = vector.broadcast %631 : vector<1x128xf32> to vector<8x128xf32>
    %633 = arith.addf %630, %632 : vector<8x128xf32>
    %cst_425 = arith.constant 0.000000e+00 : f32
    %634 = vector.broadcast %cst_425 : f32 to vector<8x128xf32>
    %635 = arith.cmpf oge, %633, %634 : vector<8x128xf32>
    %cst_426 = arith.constant 0.00999999977 : f32
    %636 = vector.broadcast %cst_426 : f32 to vector<8x128xf32>
    %637 = arith.mulf %636, %633 : vector<8x128xf32>
    %638 = arith.select %635, %633, %637 : vector<8x128xi1>, vector<8x128xf32>
    %639 = arith.truncf %638 : vector<8x128xf32> to vector<8x128xbf16>
    %c0_427 = arith.constant 0 : index
    %c0_428 = arith.constant 0 : index
    %640 = vector.load %arg8[%c0_427, %c0_428] : memref<128x128xbf16, #tpu.memory_space<vmem>>, vector<128x128xbf16>
    %cst_429 = arith.constant dense<0.000000e+00> : vector<8x128xf32>
    %641 = tpu.matmul %639, %640, %cst_429 {dimension_numbers = #tpu.dot_dimension_numbers<[1], [0], [0], [1], [0, 0, 1, 1], [], []>} : vector<8x128xbf16>, vector<128x128xbf16>, vector<8x128xf32> -> vector<8x128xf32>
    %c0_430 = arith.constant 0 : index
    %c0_431 = arith.constant 0 : index
    %642 = vector.load %arg9[%c0_430, %c0_431] : memref<1x128xf32, #tpu.memory_space<vmem>>, vector<1x128xf32>
    %643 = vector.broadcast %642 : vector<1x128xf32> to vector<8x128xf32>
    %644 = arith.addf %641, %643 : vector<8x128xf32>
    %c0_432 = arith.constant 0 : index
    %c0_433 = arith.constant 0 : index
    %645 = vector.load %arg10[%c0_432, %c0_433] : memref<8x128xf32, #tpu.memory_space<vmem>>, vector<8x128xf32>
    tpu.vector_store %arg10[%c0_432, %c0_433], %644 {strides = array<i32>} : memref<8x128xf32, #tpu.memory_space<vmem>>, vector<8x128xf32>,
    return
  }
  func.func @transform_0(%arg0: i32) -> (i32, i32, i32) {
    %c0_i32 = arith.constant 0 : i32
    %c0_i32_0 = arith.constant 0 : i32
    %c0_i32_1 = arith.constant 0 : i32
    return %c0_i32, %arg0, %c0_i32_0 : i32, i32, i32
  }
  func.func @transform_1(%arg0: i32) -> (i32, i32, i32) {
    %c0_i32 = arith.constant 0 : i32
    %c0_i32_0 = arith.constant 0 : i32
    %c0_i32_1 = arith.constant 0 : i32
    %c0_i32_2 = arith.constant 0 : i32
    return %c0_i32, %c0_i32_0, %c0_i32_1 : i32, i32, i32
  }
  func.func @transform_2(%arg0: i32) -> (i32, i32) {
    %c0_i32 = arith.constant 0 : i32
    %c0_i32_0 = arith.constant 0 : i32
    %c0_i32_1 = arith.constant 0 : i32
    return %c0_i32, %c0_i32_0 : i32, i32
  }
  func.func @transform_3(%arg0: i32) -> (i32, i32, i32) {
    %c0_i32 = arith.constant 0 : i32
    %c0_i32_0 = arith.constant 0 : i32
    %c0_i32_1 = arith.constant 0 : i32
    %c0_i32_2 = arith.constant 0 : i32
    return %c0_i32, %c0_i32_0, %c0_i32_1 : i32, i32, i32
  }
  func.func @transform_4(%arg0: i32) -> (i32, i32) {
    %c0_i32 = arith.constant 0 : i32
    %c0_i32_0 = arith.constant 0 : i32
    %c0_i32_1 = arith.constant 0 : i32
    return %c0_i32, %c0_i32_0 : i32, i32
  }
  func.func @transform_5(%arg0: i32) -> (i32, i32, i32) {
    %c0_i32 = arith.constant 0 : i32
    %c0_i32_0 = arith.constant 0 : i32
    %c0_i32_1 = arith.constant 0 : i32
    %c0_i32_2 = arith.constant 0 : i32
    return %c0_i32, %c0_i32_0, %c0_i32_1 : i32, i32, i32
  }
  func.func @transform_6(%arg0: i32) -> (i32, i32) {
    %c0_i32 = arith.constant 0 : i32
    %c0_i32_0 = arith.constant 0 : i32
    %c0_i32_1 = arith.constant 0 : i32
    return %c0_i32, %c0_i32_0 : i32, i32
  }
  func.func @transform_7(%arg0: i32) -> (i32, i32) {
    %c0_i32 = arith.constant 0 : i32
    %c0_i32_0 = arith.constant 0 : i32
    %c0_i32_1 = arith.constant 0 : i32
    return %c0_i32, %c0_i32_0 : i32, i32
  }
  func.func @transform_8(%arg0: i32) -> (i32, i32) {
    %c0_i32 = arith.constant 0 : i32
    %c0_i32_0 = arith.constant 0 : i32
    %c0_i32_1 = arith.constant 0 : i32
    return %c0_i32, %c0_i32_0 : i32, i32
  }
  func.func @transform_9(%arg0: i32) -> (i32, i32) {
    %c0_i32 = arith.constant 0 : i32
    %c0_i32_0 = arith.constant 0 : i32
    return %arg0, %c0_i32 : i32, i32
  }
}

</mosaic_0001>

<llo_original>
// kernel: gradual_style_block_forward.2
$region0: #{gradual_style_block_forward.2}
  #allocation0 [shape = 'u32[]', space=smem, size = 0x4, offset = 0x4, fixed_abs, tag = 'smem constant byte address 0x4 - core index']
  #allocation1 [shape = 'u32[144,128]{1,0:T(1,128)}', space=vmem, size = 0x12000, scoped, tag = 'internal scratch']
  %s0 = inlined_call_operand.vmem [shape: bf16[2,90,128], index: 0, kind: input, shape index: {}]
  %s1 = inlined_call_operand.vmem [shape: bf16[2,90,128], index: 1, kind: input, shape index: {}]
  %s2 = inlined_call_operand.vmem [shape: bf16[2,90,128], index: 2, kind: input, shape index: {}]
  %s3 = inlined_call_operand.vmem [shape: bf16[2,90,128], index: 3, kind: input, shape index: {}]
  %s4 = inlined_call_operand.vmem [shape: bf16[9,128,128], index: 4, kind: input, shape index: {}]
  %s5 = inlined_call_operand.vmem [shape: f32[1,128], index: 5, kind: input, shape index: {}]
  %s6 = inlined_call_operand.vmem [shape: bf16[2,72,128], index: 6, kind: output, shape index: {}]
  %s7 = sld [smem:[#allocation0]]
  $region57: #{gradual_style_block_forward.2} parent=0
    _
  %s9 = ssub.s32 1, %s7
  %s10 = scalar_select 0, %s9, %s7
  loop: start=0, step=1, limit=4
  $region2: #{gradual_style_block_forward.2} parent=0 // loop_pre_header
    _
  $region3: #{gradual_style_block_forward.2} parent=0 // loop_header
    %s12 = sphi 0, %s16
    %p13 = scmp.ge.s32.totalorder %s12, 4
    %s22 = sphi 0, %s24
    %s25 = sphi 0, %s22
    %s26 = sphi 0, %s25
    %s42 = sphi 0, %s26
    %s48 = sphi 0, %s50
    %s51 = sphi 0, %s48
    %s52 = sphi 0, %s51
    %s68 = sphi 0, %s52
    %s74 = sphi 0, %s76
    %s77 = sphi 0, %s74
    %s78 = sphi 0, %s77
    %s94 = sphi 0, %s78
    %s100 = sphi 0, %s102
    %s103 = sphi 0, %s100
    %s104 = sphi 0, %s103
    %s120 = sphi 0, %s104
    %s124 = sphi 0, %s124
    %s126 = sphi 0, %s124
    %s127 = sphi 0, %s126
    %s141 = sphi 0, %s127
    %s145 = sphi 0, %s145
    %s147 = sphi 0, %s145
    %s148 = sphi 0, %s147
    %s162 = sphi 0, %s148
    %s168 = sphi 0, %s170
    %s171 = sphi 0, %s168
    %s172 = sphi 0, %s171
    %s188 = sphi 0, %s172
  $region4: #{gradual_style_block_forward.2} parent=0 // loop_header_branch
    %15 = sbr.rel (%p13) target = $region8
  $region5: #{gradual_style_block_forward.2} parent=0 // loop_body
    %s17 = ssub.s32 %s12, 1
    %s18 = ssub.s32 %s12, 2
    %s19 = sadd.s32 %s12, 1
    %s20 = ssub.s32 %s12, %s19
    %p21 = scmp.eq.s32.totalorder %s20, 0
    %s23 = sadd.s32 %s22, 1
    %s24 = scalar_select %p21, %s22, %s23
    %p27 = pneg %p21
    %p28 = scmp.eq.s32.totalorder %s12, 1
    %p29 = por %p27, %p28
    %p30 = scmp.ne.s32.totalorder %s22, %s25
    %p31 = scmp.eq.s32.totalorder %s12, 0
    %p32 = por %p30, %p31
    %p33 = scmp.ne.s32.totalorder %s22, %s25
    %p34 = scmp.eq.s32.totalorder %s17, 1
    %p35 = por %p33, %p34
    %p36 = scmp.ne.s32.totalorder %s25, %s26
    %p37 = scmp.eq.s32.totalorder %s17, 0
    %p38 = por %p36, %p37
    %p39 = scmp.ne.s32.totalorder %s25, %s26
    %p40 = scmp.eq.s32.totalorder %s18, 1
    %p41 = por %p39, %p40
    %p43 = scmp.ne.s32.totalorder %s26, %s42
    %p44 = scmp.eq.s32.totalorder %s18, 0
    %p45 = por %p43, %p44
    %s46 = ssub.s32 %s12, %s19
    %p47 = scmp.eq.s32.totalorder %s46, 0
    %s49 = sadd.s32 %s48, 1
    %s50 = scalar_select %p47, %s48, %s49
    %p53 = pneg %p47
    %p54 = scmp.eq.s32.totalorder %s12, 1
    %p55 = por %p53, %p54
    %p56 = scmp.ne.s32.totalorder %s48, %s51
    %p57 = scmp.eq.s32.totalorder %s12, 0
    %p58 = por %p56, %p57
    %p59 = scmp.ne.s32.totalorder %s48, %s51
    %p60 = scmp.eq.s32.totalorder %s17, 1
    %p61 = por %p59, %p60
    %p62 = scmp.ne.s32.totalorder %s51, %s52
    %p63 = scmp.eq.s32.totalorder %s17, 0
    %p64 = por %p62, %p63
    %p65 = scmp.ne.s32.totalorder %s51, %s52
    %p66 = scmp.eq.s32.totalorder %s18, 1
    %p67 = por %p65, %p66
    %p69 = scmp.ne.s32.totalorder %s52, %s68
    %p70 = scmp.eq.s32.totalorder %s18, 0
    %p71 = por %p69, %p70
    %s72 = ssub.s32 %s12, %s19
    %p73 = scmp.eq.s32.totalorder %s72, 0
    %s75 = sadd.s32 %s74, 1
    %s76 = scalar_select %p73, %s74, %s75
    %p79 = pneg %p73
    %p80 = scmp.eq.s32.totalorder %s12, 1
    %p81 = por %p79, %p80
    %p82 = scmp.ne.s32.totalorder %s74, %s77
    %p83 = scmp.eq.s32.totalorder %s12, 0
    %p84 = por %p82, %p83
    %p85 = scmp.ne.s32.totalorder %s74, %s77
    %p86 = scmp.eq.s32.totalorder %s17, 1
    %p87 = por %p85, %p86
    %p88 = scmp.ne.s32.totalorder %s77, %s78
    %p89 = scmp.eq.s32.totalorder %s17, 0
    %p90 = por %p88, %p89
    %p91 = scmp.ne.s32.totalorder %s77, %s78
    %p92 = scmp.eq.s32.totalorder %s18, 1
    %p93 = por %p91, %p92
    %p95 = scmp.ne.s32.totalorder %s78, %s94
    %p96 = scmp.eq.s32.totalorder %s18, 0
    %p97 = por %p95, %p96
    %s98 = ssub.s32 %s12, %s19
    %p99 = scmp.eq.s32.totalorder %s98, 0
    %s101 = sadd.s32 %s100, 1
    %s102 = scalar_select %p99, %s100, %s101
    %p105 = pneg %p99
    %p106 = scmp.eq.s32.totalorder %s12, 1
    %p107 = por %p105, %p106
    %p108 = scmp.ne.s32.totalorder %s100, %s103
    %p109 = scmp.eq.s32.totalorder %s12, 0
    %p110 = por %p108, %p109
    %p111 = scmp.ne.s32.totalorder %s100, %s103
    %p112 = scmp.eq.s32.totalorder %s17, 1
    %p113 = por %p111, %p112
    %p114 = scmp.ne.s32.totalorder %s103, %s104
    %p115 = scmp.eq.s32.totalorder %s17, 0
    %p116 = por %p114, %p115
    %p117 = scmp.ne.s32.totalorder %s103, %s104
    %p118 = scmp.eq.s32.totalorder %s18, 1
    %p119 = por %p117, %p118
    %p121 = scmp.ne.s32.totalorder %s104, %s120
    %p122 = scmp.eq.s32.totalorder %s18, 0
    %p123 = por %p121, %p122
    %s125 = sadd.s32 %s124, 1
    %p128 = scmp.eq.s32.totalorder %s12, 1
    %p129 = scmp.ne.s32.totalorder %s124, %s126
    %p130 = scmp.eq.s32.totalorder %s12, 0
    %p131 = por %p129, %p130
    %p132 = scmp.ne.s32.totalorder %s124, %s126
    %p133 = scmp.eq.s32.totalorder %s17, 1
    %p134 = por %p132, %p133
    %p135 = scmp.ne.s32.totalorder %s126, %s127
    %p136 = scmp.eq.s32.totalorder %s17, 0
    %p137 = por %p135, %p136
    %p138 = scmp.ne.s32.totalorder %s126, %s127
    %p139 = scmp.eq.s32.totalorder %s18, 1
    %p140 = por %p138, %p139
    %p142 = scmp.ne.s32.totalorder %s127, %s141
    %p143 = scmp.eq.s32.totalorder %s18, 0
    %p144 = por %p142, %p143
    %s146 = sadd.s32 %s145, 1
    %p149 = scmp.eq.s32.totalorder %s12, 1
    %p150 = scmp.ne.s32.totalorder %s145, %s147
    %p151 = scmp.eq.s32.totalorder %s12, 0
    %p152 = por %p150, %p151
    %p153 = scmp.ne.s32.totalorder %s145, %s147
    %p154 = scmp.eq.s32.totalorder %s17, 1
    %p155 = por %p153, %p154
    %p156 = scmp.ne.s32.totalorder %s147, %s148
    %p157 = scmp.eq.s32.totalorder %s17, 0
    %p158 = por %p156, %p157
    %p159 = scmp.ne.s32.totalorder %s147, %s148
    %p160 = scmp.eq.s32.totalorder %s18, 1
    %p161 = por %p159, %p160
    %p163 = scmp.ne.s32.totalorder %s148, %s162
    %p164 = scmp.eq.s32.totalorder %s18, 0
    %p165 = por %p163, %p164
    %s166 = ssub.s32 %s12, %s19
    %p167 = scmp.eq.s32.totalorder %s166, 0
    %s169 = sadd.s32 %s168, 1
    %s170 = scalar_select %p167, %s168, %s169
    %p173 = pneg %p167
    %p174 = scmp.eq.s32.totalorder %s12, 1
    %p175 = por %p173, %p174
    %p176 = scmp.ne.s32.totalorder %s168, %s171
    %p177 = scmp.eq.s32.totalorder %s12, 0
    %p178 = por %p176, %p177
    %p179 = scmp.ne.s32.totalorder %s168, %s171
    %p180 = scmp.eq.s32.totalorder %s17, 1
    %p181 = por %p179, %p180
    %p182 = scmp.ne.s32.totalorder %s171, %s172
    %p183 = scmp.eq.s32.totalorder %s17, 0
    %p184 = por %p182, %p183
    %p185 = scmp.ne.s32.totalorder %s171, %s172
    %p186 = scmp.eq.s32.totalorder %s18, 1
    %p187 = por %p185, %p186
    %p189 = scmp.ne.s32.totalorder %s172, %s188
    %p190 = scmp.eq.s32.totalorder %s18, 0
    %p191 = por %p189, %p190
    %p192 = scmp.le.s32.totalorder 1, %s12
    %p193 = scmp.lt.s32.totalorder %s12, 3
    %p194 = pnand %p192, %p193
    %p195 = pneg %p194
    // Predicated region
    $region9: #{gradual_style_block_forward.2} parent=5 // pred_check
      _
    $region10: #{gradual_style_block_forward.2} parent=5 // pred_check_branch
      %197 = sbr.rel (%p194) target = $region12
    $region11: #{gradual_style_block_forward.2} parent=5 // pred_region
      %s198 = ssub.s32 %s12, 1
      // Predicated region
      $region13: #{gradual_style_block_forward.2} parent=11 // pred_check
        %p199 = pneg %p137
      $region14: #{gradual_style_block_forward.2} parent=11 // pred_check_branch
        %201 = sbr.rel (%p199) target = $region16
      $region15: #{gradual_style_block_forward.2} parent=11 // pred_region
        _
      $region16: #{gradual_style_block_forward.2} parent=11 // pred_fallthru
        _
      // Predicated region
      $region17: #{gradual_style_block_forward.2} parent=11 // pred_check
        %p202 = pneg %p158
      $region18: #{gradual_style_block_forward.2} parent=11 // pred_check_branch
        %204 = sbr.rel (%p202) target = $region20
      $region19: #{gradual_style_block_forward.2} parent=11 // pred_region
        _
      $region20: #{gradual_style_block_forward.2} parent=11 // pred_fallthru
        _
    $region12: #{gradual_style_block_forward.2} parent=5 // pred_fallthru
      _
    %p205 = scmp.lt.s32.totalorder %s12, 2
    // Predicated region
    $region21: #{gradual_style_block_forward.2} parent=5 // pred_check
      %p206 = pneg %p205
    $region22: #{gradual_style_block_forward.2} parent=5 // pred_check_branch
      %208 = sbr.rel (%p206) target = $region24
    $region23: #{gradual_style_block_forward.2} parent=5 // pred_region
      // Predicated region
      $region25: #{gradual_style_block_forward.2} parent=23 // pred_check
        %p209 = pneg %p32
      $region26: #{gradual_style_block_forward.2} parent=23 // pred_check_branch
        %211 = sbr.rel (%p209) target = $region28
      $region27: #{gradual_style_block_forward.2} parent=23 // pred_region
        %p212 = scmp.lt.s32.totalorder %s12, 1
        %s213 = scalar_select %p212, %s12, 1
        %s214 = smul.addr %s213, 12
        %s215 = smul.addr %s214, 4
        %s216 = scalar_lea.vmem %s0, %s215
      $region28: #{gradual_style_block_forward.2} parent=23 // pred_fallthru
        _
      // Predicated region
      $region29: #{gradual_style_block_forward.2} parent=23 // pred_check
        %p217 = pneg %p58
      $region30: #{gradual_style_block_forward.2} parent=23 // pred_check_branch
        %219 = sbr.rel (%p217) target = $region32
      $region31: #{gradual_style_block_forward.2} parent=23 // pred_region
        %p220 = scmp.lt.s32.totalorder %s12, 1
        %s221 = scalar_select %p220, %s12, 1
        %s222 = smul.addr %s221, 12
        %s223 = smul.addr %s222, 4
        %s224 = scalar_lea.vmem %s1, %s223
      $region32: #{gradual_style_block_forward.2} parent=23 // pred_fallthru
        _
      // Predicated region
      $region33: #{gradual_style_block_forward.2} parent=23 // pred_check
        %p225 = pneg %p84
      $region34: #{gradual_style_block_forward.2} parent=23 // pred_check_branch
        %227 = sbr.rel (%p225) target = $region36
      $region35: #{gradual_style_block_forward.2} parent=23 // pred_region
        %p228 = scmp.lt.s32.totalorder %s12, 1
        %s229 = scalar_select %p228, %s12, 1
        %s230 = smul.addr %s229, 12
        %s231 = smul.addr %s230, 4
        %s232 = scalar_lea.vmem %s2, %s231
      $region36: #{gradual_style_block_forward.2} parent=23 // pred_fallthru
        _
      // Predicated region
      $region37: #{gradual_style_block_forward.2} parent=23 // pred_check
        %p233 = pneg %p110
      $region38: #{gradual_style_block_forward.2} parent=23 // pred_check_branch
        %235 = sbr.rel (%p233) target = $region40
      $region39: #{gradual_style_block_forward.2} parent=23 // pred_region
        %p236 = scmp.lt.s32.totalorder %s12, 1
        %s237 = scalar_select %p236, %s12, 1
        %s238 = smul.addr %s237, 12
        %s239 = smul.addr %s238, 4
        %s240 = scalar_lea.vmem %s3, %s239
      $region40: #{gradual_style_block_forward.2} parent=23 // pred_fallthru
        _
    $region24: #{gradual_style_block_forward.2} parent=5 // pred_fallthru
      _
    %p241 = scmp.le.s32.totalorder 1, %s12
    %p242 = scmp.lt.s32.totalorder %s12, 3
    %p243 = pnand %p241, %p242
    %p244 = pneg %p243
    // Predicated region
    $region41: #{gradual_style_block_forward.2} parent=5 // pred_check
      _
    $region42: #{gradual_style_block_forward.2} parent=5 // pred_check_branch
      %246 = sbr.rel (%p243) target = $region44
    $region43: #{gradual_style_block_forward.2} parent=5 // pred_region
      %s247 = ssub.s32 %s12, 1
      %p248 = scmp.lt.s32.totalorder %s17, 1
      %s249 = scalar_select %p248, %s17, 1
      %s250 = smul.addr %s249, 12
      %s251 = smul.addr %s250, 4
      %s252 = scalar_lea.vmem %s0, %s251
      %p253 = pneg %p38
      %p254 = pneg %p35
      %p255 = scmp.lt.s32.totalorder %s17, 1
      %s256 = scalar_select %p255, %s17, 1
      %s257 = smul.addr %s256, 12
      %s258 = smul.addr %s257, 4
      %s259 = scalar_lea.vmem %s1, %s258
      %p260 = pneg %p64
      %p261 = pneg %p61
      %p262 = scmp.lt.s32.totalorder %s17, 1
      %s263 = scalar_select %p262, %s17, 1
      %s264 = smul.addr %s263, 12
      %s265 = smul.addr %s264, 4
      %s266 = scalar_lea.vmem %s2, %s265
      %p267 = pneg %p90
      %p268 = pneg %p87
      %p269 = scmp.lt.s32.totalorder %s17, 1
      %s270 = scalar_select %p269, %s17, 1
      %s271 = smul.addr %s270, 12
      %s272 = smul.addr %s271, 4
      %s273 = scalar_lea.vmem %s3, %s272
      %p274 = pneg %p116
      %p275 = pneg %p113
      %p276 = pneg %p137
      %p277 = pneg %p134
      %p278 = pneg %p158
      %p279 = pneg %p155
      %p280 = pneg %p184
      %p281 = pneg %p181
      %p282 = scmp.lt.s32.totalorder %s17, 1
      %s283 = scalar_select %p282, %s17, 1
      %s284 = smul.addr %s283, 9
      %s285 = smul.addr %s284, 4
      %s286 = scalar_lea.vmem %s6, %s285
      %p287 = scmp.lt.s32.totalorder %s17, 1
      %s288 = scalar_select %p287, %s17, 1
      %s289 = smul.addr %s288, 12
      %s290 = smul.addr %s289, 4
      %s291 = scalar_lea.vmem %s0, %s290
      %p292 = scmp.lt.s32.totalorder %s17, 1
      %s293 = scalar_select %p292, %s17, 1
      %s294 = smul.addr %s293, 12
      %s295 = smul.addr %s294, 4
      %s296 = scalar_lea.vmem %s1, %s295
      %p297 = scmp.lt.s32.totalorder %s17, 1
      %s298 = scalar_select %p297, %s17, 1
      %s299 = smul.addr %s298, 12
      %s300 = smul.addr %s299, 4
      %s301 = scalar_lea.vmem %s2, %s300
      %p302 = scmp.lt.s32.totalorder %s17, 1
      %s303 = scalar_select %p302, %s17, 1
      %s304 = smul.addr %s303, 12
      %s305 = smul.addr %s304, 4
      %s306 = scalar_lea.vmem %s3, %s305
      %p307 = scmp.lt.s32.totalorder %s17, 1
      %s308 = scalar_select %p307, %s17, 1
      %s309 = smul.addr %s308, 9
      %s310 = smul.addr %s309, 4
      %s311 = scalar_lea.vmem %s6, %s310
      %v313 = vld [vmem:[%s291] sm:$0xf]
      %v314 = vld [vmem:[%s291 + $0x4] sm:$0xf]
      %v315 = vld [vmem:[%s291 + $0x8] sm:$0xf]
      %v316 = vld [vmem:[%s291 + $0xc] sm:$0xf]
      %v317 = vld [vmem:[%s291 + $0x10] sm:$0xf]
      %v318 = vld [vmem:[%s291 + $0x14] sm:$0xf]
      %v319 = vld [vmem:[%s291 + $0x18] sm:$0xf]
      %v320 = vld [vmem:[%s291 + $0x1c] sm:$0xf]
      %v321 = vld [vmem:[%s291 + $0x20] sm:$0xf]
      %v322 = vld [vmem:[%s4] sm:$0xf]
      %v323 = vld [vmem:[%s4 + $0x4] sm:$0xf]
      %v324 = vld [vmem:[%s4 + $0x8] sm:$0xf]
      %v325 = vld [vmem:[%s4 + $0xc] sm:$0xf]
      %v326 = vld [vmem:[%s4 + $0x10] sm:$0xf]
      %v327 = vld [vmem:[%s4 + $0x14] sm:$0xf]
      %v328 = vld [vmem:[%s4 + $0x18] sm:$0xf]
      %v329 = vld [vmem:[%s4 + $0x1c] sm:$0xf]
      %v330 = vld [vmem:[%s4 + $0x20] sm:$0xf]
      %v331 = vld [vmem:[%s4 + $0x24] sm:$0xf]
      %v332 = vld [vmem:[%s4 + $0x28] sm:$0xf]
      %v333 = vld [vmem:[%s4 + $0x2c] sm:$0xf]
      %v334 = vld [vmem:[%s4 + $0x30] sm:$0xf]
      %v335 = vld [vmem:[%s4 + $0x34] sm:$0xf]
      %v336 = vld [vmem:[%s4 + $0x38] sm:$0xf]
      %v337 = vld [vmem:[%s4 + $0x3c] sm:$0xf]
      %v338 = vld [vmem:[%s296] sm:$0xf]
      %v339 = vld [vmem:[%s296 + $0x4] sm:$0xf]
      %v340 = vld [vmem:[%s296 + $0x8] sm:$0xf]
      %v341 = vld [vmem:[%s296 + $0xc] sm:$0xf]
      %v342 = vld [vmem:[%s296 + $0x10] sm:$0xf]
      %v343 = vld [vmem:[%s296 + $0x14] sm:$0xf]
      %v344 = vld [vmem:[%s296 + $0x18] sm:$0xf]
      %v345 = vld [vmem:[%s296 + $0x1c] sm:$0xf]
      %v346 = vld [vmem:[%s296 + $0x20] sm:$0xf]
      %s347 = scalar_lea.vmem %s4, 64
      %v348 = vld [vmem:[%s347] sm:$0xf]
      %v349 = vld [vmem:[%s347 + $0x4] sm:$0xf]
      %v350 = vld [vmem:[%s347 + $0x8] sm:$0xf]
      %v351 = vld [vmem:[%s347 + $0xc] sm:$0xf]
      %v352 = vld [vmem:[%s347 + $0x10] sm:$0xf]
      %v353 = vld [vmem:[%s347 + $0x14] sm:$0xf]
      %v354 = vld [vmem:[%s347 + $0x18] sm:$0xf]
      %v355 = vld [vmem:[%s347 + $0x1c] sm:$0xf]
      %v356 = vld [vmem:[%s347 + $0x20] sm:$0xf]
      %v357 = vld [vmem:[%s347 + $0x24] sm:$0xf]
      %v358 = vld [vmem:[%s347 + $0x28] sm:$0xf]
      %v359 = vld [vmem:[%s347 + $0x2c] sm:$0xf]
      %v360 = vld [vmem:[%s347 + $0x30] sm:$0xf]
      %v361 = vld [vmem:[%s347 + $0x34] sm:$0xf]
      %v362 = vld [vmem:[%s347 + $0x38] sm:$0xf]
      %v363 = vld [vmem:[%s347 + $0x3c] sm:$0xf]
      %v373 = vunpack.c.l.b16 %v338
      %v374 = vunpack.c.l.b16 %v339
      %v375 = vunpack.c.l.b16 %v340
      %v376 = vunpack.c.l.b16 %v341
      %v377 = vunpack.c.l.b16 %v342
      %v378 = vunpack.c.l.b16 %v343
      %v379 = vunpack.c.l.b16 %v344
      %v380 = vunpack.c.l.b16 %v345
      %v381 = vunpack.c.l.b16 %v346
      %v382 = vpack.c.b16 %v374, %v373
      %v383 = vpack.c.b16 %v376, %v375
      %v384 = vpack.c.b16 %v378, %v377
      %v385 = vpack.c.b16 %v380, %v379
      %v386 = vpack.c.b16 %v381, %v381
      %v408 = vunpack.c.l.b16 %v348
      %v409 = vunpack.c.l.b16 %v349
      %v410 = vunpack.c.l.b16 %v350
      %v411 = vunpack.c.l.b16 %v351
      %v412 = vunpack.c.l.b16 %v352
      %v413 = vunpack.c.l.b16 %v353
      %v414 = vunpack.c.l.b16 %v354
      %v415 = vunpack.c.l.b16 %v355
      %v416 = vunpack.c.l.b16 %v356
      %v417 = vunpack.c.l.b16 %v357
      %v418 = vunpack.c.l.b16 %v358
      %v419 = vunpack.c.l.b16 %v359
      %v420 = vunpack.c.l.b16 %v360
      %v421 = vunpack.c.l.b16 %v361
      %v422 = vunpack.c.l.b16 %v362
      %v423 = vunpack.c.l.b16 %v363
      %v424 = vpack.c.b16 %v409, %v408
      %v425 = vpack.c.b16 %v411, %v410
      %v426 = vpack.c.b16 %v413, %v412
      %v427 = vpack.c.b16 %v415, %v414
      %v428 = vpack.c.b16 %v417, %v416
      %v429 = vpack.c.b16 %v419, %v418
      %v430 = vpack.c.b16 %v421, %v420
      %v431 = vpack.c.b16 %v423, %v422
      %440 = vmatprep.subr.bf16.mxu0 0
      %441 = vmatpush1.bf16.msra.mxu0 %v431
      %442 = vmatprep.subr.bf16.mxu0 0
      %443 = vmatpush1.bf16.msra.mxu0 %v430
      %444 = vmatprep.subr.bf16.mxu0 0
      %445 = vmatpush1.bf16.msra.mxu0 %v429
      %446 = vmatprep.subr.bf16.mxu0 0
      %447 = vmatpush1.bf16.msra.mxu0 %v428
      %448 = vmatprep.subr.bf16.mxu0 0
      %449 = vmatpush1.bf16.msra.mxu0 %v427
      %450 = vmatprep.subr.bf16.mxu0 0
      %451 = vmatpush1.bf16.msra.mxu0 %v426
      %452 = vmatprep.subr.bf16.mxu0 0
      %453 = vmatpush1.bf16.msra.mxu0 %v425
      %454 = vmatprep.subr.bf16.mxu0 0
      %455 = vmatpush1.bf16.msra.mxu0 %v424
      %456 = vmatprep.subr.bf16.mxu0 0
      %457 = vmatpush2.bf16.msra.mxu0 0
      %458 = vmatprep.subr.bf16.mxu0 0
      %459 = vmatpush2.bf16.msra.mxu0 0
      %460 = vmatprep.subr.bf16.mxu0 0
      %461 = vmatpush2.bf16.msra.mxu0 0
      %462 = vmatprep.subr.bf16.mxu0 0
      %463 = vmatpush2.bf16.msra.mxu0 0
      %464 = vmatprep.subr.bf16.mxu0 0
      %465 = vmatpush2.bf16.msra.mxu0 0
      %466 = vmatprep.subr.bf16.mxu0 0
      %467 = vmatpush2.bf16.msra.mxu0 0
      %468 = vmatprep.subr.bf16.mxu0 0
      %469 = vmatpush2.bf16.msra.mxu0 0
      %470 = vmatprep.subr.bf16.mxu0 0
      %471 = vmatpush2.bf16.msra.mxu0 0
      %472 = vmatprep.mubr.bf16.mxu0 0
      %473 = vmatmul.mubr.bf16.gmra.mxu0 %v382
      %v474 = vpop.f32.mrf.mxu0
      %v475 = vadd.f32 0.0, %v474
      %v476 = vpop.f32.mrf.mxu0
      %v477 = vpop.f32.mrf.mxu0
      %v478 = vadd.f32 0.0, %v477
      %v479 = vpop.f32.mrf.mxu0
      %480 = vmatprep.mubr.bf16.mxu0 0
      %481 = vmatmul.mubr.bf16.gmra.mxu0 %v383
      %v482 = vpop.f32.mrf.mxu0
      %v483 = vadd.f32 0.0, %v482
      %v484 = vpop.f32.mrf.mxu0
      %v485 = vpop.f32.mrf.mxu0
      %v486 = vadd.f32 0.0, %v485
      %v487 = vpop.f32.mrf.mxu0
      %488 = vmatprep.mubr.bf16.mxu0 0
      %489 = vmatmul.mubr.bf16.gmra.mxu0 %v384
      %v490 = vpop.f32.mrf.mxu0
      %v491 = vadd.f32 0.0, %v490
      %v492 = vpop.f32.mrf.mxu0
      %v493 = vpop.f32.mrf.mxu0
      %v494 = vadd.f32 0.0, %v493
      %v495 = vpop.f32.mrf.mxu0
      %496 = vmatprep.mubr.bf16.mxu0 0
      %497 = vmatmul.mubr.bf16.gmra.mxu0 %v385
      %v498 = vpop.f32.mrf.mxu0
      %v499 = vadd.f32 0.0, %v498
      %v500 = vpop.f32.mrf.mxu0
      %v501 = vpop.f32.mrf.mxu0
      %v502 = vadd.f32 0.0, %v501
      %v503 = vpop.f32.mrf.mxu0
      %504 = vmatprep.mubr.bf16.mxu0 0
      %505 = vmatmul.mubr.bf16.gmra.mxu0 %v386
      %v506 = vpop.f32.mrf.mxu0
      %v507 = vadd.f32 0.0, %v506
      %v508 = vpop.f32.mrf.mxu0
      %v509 = vpop.f32.mrf.mxu0
      %v510 = vpop.f32.mrf.mxu0
      %511 = vdwg.mxu0
      %v521 = vunpack.c.l.b16 %v313
      %v522 = vunpack.c.l.b16 %v314
      %v523 = vunpack.c.l.b16 %v315
      %v524 = vunpack.c.l.b16 %v316
      %v525 = vunpack.c.l.b16 %v317
      %v526 = vunpack.c.l.b16 %v318
      %v527 = vunpack.c.l.b16 %v319
      %v528 = vunpack.c.l.b16 %v320
      %v529 = vunpack.c.l.b16 %v321
      %v530 = vpack.c.b16 %v522, %v521
      %v531 = vpack.c.b16 %v524, %v523
      %v532 = vpack.c.b16 %v526, %v525
      %v533 = vpack.c.b16 %v528, %v527
      %v534 = vpack.c.b16 %v529, %v529
      %v556 = vunpack.c.l.b16 %v322
      %v557 = vunpack.c.l.b16 %v323
      %v558 = vunpack.c.l.b16 %v324
      %v559 = vunpack.c.l.b16 %v325
      %v560 = vunpack.c.l.b16 %v326
      %v561 = vunpack.c.l.b16 %v327
      %v562 = vunpack.c.l.b16 %v328
      %v563 = vunpack.c.l.b16 %v329
      %v564 = vunpack.c.l.b16 %v330
      %v565 = vunpack.c.l.b16 %v331
      %v566 = vunpack.c.l.b16 %v332
      %v567 = vunpack.c.l.b16 %v333
      %v568 = vunpack.c.l.b16 %v334
      %v569 = vunpack.c.l.b16 %v335
      %v570 = vunpack.c.l.b16 %v336
      %v571 = vunpack.c.l.b16 %v337
      %v572 = vpack.c.b16 %v557, %v556
      %v573 = vpack.c.b16 %v559, %v558
      %v574 = vpack.c.b16 %v561, %v560
      %v575 = vpack.c.b16 %v563, %v562
      %v576 = vpack.c.b16 %v565, %v564
      %v577 = vpack.c.b16 %v567, %v566
      %v578 = vpack.c.b16 %v569, %v568
      %v579 = vpack.c.b16 %v571, %v570
      %588 = vmatprep.subr.bf16.mxu0 0
      %589 = vmatpush1.bf16.msra.mxu0 %v579
      %590 = vmatprep.subr.bf16.mxu0 0
      %591 = vmatpush1.bf16.msra.mxu0 %v578
      %592 = vmatprep.subr.bf16.mxu0 0
      %593 = vmatpush1.bf16.msra.mxu0 %v577
      %594 = vmatprep.subr.bf16.mxu0 0
      %595 = vmatpush1.bf16.msra.mxu0 %v576
      %596 = vmatprep.subr.bf16.mxu0 0
      %597 = vmatpush1.bf16.msra.mxu0 %v575
      %598 = vmatprep.subr.bf16.mxu0 0
      %599 = vmatpush1.bf16.msra.mxu0 %v574
      %600 = vmatprep.subr.bf16.mxu0 0
      %601 = vmatpush1.bf16.msra.mxu0 %v573
      %602 = vmatprep.subr.bf16.mxu0 0
      %603 = vmatpush1.bf16.msra.mxu0 %v572
      %604 = vmatprep.subr.bf16.mxu0 0
      %605 = vmatpush2.bf16.msra.mxu0 0
      %606 = vmatprep.subr.bf16.mxu0 0
      %607 = vmatpush2.bf16.msra.mxu0 0
      %608 = vmatprep.subr.bf16.mxu0 0
      %609 = vmatpush2.bf16.msra.mxu0 0
      %610 = vmatprep.subr.bf16.mxu0 0
      %611 = vmatpush2.bf16.msra.mxu0 0
      %612 = vmatprep.subr.bf16.mxu0 0
      %613 = vmatpush2.bf16.msra.mxu0 0
      %614 = vmatprep.subr.bf16.mxu0 0
      %615 = vmatpush2.bf16.msra.mxu0 0
      %616 = vmatprep.subr.bf16.mxu0 0
      %617 = vmatpush2.bf16.msra.mxu0 0
      %618 = vmatprep.subr.bf16.mxu0 0
      %619 = vmatpush2.bf16.msra.mxu0 0
      %620 = vmatprep.mubr.bf16.mxu0 0
      %621 = vmatmul.mubr.bf16.gmra.mxu0 %v530
      %v622 = vpop.f32.mrf.mxu0
      %v623 = vadd.f32 %v475, %v622
      %v624 = vpop.f32.mrf.mxu0
      %v625 = vpop.f32.mrf.mxu0
      %v626 = vadd.f32 %v478, %v625
      %v627 = vpop.f32.mrf.mxu0
      %628 = vmatprep.mubr.bf16.mxu0 0
      %629 = vmatmul.mubr.bf16.gmra.mxu0 %v531
      %v630 = vpop.f32.mrf.mxu0
      %v631 = vadd.f32 %v483, %v630
      %v632 = vpop.f32.mrf.mxu0
      %v633 = vpop.f32.mrf.mxu0
      %v634 = vadd.f32 %v486, %v633
      %v635 = vpop.f32.mrf.mxu0
      %636 = vmatprep.mubr.bf16.mxu0 0
      %637 = vmatmul.mubr.bf16.gmra.mxu0 %v532
      %v638 = vpop.f32.mrf.mxu0
      %v639 = vadd.f32 %v491, %v638
      %v640 = vpop.f32.mrf.mxu0
      %v641 = vpop.f32.mrf.mxu0
      %v642 = vadd.f32 %v494, %v641
      %v643 = vpop.f32.mrf.mxu0
      %644 = vmatprep.mubr.bf16.mxu0 0
      %645 = vmatmul.mubr.bf16.gmra.mxu0 %v533
      %v646 = vpop.f32.mrf.mxu0
      %v647 = vadd.f32 %v499, %v646
      %v648 = vpop.f32.mrf.mxu0
      %v649 = vpop.f32.mrf.mxu0
      %v650 = vadd.f32 %v502, %v649
      %v651 = vpop.f32.mrf.mxu0
      %652 = vmatprep.mubr.bf16.mxu0 0
      %653 = vmatmul.mubr.bf16.gmra.mxu0 %v534
      %v654 = vpop.f32.mrf.mxu0
      %v655 = vadd.f32 %v507, %v654
      %v656 = vpop.f32.mrf.mxu0
      %v657 = vpop.f32.mrf.mxu0
      %v658 = vpop.f32.mrf.mxu0
      %659 = vdwg.mxu0
      %v660 = vld [vmem:[%s291] sm:$0xf]
      %v661 = vld [vmem:[%s291 + $0x4] sm:$0xf]
      %v662 = vld [vmem:[%s291 + $0x8] sm:$0xf]
      %v663 = vld [vmem:[%s291 + $0xc] sm:$0xf]
      %v664 = vld [vmem:[%s291 + $0x10] sm:$0xf]
      %v665 = vld [vmem:[%s291 + $0x14] sm:$0xf]
      %v666 = vld [vmem:[%s291 + $0x18] sm:$0xf]
      %v667 = vld [vmem:[%s291 + $0x1c] sm:$0xf]
      %v668 = vld [vmem:[%s291 + $0x20] sm:$0xf]
      %v669 = vld [vmem:[%s291 + $0x24] sm:$0x1]
      %s670 = scalar_lea.vmem %s4, 128
      %v671 = vld [vmem:[%s670] sm:$0xf]
      %v672 = vld [vmem:[%s670 + $0x4] sm:$0xf]
      %v673 = vld [vmem:[%s670 + $0x8] sm:$0xf]
      %v674 = vld [vmem:[%s670 + $0xc] sm:$0xf]
      %v675 = vld [vmem:[%s670 + $0x10] sm:$0xf]
      %v676 = vld [vmem:[%s670 + $0x14] sm:$0xf]
      %v677 = vld [vmem:[%s670 + $0x18] sm:$0xf]
      %v678 = vld [vmem:[%s670 + $0x1c] sm:$0xf]
      %v679 = vld [vmem:[%s670 + $0x20] sm:$0xf]
      %v680 = vld [vmem:[%s670 + $0x24] sm:$0xf]
      %v681 = vld [vmem:[%s670 + $0x28] sm:$0xf]
      %v682 = vld [vmem:[%s670 + $0x2c] sm:$0xf]
      %v683 = vld [vmem:[%s670 + $0x30] sm:$0xf]
      %v684 = vld [vmem:[%s670 + $0x34] sm:$0xf]
      %v685 = vld [vmem:[%s670 + $0x38] sm:$0xf]
      %v686 = vld [vmem:[%s670 + $0x3c] sm:$0xf]
      %v697 = vunpack.c.l.b16 %v660
      %v698 = vunpack.c.l.b16 %v661
      %v699 = vunpack.c.l.b16 %v662
      %v700 = vunpack.c.l.b16 %v663
      %v701 = vunpack.c.l.b16 %v664
      %v702 = vunpack.c.l.b16 %v665
      %v703 = vunpack.c.l.b16 %v666
      %v704 = vunpack.c.l.b16 %v667
      %v705 = vunpack.c.l.b16 %v668
      %v706 = vunpack.c.l.b16 %v669
      %v707 = vpack.c.b16 %v698, %v697
      %v708 = vpack.c.b16 %v700, %v699
      %v709 = vpack.c.b16 %v702, %v701
      %v710 = vpack.c.b16 %v704, %v703
      %v711 = vpack.c.b16 %v706, %v705
      %vm712 = vsmask.f32 7424
      %v714 = vshrl.u32 %v707, 16
      %v716 = vshll.u32 %v707, 16
      %v718 = vrot.slane %v716, 1
      %v719 = vor.u32 %v714, %v718
      %v721 = vshll.u32 %v708, 16
      %v723 = vrot.slane %v721, 1
      %v724 = vsel %vm712, %v719, %v723
      %v725 = vshrl.u32 %v708, 16
      %v727 = vor.u32 %v725, %v723
      %v729 = vshll.u32 %v709, 16
      %v731 = vrot.slane %v729, 1
      %v732 = vsel %vm712, %v727, %v731
      %v733 = vshrl.u32 %v709, 16
      %v735 = vor.u32 %v733, %v731
      %v737 = vshll.u32 %v710, 16
      %v739 = vrot.slane %v737, 1
      %v740 = vsel %vm712, %v735, %v739
      %v741 = vshrl.u32 %v710, 16
      %v743 = vor.u32 %v741, %v739
      %v745 = vshll.u32 %v711, 16
      %v747 = vrot.slane %v745, 1
      %v748 = vsel %vm712, %v743, %v747
      %v749 = vshrl.u32 %v711, 16
      %v751 = vor.u32 %v749, %v747
      %v773 = vunpack.c.l.b16 %v671
      %v774 = vunpack.c.l.b16 %v672
      %v775 = vunpack.c.l.b16 %v673
      %v776 = vunpack.c.l.b16 %v674
      %v777 = vunpack.c.l.b16 %v675
      %v778 = vunpack.c.l.b16 %v676
      %v779 = vunpack.c.l.b16 %v677
      %v780 = vunpack.c.l.b16 %v678
      %v781 = vunpack.c.l.b16 %v679
      %v782 = vunpack.c.l.b16 %v680
      %v783 = vunpack.c.l.b16 %v681
      %v784 = vunpack.c.l.b16 %v682
      %v785 = vunpack.c.l.b16 %v683
      %v786 = vunpack.c.l.b16 %v684
      %v787 = vunpack.c.l.b16 %v685
      %v788 = vunpack.c.l.b16 %v686
      %v789 = vpack.c.b16 %v774, %v773
      %v790 = vpack.c.b16 %v776, %v775
      %v791 = vpack.c.b16 %v778, %v777
      %v792 = vpack.c.b16 %v780, %v779
      %v793 = vpack.c.b16 %v782, %v781
      %v794 = vpack.c.b16 %v784, %v783
      %v795 = vpack.c.b16 %v786, %v785
      %v796 = vpack.c.b16 %v788, %v787
      %805 = vmatprep.subr.bf16.mxu0 0
      %806 = vmatpush1.bf16.msra.mxu0 %v796
      %807 = vmatprep.subr.bf16.mxu0 0
      %808 = vmatpush1.bf16.msra.mxu0 %v795
      %809 = vmatprep.subr.bf16.mxu0 0
      %810 = vmatpush1.bf16.msra.mxu0 %v794
      %811 = vmatprep.subr.bf16.mxu0 0
      %812 = vmatpush1.bf16.msra.mxu0 %v793
      %813 = vmatprep.subr.bf16.mxu0 0
      %814 = vmatpush1.bf16.msra.mxu0 %v792
      %815 = vmatprep.subr.bf16.mxu0 0
      %816 = vmatpush1.bf16.msra.mxu0 %v791
      %817 = vmatprep.subr.bf16.mxu0 0
      %818 = vmatpush1.bf16.msra.mxu0 %v790
      %819 = vmatprep.subr.bf16.mxu0 0
      %820 = vmatpush1.bf16.msra.mxu0 %v789
      %821 = vmatprep.subr.bf16.mxu0 0
      %822 = vmatpush2.bf16.msra.mxu0 0
      %823 = vmatprep.subr.bf16.mxu0 0
      %824 = vmatpush2.bf16.msra.mxu0 0
      %825 = vmatprep.subr.bf16.mxu0 0
      %826 = vmatpush2.bf16.msra.mxu0 0
      %827 = vmatprep.subr.bf16.mxu0 0
      %828 = vmatpush2.bf16.msra.mxu0 0
      %829 = vmatprep.subr.bf16.mxu0 0
      %830 = vmatpush2.bf16.msra.mxu0 0
      %831 = vmatprep.subr.bf16.mxu0 0
      %832 = vmatpush2.bf16.msra.mxu0 0
      %833 = vmatprep.subr.bf16.mxu0 0
      %834 = vmatpush2.bf16.msra.mxu0 0
      %835 = vmatprep.subr.bf16.mxu0 0
      %836 = vmatpush2.bf16.msra.mxu0 0
      %837 = vmatprep.mubr.bf16.mxu0 0
      %838 = vmatmul.mubr.bf16.gmra.mxu0 %v724
      %v839 = vpop.f32.mrf.mxu0
      %v840 = vadd.f32 0.0, %v839
      %v841 = vpop.f32.mrf.mxu0
      %v842 = vpop.f32.mrf.mxu0
      %v843 = vadd.f32 0.0, %v842
      %v844 = vpop.f32.mrf.mxu0
      %845 = vmatprep.mubr.bf16.mxu0 0
      %846 = vmatmul.mubr.bf16.gmra.mxu0 %v732
      %v847 = vpop.f32.mrf.mxu0
      %v848 = vadd.f32 0.0, %v847
      %v849 = vpop.f32.mrf.mxu0
      %v850 = vpop.f32.mrf.mxu0
      %v851 = vadd.f32 0.0, %v850
      %v852 = vpop.f32.mrf.mxu0
      %853 = vmatprep.mubr.bf16.mxu0 0
      %854 = vmatmul.mubr.bf16.gmra.mxu0 %v740
      %v855 = vpop.f32.mrf.mxu0
      %v856 = vadd.f32 0.0, %v855
      %v857 = vpop.f32.mrf.mxu0
      %v858 = vpop.f32.mrf.mxu0
      %v859 = vadd.f32 0.0, %v858
      %v860 = vpop.f32.mrf.mxu0
      %861 = vmatprep.mubr.bf16.mxu0 0
      %862 = vmatmul.mubr.bf16.gmra.mxu0 %v748
      %v863 = vpop.f32.mrf.mxu0
      %v864 = vadd.f32 0.0, %v863
      %v865 = vpop.f32.mrf.mxu0
      %v866 = vpop.f32.mrf.mxu0
      %v867 = vadd.f32 0.0, %v866
      %v868 = vpop.f32.mrf.mxu0
      %869 = vmatprep.mubr.bf16.mxu0 0
      %870 = vmatmul.mubr.bf16.gmra.mxu0 %v751
      %v871 = vpop.f32.mrf.mxu0
      %v872 = vadd.f32 0.0, %v871
      %v873 = vpop.f32.mrf.mxu0
      %v874 = vpop.f32.mrf.mxu0
      %v875 = vpop.f32.mrf.mxu0
      %876 = vdwg.mxu0
      %v877 = vadd.f32 %v623, %v840
      %v878 = vadd.f32 %v626, %v843
      %v879 = vadd.f32 %v631, %v848
      %v880 = vadd.f32 %v634, %v851
      %v881 = vadd.f32 %v639, %v856
      %v882 = vadd.f32 %v642, %v859
      %v883 = vadd.f32 %v647, %v864
      %v884 = vadd.f32 %v650, %v867
      %v885 = vadd.f32 %v655, %v872
      %v886 = vld [vmem:[%s301] sm:$0xf]
      %v887 = vld [vmem:[%s301 + $0x4] sm:$0xf]
      %v888 = vld [vmem:[%s301 + $0x8] sm:$0xf]
      %v889 = vld [vmem:[%s301 + $0xc] sm:$0xf]
      %v890 = vld [vmem:[%s301 + $0x10] sm:$0xf]
      %v891 = vld [vmem:[%s301 + $0x14] sm:$0xf]
      %v892 = vld [vmem:[%s301 + $0x18] sm:$0xf]
      %v893 = vld [vmem:[%s301 + $0x1c] sm:$0xf]
      %v894 = vld [vmem:[%s301 + $0x20] sm:$0xf]
      %s895 = scalar_lea.vmem %s4, 192
      %v896 = vld [vmem:[%s895] sm:$0xf]
      %v897 = vld [vmem:[%s895 + $0x4] sm:$0xf]
      %v898 = vld [vmem:[%s895 + $0x8] sm:$0xf]
      %v899 = vld [vmem:[%s895 + $0xc] sm:$0xf]
      %v900 = vld [vmem:[%s895 + $0x10] sm:$0xf]
      %v901 = vld [vmem:[%s895 + $0x14] sm:$0xf]
      %v902 = vld [vmem:[%s895 + $0x18] sm:$0xf]
      %v903 = vld [vmem:[%s895 + $0x1c] sm:$0xf]
      %v904 = vld [vmem:[%s895 + $0x20] sm:$0xf]
      %v905 = vld [vmem:[%s895 + $0x24] sm:$0xf]
      %v906 = vld [vmem:[%s895 + $0x28] sm:$0xf]
      %v907 = vld [vmem:[%s895 + $0x2c] sm:$0xf]
      %v908 = vld [vmem:[%s895 + $0x30] sm:$0xf]
      %v909 = vld [vmem:[%s895 + $0x34] sm:$0xf]
      %v910 = vld [vmem:[%s895 + $0x38] sm:$0xf]
      %v911 = vld [vmem:[%s895 + $0x3c] sm:$0xf]
      %v921 = vunpack.c.l.b16 %v886
      %v922 = vunpack.c.l.b16 %v887
      %v923 = vunpack.c.l.b16 %v888
      %v924 = vunpack.c.l.b16 %v889
      %v925 = vunpack.c.l.b16 %v890
      %v926 = vunpack.c.l.b16 %v891
      %v927 = vunpack.c.l.b16 %v892
      %v928 = vunpack.c.l.b16 %v893
      %v929 = vunpack.c.l.b16 %v894
      %v930 = vpack.c.b16 %v922, %v921
      %v931 = vpack.c.b16 %v924, %v923
      %v932 = vpack.c.b16 %v926, %v925
      %v933 = vpack.c.b16 %v928, %v927
      %v934 = vpack.c.b16 %v929, %v929
      %v956 = vunpack.c.l.b16 %v896
      %v957 = vunpack.c.l.b16 %v897
      %v958 = vunpack.c.l.b16 %v898
      %v959 = vunpack.c.l.b16 %v899
      %v960 = vunpack.c.l.b16 %v900
      %v961 = vunpack.c.l.b16 %v901
      %v962 = vunpack.c.l.b16 %v902
      %v963 = vunpack.c.l.b16 %v903
      %v964 = vunpack.c.l.b16 %v904
      %v965 = vunpack.c.l.b16 %v905
      %v966 = vunpack.c.l.b16 %v906
      %v967 = vunpack.c.l.b16 %v907
      %v968 = vunpack.c.l.b16 %v908
      %v969 = vunpack.c.l.b16 %v909
      %v970 = vunpack.c.l.b16 %v910
      %v971 = vunpack.c.l.b16 %v911
      %v972 = vpack.c.b16 %v957, %v956
      %v973 = vpack.c.b16 %v959, %v958
      %v974 = vpack.c.b16 %v961, %v960
      %v975 = vpack.c.b16 %v963, %v962
      %v976 = vpack.c.b16 %v965, %v964
      %v977 = vpack.c.b16 %v967, %v966
      %v978 = vpack.c.b16 %v969, %v968
      %v979 = vpack.c.b16 %v971, %v970
      %988 = vmatprep.subr.bf16.mxu0 0
      %989 = vmatpush1.bf16.msra.mxu0 %v979
      %990 = vmatprep.subr.bf16.mxu0 0
      %991 = vmatpush1.bf16.msra.mxu0 %v978
      %992 = vmatprep.subr.bf16.mxu0 0
      %993 = vmatpush1.bf16.msra.mxu0 %v977
      %994 = vmatprep.subr.bf16.mxu0 0
      %995 = vmatpush1.bf16.msra.mxu0 %v976
      %996 = vmatprep.subr.bf16.mxu0 0
      %997 = vmatpush1.bf16.msra.mxu0 %v975
      %998 = vmatprep.subr.bf16.mxu0 0
      %999 = vmatpush1.bf16.msra.mxu0 %v974
      %1000 = vmatprep.subr.bf16.mxu0 0
      %1001 = vmatpush1.bf16.msra.mxu0 %v973
      %1002 = vmatprep.subr.bf16.mxu0 0
      %1003 = vmatpush1.bf16.msra.mxu0 %v972
      %1004 = vmatprep.subr.bf16.mxu0 0
      %1005 = vmatpush2.bf16.msra.mxu0 0
      %1006 = vmatprep.subr.bf16.mxu0 0
      %1007 = vmatpush2.bf16.msra.mxu0 0
      %1008 = vmatprep.subr.bf16.mxu0 0
      %1009 = vmatpush2.bf16.msra.mxu0 0
      %1010 = vmatprep.subr.bf16.mxu0 0
      %1011 = vmatpush2.bf16.msra.mxu0 0
      %1012 = vmatprep.subr.bf16.mxu0 0
      %1013 = vmatpush2.bf16.msra.mxu0 0
      %1014 = vmatprep.subr.bf16.mxu0 0
      %1015 = vmatpush2.bf16.msra.mxu0 0
      %1016 = vmatprep.subr.bf16.mxu0 0
      %1017 = vmatpush2.bf16.msra.mxu0 0
      %1018 = vmatprep.subr.bf16.mxu0 0
      %1019 = vmatpush2.bf16.msra.mxu0 0
      %1020 = vmatprep.mubr.bf16.mxu0 0
      %1021 = vmatmul.mubr.bf16.gmra.mxu0 %v930
      %v1022 = vpop.f32.mrf.mxu0
      %v1023 = vadd.f32 0.0, %v1022
      %v1024 = vpop.f32.mrf.mxu0
      %v1025 = vpop.f32.mrf.mxu0
      %v1026 = vadd.f32 0.0, %v1025
      %v1027 = vpop.f32.mrf.mxu0
      %1028 = vmatprep.mubr.bf16.mxu0 0
      %1029 = vmatmul.mubr.bf16.gmra.mxu0 %v931
      %v1030 = vpop.f32.mrf.mxu0
      %v1031 = vadd.f32 0.0, %v1030
      %v1032 = vpop.f32.mrf.mxu0
      %v1033 = vpop.f32.mrf.mxu0
      %v1034 = vadd.f32 0.0, %v1033
      %v1035 = vpop.f32.mrf.mxu0
      %1036 = vmatprep.mubr.bf16.mxu0 0
      %1037 = vmatmul.mubr.bf16.gmra.mxu0 %v932
      %v1038 = vpop.f32.mrf.mxu0
      %v1039 = vadd.f32 0.0, %v1038
      %v1040 = vpop.f32.mrf.mxu0
      %v1041 = vpop.f32.mrf.mxu0
      %v1042 = vadd.f32 0.0, %v1041
      %v1043 = vpop.f32.mrf.mxu0
      %1044 = vmatprep.mubr.bf16.mxu0 0
      %1045 = vmatmul.mubr.bf16.gmra.mxu0 %v933
      %v1046 = vpop.f32.mrf.mxu0
      %v1047 = vadd.f32 0.0, %v1046
      %v1048 = vpop.f32.mrf.mxu0
      %v1049 = vpop.f32.mrf.mxu0
      %v1050 = vadd.f32 0.0, %v1049
      %v1051 = vpop.f32.mrf.mxu0
      %1052 = vmatprep.mubr.bf16.mxu0 0
      %1053 = vmatmul.mubr.bf16.gmra.mxu0 %v934
      %v1054 = vpop.f32.mrf.mxu0
      %v1055 = vadd.f32 0.0, %v1054
      %v1056 = vpop.f32.mrf.mxu0
      %v1057 = vpop.f32.mrf.mxu0
      %v1058 = vpop.f32.mrf.mxu0
      %1059 = vdwg.mxu0
      %v1060 = vadd.f32 %v877, %v1023
      %v1061 = vadd.f32 %v878, %v1026
      %v1062 = vadd.f32 %v879, %v1031
      %v1063 = vadd.f32 %v880, %v1034
      %v1064 = vadd.f32 %v881, %v1039
      %v1065 = vadd.f32 %v882, %v1042
      %v1066 = vadd.f32 %v883, %v1047
      %v1067 = vadd.f32 %v884, %v1050
      %v1068 = vadd.f32 %v885, %v1055
      %v1069 = vld [vmem:[%s306] sm:$0xf]
      %v1070 = vld [vmem:[%s306 + $0x4] sm:$0xf]
      %v1071 = vld [vmem:[%s306 + $0x8] sm:$0xf]
      %v1072 = vld [vmem:[%s306 + $0xc] sm:$0xf]
      %v1073 = vld [vmem:[%s306 + $0x10] sm:$0xf]
      %v1074 = vld [vmem:[%s306 + $0x14] sm:$0xf]
      %v1075 = vld [vmem:[%s306 + $0x18] sm:$0xf]
      %v1076 = vld [vmem:[%s306 + $0x1c] sm:$0xf]
      %v1077 = vld [vmem:[%s306 + $0x20] sm:$0xf]
      %s1078 = scalar_lea.vmem %s4, 256
      %v1079 = vld [vmem:[%s1078] sm:$0xf]
      %v1080 = vld [vmem:[%s1078 + $0x4] sm:$0xf]
      %v1081 = vld [vmem:[%s1078 + $0x8] sm:$0xf]
      %v1082 = vld [vmem:[%s1078 + $0xc] sm:$0xf]
      %v1083 = vld [vmem:[%s1078 + $0x10] sm:$0xf]
      %v1084 = vld [vmem:[%s1078 + $0x14] sm:$0xf]
      %v1085 = vld [vmem:[%s1078 + $0x18] sm:$0xf]
      %v1086 = vld [vmem:[%s1078 + $0x1c] sm:$0xf]
      %v1087 = vld [vmem:[%s1078 + $0x20] sm:$0xf]
      %v1088 = vld [vmem:[%s1078 + $0x24] sm:$0xf]
      %v1089 = vld [vmem:[%s1078 + $0x28] sm:$0xf]
      %v1090 = vld [vmem:[%s1078 + $0x2c] sm:$0xf]
      %v1091 = vld [vmem:[%s1078 + $0x30] sm:$0xf]
      %v1092 = vld [vmem:[%s1078 + $0x34] sm:$0xf]
      %v1093 = vld [vmem:[%s1078 + $0x38] sm:$0xf]
      %v1094 = vld [vmem:[%s1078 + $0x3c] sm:$0xf]
      %v1104 = vunpack.c.l.b16 %v1069
      %v1105 = vunpack.c.l.b16 %v1070
      %v1106 = vunpack.c.l.b16 %v1071
      %v1107 = vunpack.c.l.b16 %v1072
      %v1108 = vunpack.c.l.b16 %v1073
      %v1109 = vunpack.c.l.b16 %v1074
      %v1110 = vunpack.c.l.b16 %v1075
      %v1111 = vunpack.c.l.b16 %v1076
      %v1112 = vunpack.c.l.b16 %v1077
      %v1113 = vpack.c.b16 %v1105, %v1104
      %v1114 = vpack.c.b16 %v1107, %v1106
      %v1115 = vpack.c.b16 %v1109, %v1108
      %v1116 = vpack.c.b16 %v1111, %v1110
      %v1117 = vpack.c.b16 %v1112, %v1112
      %v1139 = vunpack.c.l.b16 %v1079
      %v1140 = vunpack.c.l.b16 %v1080
      %v1141 = vunpack.c.l.b16 %v1081
      %v1142 = vunpack.c.l.b16 %v1082
      %v1143 = vunpack.c.l.b16 %v1083
      %v1144 = vunpack.c.l.b16 %v1084
      %v1145 = vunpack.c.l.b16 %v1085
      %v1146 = vunpack.c.l.b16 %v1086
      %v1147 = vunpack.c.l.b16 %v1087
      %v1148 = vunpack.c.l.b16 %v1088
      %v1149 = vunpack.c.l.b16 %v1089
      %v1150 = vunpack.c.l.b16 %v1090
      %v1151 = vunpack.c.l.b16 %v1091
      %v1152 = vunpack.c.l.b16 %v1092
      %v1153 = vunpack.c.l.b16 %v1093
      %v1154 = vunpack.c.l.b16 %v1094
      %v1155 = vpack.c.b16 %v1140, %v1139
      %v1156 = vpack.c.b16 %v1142, %v1141
      %v1157 = vpack.c.b16 %v1144, %v1143
      %v1158 = vpack.c.b16 %v1146, %v1145
      %v1159 = vpack.c.b16 %v1148, %v1147
      %v1160 = vpack.c.b16 %v1150, %v1149
      %v1161 = vpack.c.b16 %v1152, %v1151
      %v1162 = vpack.c.b16 %v1154, %v1153
      %1171 = vmatprep.subr.bf16.mxu0 0
      %1172 = vmatpush1.bf16.msra.mxu0 %v1162
      %1173 = vmatprep.subr.bf16.mxu0 0
      %1174 = vmatpush1.bf16.msra.mxu0 %v1161
      %1175 = vmatprep.subr.bf16.mxu0 0
      %1176 = vmatpush1.bf16.msra.mxu0 %v1160
      %1177 = vmatprep.subr.bf16.mxu0 0
      %1178 = vmatpush1.bf16.msra.mxu0 %v1159
      %1179 = vmatprep.subr.bf16.mxu0 0
      %1180 = vmatpush1.bf16.msra.mxu0 %v1158
      %1181 = vmatprep.subr.bf16.mxu0 0
      %1182 = vmatpush1.bf16.msra.mxu0 %v1157
      %1183 = vmatprep.subr.bf16.mxu0 0
      %1184 = vmatpush1.bf16.msra.mxu0 %v1156
      %1185 = vmatprep.subr.bf16.mxu0 0
      %1186 = vmatpush1.bf16.msra.mxu0 %v1155
      %1187 = vmatprep.subr.bf16.mxu0 0
      %1188 = vmatpush2.bf16.msra.mxu0 0
      %1189 = vmatprep.subr.bf16.mxu0 0
      %1190 = vmatpush2.bf16.msra.mxu0 0
      %1191 = vmatprep.subr.bf16.mxu0 0
      %1192 = vmatpush2.bf16.msra.mxu0 0
      %1193 = vmatprep.subr.bf16.mxu0 0
      %1194 = vmatpush2.bf16.msra.mxu0 0
      %1195 = vmatprep.subr.bf16.mxu0 0
      %1196 = vmatpush2.bf16.msra.mxu0 0
      %1197 = vmatprep.subr.bf16.mxu0 0
      %1198 = vmatpush2.bf16.msra.mxu0 0
      %1199 = vmatprep.subr.bf16.mxu0 0
      %1200 = vmatpush2.bf16.msra.mxu0 0
      %1201 = vmatprep.subr.bf16.mxu0 0
      %1202 = vmatpush2.bf16.msra.mxu0 0
      %1203 = vmatprep.mubr.bf16.mxu0 0
      %1204 = vmatmul.mubr.bf16.gmra.mxu0 %v1113
      %v1205 = vpop.f32.mrf.mxu0
      %v1206 = vadd.f32 0.0, %v1205
      %v1207 = vpop.f32.mrf.mxu0
      %v1208 = vpop.f32.mrf.mxu0
      %v1209 = vadd.f32 0.0, %v1208
      %v1210 = vpop.f32.mrf.mxu0
      %1211 = vmatprep.mubr.bf16.mxu0 0
      %1212 = vmatmul.mubr.bf16.gmra.mxu0 %v1114
      %v1213 = vpop.f32.mrf.mxu0
      %v1214 = vadd.f32 0.0, %v1213
      %v1215 = vpop.f32.mrf.mxu0
      %v1216 = vpop.f32.mrf.mxu0
      %v1217 = vadd.f32 0.0, %v1216
      %v1218 = vpop.f32.mrf.mxu0
      %1219 = vmatprep.mubr.bf16.mxu0 0
      %1220 = vmatmul.mubr.bf16.gmra.mxu0 %v1115
      %v1221 = vpop.f32.mrf.mxu0
      %v1222 = vadd.f32 0.0, %v1221
      %v1223 = vpop.f32.mrf.mxu0
      %v1224 = vpop.f32.mrf.mxu0
      %v1225 = vadd.f32 0.0, %v1224
      %v1226 = vpop.f32.mrf.mxu0
      %1227 = vmatprep.mubr.bf16.mxu0 0
      %1228 = vmatmul.mubr.bf16.gmra.mxu0 %v1116
      %v1229 = vpop.f32.mrf.mxu0
      %v1230 = vadd.f32 0.0, %v1229
      %v1231 = vpop.f32.mrf.mxu0
      %v1232 = vpop.f32.mrf.mxu0
      %v1233 = vadd.f32 0.0, %v1232
      %v1234 = vpop.f32.mrf.mxu0
      %1235 = vmatprep.mubr.bf16.mxu0 0
      %1236 = vmatmul.mubr.bf16.gmra.mxu0 %v1117
      %v1237 = vpop.f32.mrf.mxu0
      %v1238 = vadd.f32 0.0, %v1237
      %v1239 = vpop.f32.mrf.mxu0
      %v1240 = vpop.f32.mrf.mxu0
      %v1241 = vpop.f32.mrf.mxu0
      %1242 = vdwg.mxu0
      %v1243 = vadd.f32 %v1060, %v1206
      %v1244 = vadd.f32 %v1061, %v1209
      %v1245 = vadd.f32 %v1062, %v1214
      %v1246 = vadd.f32 %v1063, %v1217
      %v1247 = vadd.f32 %v1064, %v1222
      %v1248 = vadd.f32 %v1065, %v1225
      %v1249 = vadd.f32 %v1066, %v1230
      %v1250 = vadd.f32 %v1067, %v1233
      %v1251 = vadd.f32 %v1068, %v1238
      %v1252 = vld [vmem:[%s301] sm:$0xf]
      %v1253 = vld [vmem:[%s301 + $0x4] sm:$0xf]
      %v1254 = vld [vmem:[%s301 + $0x8] sm:$0xf]
      %v1255 = vld [vmem:[%s301 + $0xc] sm:$0xf]
      %v1256 = vld [vmem:[%s301 + $0x10] sm:$0xf]
      %v1257 = vld [vmem:[%s301 + $0x14] sm:$0xf]
      %v1258 = vld [vmem:[%s301 + $0x18] sm:$0xf]
      %v1259 = vld [vmem:[%s301 + $0x1c] sm:$0xf]
      %v1260 = vld [vmem:[%s301 + $0x20] sm:$0xf]
      %v1261 = vld [vmem:[%s301 + $0x24] sm:$0x1]
      %s1262 = scalar_lea.vmem %s4, 320
      %v1263 = vld [vmem:[%s1262] sm:$0xf]
      %v1264 = vld [vmem:[%s1262 + $0x4] sm:$0xf]
      %v1265 = vld [vmem:[%s1262 + $0x8] sm:$0xf]
      %v1266 = vld [vmem:[%s1262 + $0xc] sm:$0xf]
      %v1267 = vld [vmem:[%s1262 + $0x10] sm:$0xf]
      %v1268 = vld [vmem:[%s1262 + $0x14] sm:$0xf]
      %v1269 = vld [vmem:[%s1262 + $0x18] sm:$0xf]
      %v1270 = vld [vmem:[%s1262 + $0x1c] sm:$0xf]
      %v1271 = vld [vmem:[%s1262 + $0x20] sm:$0xf]
      %v1272 = vld [vmem:[%s1262 + $0x24] sm:$0xf]
      %v1273 = vld [vmem:[%s1262 + $0x28] sm:$0xf]
      %v1274 = vld [vmem:[%s1262 + $0x2c] sm:$0xf]
      %v1275 = vld [vmem:[%s1262 + $0x30] sm:$0xf]
      %v1276 = vld [vmem:[%s1262 + $0x34] sm:$0xf]
      %v1277 = vld [vmem:[%s1262 + $0x38] sm:$0xf]
      %v1278 = vld [vmem:[%s1262 + $0x3c] sm:$0xf]
      %v1289 = vunpack.c.l.b16 %v1252
      %v1290 = vunpack.c.l.b16 %v1253
      %v1291 = vunpack.c.l.b16 %v1254
      %v1292 = vunpack.c.l.b16 %v1255
      %v1293 = vunpack.c.l.b16 %v1256
      %v1294 = vunpack.c.l.b16 %v1257
      %v1295 = vunpack.c.l.b16 %v1258
      %v1296 = vunpack.c.l.b16 %v1259
      %v1297 = vunpack.c.l.b16 %v1260
      %v1298 = vunpack.c.l.b16 %v1261
      %v1299 = vpack.c.b16 %v1290, %v1289
      %v1300 = vpack.c.b16 %v1292, %v1291
      %v1301 = vpack.c.b16 %v1294, %v1293
      %v1302 = vpack.c.b16 %v1296, %v1295
      %v1303 = vpack.c.b16 %v1298, %v1297
      %v1305 = vshrl.u32 %v1299, 16
      %v1307 = vshll.u32 %v1299, 16
      %v1309 = vrot.slane %v1307, 1
      %v1310 = vor.u32 %v1305, %v1309
      %v1312 = vshll.u32 %v1300, 16
      %v1314 = vrot.slane %v1312, 1
      %v1315 = vsel %vm712, %v1310, %v1314
      %v1316 = vshrl.u32 %v1300, 16
      %v1318 = vor.u32 %v1316, %v1314
      %v1320 = vshll.u32 %v1301, 16
      %v1322 = vrot.slane %v1320, 1
      %v1323 = vsel %vm712, %v1318, %v1322
      %v1324 = vshrl.u32 %v1301, 16
      %v1326 = vor.u32 %v1324, %v1322
      %v1328 = vshll.u32 %v1302, 16
      %v1330 = vrot.slane %v1328, 1
      %v1331 = vsel %vm712, %v1326, %v1330
      %v1332 = vshrl.u32 %v1302, 16
      %v1334 = vor.u32 %v1332, %v1330
      %v1336 = vshll.u32 %v1303, 16
      %v1338 = vrot.slane %v1336, 1
      %v1339 = vsel %vm712, %v1334, %v1338
      %v1340 = vshrl.u32 %v1303, 16
      %v1342 = vor.u32 %v1340, %v1338
      %v1364 = vunpack.c.l.b16 %v1263
      %v1365 = vunpack.c.l.b16 %v1264
      %v1366 = vunpack.c.l.b16 %v1265
      %v1367 = vunpack.c.l.b16 %v1266
      %v1368 = vunpack.c.l.b16 %v1267
      %v1369 = vunpack.c.l.b16 %v1268
      %v1370 = vunpack.c.l.b16 %v1269
      %v1371 = vunpack.c.l.b16 %v1270
      %v1372 = vunpack.c.l.b16 %v1271
      %v1373 = vunpack.c.l.b16 %v1272
      %v1374 = vunpack.c.l.b16 %v1273
      %v1375 = vunpack.c.l.b16 %v1274
      %v1376 = vunpack.c.l.b16 %v1275
      %v1377 = vunpack.c.l.b16 %v1276
      %v1378 = vunpack.c.l.b16 %v1277
      %v1379 = vunpack.c.l.b16 %v1278
      %v1380 = vpack.c.b16 %v1365, %v1364
      %v1381 = vpack.c.b16 %v1367, %v1366
      %v1382 = vpack.c.b16 %v1369, %v1368
      %v1383 = vpack.c.b16 %v1371, %v1370
      %v1384 = vpack.c.b16 %v1373, %v1372
      %v1385 = vpack.c.b16 %v1375, %v1374
      %v1386 = vpack.c.b16 %v1377, %v1376
      %v1387 = vpack.c.b16 %v1379, %v1378
      %1396 = vmatprep.subr.bf16.mxu0 0
      %1397 = vmatpush1.bf16.msra.mxu0 %v1387
      %1398 = vmatprep.subr.bf16.mxu0 0
      %1399 = vmatpush1.bf16.msra.mxu0 %v1386
      %1400 = vmatprep.subr.bf16.mxu0 0
      %1401 = vmatpush1.bf16.msra.mxu0 %v1385
      %1402 = vmatprep.subr.bf16.mxu0 0
      %1403 = vmatpush1.bf16.msra.mxu0 %v1384
      %1404 = vmatprep.subr.bf16.mxu0 0
      %1405 = vmatpush1.bf16.msra.mxu0 %v1383
      %1406 = vmatprep.subr.bf16.mxu0 0
      %1407 = vmatpush1.bf16.msra.mxu0 %v1382
      %1408 = vmatprep.subr.bf16.mxu0 0
      %1409 = vmatpush1.bf16.msra.mxu0 %v1381
      %1410 = vmatprep.subr.bf16.mxu0 0
      %1411 = vmatpush1.bf16.msra.mxu0 %v1380
      %1412 = vmatprep.subr.bf16.mxu0 0
      %1413 = vmatpush2.bf16.msra.mxu0 0
      %1414 = vmatprep.subr.bf16.mxu0 0
      %1415 = vmatpush2.bf16.msra.mxu0 0
      %1416 = vmatprep.subr.bf16.mxu0 0
      %1417 = vmatpush2.bf16.msra.mxu0 0
      %1418 = vmatprep.subr.bf16.mxu0 0
      %1419 = vmatpush2.bf16.msra.mxu0 0
      %1420 = vmatprep.subr.bf16.mxu0 0
      %1421 = vmatpush2.bf16.msra.mxu0 0
      %1422 = vmatprep.subr.bf16.mxu0 0
      %1423 = vmatpush2.bf16.msra.mxu0 0
      %1424 = vmatprep.subr.bf16.mxu0 0
      %1425 = vmatpush2.bf16.msra.mxu0 0
      %1426 = vmatprep.subr.bf16.mxu0 0
      %1427 = vmatpush2.bf16.msra.mxu0 0
      %1428 = vmatprep.mubr.bf16.mxu0 0
      %1429 = vmatmul.mubr.bf16.gmra.mxu0 %v1315
      %v1430 = vpop.f32.mrf.mxu0
      %v1431 = vadd.f32 0.0, %v1430
      %v1432 = vpop.f32.mrf.mxu0
      %v1433 = vpop.f32.mrf.mxu0
      %v1434 = vadd.f32 0.0, %v1433
      %v1435 = vpop.f32.mrf.mxu0
      %1436 = vmatprep.mubr.bf16.mxu0 0
      %1437 = vmatmul.mubr.bf16.gmra.mxu0 %v1323
      %v1438 = vpop.f32.mrf.mxu0
      %v1439 = vadd.f32 0.0, %v1438
      %v1440 = vpop.f32.mrf.mxu0
      %v1441 = vpop.f32.mrf.mxu0
      %v1442 = vadd.f32 0.0, %v1441
      %v1443 = vpop.f32.mrf.mxu0
      %1444 = vmatprep.mubr.bf16.mxu0 0
      %1445 = vmatmul.mubr.bf16.gmra.mxu0 %v1331
      %v1446 = vpop.f32.mrf.mxu0
      %v1447 = vadd.f32 0.0, %v1446
      %v1448 = vpop.f32.mrf.mxu0
      %v1449 = vpop.f32.mrf.mxu0
      %v1450 = vadd.f32 0.0, %v1449
      %v1451 = vpop.f32.mrf.mxu0
      %1452 = vmatprep.mubr.bf16.mxu0 0
      %1453 = vmatmul.mubr.bf16.gmra.mxu0 %v1339
      %v1454 = vpop.f32.mrf.mxu0
      %v1455 = vadd.f32 0.0, %v1454
      %v1456 = vpop.f32.mrf.mxu0
      %v1457 = vpop.f32.mrf.mxu0
      %v1458 = vadd.f32 0.0, %v1457
      %v1459 = vpop.f32.mrf.mxu0
      %1460 = vmatprep.mubr.bf16.mxu0 0
      %1461 = vmatmul.mubr.bf16.gmra.mxu0 %v1342
      %v1462 = vpop.f32.mrf.mxu0
      %v1463 = vadd.f32 0.0, %v1462
      %v1464 = vpop.f32.mrf.mxu0
      %v1465 = vpop.f32.mrf.mxu0
      %v1466 = vpop.f32.mrf.mxu0
      %1467 = vdwg.mxu0
      %v1468 = vadd.f32 %v1243, %v1431
      %v1469 = vadd.f32 %v1244, %v1434
      %v1470 = vadd.f32 %v1245, %v1439
      %v1471 = vadd.f32 %v1246, %v1442
      %v1472 = vadd.f32 %v1247, %v1447
      %v1473 = vadd.f32 %v1248, %v1450
      %v1474 = vadd.f32 %v1249, %v1455
      %v1475 = vadd.f32 %v1250, %v1458
      %v1476 = vadd.f32 %v1251, %v1463
      %v1477 = vld [vmem:[%s291 + $0x4] sm:$0xf]
      %v1478 = vld [vmem:[%s291 + $0x8] sm:$0xf]
      %v1479 = vld [vmem:[%s291 + $0xc] sm:$0xf]
      %v1480 = vld [vmem:[%s291 + $0x10] sm:$0xf]
      %v1481 = vld [vmem:[%s291 + $0x14] sm:$0xf]
      %v1482 = vld [vmem:[%s291 + $0x18] sm:$0xf]
      %v1483 = vld [vmem:[%s291 + $0x1c] sm:$0xf]
      %v1484 = vld [vmem:[%s291 + $0x20] sm:$0xf]
      %v1485 = vld [vmem:[%s291 + $0x24] sm:$0xf]
      %v1486 = vld [vmem:[%s291 + $0x28] sm:$0x1]
      %s1487 = scalar_lea.vmem %s4, 384
      %v1488 = vld [vmem:[%s1487] sm:$0xf]
      %v1489 = vld [vmem:[%s1487 + $0x4] sm:$0xf]
      %v1490 = vld [vmem:[%s1487 + $0x8] sm:$0xf]
      %v1491 = vld [vmem:[%s1487 + $0xc] sm:$0xf]
      %v1492 = vld [vmem:[%s1487 + $0x10] sm:$0xf]
      %v1493 = vld [vmem:[%s1487 + $0x14] sm:$0xf]
      %v1494 = vld [vmem:[%s1487 + $0x18] sm:$0xf]
      %v1495 = vld [vmem:[%s1487 + $0x1c] sm:$0xf]
      %v1496 = vld [vmem:[%s1487 + $0x20] sm:$0xf]
      %v1497 = vld [vmem:[%s1487 + $0x24] sm:$0xf]
      %v1498 = vld [vmem:[%s1487 + $0x28] sm:$0xf]
      %v1499 = vld [vmem:[%s1487 + $0x2c] sm:$0xf]
      %v1500 = vld [vmem:[%s1487 + $0x30] sm:$0xf]
      %v1501 = vld [vmem:[%s1487 + $0x34] sm:$0xf]
      %v1502 = vld [vmem:[%s1487 + $0x38] sm:$0xf]
      %v1503 = vld [vmem:[%s1487 + $0x3c] sm:$0xf]
      %v1514 = vunpack.c.l.b16 %v1477
      %v1515 = vunpack.c.l.b16 %v1478
      %v1516 = vunpack.c.l.b16 %v1479
      %v1517 = vunpack.c.l.b16 %v1480
      %v1518 = vunpack.c.l.b16 %v1481
      %v1519 = vunpack.c.l.b16 %v1482
      %v1520 = vunpack.c.l.b16 %v1483
      %v1521 = vunpack.c.l.b16 %v1484
      %v1522 = vunpack.c.l.b16 %v1485
      %v1523 = vunpack.c.l.b16 %v1486
      %v1524 = vpack.c.b16 %v1515, %v1514
      %v1525 = vpack.c.b16 %v1517, %v1516
      %v1526 = vpack.c.b16 %v1519, %v1518
      %v1527 = vpack.c.b16 %v1521, %v1520
      %v1528 = vpack.c.b16 %v1523, %v1522
      %v1530 = vshrl.u32 %v1524, 16
      %v1532 = vshll.u32 %v1524, 16
      %v1534 = vrot.slane %v1532, 1
      %v1535 = vor.u32 %v1530, %v1534
      %v1537 = vshll.u32 %v1525, 16
      %v1539 = vrot.slane %v1537, 1
      %v1540 = vsel %vm712, %v1535, %v1539
      %v1541 = vshrl.u32 %v1525, 16
      %v1543 = vor.u32 %v1541, %v1539
      %v1545 = vshll.u32 %v1526, 16
      %v1547 = vrot.slane %v1545, 1
      %v1548 = vsel %vm712, %v1543, %v1547
      %v1549 = vshrl.u32 %v1526, 16
      %v1551 = vor.u32 %v1549, %v1547
      %v1553 = vshll.u32 %v1527, 16
      %v1555 = vrot.slane %v1553, 1
      %v1556 = vsel %vm712, %v1551, %v1555
      %v1557 = vshrl.u32 %v1527, 16
      %v1559 = vor.u32 %v1557, %v1555
      %v1561 = vshll.u32 %v1528, 16
      %v1563 = vrot.slane %v1561, 1
      %v1564 = vsel %vm712, %v1559, %v1563
      %v1565 = vshrl.u32 %v1528, 16
      %v1567 = vor.u32 %v1565, %v1563
      %v1589 = vunpack.c.l.b16 %v1488
      %v1590 = vunpack.c.l.b16 %v1489
      %v1591 = vunpack.c.l.b16 %v1490
      %v1592 = vunpack.c.l.b16 %v1491
      %v1593 = vunpack.c.l.b16 %v1492
      %v1594 = vunpack.c.l.b16 %v1493
      %v1595 = vunpack.c.l.b16 %v1494
      %v1596 = vunpack.c.l.b16 %v1495
      %v1597 = vunpack.c.l.b16 %v1496
      %v1598 = vunpack.c.l.b16 %v1497
      %v1599 = vunpack.c.l.b16 %v1498
      %v1600 = vunpack.c.l.b16 %v1499
      %v1601 = vunpack.c.l.b16 %v1500
      %v1602 = vunpack.c.l.b16 %v1501
      %v1603 = vunpack.c.l.b16 %v1502
      %v1604 = vunpack.c.l.b16 %v1503
      %v1605 = vpack.c.b16 %v1590, %v1589
      %v1606 = vpack.c.b16 %v1592, %v1591
      %v1607 = vpack.c.b16 %v1594, %v1593
      %v1608 = vpack.c.b16 %v1596, %v1595
      %v1609 = vpack.c.b16 %v1598, %v1597
      %v1610 = vpack.c.b16 %v1600, %v1599
      %v1611 = vpack.c.b16 %v1602, %v1601
      %v1612 = vpack.c.b16 %v1604, %v1603
      %1621 = vmatprep.subr.bf16.mxu0 0
      %1622 = vmatpush1.bf16.msra.mxu0 %v1612
      %1623 = vmatprep.subr.bf16.mxu0 0
      %1624 = vmatpush1.bf16.msra.mxu0 %v1611
      %1625 = vmatprep.subr.bf16.mxu0 0
      %1626 = vmatpush1.bf16.msra.mxu0 %v1610
      %1627 = vmatprep.subr.bf16.mxu0 0
      %1628 = vmatpush1.bf16.msra.mxu0 %v1609
      %1629 = vmatprep.subr.bf16.mxu0 0
      %1630 = vmatpush1.bf16.msra.mxu0 %v1608
      %1631 = vmatprep.subr.bf16.mxu0 0
      %1632 = vmatpush1.bf16.msra.mxu0 %v1607
      %1633 = vmatprep.subr.bf16.mxu0 0
      %1634 = vmatpush1.bf16.msra.mxu0 %v1606
      %1635 = vmatprep.subr.bf16.mxu0 0
      %1636 = vmatpush1.bf16.msra.mxu0 %v1605
      %1637 = vmatprep.subr.bf16.mxu0 0
      %1638 = vmatpush2.bf16.msra.mxu0 0
      %1639 = vmatprep.subr.bf16.mxu0 0
      %1640 = vmatpush2.bf16.msra.mxu0 0
      %1641 = vmatprep.subr.bf16.mxu0 0
      %1642 = vmatpush2.bf16.msra.mxu0 0
      %1643 = vmatprep.subr.bf16.mxu0 0
      %1644 = vmatpush2.bf16.msra.mxu0 0
      %1645 = vmatprep.subr.bf16.mxu0 0
      %1646 = vmatpush2.bf16.msra.mxu0 0
      %1647 = vmatprep.subr.bf16.mxu0 0
      %1648 = vmatpush2.bf16.msra.mxu0 0
      %1649 = vmatprep.subr.bf16.mxu0 0
      %1650 = vmatpush2.bf16.msra.mxu0 0
      %1651 = vmatprep.subr.bf16.mxu0 0
      %1652 = vmatpush2.bf16.msra.mxu0 0
      %1653 = vmatprep.mubr.bf16.mxu0 0
      %1654 = vmatmul.mubr.bf16.gmra.mxu0 %v1540
      %v1655 = vpop.f32.mrf.mxu0
      %v1656 = vadd.f32 0.0, %v1655
      %v1657 = vpop.f32.mrf.mxu0
      %v1658 = vpop.f32.mrf.mxu0
      %v1659 = vadd.f32 0.0, %v1658
      %v1660 = vpop.f32.mrf.mxu0
      %1661 = vmatprep.mubr.bf16.mxu0 0
      %1662 = vmatmul.mubr.bf16.gmra.mxu0 %v1548
      %v1663 = vpop.f32.mrf.mxu0
      %v1664 = vadd.f32 0.0, %v1663
      %v1665 = vpop.f32.mrf.mxu0
      %v1666 = vpop.f32.mrf.mxu0
      %v1667 = vadd.f32 0.0, %v1666
      %v1668 = vpop.f32.mrf.mxu0
      %1669 = vmatprep.mubr.bf16.mxu0 0
      %1670 = vmatmul.mubr.bf16.gmra.mxu0 %v1556
      %v1671 = vpop.f32.mrf.mxu0
      %v1672 = vadd.f32 0.0, %v1671
      %v1673 = vpop.f32.mrf.mxu0
      %v1674 = vpop.f32.mrf.mxu0
      %v1675 = vadd.f32 0.0, %v1674
      %v1676 = vpop.f32.mrf.mxu0
      %1677 = vmatprep.mubr.bf16.mxu0 0
      %1678 = vmatmul.mubr.bf16.gmra.mxu0 %v1564
      %v1679 = vpop.f32.mrf.mxu0
      %v1680 = vadd.f32 0.0, %v1679
      %v1681 = vpop.f32.mrf.mxu0
      %v1682 = vpop.f32.mrf.mxu0
      %v1683 = vadd.f32 0.0, %v1682
      %v1684 = vpop.f32.mrf.mxu0
      %1685 = vmatprep.mubr.bf16.mxu0 0
      %1686 = vmatmul.mubr.bf16.gmra.mxu0 %v1567
      %v1687 = vpop.f32.mrf.mxu0
      %v1688 = vadd.f32 0.0, %v1687
      %v1689 = vpop.f32.mrf.mxu0
      %v1690 = vpop.f32.mrf.mxu0
      %v1691 = vpop.f32.mrf.mxu0
      %1692 = vdwg.mxu0
      %v1693 = vadd.f32 %v1468, %v1656
      %v1694 = vadd.f32 %v1469, %v1659
      %v1695 = vadd.f32 %v1470, %v1664
      %v1696 = vadd.f32 %v1471, %v1667
      %v1697 = vadd.f32 %v1472, %v1672
      %v1698 = vadd.f32 %v1473, %v1675
      %v1699 = vadd.f32 %v1474, %v1680
      %v1700 = vadd.f32 %v1475, %v1683
      %v1701 = vadd.f32 %v1476, %v1688
      %v1702 = vld [vmem:[%s296 + $0x4] sm:$0xf]
      %v1703 = vld [vmem:[%s296 + $0x8] sm:$0xf]
      %v1704 = vld [vmem:[%s296 + $0xc] sm:$0xf]
      %v1705 = vld [vmem:[%s296 + $0x10] sm:$0xf]
      %v1706 = vld [vmem:[%s296 + $0x14] sm:$0xf]
      %v1707 = vld [vmem:[%s296 + $0x18] sm:$0xf]
      %v1708 = vld [vmem:[%s296 + $0x1c] sm:$0xf]
      %v1709 = vld [vmem:[%s296 + $0x20] sm:$0xf]
      %v1710 = vld [vmem:[%s296 + $0x24] sm:$0xf]
      %v1711 = vld [vmem:[%s296 + $0x28] sm:$0x1]
      %s1712 = scalar_lea.vmem %s4, 448
      %v1713 = vld [vmem:[%s1712] sm:$0xf]
      %v1714 = vld [vmem:[%s1712 + $0x4] sm:$0xf]
      %v1715 = vld [vmem:[%s1712 + $0x8] sm:$0xf]
      %v1716 = vld [vmem:[%s1712 + $0xc] sm:$0xf]
      %v1717 = vld [vmem:[%s1712 + $0x10] sm:$0xf]
      %v1718 = vld [vmem:[%s1712 + $0x14] sm:$0xf]
      %v1719 = vld [vmem:[%s1712 + $0x18] sm:$0xf]
      %v1720 = vld [vmem:[%s1712 + $0x1c] sm:$0xf]
      %v1721 = vld [vmem:[%s1712 + $0x20] sm:$0xf]
      %v1722 = vld [vmem:[%s1712 + $0x24] sm:$0xf]
      %v1723 = vld [vmem:[%s1712 + $0x28] sm:$0xf]
      %v1724 = vld [vmem:[%s1712 + $0x2c] sm:$0xf]
      %v1725 = vld [vmem:[%s1712 + $0x30] sm:$0xf]
      %v1726 = vld [vmem:[%s1712 + $0x34] sm:$0xf]
      %v1727 = vld [vmem:[%s1712 + $0x38] sm:$0xf]
      %v1728 = vld [vmem:[%s1712 + $0x3c] sm:$0xf]
      %v1739 = vunpack.c.l.b16 %v1702
      %v1740 = vunpack.c.l.b16 %v1703
      %v1741 = vunpack.c.l.b16 %v1704
      %v1742 = vunpack.c.l.b16 %v1705
      %v1743 = vunpack.c.l.b16 %v1706
      %v1744 = vunpack.c.l.b16 %v1707
      %v1745 = vunpack.c.l.b16 %v1708
      %v1746 = vunpack.c.l.b16 %v1709
      %v1747 = vunpack.c.l.b16 %v1710
      %v1748 = vunpack.c.l.b16 %v1711
      %v1749 = vpack.c.b16 %v1740, %v1739
      %v1750 = vpack.c.b16 %v1742, %v1741
      %v1751 = vpack.c.b16 %v1744, %v1743
      %v1752 = vpack.c.b16 %v1746, %v1745
      %v1753 = vpack.c.b16 %v1748, %v1747
      %v1755 = vshrl.u32 %v1749, 16
      %v1757 = vshll.u32 %v1749, 16
      %v1759 = vrot.slane %v1757, 1
      %v1760 = vor.u32 %v1755, %v1759
      %v1762 = vshll.u32 %v1750, 16
      %v1764 = vrot.slane %v1762, 1
      %v1765 = vsel %vm712, %v1760, %v1764
      %v1766 = vshrl.u32 %v1750, 16
      %v1768 = vor.u32 %v1766, %v1764
      %v1770 = vshll.u32 %v1751, 16
      %v1772 = vrot.slane %v1770, 1
      %v1773 = vsel %vm712, %v1768, %v1772
      %v1774 = vshrl.u32 %v1751, 16
      %v1776 = vor.u32 %v1774, %v1772
      %v1778 = vshll.u32 %v1752, 16
      %v1780 = vrot.slane %v1778, 1
      %v1781 = vsel %vm712, %v1776, %v1780
      %v1782 = vshrl.u32 %v1752, 16
      %v1784 = vor.u32 %v1782, %v1780
      %v1786 = vshll.u32 %v1753, 16
      %v1788 = vrot.slane %v1786, 1
      %v1789 = vsel %vm712, %v1784, %v1788
      %v1790 = vshrl.u32 %v1753, 16
      %v1792 = vor.u32 %v1790, %v1788
      %v1814 = vunpack.c.l.b16 %v1713
      %v1815 = vunpack.c.l.b16 %v1714
      %v1816 = vunpack.c.l.b16 %v1715
      %v1817 = vunpack.c.l.b16 %v1716
      %v1818 = vunpack.c.l.b16 %v1717
      %v1819 = vunpack.c.l.b16 %v1718
      %v1820 = vunpack.c.l.b16 %v1719
      %v1821 = vunpack.c.l.b16 %v1720
      %v1822 = vunpack.c.l.b16 %v1721
      %v1823 = vunpack.c.l.b16 %v1722
      %v1824 = vunpack.c.l.b16 %v1723
      %v1825 = vunpack.c.l.b16 %v1724
      %v1826 = vunpack.c.l.b16 %v1725
      %v1827 = vunpack.c.l.b16 %v1726
      %v1828 = vunpack.c.l.b16 %v1727
      %v1829 = vunpack.c.l.b16 %v1728
      %v1830 = vpack.c.b16 %v1815, %v1814
      %v1831 = vpack.c.b16 %v1817, %v1816
      %v1832 = vpack.c.b16 %v1819, %v1818
      %v1833 = vpack.c.b16 %v1821, %v1820
      %v1834 = vpack.c.b16 %v1823, %v1822
      %v1835 = vpack.c.b16 %v1825, %v1824
      %v1836 = vpack.c.b16 %v1827, %v1826
      %v1837 = vpack.c.b16 %v1829, %v1828
      %1846 = vmatprep.subr.bf16.mxu0 0
      %1847 = vmatpush1.bf16.msra.mxu0 %v1837
      %1848 = vmatprep.subr.bf16.mxu0 0
      %1849 = vmatpush1.bf16.msra.mxu0 %v1836
      %1850 = vmatprep.subr.bf16.mxu0 0
      %1851 = vmatpush1.bf16.msra.mxu0 %v1835
      %1852 = vmatprep.subr.bf16.mxu0 0
      %1853 = vmatpush1.bf16.msra.mxu0 %v1834
      %1854 = vmatprep.subr.bf16.mxu0 0
      %1855 = vmatpush1.bf16.msra.mxu0 %v1833
      %1856 = vmatprep.subr.bf16.mxu0 0
      %1857 = vmatpush1.bf16.msra.mxu0 %v1832
      %1858 = vmatprep.subr.bf16.mxu0 0
      %1859 = vmatpush1.bf16.msra.mxu0 %v1831
      %1860 = vmatprep.subr.bf16.mxu0 0
      %1861 = vmatpush1.bf16.msra.mxu0 %v1830
      %1862 = vmatprep.subr.bf16.mxu0 0
      %1863 = vmatpush2.bf16.msra.mxu0 0
      %1864 = vmatprep.subr.bf16.mxu0 0
      %1865 = vmatpush2.bf16.msra.mxu0 0
      %1866 = vmatprep.subr.bf16.mxu0 0
      %1867 = vmatpush2.bf16.msra.mxu0 0
      %1868 = vmatprep.subr.bf16.mxu0 0
      %1869 = vmatpush2.bf16.msra.mxu0 0
      %1870 = vmatprep.subr.bf16.mxu0 0
      %1871 = vmatpush2.bf16.msra.mxu0 0
      %1872 = vmatprep.subr.bf16.mxu0 0
      %1873 = vmatpush2.bf16.msra.mxu0 0
      %1874 = vmatprep.subr.bf16.mxu0 0
      %1875 = vmatpush2.bf16.msra.mxu0 0
      %1876 = vmatprep.subr.bf16.mxu0 0
      %1877 = vmatpush2.bf16.msra.mxu0 0
      %1878 = vmatprep.mubr.bf16.mxu0 0
      %1879 = vmatmul.mubr.bf16.gmra.mxu0 %v1765
      %v1880 = vpop.f32.mrf.mxu0
      %v1881 = vadd.f32 0.0, %v1880
      %v1882 = vpop.f32.mrf.mxu0
      %v1883 = vpop.f32.mrf.mxu0
      %v1884 = vadd.f32 0.0, %v1883
      %v1885 = vpop.f32.mrf.mxu0
      %1886 = vmatprep.mubr.bf16.mxu0 0
      %1887 = vmatmul.mubr.bf16.gmra.mxu0 %v1773
      %v1888 = vpop.f32.mrf.mxu0
      %v1889 = vadd.f32 0.0, %v1888
      %v1890 = vpop.f32.mrf.mxu0
      %v1891 = vpop.f32.mrf.mxu0
      %v1892 = vadd.f32 0.0, %v1891
      %v1893 = vpop.f32.mrf.mxu0
      %1894 = vmatprep.mubr.bf16.mxu0 0
      %1895 = vmatmul.mubr.bf16.gmra.mxu0 %v1781
      %v1896 = vpop.f32.mrf.mxu0
      %v1897 = vadd.f32 0.0, %v1896
      %v1898 = vpop.f32.mrf.mxu0
      %v1899 = vpop.f32.mrf.mxu0
      %v1900 = vadd.f32 0.0, %v1899
      %v1901 = vpop.f32.mrf.mxu0
      %1902 = vmatprep.mubr.bf16.mxu0 0
      %1903 = vmatmul.mubr.bf16.gmra.mxu0 %v1789
      %v1904 = vpop.f32.mrf.mxu0
      %v1905 = vadd.f32 0.0, %v1904
      %v1906 = vpop.f32.mrf.mxu0
      %v1907 = vpop.f32.mrf.mxu0
      %v1908 = vadd.f32 0.0, %v1907
      %v1909 = vpop.f32.mrf.mxu0
      %1910 = vmatprep.mubr.bf16.mxu0 0
      %1911 = vmatmul.mubr.bf16.gmra.mxu0 %v1792
      %v1912 = vpop.f32.mrf.mxu0
      %v1913 = vadd.f32 0.0, %v1912
      %v1914 = vpop.f32.mrf.mxu0
      %v1915 = vpop.f32.mrf.mxu0
      %v1916 = vpop.f32.mrf.mxu0
      %1917 = vdwg.mxu0
      %v1918 = vadd.f32 %v1693, %v1881
      %v1919 = vadd.f32 %v1694, %v1884
      %v1920 = vadd.f32 %v1695, %v1889
      %v1921 = vadd.f32 %v1696, %v1892
      %v1922 = vadd.f32 %v1697, %v1897
      %v1923 = vadd.f32 %v1698, %v1900
      %v1924 = vadd.f32 %v1699, %v1905
      %v1925 = vadd.f32 %v1700, %v1908
      %v1926 = vadd.f32 %v1701, %v1913
      %v1927 = vld [vmem:[%s291 + $0x4] sm:$0xe]
      %s1928 = scalar_lea.vmem %s4, 512
      %v1929 = vld [vmem:[%s1928] sm:$0xf]
      %v1930 = vld [vmem:[%s1928 + $0x4] sm:$0xf]
      %v1931 = vld [vmem:[%s1928 + $0x8] sm:$0xf]
      %v1932 = vld [vmem:[%s1928 + $0xc] sm:$0xf]
      %v1933 = vld [vmem:[%s1928 + $0x10] sm:$0xf]
      %v1934 = vld [vmem:[%s1928 + $0x14] sm:$0xf]
      %v1935 = vld [vmem:[%s1928 + $0x18] sm:$0xf]
      %v1936 = vld [vmem:[%s1928 + $0x1c] sm:$0xf]
      %v1937 = vld [vmem:[%s1928 + $0x20] sm:$0xf]
      %v1938 = vld [vmem:[%s1928 + $0x24] sm:$0xf]
      %v1939 = vld [vmem:[%s1928 + $0x28] sm:$0xf]
      %v1940 = vld [vmem:[%s1928 + $0x2c] sm:$0xf]
      %v1941 = vld [vmem:[%s1928 + $0x30] sm:$0xf]
      %v1942 = vld [vmem:[%s1928 + $0x34] sm:$0xf]
      %v1943 = vld [vmem:[%s1928 + $0x38] sm:$0xf]
      %v1944 = vld [vmem:[%s1928 + $0x3c] sm:$0xf]
      %v1946 = vunpack.c.l.b16 %v1927
      %v1947 = vpack.c.b16 %v1515, %v1946
      %vm1948 = vcmask 1046528
      %v1949 = vrot.slane %v1947, 1
      %v1950 = vrot.slane %v1525, 1
      %v1951 = vsel %vm1948, %v1949, %v1950
      %v1952 = vrot.slane %v1526, 1
      %v1953 = vsel %vm1948, %v1950, %v1952
      %v1954 = vrot.slane %v1527, 1
      %v1955 = vsel %vm1948, %v1952, %v1954
      %v1956 = vrot.slane %v1528, 1
      %v1957 = vsel %vm1948, %v1954, %v1956
      %v1979 = vunpack.c.l.b16 %v1929
      %v1980 = vunpack.c.l.b16 %v1930
      %v1981 = vunpack.c.l.b16 %v1931
      %v1982 = vunpack.c.l.b16 %v1932
      %v1983 = vunpack.c.l.b16 %v1933
      %v1984 = vunpack.c.l.b16 %v1934
      %v1985 = vunpack.c.l.b16 %v1935
      %v1986 = vunpack.c.l.b16 %v1936
      %v1987 = vunpack.c.l.b16 %v1937
      %v1988 = vunpack.c.l.b16 %v1938
      %v1989 = vunpack.c.l.b16 %v1939
      %v1990 = vunpack.c.l.b16 %v1940
      %v1991 = vunpack.c.l.b16 %v1941
      %v1992 = vunpack.c.l.b16 %v1942
      %v1993 = vunpack.c.l.b16 %v1943
      %v1994 = vunpack.c.l.b16 %v1944
      %v1995 = vpack.c.b16 %v1980, %v1979
      %v1996 = vpack.c.b16 %v1982, %v1981
      %v1997 = vpack.c.b16 %v1984, %v1983
      %v1998 = vpack.c.b16 %v1986, %v1985
      %v1999 = vpack.c.b16 %v1988, %v1987
      %v2000 = vpack.c.b16 %v1990, %v1989
      %v2001 = vpack.c.b16 %v1992, %v1991
      %v2002 = vpack.c.b16 %v1994, %v1993
      %2011 = vmatprep.subr.bf16.mxu0 0
      %2012 = vmatpush1.bf16.msra.mxu0 %v2002
      %2013 = vmatprep.subr.bf16.mxu0 0
      %2014 = vmatpush1.bf16.msra.mxu0 %v2001
      %2015 = vmatprep.subr.bf16.mxu0 0
      %2016 = vmatpush1.bf16.msra.mxu0 %v2000
      %2017 = vmatprep.subr.bf16.mxu0 0
      %2018 = vmatpush1.bf16.msra.mxu0 %v1999
      %2019 = vmatprep.subr.bf16.mxu0 0
      %2020 = vmatpush1.bf16.msra.mxu0 %v1998
      %2021 = vmatprep.subr.bf16.mxu0 0
      %2022 = vmatpush1.bf16.msra.mxu0 %v1997
      %2023 = vmatprep.subr.bf16.mxu0 0
      %2024 = vmatpush1.bf16.msra.mxu0 %v1996
      %2025 = vmatprep.subr.bf16.mxu0 0
      %2026 = vmatpush1.bf16.msra.mxu0 %v1995
      %2027 = vmatprep.subr.bf16.mxu0 0
      %2028 = vmatpush2.bf16.msra.mxu0 0
      %2029 = vmatprep.subr.bf16.mxu0 0
      %2030 = vmatpush2.bf16.msra.mxu0 0
      %2031 = vmatprep.subr.bf16.mxu0 0
      %2032 = vmatpush2.bf16.msra.mxu0 0
      %2033 = vmatprep.subr.bf16.mxu0 0
      %2034 = vmatpush2.bf16.msra.mxu0 0
      %2035 = vmatprep.subr.bf16.mxu0 0
      %2036 = vmatpush2.bf16.msra.mxu0 0
      %2037 = vmatprep.subr.bf16.mxu0 0
      %2038 = vmatpush2.bf16.msra.mxu0 0
      %2039 = vmatprep.subr.bf16.mxu0 0
      %2040 = vmatpush2.bf16.msra.mxu0 0
      %2041 = vmatprep.subr.bf16.mxu0 0
      %2042 = vmatpush2.bf16.msra.mxu0 0
      %2043 = vmatprep.mubr.bf16.mxu0 0
      %2044 = vmatmul.mubr.bf16.gmra.mxu0 %v1951
      %v2045 = vpop.f32.mrf.mxu0
      %v2046 = vadd.f32 0.0, %v2045
      %v2047 = vpop.f32.mrf.mxu0
      %v2048 = vpop.f32.mrf.mxu0
      %v2049 = vadd.f32 0.0, %v2048
      %v2050 = vpop.f32.mrf.mxu0
      %2051 = vmatprep.mubr.bf16.mxu0 0
      %2052 = vmatmul.mubr.bf16.gmra.mxu0 %v1953
      %v2053 = vpop.f32.mrf.mxu0
      %v2054 = vadd.f32 0.0, %v2053
      %v2055 = vpop.f32.mrf.mxu0
      %v2056 = vpop.f32.mrf.mxu0
      %v2057 = vadd.f32 0.0, %v2056
      %v2058 = vpop.f32.mrf.mxu0
      %2059 = vmatprep.mubr.bf16.mxu0 0
      %2060 = vmatmul.mubr.bf16.gmra.mxu0 %v1955
      %v2061 = vpop.f32.mrf.mxu0
      %v2062 = vadd.f32 0.0, %v2061
      %v2063 = vpop.f32.mrf.mxu0
      %v2064 = vpop.f32.mrf.mxu0
      %v2065 = vadd.f32 0.0, %v2064
      %v2066 = vpop.f32.mrf.mxu0
      %2067 = vmatprep.mubr.bf16.mxu0 0
      %2068 = vmatmul.mubr.bf16.gmra.mxu0 %v1957
      %v2069 = vpop.f32.mrf.mxu0
      %v2070 = vadd.f32 0.0, %v2069
      %v2071 = vpop.f32.mrf.mxu0
      %v2072 = vpop.f32.mrf.mxu0
      %v2073 = vadd.f32 0.0, %v2072
      %v2074 = vpop.f32.mrf.mxu0
      %2075 = vmatprep.mubr.bf16.mxu0 0
      %2076 = vmatmul.mubr.bf16.gmra.mxu0 %v1956
      %v2077 = vpop.f32.mrf.mxu0
      %v2078 = vadd.f32 0.0, %v2077
      %v2079 = vpop.f32.mrf.mxu0
      %v2080 = vpop.f32.mrf.mxu0
      %v2081 = vpop.f32.mrf.mxu0
      %2082 = vdwg.mxu0
      %v2083 = vadd.f32 %v1918, %v2046
      %v2084 = vadd.f32 %v1919, %v2049
      %v2085 = vadd.f32 %v1920, %v2054
      %v2086 = vadd.f32 %v1921, %v2057
      %v2087 = vadd.f32 %v1922, %v2062
      %v2088 = vadd.f32 %v1923, %v2065
      %v2089 = vadd.f32 %v1924, %v2070
      %v2090 = vadd.f32 %v1925, %v2073
      %v2091 = vadd.f32 %v1926, %v2078
      %v2092 = vld [vmem:[%s5] sm:$0x1]
      %v2094 = vlaneseq
      %v2095 = vshrl.u32 %v2094, 7
      %v2096 = vsub.s32 0, %v2095
      %v2097 = vrot.slane %v2092, %v2096
      %v2099 = vadd.f32 %v2083, %v2097
      %v2100 = vadd.f32 %v2084, %v2097
      %v2101 = vadd.f32 %v2085, %v2097
      %v2102 = vadd.f32 %v2086, %v2097
      %v2103 = vadd.f32 %v2087, %v2097
      %v2104 = vadd.f32 %v2088, %v2097
      %v2105 = vadd.f32 %v2089, %v2097
      %v2106 = vadd.f32 %v2090, %v2097
      %v2107 = vadd.f32 %v2091, %v2097
      %vm2108 = vcmp.ge.f32.partialorder %v2099, 0.0
      %vm2109 = vcmp.ge.f32.partialorder %v2100, 0.0
      %vm2110 = vcmp.ge.f32.partialorder %v2101, 0.0
      %vm2111 = vcmp.ge.f32.partialorder %v2102, 0.0
      %vm2112 = vcmp.ge.f32.partialorder %v2103, 0.0
      %vm2113 = vcmp.ge.f32.partialorder %v2104, 0.0
      %vm2114 = vcmp.ge.f32.partialorder %v2105, 0.0
      %vm2115 = vcmp.ge.f32.partialorder %v2106, 0.0
      %vm2116 = vcmp.ge.f32.partialorder %v2107, 0.0
      %v2117 = vmul.f32 %v2099, 0.01
      %v2118 = vmul.f32 %v2100, 0.01
      %v2119 = vmul.f32 %v2101, 0.01
      %v2120 = vmul.f32 %v2102, 0.01
      %v2121 = vmul.f32 %v2103, 0.01
      %v2122 = vmul.f32 %v2104, 0.01
      %v2123 = vmul.f32 %v2105, 0.01
      %v2124 = vmul.f32 %v2106, 0.01
      %v2125 = vmul.f32 %v2107, 0.01
      %v2126 = vsel %vm2108, %v2099, %v2117
      %v2127 = vsel %vm2109, %v2100, %v2118
      %v2128 = vsel %vm2110, %v2101, %v2119
      %v2129 = vsel %vm2111, %v2102, %v2120
      %v2130 = vsel %vm2112, %v2103, %v2121
      %v2131 = vsel %vm2113, %v2104, %v2122
      %v2132 = vsel %vm2114, %v2105, %v2123
      %v2133 = vsel %vm2115, %v2106, %v2124
      %v2134 = vsel %vm2116, %v2107, %v2125
      %v2135 = vpack.c.bf16 %v2127, %v2126
      %v2136 = vpack.c.bf16 %v2129, %v2128
      %v2137 = vpack.c.bf16 %v2131, %v2130
      %v2138 = vpack.c.bf16 %v2133, %v2132
      %v2139 = vpack.c.bf16 %v2134, %v2134
      %v2145 = vunpack.c.l.b16 %v2135
      %v2146 = vunpack.c.h.b16 %v2135
      %v2147 = vunpack.c.l.b16 %v2136
      %v2148 = vunpack.c.h.b16 %v2136
      %v2149 = vunpack.c.l.b16 %v2137
      %v2150 = vunpack.c.h.b16 %v2137
      %v2151 = vunpack.c.l.b16 %v2138
      %v2152 = vunpack.c.h.b16 %v2138
      %v2153 = vunpack.c.l.b16 %v2139
      %v2154 = vpack.c.b16 %v2145, %v2145
      %v2155 = vpack.c.b16 %v2146, %v2146
      %v2156 = vpack.c.b16 %v2147, %v2147
      %v2157 = vpack.c.b16 %v2148, %v2148
      %v2158 = vpack.c.b16 %v2149, %v2149
      %v2159 = vpack.c.b16 %v2150, %v2150
      %v2160 = vpack.c.b16 %v2151, %v2151
      %v2161 = vpack.c.b16 %v2152, %v2152
      %v2162 = vpack.c.b16 %v2153, %v2153
      %2172 = vst [vmem:[%s311] sm:$0xf] %v2154
      %2173 = vst [vmem:[%s311 + $0x4] sm:$0xf] %v2155
      %2174 = vst [vmem:[%s311 + $0x8] sm:$0xf] %v2156
      %2175 = vst [vmem:[%s311 + $0xc] sm:$0xf] %v2157
      %2176 = vst [vmem:[%s311 + $0x10] sm:$0xf] %v2158
      %2177 = vst [vmem:[%s311 + $0x14] sm:$0xf] %v2159
      %2178 = vst [vmem:[%s311 + $0x18] sm:$0xf] %v2160
      %2179 = vst [vmem:[%s311 + $0x1c] sm:$0xf] %v2161
      %2180 = vst [vmem:[%s311 + $0x20] sm:$0xf] %v2162
      %p2181 = scmp.lt.s32.totalorder %s17, 1
      %s2182 = scalar_select %p2181, %s17, 1
      %s2183 = smul.addr %s2182, 9
      %s2184 = smul.addr %s2183, 4
      %s2185 = scalar_lea.vmem %s6, %s2184
      // Predicated region
      $region45: #{gradual_style_block_forward.2} parent=43 // pred_check
        %p2186 = pneg %p181
      $region46: #{gradual_style_block_forward.2} parent=43 // pred_check_branch
        %2188 = sbr.rel (%p2186) target = $region48
      $region47: #{gradual_style_block_forward.2} parent=43 // pred_region
        _
      $region48: #{gradual_style_block_forward.2} parent=43 // pred_fallthru
        _
    $region44: #{gradual_style_block_forward.2} parent=5 // pred_fallthru
      _
    %p2189 = scmp.le.s32.totalorder 2, %s12
    // Predicated region
    $region49: #{gradual_style_block_forward.2} parent=5 // pred_check
      %p2190 = pneg %p2189
    $region50: #{gradual_style_block_forward.2} parent=5 // pred_check_branch
      %2192 = sbr.rel (%p2190) target = $region52
    $region51: #{gradual_style_block_forward.2} parent=5 // pred_region
      %s2193 = ssub.s32 %s12, 2
      // Predicated region
      $region53: #{gradual_style_block_forward.2} parent=51 // pred_check
        %p2194 = pneg %p187
      $region54: #{gradual_style_block_forward.2} parent=51 // pred_check_branch
        %2196 = sbr.rel (%p2194) target = $region56
      $region55: #{gradual_style_block_forward.2} parent=51 // pred_region
        %p2197 = scmp.lt.s32.totalorder %s18, 1
        %s2198 = scalar_select %p2197, %s18, 1
        %s2199 = smul.addr %s2198, 9
        %s2200 = smul.addr %s2199, 4
        %s2201 = scalar_lea.vmem %s6, %s2200
      $region56: #{gradual_style_block_forward.2} parent=51 // pred_fallthru
        _
    $region52: #{gradual_style_block_forward.2} parent=5 // pred_fallthru
      _
  $region6: #{gradual_style_block_forward.2} parent=0 // loop_footer
    %s16 = sadd.s32 1, %s12
  $region7: #{gradual_style_block_forward.2} parent=0 // loop_footer_branch
    %11 = sbr.rel target = $region3
  $region8: #{gradual_style_block_forward.2} parent=0 // loop_exit
    _

// kernel: gradual_style_block_forward.3
$region0: #{gradual_style_block_forward.3}
  #allocation0 [shape = 'u32[]', space=smem, size = 0x4, offset = 0x4, fixed_abs, tag = 'smem constant byte address 0x4 - core index']
  #allocation1 [shape = 'u32[144,128]{1,0:T(1,128)}', space=vmem, size = 0x12000, scoped, tag = 'internal scratch']
  %s0 = inlined_call_operand.vmem [shape: bf16[64,8,128], index: 0, kind: input, shape index: {}]
  %s1 = inlined_call_operand.vmem [shape: bf16[9,128,128], index: 1, kind: input, shape index: {}]
  %s2 = inlined_call_operand.vmem [shape: f32[1,128], index: 2, kind: input, shape index: {}]
  %s3 = inlined_call_operand.vmem [shape: bf16[9,128,128], index: 3, kind: input, shape index: {}]
  %s4 = inlined_call_operand.vmem [shape: f32[1,128], index: 4, kind: input, shape index: {}]
  %s5 = inlined_call_operand.vmem [shape: bf16[9,128,128], index: 5, kind: input, shape index: {}]
  %s6 = inlined_call_operand.vmem [shape: f32[1,128], index: 6, kind: input, shape index: {}]
  %s7 = inlined_call_operand.vmem [shape: bf16[128,128], index: 7, kind: input, shape index: {}]
  %s8 = inlined_call_operand.vmem [shape: f32[1,128], index: 8, kind: input, shape index: {}]
  %s9 = inlined_call_operand.vmem [shape: f32[8,128], index: 9, kind: output, shape index: {}]
  %s10 = sld [smem:[#allocation0]]
  $region46: #{gradual_style_block_forward.3} parent=0
    _
  %s12 = ssub.s32 1, %s10
  %s13 = scalar_select 0, %s12, %s10
  // Predicated region
  $region2: #{gradual_style_block_forward.3} parent=0 // pred_check
    _
  $region3: #{gradual_style_block_forward.3} parent=0 // pred_check_branch
    %15 = sbr.rel (0) target = $region5
  $region4: #{gradual_style_block_forward.3} parent=0 // pred_region
    _
  $region5: #{gradual_style_block_forward.3} parent=0 // pred_fallthru
    _
  // Predicated region
  $region6: #{gradual_style_block_forward.3} parent=0 // pred_check
    _
  $region7: #{gradual_style_block_forward.3} parent=0 // pred_check_branch
    %17 = sbr.rel (0) target = $region9
  $region8: #{gradual_style_block_forward.3} parent=0 // pred_region
    _
  $region9: #{gradual_style_block_forward.3} parent=0 // pred_fallthru
    _
  // Predicated region
  $region10: #{gradual_style_block_forward.3} parent=0 // pred_check
    _
  $region11: #{gradual_style_block_forward.3} parent=0 // pred_check_branch
    %19 = sbr.rel (0) target = $region13
  $region12: #{gradual_style_block_forward.3} parent=0 // pred_region
    _
  $region13: #{gradual_style_block_forward.3} parent=0 // pred_fallthru
    _
  // Predicated region
  $region14: #{gradual_style_block_forward.3} parent=0 // pred_check
    _
  $region15: #{gradual_style_block_forward.3} parent=0 // pred_check_branch
    %21 = sbr.rel (0) target = $region17
  $region16: #{gradual_style_block_forward.3} parent=0 // pred_region
    _
  $region17: #{gradual_style_block_forward.3} parent=0 // pred_fallthru
    _
  // Predicated region
  $region18: #{gradual_style_block_forward.3} parent=0 // pred_check
    _
  $region19: #{gradual_style_block_forward.3} parent=0 // pred_check_branch
    %23 = sbr.rel (0) target = $region21
  $region20: #{gradual_style_block_forward.3} parent=0 // pred_region
    _
  $region21: #{gradual_style_block_forward.3} parent=0 // pred_fallthru
    _
  // Predicated region
  $region22: #{gradual_style_block_forward.3} parent=0 // pred_check
    _
  $region23: #{gradual_style_block_forward.3} parent=0 // pred_check_branch
    %25 = sbr.rel (0) target = $region25
  $region24: #{gradual_style_block_forward.3} parent=0 // pred_region
    _
  $region25: #{gradual_style_block_forward.3} parent=0 // pred_fallthru
    _
  // Predicated region
  $region26: #{gradual_style_block_forward.3} parent=0 // pred_check
    _
  $region27: #{gradual_style_block_forward.3} parent=0 // pred_check_branch
    %27 = sbr.rel (0) target = $region29
  $region28: #{gradual_style_block_forward.3} parent=0 // pred_region
    _
  $region29: #{gradual_style_block_forward.3} parent=0 // pred_fallthru
    _
  // Predicated region
  $region30: #{gradual_style_block_forward.3} parent=0 // pred_check
    _
  $region31: #{gradual_style_block_forward.3} parent=0 // pred_check_branch
    %29 = sbr.rel (0) target = $region33
  $region32: #{gradual_style_block_forward.3} parent=0 // pred_region
    _
  $region33: #{gradual_style_block_forward.3} parent=0 // pred_fallthru
    _
  // Predicated region
  $region34: #{gradual_style_block_forward.3} parent=0 // pred_check
    _
  $region35: #{gradual_style_block_forward.3} parent=0 // pred_check_branch
    %31 = sbr.rel (0) target = $region37
  $region36: #{gradual_style_block_forward.3} parent=0 // pred_region
    _
  $region37: #{gradual_style_block_forward.3} parent=0 // pred_fallthru
    _
  %v33 = vld [vmem:[%s0] sm:$0xf]
  %s34 = scalar_lea.vmem %s0, 4
  %v35 = vld [vmem:[%s34] sm:$0xf]
  %s36 = scalar_lea.vmem %s0, 8
  %v37 = vld [vmem:[%s36] sm:$0xf]
  %s38 = scalar_lea.vmem %s0, 12
  %v39 = vld [vmem:[%s38] sm:$0xf]
  %s40 = scalar_lea.vmem %s0, 16
  %v41 = vld [vmem:[%s40] sm:$0xf]
  %s42 = scalar_lea.vmem %s0, 20
  %v43 = vld [vmem:[%s42] sm:$0xf]
  %s44 = scalar_lea.vmem %s0, 24
  %v45 = vld [vmem:[%s44] sm:$0xf]
  %s46 = scalar_lea.vmem %s0, 28
  %v47 = vld [vmem:[%s46] sm:$0xf]
  %s48 = scalar_lea.vmem %s0, 32
  %v49 = vld [vmem:[%s48] sm:$0xf]
  %s50 = scalar_lea.vmem %s0, 36
  %v51 = vld [vmem:[%s50] sm:$0xf]
  %s52 = scalar_lea.vmem %s0, 40
  %v53 = vld [vmem:[%s52] sm:$0xf]
  %s54 = scalar_lea.vmem %s0, 44
  %v55 = vld [vmem:[%s54] sm:$0xf]
  %s56 = scalar_lea.vmem %s0, 48
  %v57 = vld [vmem:[%s56] sm:$0xf]
  %s58 = scalar_lea.vmem %s0, 52
  %v59 = vld [vmem:[%s58] sm:$0xf]
  %s60 = scalar_lea.vmem %s0, 56
  %v61 = vld [vmem:[%s60] sm:$0xf]
  %s62 = scalar_lea.vmem %s0, 60
  %v63 = vld [vmem:[%s62] sm:$0xf]
  %s64 = scalar_lea.vmem %s0, 64
  %v65 = vld [vmem:[%s64] sm:$0xf]
  %s66 = scalar_lea.vmem %s0, 68
  %v67 = vld [vmem:[%s66] sm:$0xf]
  %s68 = scalar_lea.vmem %s0, 72
  %v69 = vld [vmem:[%s68] sm:$0xf]
  %s70 = scalar_lea.vmem %s0, 76
  %v71 = vld [vmem:[%s70] sm:$0xf]
  %s72 = scalar_lea.vmem %s0, 80
  %v73 = vld [vmem:[%s72] sm:$0xf]
  %s74 = scalar_lea.vmem %s0, 84
  %v75 = vld [vmem:[%s74] sm:$0xf]
  %s76 = scalar_lea.vmem %s0, 88
  %v77 = vld [vmem:[%s76] sm:$0xf]
  %s78 = scalar_lea.vmem %s0, 92
  %v79 = vld [vmem:[%s78] sm:$0xf]
  %s80 = scalar_lea.vmem %s0, 96
  %v81 = vld [vmem:[%s80] sm:$0xf]
  %s82 = scalar_lea.vmem %s0, 100
  %v83 = vld [vmem:[%s82] sm:$0xf]
  %s84 = scalar_lea.vmem %s0, 104
  %v85 = vld [vmem:[%s84] sm:$0xf]
  %s86 = scalar_lea.vmem %s0, 108
  %v87 = vld [vmem:[%s86] sm:$0xf]
  %s88 = scalar_lea.vmem %s0, 112
  %v89 = vld [vmem:[%s88] sm:$0xf]
  %s90 = scalar_lea.vmem %s0, 116
  %v91 = vld [vmem:[%s90] sm:$0xf]
  %s92 = scalar_lea.vmem %s0, 120
  %v93 = vld [vmem:[%s92] sm:$0xf]
  %s94 = scalar_lea.vmem %s0, 124
  %v95 = vld [vmem:[%s94] sm:$0xf]
  %s96 = scalar_lea.vmem %s0, 128
  %v97 = vld [vmem:[%s96] sm:$0xf]
  %s98 = scalar_lea.vmem %s0, 132
  %v99 = vld [vmem:[%s98] sm:$0xf]
  %s100 = scalar_lea.vmem %s0, 136
  %v101 = vld [vmem:[%s100] sm:$0xf]
  %s102 = scalar_lea.vmem %s0, 140
  %v103 = vld [vmem:[%s102] sm:$0xf]
  %s104 = scalar_lea.vmem %s0, 144
  %v105 = vld [vmem:[%s104] sm:$0xf]
  %s106 = scalar_lea.vmem %s0, 148
  %v107 = vld [vmem:[%s106] sm:$0xf]
  %s108 = scalar_lea.vmem %s0, 152
  %v109 = vld [vmem:[%s108] sm:$0xf]
  %s110 = scalar_lea.vmem %s0, 156
  %v111 = vld [vmem:[%s110] sm:$0xf]
  %s112 = scalar_lea.vmem %s0, 160
  %v113 = vld [vmem:[%s112] sm:$0xf]
  %s114 = scalar_lea.vmem %s0, 164
  %v115 = vld [vmem:[%s114] sm:$0xf]
  %s116 = scalar_lea.vmem %s0, 168
  %v117 = vld [vmem:[%s116] sm:$0xf]
  %s118 = scalar_lea.vmem %s0, 172
  %v119 = vld [vmem:[%s118] sm:$0xf]
  %s120 = scalar_lea.vmem %s0, 176
  %v121 = vld [vmem:[%s120] sm:$0xf]
  %s122 = scalar_lea.vmem %s0, 180
  %v123 = vld [vmem:[%s122] sm:$0xf]
  %s124 = scalar_lea.vmem %s0, 184
  %v125 = vld [vmem:[%s124] sm:$0xf]
  %s126 = scalar_lea.vmem %s0, 188
  %v127 = vld [vmem:[%s126] sm:$0xf]
  %s128 = scalar_lea.vmem %s0, 192
  %v129 = vld [vmem:[%s128] sm:$0xf]
  %s130 = scalar_lea.vmem %s0, 196
  %v131 = vld [vmem:[%s130] sm:$0xf]
  %s132 = scalar_lea.vmem %s0, 200
  %v133 = vld [vmem:[%s132] sm:$0xf]
  %s134 = scalar_lea.vmem %s0, 204
  %v135 = vld [vmem:[%s134] sm:$0xf]
  %s136 = scalar_lea.vmem %s0, 208
  %v137 = vld [vmem:[%s136] sm:$0xf]
  %s138 = scalar_lea.vmem %s0, 212
  %v139 = vld [vmem:[%s138] sm:$0xf]
  %s140 = scalar_lea.vmem %s0, 216
  %v141 = vld [vmem:[%s140] sm:$0xf]
  %s142 = scalar_lea.vmem %s0, 220
  %v143 = vld [vmem:[%s142] sm:$0xf]
  %s144 = scalar_lea.vmem %s0, 224
  %v145 = vld [vmem:[%s144] sm:$0xf]
  %s146 = scalar_lea.vmem %s0, 228
  %v147 = vld [vmem:[%s146] sm:$0xf]
  %s148 = scalar_lea.vmem %s0, 232
  %v149 = vld [vmem:[%s148] sm:$0xf]
  %s150 = scalar_lea.vmem %s0, 236
  %v151 = vld [vmem:[%s150] sm:$0xf]
  %s152 = scalar_lea.vmem %s0, 240
  %v153 = vld [vmem:[%s152] sm:$0xf]
  %s154 = scalar_lea.vmem %s0, 244
  %v155 = vld [vmem:[%s154] sm:$0xf]
  %s156 = scalar_lea.vmem %s0, 248
  %v157 = vld [vmem:[%s156] sm:$0xf]
  %s158 = scalar_lea.vmem %s0, 252
  %v159 = vld [vmem:[%s158] sm:$0xf]
  %s160 = scalar_lea.vmem %s1, 256
  %v161 = vld [vmem:[%s160] sm:$0xf]
  %v162 = vld [vmem:[%s160 + $0x4] sm:$0xf]
  %v163 = vld [vmem:[%s160 + $0x8] sm:$0xf]
  %v164 = vld [vmem:[%s160 + $0xc] sm:$0xf]
  %v165 = vld [vmem:[%s160 + $0x10] sm:$0xf]
  %v166 = vld [vmem:[%s160 + $0x14] sm:$0xf]
  %v167 = vld [vmem:[%s160 + $0x18] sm:$0xf]
  %v168 = vld [vmem:[%s160 + $0x1c] sm:$0xf]
  %v169 = vld [vmem:[%s160 + $0x20] sm:$0xf]
  %v170 = vld [vmem:[%s160 + $0x24] sm:$0xf]
  %v171 = vld [vmem:[%s160 + $0x28] sm:$0xf]
  %v172 = vld [vmem:[%s160 + $0x2c] sm:$0xf]
  %v173 = vld [vmem:[%s160 + $0x30] sm:$0xf]
  %v174 = vld [vmem:[%s160 + $0x34] sm:$0xf]
  %v175 = vld [vmem:[%s160 + $0x38] sm:$0xf]
  %v176 = vld [vmem:[%s160 + $0x3c] sm:$0xf]
  %s177 = scalar_lea.vmem %s1, 320
  %v178 = vld [vmem:[%s177] sm:$0xf]
  %v179 = vld [vmem:[%s177 + $0x4] sm:$0xf]
  %v180 = vld [vmem:[%s177 + $0x8] sm:$0xf]
  %v181 = vld [vmem:[%s177 + $0xc] sm:$0xf]
  %v182 = vld [vmem:[%s177 + $0x10] sm:$0xf]
  %v183 = vld [vmem:[%s177 + $0x14] sm:$0xf]
  %v184 = vld [vmem:[%s177 + $0x18] sm:$0xf]
  %v185 = vld [vmem:[%s177 + $0x1c] sm:$0xf]
  %v186 = vld [vmem:[%s177 + $0x20] sm:$0xf]
  %v187 = vld [vmem:[%s177 + $0x24] sm:$0xf]
  %v188 = vld [vmem:[%s177 + $0x28] sm:$0xf]
  %v189 = vld [vmem:[%s177 + $0x2c] sm:$0xf]
  %v190 = vld [vmem:[%s177 + $0x30] sm:$0xf]
  %v191 = vld [vmem:[%s177 + $0x34] sm:$0xf]
  %v192 = vld [vmem:[%s177 + $0x38] sm:$0xf]
  %v193 = vld [vmem:[%s177 + $0x3c] sm:$0xf]
  %v210 = vunpack.c.l.b16 %v178
  %v211 = vunpack.c.l.b16 %v179
  %v212 = vunpack.c.l.b16 %v180
  %v213 = vunpack.c.l.b16 %v181
  %v214 = vunpack.c.l.b16 %v182
  %v215 = vunpack.c.l.b16 %v183
  %v216 = vunpack.c.l.b16 %v184
  %v217 = vunpack.c.l.b16 %v185
  %v218 = vunpack.c.l.b16 %v186
  %v219 = vunpack.c.l.b16 %v187
  %v220 = vunpack.c.l.b16 %v188
  %v221 = vunpack.c.l.b16 %v189
  %v222 = vunpack.c.l.b16 %v190
  %v223 = vunpack.c.l.b16 %v191
  %v224 = vunpack.c.l.b16 %v192
  %v225 = vunpack.c.l.b16 %v193
  %v226 = vpack.c.b16 %v211, %v210
  %v227 = vpack.c.b16 %v213, %v212
  %v228 = vpack.c.b16 %v215, %v214
  %v229 = vpack.c.b16 %v217, %v216
  %v230 = vpack.c.b16 %v219, %v218
  %v231 = vpack.c.b16 %v221, %v220
  %v232 = vpack.c.b16 %v223, %v222
  %v233 = vpack.c.b16 %v225, %v224
  %242 = vmatprep.subr.bf16.mxu0 0
  %243 = vmatpush1.bf16.msra.mxu0 %v233
  %244 = vmatprep.subr.bf16.mxu0 0
  %245 = vmatpush1.bf16.msra.mxu0 %v232
  %246 = vmatprep.subr.bf16.mxu0 0
  %247 = vmatpush1.bf16.msra.mxu0 %v231
  %248 = vmatprep.subr.bf16.mxu0 0
  %249 = vmatpush1.bf16.msra.mxu0 %v230
  %250 = vmatprep.subr.bf16.mxu0 0
  %251 = vmatpush1.bf16.msra.mxu0 %v229
  %252 = vmatprep.subr.bf16.mxu0 0
  %253 = vmatpush1.bf16.msra.mxu0 %v228
  %254 = vmatprep.subr.bf16.mxu0 0
  %255 = vmatpush1.bf16.msra.mxu0 %v227
  %256 = vmatprep.subr.bf16.mxu0 0
  %257 = vmatpush1.bf16.msra.mxu0 %v226
  %258 = vmatprep.subr.bf16.mxu0 0
  %259 = vmatpush2.bf16.msra.mxu0 0
  %260 = vmatprep.subr.bf16.mxu0 0
  %261 = vmatpush2.bf16.msra.mxu0 0
  %262 = vmatprep.subr.bf16.mxu0 0
  %263 = vmatpush2.bf16.msra.mxu0 0
  %264 = vmatprep.subr.bf16.mxu0 0
  %265 = vmatpush2.bf16.msra.mxu0 0
  %266 = vmatprep.subr.bf16.mxu0 0
  %267 = vmatpush2.bf16.msra.mxu0 0
  %268 = vmatprep.subr.bf16.mxu0 0
  %269 = vmatpush2.bf16.msra.mxu0 0
  %270 = vmatprep.subr.bf16.mxu0 0
  %271 = vmatpush2.bf16.msra.mxu0 0
  %272 = vmatprep.subr.bf16.mxu0 0
  %273 = vmatpush2.bf16.msra.mxu0 0
  %274 = vmatprep.mubr.bf16.mxu0 0
  %275 = vmatmul.mubr.bf16.gmra.mxu0 %v35
  %v276 = vpop.f32.mrf.mxu0
  %v277 = vadd.f32 0.0, %v276
  %v278 = vpop.f32.mrf.mxu0
  %v279 = vpop.f32.mrf.mxu0
  %v280 = vpop.f32.mrf.mxu0
  %281 = vdwg.mxu0
  %v298 = vunpack.c.l.b16 %v161
  %v299 = vunpack.c.l.b16 %v162
  %v300 = vunpack.c.l.b16 %v163
  %v301 = vunpack.c.l.b16 %v164
  %v302 = vunpack.c.l.b16 %v165
  %v303 = vunpack.c.l.b16 %v166
  %v304 = vunpack.c.l.b16 %v167
  %v305 = vunpack.c.l.b16 %v168
  %v306 = vunpack.c.l.b16 %v169
  %v307 = vunpack.c.l.b16 %v170
  %v308 = vunpack.c.l.b16 %v171
  %v309 = vunpack.c.l.b16 %v172
  %v310 = vunpack.c.l.b16 %v173
  %v311 = vunpack.c.l.b16 %v174
  %v312 = vunpack.c.l.b16 %v175
  %v313 = vunpack.c.l.b16 %v176
  %v314 = vpack.c.b16 %v299, %v298
  %v315 = vpack.c.b16 %v301, %v300
  %v316 = vpack.c.b16 %v303, %v302
  %v317 = vpack.c.b16 %v305, %v304
  %v318 = vpack.c.b16 %v307, %v306
  %v319 = vpack.c.b16 %v309, %v308
  %v320 = vpack.c.b16 %v311, %v310
  %v321 = vpack.c.b16 %v313, %v312
  %330 = vmatprep.subr.bf16.mxu0 0
  %331 = vmatpush1.bf16.msra.mxu0 %v321
  %332 = vmatprep.subr.bf16.mxu0 0
  %333 = vmatpush1.bf16.msra.mxu0 %v320
  %334 = vmatprep.subr.bf16.mxu0 0
  %335 = vmatpush1.bf16.msra.mxu0 %v319
  %336 = vmatprep.subr.bf16.mxu0 0
  %337 = vmatpush1.bf16.msra.mxu0 %v318
  %338 = vmatprep.subr.bf16.mxu0 0
  %339 = vmatpush1.bf16.msra.mxu0 %v317
  %340 = vmatprep.subr.bf16.mxu0 0
  %341 = vmatpush1.bf16.msra.mxu0 %v316
  %342 = vmatprep.subr.bf16.mxu0 0
  %343 = vmatpush1.bf16.msra.mxu0 %v315
  %344 = vmatprep.subr.bf16.mxu0 0
  %345 = vmatpush1.bf16.msra.mxu0 %v314
  %346 = vmatprep.subr.bf16.mxu0 0
  %347 = vmatpush2.bf16.msra.mxu0 0
  %348 = vmatprep.subr.bf16.mxu0 0
  %349 = vmatpush2.bf16.msra.mxu0 0
  %350 = vmatprep.subr.bf16.mxu0 0
  %351 = vmatpush2.bf16.msra.mxu0 0
  %352 = vmatprep.subr.bf16.mxu0 0
  %353 = vmatpush2.bf16.msra.mxu0 0
  %354 = vmatprep.subr.bf16.mxu0 0
  %355 = vmatpush2.bf16.msra.mxu0 0
  %356 = vmatprep.subr.bf16.mxu0 0
  %357 = vmatpush2.bf16.msra.mxu0 0
  %358 = vmatprep.subr.bf16.mxu0 0
  %359 = vmatpush2.bf16.msra.mxu0 0
  %360 = vmatprep.subr.bf16.mxu0 0
  %361 = vmatpush2.bf16.msra.mxu0 0
  %362 = vmatprep.mubr.bf16.mxu0 0
  %363 = vmatmul.mubr.bf16.gmra.mxu0 %v33
  %v364 = vpop.f32.mrf.mxu0
  %v365 = vadd.f32 %v277, %v364
  %v366 = vpop.f32.mrf.mxu0
  %v367 = vpop.f32.mrf.mxu0
  %v368 = vpop.f32.mrf.mxu0
  %369 = vdwg.mxu0
  %s370 = scalar_lea.vmem %s1, 448
  %v371 = vld [vmem:[%s370] sm:$0xf]
  %v372 = vld [vmem:[%s370 + $0x4] sm:$0xf]
  %v373 = vld [vmem:[%s370 + $0x8] sm:$0xf]
  %v374 = vld [vmem:[%s370 + $0xc] sm:$0xf]
  %v375 = vld [vmem:[%s370 + $0x10] sm:$0xf]
  %v376 = vld [vmem:[%s370 + $0x14] sm:$0xf]
  %v377 = vld [vmem:[%s370 + $0x18] sm:$0xf]
  %v378 = vld [vmem:[%s370 + $0x1c] sm:$0xf]
  %v379 = vld [vmem:[%s370 + $0x20] sm:$0xf]
  %v380 = vld [vmem:[%s370 + $0x24] sm:$0xf]
  %v381 = vld [vmem:[%s370 + $0x28] sm:$0xf]
  %v382 = vld [vmem:[%s370 + $0x2c] sm:$0xf]
  %v383 = vld [vmem:[%s370 + $0x30] sm:$0xf]
  %v384 = vld [vmem:[%s370 + $0x34] sm:$0xf]
  %v385 = vld [vmem:[%s370 + $0x38] sm:$0xf]
  %v386 = vld [vmem:[%s370 + $0x3c] sm:$0xf]
  %v403 = vunpack.c.l.b16 %v371
  %v404 = vunpack.c.l.b16 %v372
  %v405 = vunpack.c.l.b16 %v373
  %v406 = vunpack.c.l.b16 %v374
  %v407 = vunpack.c.l.b16 %v375
  %v408 = vunpack.c.l.b16 %v376
  %v409 = vunpack.c.l.b16 %v377
  %v410 = vunpack.c.l.b16 %v378
  %v411 = vunpack.c.l.b16 %v379
  %v412 = vunpack.c.l.b16 %v380
  %v413 = vunpack.c.l.b16 %v381
  %v414 = vunpack.c.l.b16 %v382
  %v415 = vunpack.c.l.b16 %v383
  %v416 = vunpack.c.l.b16 %v384
  %v417 = vunpack.c.l.b16 %v385
  %v418 = vunpack.c.l.b16 %v386
  %v419 = vpack.c.b16 %v404, %v403
  %v420 = vpack.c.b16 %v406, %v405
  %v421 = vpack.c.b16 %v408, %v407
  %v422 = vpack.c.b16 %v410, %v409
  %v423 = vpack.c.b16 %v412, %v411
  %v424 = vpack.c.b16 %v414, %v413
  %v425 = vpack.c.b16 %v416, %v415
  %v426 = vpack.c.b16 %v418, %v417
  %435 = vmatprep.subr.bf16.mxu0 0
  %436 = vmatpush1.bf16.msra.mxu0 %v426
  %437 = vmatprep.subr.bf16.mxu0 0
  %438 = vmatpush1.bf16.msra.mxu0 %v425
  %439 = vmatprep.subr.bf16.mxu0 0
  %440 = vmatpush1.bf16.msra.mxu0 %v424
  %441 = vmatprep.subr.bf16.mxu0 0
  %442 = vmatpush1.bf16.msra.mxu0 %v423
  %443 = vmatprep.subr.bf16.mxu0 0
  %444 = vmatpush1.bf16.msra.mxu0 %v422
  %445 = vmatprep.subr.bf16.mxu0 0
  %446 = vmatpush1.bf16.msra.mxu0 %v421
  %447 = vmatprep.subr.bf16.mxu0 0
  %448 = vmatpush1.bf16.msra.mxu0 %v420
  %449 = vmatprep.subr.bf16.mxu0 0
  %450 = vmatpush1.bf16.msra.mxu0 %v419
  %451 = vmatprep.subr.bf16.mxu0 0
  %452 = vmatpush2.bf16.msra.mxu0 0
  %453 = vmatprep.subr.bf16.mxu0 0
  %454 = vmatpush2.bf16.msra.mxu0 0
  %455 = vmatprep.subr.bf16.mxu0 0
  %456 = vmatpush2.bf16.msra.mxu0 0
  %457 = vmatprep.subr.bf16.mxu0 0
  %458 = vmatpush2.bf16.msra.mxu0 0
  %459 = vmatprep.subr.bf16.mxu0 0
  %460 = vmatpush2.bf16.msra.mxu0 0
  %461 = vmatprep.subr.bf16.mxu0 0
  %462 = vmatpush2.bf16.msra.mxu0 0
  %463 = vmatprep.subr.bf16.mxu0 0
  %464 = vmatpush2.bf16.msra.mxu0 0
  %465 = vmatprep.subr.bf16.mxu0 0
  %466 = vmatpush2.bf16.msra.mxu0 0
  %467 = vmatprep.mubr.bf16.mxu0 0
  %468 = vmatmul.mubr.bf16.gmra.mxu0 %v49
  %v469 = vpop.f32.mrf.mxu0
  %v470 = vadd.f32 0.0, %v469
  %v471 = vpop.f32.mrf.mxu0
  %v472 = vpop.f32.mrf.mxu0
  %v473 = vpop.f32.mrf.mxu0
  %474 = vdwg.mxu0
  %v475 = vadd.f32 %v365, %v470
  %s476 = scalar_lea.vmem %s1, 512
  %v477 = vld [vmem:[%s476] sm:$0xf]
  %v478 = vld [vmem:[%s476 + $0x4] sm:$0xf]
  %v479 = vld [vmem:[%s476 + $0x8] sm:$0xf]
  %v480 = vld [vmem:[%s476 + $0xc] sm:$0xf]
  %v481 = vld [vmem:[%s476 + $0x10] sm:$0xf]
  %v482 = vld [vmem:[%s476 + $0x14] sm:$0xf]
  %v483 = vld [vmem:[%s476 + $0x18] sm:$0xf]
  %v484 = vld [vmem:[%s476 + $0x1c] sm:$0xf]
  %v485 = vld [vmem:[%s476 + $0x20] sm:$0xf]
  %v486 = vld [vmem:[%s476 + $0x24] sm:$0xf]
  %v487 = vld [vmem:[%s476 + $0x28] sm:$0xf]
  %v488 = vld [vmem:[%s476 + $0x2c] sm:$0xf]
  %v489 = vld [vmem:[%s476 + $0x30] sm:$0xf]
  %v490 = vld [vmem:[%s476 + $0x34] sm:$0xf]
  %v491 = vld [vmem:[%s476 + $0x38] sm:$0xf]
  %v492 = vld [vmem:[%s476 + $0x3c] sm:$0xf]
  %v509 = vunpack.c.l.b16 %v477
  %v510 = vunpack.c.l.b16 %v478
  %v511 = vunpack.c.l.b16 %v479
  %v512 = vunpack.c.l.b16 %v480
  %v513 = vunpack.c.l.b16 %v481
  %v514 = vunpack.c.l.b16 %v482
  %v515 = vunpack.c.l.b16 %v483
  %v516 = vunpack.c.l.b16 %v484
  %v517 = vunpack.c.l.b16 %v485
  %v518 = vunpack.c.l.b16 %v486
  %v519 = vunpack.c.l.b16 %v487
  %v520 = vunpack.c.l.b16 %v488
  %v521 = vunpack.c.l.b16 %v489
  %v522 = vunpack.c.l.b16 %v490
  %v523 = vunpack.c.l.b16 %v491
  %v524 = vunpack.c.l.b16 %v492
  %v525 = vpack.c.b16 %v510, %v509
  %v526 = vpack.c.b16 %v512, %v511
  %v527 = vpack.c.b16 %v514, %v513
  %v528 = vpack.c.b16 %v516, %v515
  %v529 = vpack.c.b16 %v518, %v517
  %v530 = vpack.c.b16 %v520, %v519
  %v531 = vpack.c.b16 %v522, %v521
  %v532 = vpack.c.b16 %v524, %v523
  %541 = vmatprep.subr.bf16.mxu0 0
  %542 = vmatpush1.bf16.msra.mxu0 %v532
  %543 = vmatprep.subr.bf16.mxu0 0
  %544 = vmatpush1.bf16.msra.mxu0 %v531
  %545 = vmatprep.subr.bf16.mxu0 0
  %546 = vmatpush1.bf16.msra.mxu0 %v530
  %547 = vmatprep.subr.bf16.mxu0 0
  %548 = vmatpush1.bf16.msra.mxu0 %v529
  %549 = vmatprep.subr.bf16.mxu0 0
  %550 = vmatpush1.bf16.msra.mxu0 %v528
  %551 = vmatprep.subr.bf16.mxu0 0
  %552 = vmatpush1.bf16.msra.mxu0 %v527
  %553 = vmatprep.subr.bf16.mxu0 0
  %554 = vmatpush1.bf16.msra.mxu0 %v526
  %555 = vmatprep.subr.bf16.mxu0 0
  %556 = vmatpush1.bf16.msra.mxu0 %v525
  %557 = vmatprep.subr.bf16.mxu0 0
  %558 = vmatpush2.bf16.msra.mxu0 0
  %559 = vmatprep.subr.bf16.mxu0 0
  %560 = vmatpush2.bf16.msra.mxu0 0
  %561 = vmatprep.subr.bf16.mxu0 0
  %562 = vmatpush2.bf16.msra.mxu0 0
  %563 = vmatprep.subr.bf16.mxu0 0
  %564 = vmatpush2.bf16.msra.mxu0 0
  %565 = vmatprep.subr.bf16.mxu0 0
  %566 = vmatpush2.bf16.msra.mxu0 0
  %567 = vmatprep.subr.bf16.mxu0 0
  %568 = vmatpush2.bf16.msra.mxu0 0
  %569 = vmatprep.subr.bf16.mxu0 0
  %570 = vmatpush2.bf16.msra.mxu0 0
  %571 = vmatprep.subr.bf16.mxu0 0
  %572 = vmatpush2.bf16.msra.mxu0 0
  %573 = vmatprep.mubr.bf16.mxu0 0
  %574 = vmatmul.mubr.bf16.gmra.mxu0 %v51
  %v575 = vpop.f32.mrf.mxu0
  %v576 = vadd.f32 0.0, %v575
  %v577 = vpop.f32.mrf.mxu0
  %v578 = vpop.f32.mrf.mxu0
  %v579 = vpop.f32.mrf.mxu0
  %580 = vdwg.mxu0
  %v581 = vadd.f32 %v475, %v576
  %v582 = vld [vmem:[%s2] sm:$0x1]
  %v584 = vlaneseq
  %v585 = vshrl.u32 %v584, 7
  %v586 = vsub.s32 0, %v585
  %v587 = vrot.slane %v582, %v586
  %v589 = vadd.f32 %v581, %v587
  %vm590 = vcmp.ge.f32.partialorder %v589, 0.0
  %v591 = vmul.f32 %v589, 0.01
  %v592 = vsel %vm590, %v589, %v591
  %v593 = vpack.c.bf16 %v592, %v592
  %s594 = scalar_lea.vmem %s1, 192
  %v595 = vld [vmem:[%s594] sm:$0xf]
  %v596 = vld [vmem:[%s594 + $0x4] sm:$0xf]
  %v597 = vld [vmem:[%s594 + $0x8] sm:$0xf]
  %v598 = vld [vmem:[%s594 + $0xc] sm:$0xf]
  %v599 = vld [vmem:[%s594 + $0x10] sm:$0xf]
  %v600 = vld [vmem:[%s594 + $0x14] sm:$0xf]
  %v601 = vld [vmem:[%s594 + $0x18] sm:$0xf]
  %v602 = vld [vmem:[%s594 + $0x1c] sm:$0xf]
  %v603 = vld [vmem:[%s594 + $0x20] sm:$0xf]
  %v604 = vld [vmem:[%s594 + $0x24] sm:$0xf]
  %v605 = vld [vmem:[%s594 + $0x28] sm:$0xf]
  %v606 = vld [vmem:[%s594 + $0x2c] sm:$0xf]
  %v607 = vld [vmem:[%s594 + $0x30] sm:$0xf]
  %v608 = vld [vmem:[%s594 + $0x34] sm:$0xf]
  %v609 = vld [vmem:[%s594 + $0x38] sm:$0xf]
  %v610 = vld [vmem:[%s594 + $0x3c] sm:$0xf]
  %611 = vmatprep.subr.bf16.mxu0 0
  %612 = vmatpush1.bf16.msra.mxu0 %v321
  %613 = vmatprep.subr.bf16.mxu0 0
  %614 = vmatpush1.bf16.msra.mxu0 %v320
  %615 = vmatprep.subr.bf16.mxu0 0
  %616 = vmatpush1.bf16.msra.mxu0 %v319
  %617 = vmatprep.subr.bf16.mxu0 0
  %618 = vmatpush1.bf16.msra.mxu0 %v318
  %619 = vmatprep.subr.bf16.mxu0 0
  %620 = vmatpush1.bf16.msra.mxu0 %v317
  %621 = vmatprep.subr.bf16.mxu0 0
  %622 = vmatpush1.bf16.msra.mxu0 %v316
  %623 = vmatprep.subr.bf16.mxu0 0
  %624 = vmatpush1.bf16.msra.mxu0 %v315
  %625 = vmatprep.subr.bf16.mxu0 0
  %626 = vmatpush1.bf16.msra.mxu0 %v314
  %627 = vmatprep.subr.bf16.mxu0 0
  %628 = vmatpush2.bf16.msra.mxu0 0
  %629 = vmatprep.subr.bf16.mxu0 0
  %630 = vmatpush2.bf16.msra.mxu0 0
  %631 = vmatprep.subr.bf16.mxu0 0
  %632 = vmatpush2.bf16.msra.mxu0 0
  %633 = vmatprep.subr.bf16.mxu0 0
  %634 = vmatpush2.bf16.msra.mxu0 0
  %635 = vmatprep.subr.bf16.mxu0 0
  %636 = vmatpush2.bf16.msra.mxu0 0
  %637 = vmatprep.subr.bf16.mxu0 0
  %638 = vmatpush2.bf16.msra.mxu0 0
  %639 = vmatprep.subr.bf16.mxu0 0
  %640 = vmatpush2.bf16.msra.mxu0 0
  %641 = vmatprep.subr.bf16.mxu0 0
  %642 = vmatpush2.bf16.msra.mxu0 0
  %643 = vmatprep.mubr.bf16.mxu0 0
  %644 = vmatmul.mubr.bf16.gmra.mxu0 %v37
  %v645 = vpop.f32.mrf.mxu0
  %v646 = vadd.f32 0.0, %v645
  %v647 = vpop.f32.mrf.mxu0
  %v648 = vpop.f32.mrf.mxu0
  %v649 = vpop.f32.mrf.mxu0
  %650 = vdwg.mxu0
  %v667 = vunpack.c.l.b16 %v595
  %v668 = vunpack.c.l.b16 %v596
  %v669 = vunpack.c.l.b16 %v597
  %v670 = vunpack.c.l.b16 %v598
  %v671 = vunpack.c.l.b16 %v599
  %v672 = vunpack.c.l.b16 %v600
  %v673 = vunpack.c.l.b16 %v601
  %v674 = vunpack.c.l.b16 %v602
  %v675 = vunpack.c.l.b16 %v603
  %v676 = vunpack.c.l.b16 %v604
  %v677 = vunpack.c.l.b16 %v605
  %v678 = vunpack.c.l.b16 %v606
  %v679 = vunpack.c.l.b16 %v607
  %v680 = vunpack.c.l.b16 %v608
  %v681 = vunpack.c.l.b16 %v609
  %v682 = vunpack.c.l.b16 %v610
  %v683 = vpack.c.b16 %v668, %v667
  %v684 = vpack.c.b16 %v670, %v669
  %v685 = vpack.c.b16 %v672, %v671
  %v686 = vpack.c.b16 %v674, %v673
  %v687 = vpack.c.b16 %v676, %v675
  %v688 = vpack.c.b16 %v678, %v677
  %v689 = vpack.c.b16 %v680, %v679
  %v690 = vpack.c.b16 %v682, %v681
  %699 = vmatprep.subr.bf16.mxu0 0
  %700 = vmatpush1.bf16.msra.mxu0 %v690
  %701 = vmatprep.subr.bf16.mxu0 0
  %702 = vmatpush1.bf16.msra.mxu0 %v689
  %703 = vmatprep.subr.bf16.mxu0 0
  %704 = vmatpush1.bf16.msra.mxu0 %v688
  %705 = vmatprep.subr.bf16.mxu0 0
  %706 = vmatpush1.bf16.msra.mxu0 %v687
  %707 = vmatprep.subr.bf16.mxu0 0
  %708 = vmatpush1.bf16.msra.mxu0 %v686
  %709 = vmatprep.subr.bf16.mxu0 0
  %710 = vmatpush1.bf16.msra.mxu0 %v685
  %711 = vmatprep.subr.bf16.mxu0 0
  %712 = vmatpush1.bf16.msra.mxu0 %v684
  %713 = vmatprep.subr.bf16.mxu0 0
  %714 = vmatpush1.bf16.msra.mxu0 %v683
  %715 = vmatprep.subr.bf16.mxu0 0
  %716 = vmatpush2.bf16.msra.mxu0 0
  %717 = vmatprep.subr.bf16.mxu0 0
  %718 = vmatpush2.bf16.msra.mxu0 0
  %719 = vmatprep.subr.bf16.mxu0 0
  %720 = vmatpush2.bf16.msra.mxu0 0
  %721 = vmatprep.subr.bf16.mxu0 0
  %722 = vmatpush2.bf16.msra.mxu0 0
  %723 = vmatprep.subr.bf16.mxu0 0
  %724 = vmatpush2.bf16.msra.mxu0 0
  %725 = vmatprep.subr.bf16.mxu0 0
  %726 = vmatpush2.bf16.msra.mxu0 0
  %727 = vmatprep.subr.bf16.mxu0 0
  %728 = vmatpush2.bf16.msra.mxu0 0
  %729 = vmatprep.subr.bf16.mxu0 0
  %730 = vmatpush2.bf16.msra.mxu0 0
  %731 = vmatprep.mubr.bf16.mxu0 0
  %732 = vmatmul.mubr.bf16.gmra.mxu0 %v35
  %v733 = vpop.f32.mrf.mxu0
  %v734 = vadd.f32 %v646, %v733
  %v735 = vpop.f32.mrf.mxu0
  %v736 = vpop.f32.mrf.mxu0
  %v737 = vpop.f32.mrf.mxu0
  %738 = vdwg.mxu0
  %739 = vmatprep.subr.bf16.mxu0 0
  %740 = vmatpush1.bf16.msra.mxu0 %v233
  %741 = vmatprep.subr.bf16.mxu0 0
  %742 = vmatpush1.bf16.msra.mxu0 %v232
  %743 = vmatprep.subr.bf16.mxu0 0
  %744 = vmatpush1.bf16.msra.mxu0 %v231
  %745 = vmatprep.subr.bf16.mxu0 0
  %746 = vmatpush1.bf16.msra.mxu0 %v230
  %747 = vmatprep.subr.bf16.mxu0 0
  %748 = vmatpush1.bf16.msra.mxu0 %v229
  %749 = vmatprep.subr.bf16.mxu0 0
  %750 = vmatpush1.bf16.msra.mxu0 %v228
  %751 = vmatprep.subr.bf16.mxu0 0
  %752 = vmatpush1.bf16.msra.mxu0 %v227
  %753 = vmatprep.subr.bf16.mxu0 0
  %754 = vmatpush1.bf16.msra.mxu0 %v226
  %755 = vmatprep.subr.bf16.mxu0 0
  %756 = vmatpush2.bf16.msra.mxu0 0
  %757 = vmatprep.subr.bf16.mxu0 0
  %758 = vmatpush2.bf16.msra.mxu0 0
  %759 = vmatprep.subr.bf16.mxu0 0
  %760 = vmatpush2.bf16.msra.mxu0 0
  %761 = vmatprep.subr.bf16.mxu0 0
  %762 = vmatpush2.bf16.msra.mxu0 0
  %763 = vmatprep.subr.bf16.mxu0 0
  %764 = vmatpush2.bf16.msra.mxu0 0
  %765 = vmatprep.subr.bf16.mxu0 0
  %766 = vmatpush2.bf16.msra.mxu0 0
  %767 = vmatprep.subr.bf16.mxu0 0
  %768 = vmatpush2.bf16.msra.mxu0 0
  %769 = vmatprep.subr.bf16.mxu0 0
  %770 = vmatpush2.bf16.msra.mxu0 0
  %771 = vmatprep.mubr.bf16.mxu0 0
  %772 = vmatmul.mubr.bf16.gmra.mxu0 %v39
  %v773 = vpop.f32.mrf.mxu0
  %v774 = vadd.f32 0.0, %v773
  %v775 = vpop.f32.mrf.mxu0
  %v776 = vpop.f32.mrf.mxu0
  %v777 = vpop.f32.mrf.mxu0
  %778 = vdwg.mxu0
  %v779 = vadd.f32 %v734, %v774
  %s780 = scalar_lea.vmem %s1, 384
  %v781 = vld [vmem:[%s780] sm:$0xf]
  %v782 = vld [vmem:[%s780 + $0x4] sm:$0xf]
  %v783 = vld [vmem:[%s780 + $0x8] sm:$0xf]
  %v784 = vld [vmem:[%s780 + $0xc] sm:$0xf]
  %v785 = vld [vmem:[%s780 + $0x10] sm:$0xf]
  %v786 = vld [vmem:[%s780 + $0x14] sm:$0xf]
  %v787 = vld [vmem:[%s780 + $0x18] sm:$0xf]
  %v788 = vld [vmem:[%s780 + $0x1c] sm:$0xf]
  %v789 = vld [vmem:[%s780 + $0x20] sm:$0xf]
  %v790 = vld [vmem:[%s780 + $0x24] sm:$0xf]
  %v791 = vld [vmem:[%s780 + $0x28] sm:$0xf]
  %v792 = vld [vmem:[%s780 + $0x2c] sm:$0xf]
  %v793 = vld [vmem:[%s780 + $0x30] sm:$0xf]
  %v794 = vld [vmem:[%s780 + $0x34] sm:$0xf]
  %v795 = vld [vmem:[%s780 + $0x38] sm:$0xf]
  %v796 = vld [vmem:[%s780 + $0x3c] sm:$0xf]
  %v813 = vunpack.c.l.b16 %v781
  %v814 = vunpack.c.l.b16 %v782
  %v815 = vunpack.c.l.b16 %v783
  %v816 = vunpack.c.l.b16 %v784
  %v817 = vunpack.c.l.b16 %v785
  %v818 = vunpack.c.l.b16 %v786
  %v819 = vunpack.c.l.b16 %v787
  %v820 = vunpack.c.l.b16 %v788
  %v821 = vunpack.c.l.b16 %v789
  %v822 = vunpack.c.l.b16 %v790
  %v823 = vunpack.c.l.b16 %v791
  %v824 = vunpack.c.l.b16 %v792
  %v825 = vunpack.c.l.b16 %v793
  %v826 = vunpack.c.l.b16 %v794
  %v827 = vunpack.c.l.b16 %v795
  %v828 = vunpack.c.l.b16 %v796
  %v829 = vpack.c.b16 %v814, %v813
  %v830 = vpack.c.b16 %v816, %v815
  %v831 = vpack.c.b16 %v818, %v817
  %v832 = vpack.c.b16 %v820, %v819
  %v833 = vpack.c.b16 %v822, %v821
  %v834 = vpack.c.b16 %v824, %v823
  %v835 = vpack.c.b16 %v826, %v825
  %v836 = vpack.c.b16 %v828, %v827
  %845 = vmatprep.subr.bf16.mxu0 0
  %846 = vmatpush1.bf16.msra.mxu0 %v836
  %847 = vmatprep.subr.bf16.mxu0 0
  %848 = vmatpush1.bf16.msra.mxu0 %v835
  %849 = vmatprep.subr.bf16.mxu0 0
  %850 = vmatpush1.bf16.msra.mxu0 %v834
  %851 = vmatprep.subr.bf16.mxu0 0
  %852 = vmatpush1.bf16.msra.mxu0 %v833
  %853 = vmatprep.subr.bf16.mxu0 0
  %854 = vmatpush1.bf16.msra.mxu0 %v832
  %855 = vmatprep.subr.bf16.mxu0 0
  %856 = vmatpush1.bf16.msra.mxu0 %v831
  %857 = vmatprep.subr.bf16.mxu0 0
  %858 = vmatpush1.bf16.msra.mxu0 %v830
  %859 = vmatprep.subr.bf16.mxu0 0
  %860 = vmatpush1.bf16.msra.mxu0 %v829
  %861 = vmatprep.subr.bf16.mxu0 0
  %862 = vmatpush2.bf16.msra.mxu0 0
  %863 = vmatprep.subr.bf16.mxu0 0
  %864 = vmatpush2.bf16.msra.mxu0 0
  %865 = vmatprep.subr.bf16.mxu0 0
  %866 = vmatpush2.bf16.msra.mxu0 0
  %867 = vmatprep.subr.bf16.mxu0 0
  %868 = vmatpush2.bf16.msra.mxu0 0
  %869 = vmatprep.subr.bf16.mxu0 0
  %870 = vmatpush2.bf16.msra.mxu0 0
  %871 = vmatprep.subr.bf16.mxu0 0
  %872 = vmatpush2.bf16.msra.mxu0 0
  %873 = vmatprep.subr.bf16.mxu0 0
  %874 = vmatpush2.bf16.msra.mxu0 0
  %875 = vmatprep.subr.bf16.mxu0 0
  %876 = vmatpush2.bf16.msra.mxu0 0
  %877 = vmatprep.mubr.bf16.mxu0 0
  %878 = vmatmul.mubr.bf16.gmra.mxu0 %v51
  %v879 = vpop.f32.mrf.mxu0
  %v880 = vadd.f32 0.0, %v879
  %v881 = vpop.f32.mrf.mxu0
  %v882 = vpop.f32.mrf.mxu0
  %v883 = vpop.f32.mrf.mxu0
  %884 = vdwg.mxu0
  %v885 = vadd.f32 %v779, %v880
  %886 = vmatprep.subr.bf16.mxu0 0
  %887 = vmatpush1.bf16.msra.mxu0 %v426
  %888 = vmatprep.subr.bf16.mxu0 0
  %889 = vmatpush1.bf16.msra.mxu0 %v425
  %890 = vmatprep.subr.bf16.mxu0 0
  %891 = vmatpush1.bf16.msra.mxu0 %v424
  %892 = vmatprep.subr.bf16.mxu0 0
  %893 = vmatpush1.bf16.msra.mxu0 %v423
  %894 = vmatprep.subr.bf16.mxu0 0
  %895 = vmatpush1.bf16.msra.mxu0 %v422
  %896 = vmatprep.subr.bf16.mxu0 0
  %897 = vmatpush1.bf16.msra.mxu0 %v421
  %898 = vmatprep.subr.bf16.mxu0 0
  %899 = vmatpush1.bf16.msra.mxu0 %v420
  %900 = vmatprep.subr.bf16.mxu0 0
  %901 = vmatpush1.bf16.msra.mxu0 %v419
  %902 = vmatprep.subr.bf16.mxu0 0
  %903 = vmatpush2.bf16.msra.mxu0 0
  %904 = vmatprep.subr.bf16.mxu0 0
  %905 = vmatpush2.bf16.msra.mxu0 0
  %906 = vmatprep.subr.bf16.mxu0 0
  %907 = vmatpush2.bf16.msra.mxu0 0
  %908 = vmatprep.subr.bf16.mxu0 0
  %909 = vmatpush2.bf16.msra.mxu0 0
  %910 = vmatprep.subr.bf16.mxu0 0
  %911 = vmatpush2.bf16.msra.mxu0 0
  %912 = vmatprep.subr.bf16.mxu0 0
  %913 = vmatpush2.bf16.msra.mxu0 0
  %914 = vmatprep.subr.bf16.mxu0 0
  %915 = vmatpush2.bf16.msra.mxu0 0
  %916 = vmatprep.subr.bf16.mxu0 0
  %917 = vmatpush2.bf16.msra.mxu0 0
  %918 = vmatprep.mubr.bf16.mxu0 0
  %919 = vmatmul.mubr.bf16.gmra.mxu0 %v53
  %v920 = vpop.f32.mrf.mxu0
  %v921 = vadd.f32 0.0, %v920
  %v922 = vpop.f32.mrf.mxu0
  %v923 = vpop.f32.mrf.mxu0
  %v924 = vpop.f32.mrf.mxu0
  %925 = vdwg.mxu0
  %v926 = vadd.f32 %v885, %v921
  %927 = vmatprep.subr.bf16.mxu0 0
  %928 = vmatpush1.bf16.msra.mxu0 %v532
  %929 = vmatprep.subr.bf16.mxu0 0
  %930 = vmatpush1.bf16.msra.mxu0 %v531
  %931 = vmatprep.subr.bf16.mxu0 0
  %932 = vmatpush1.bf16.msra.mxu0 %v530
  %933 = vmatprep.subr.bf16.mxu0 0
  %934 = vmatpush1.bf16.msra.mxu0 %v529
  %935 = vmatprep.subr.bf16.mxu0 0
  %936 = vmatpush1.bf16.msra.mxu0 %v528
  %937 = vmatprep.subr.bf16.mxu0 0
  %938 = vmatpush1.bf16.msra.mxu0 %v527
  %939 = vmatprep.subr.bf16.mxu0 0
  %940 = vmatpush1.bf16.msra.mxu0 %v526
  %941 = vmatprep.subr.bf16.mxu0 0
  %942 = vmatpush1.bf16.msra.mxu0 %v525
  %943 = vmatprep.subr.bf16.mxu0 0
  %944 = vmatpush2.bf16.msra.mxu0 0
  %945 = vmatprep.subr.bf16.mxu0 0
  %946 = vmatpush2.bf16.msra.mxu0 0
  %947 = vmatprep.subr.bf16.mxu0 0
  %948 = vmatpush2.bf16.msra.mxu0 0
  %949 = vmatprep.subr.bf16.mxu0 0
  %950 = vmatpush2.bf16.msra.mxu0 0
  %951 = vmatprep.subr.bf16.mxu0 0
  %952 = vmatpush2.bf16.msra.mxu0 0
  %953 = vmatprep.subr.bf16.mxu0 0
  %954 = vmatpush2.bf16.msra.mxu0 0
  %955 = vmatprep.subr.bf16.mxu0 0
  %956 = vmatpush2.bf16.msra.mxu0 0
  %957 = vmatprep.subr.bf16.mxu0 0
  %958 = vmatpush2.bf16.msra.mxu0 0
  %959 = vmatprep.mubr.bf16.mxu0 0
  %960 = vmatmul.mubr.bf16.gmra.mxu0 %v55
  %v961 = vpop.f32.mrf.mxu0
  %v962 = vadd.f32 0.0, %v961
  %v963 = vpop.f32.mrf.mxu0
  %v964 = vpop.f32.mrf.mxu0
  %v965 = vpop.f32.mrf.mxu0
  %966 = vdwg.mxu0
  %v967 = vadd.f32 %v926, %v962
  %v968 = vadd.f32 %v967, %v587
  %vm969 = vcmp.ge.f32.partialorder %v968, 0.0
  %v970 = vmul.f32 %v968, 0.01
  %v971 = vsel %vm969, %v968, %v970
  %v972 = vpack.c.bf16 %v971, %v971
  %973 = vmatprep.subr.bf16.mxu0 0
  %974 = vmatpush1.bf16.msra.mxu0 %v321
  %975 = vmatprep.subr.bf16.mxu0 0
  %976 = vmatpush1.bf16.msra.mxu0 %v320
  %977 = vmatprep.subr.bf16.mxu0 0
  %978 = vmatpush1.bf16.msra.mxu0 %v319
  %979 = vmatprep.subr.bf16.mxu0 0
  %980 = vmatpush1.bf16.msra.mxu0 %v318
  %981 = vmatprep.subr.bf16.mxu0 0
  %982 = vmatpush1.bf16.msra.mxu0 %v317
  %983 = vmatprep.subr.bf16.mxu0 0
  %984 = vmatpush1.bf16.msra.mxu0 %v316
  %985 = vmatprep.subr.bf16.mxu0 0
  %986 = vmatpush1.bf16.msra.mxu0 %v315
  %987 = vmatprep.subr.bf16.mxu0 0
  %988 = vmatpush1.bf16.msra.mxu0 %v314
  %989 = vmatprep.subr.bf16.mxu0 0
  %990 = vmatpush2.bf16.msra.mxu0 0
  %991 = vmatprep.subr.bf16.mxu0 0
  %992 = vmatpush2.bf16.msra.mxu0 0
  %993 = vmatprep.subr.bf16.mxu0 0
  %994 = vmatpush2.bf16.msra.mxu0 0
  %995 = vmatprep.subr.bf16.mxu0 0
  %996 = vmatpush2.bf16.msra.mxu0 0
  %997 = vmatprep.subr.bf16.mxu0 0
  %998 = vmatpush2.bf16.msra.mxu0 0
  %999 = vmatprep.subr.bf16.mxu0 0
  %1000 = vmatpush2.bf16.msra.mxu0 0
  %1001 = vmatprep.subr.bf16.mxu0 0
  %1002 = vmatpush2.bf16.msra.mxu0 0
  %1003 = vmatprep.subr.bf16.mxu0 0
  %1004 = vmatpush2.bf16.msra.mxu0 0
  %1005 = vmatprep.mubr.bf16.mxu0 0
  %1006 = vmatmul.mubr.bf16.gmra.mxu0 %v41
  %v1007 = vpop.f32.mrf.mxu0
  %v1008 = vadd.f32 0.0, %v1007
  %v1009 = vpop.f32.mrf.mxu0
  %v1010 = vpop.f32.mrf.mxu0
  %v1011 = vpop.f32.mrf.mxu0
  %1012 = vdwg.mxu0
  %1013 = vmatprep.subr.bf16.mxu0 0
  %1014 = vmatpush1.bf16.msra.mxu0 %v690
  %1015 = vmatprep.subr.bf16.mxu0 0
  %1016 = vmatpush1.bf16.msra.mxu0 %v689
  %1017 = vmatprep.subr.bf16.mxu0 0
  %1018 = vmatpush1.bf16.msra.mxu0 %v688
  %1019 = vmatprep.subr.bf16.mxu0 0
  %1020 = vmatpush1.bf16.msra.mxu0 %v687
  %1021 = vmatprep.subr.bf16.mxu0 0
  %1022 = vmatpush1.bf16.msra.mxu0 %v686
  %1023 = vmatprep.subr.bf16.mxu0 0
  %1024 = vmatpush1.bf16.msra.mxu0 %v685
  %1025 = vmatprep.subr.bf16.mxu0 0
  %1026 = vmatpush1.bf16.msra.mxu0 %v684
  %1027 = vmatprep.subr.bf16.mxu0 0
  %1028 = vmatpush1.bf16.msra.mxu0 %v683
  %1029 = vmatprep.subr.bf16.mxu0 0
  %1030 = vmatpush2.bf16.msra.mxu0 0
  %1031 = vmatprep.subr.bf16.mxu0 0
  %1032 = vmatpush2.bf16.msra.mxu0 0
  %1033 = vmatprep.subr.bf16.mxu0 0
  %1034 = vmatpush2.bf16.msra.mxu0 0
  %1035 = vmatprep.subr.bf16.mxu0 0
  %1036 = vmatpush2.bf16.msra.mxu0 0
  %1037 = vmatprep.subr.bf16.mxu0 0
  %1038 = vmatpush2.bf16.msra.mxu0 0
  %1039 = vmatprep.subr.bf16.mxu0 0
  %1040 = vmatpush2.bf16.msra.mxu0 0
  %1041 = vmatprep.subr.bf16.mxu0 0
  %1042 = vmatpush2.bf16.msra.mxu0 0
  %1043 = vmatprep.subr.bf16.mxu0 0
  %1044 = vmatpush2.bf16.msra.mxu0 0
  %1045 = vmatprep.mubr.bf16.mxu0 0
  %1046 = vmatmul.mubr.bf16.gmra.mxu0 %v39
  %v1047 = vpop.f32.mrf.mxu0
  %v1048 = vadd.f32 %v1008, %v1047
  %v1049 = vpop.f32.mrf.mxu0
  %v1050 = vpop.f32.mrf.mxu0
  %v1051 = vpop.f32.mrf.mxu0
  %1052 = vdwg.mxu0
  %1053 = vmatprep.subr.bf16.mxu0 0
  %1054 = vmatpush1.bf16.msra.mxu0 %v233
  %1055 = vmatprep.subr.bf16.mxu0 0
  %1056 = vmatpush1.bf16.msra.mxu0 %v232
  %1057 = vmatprep.subr.bf16.mxu0 0
  %1058 = vmatpush1.bf16.msra.mxu0 %v231
  %1059 = vmatprep.subr.bf16.mxu0 0
  %1060 = vmatpush1.bf16.msra.mxu0 %v230
  %1061 = vmatprep.subr.bf16.mxu0 0
  %1062 = vmatpush1.bf16.msra.mxu0 %v229
  %1063 = vmatprep.subr.bf16.mxu0 0
  %1064 = vmatpush1.bf16.msra.mxu0 %v228
  %1065 = vmatprep.subr.bf16.mxu0 0
  %1066 = vmatpush1.bf16.msra.mxu0 %v227
  %1067 = vmatprep.subr.bf16.mxu0 0
  %1068 = vmatpush1.bf16.msra.mxu0 %v226
  %1069 = vmatprep.subr.bf16.mxu0 0
  %1070 = vmatpush2.bf16.msra.mxu0 0
  %1071 = vmatprep.subr.bf16.mxu0 0
  %1072 = vmatpush2.bf16.msra.mxu0 0
  %1073 = vmatprep.subr.bf16.mxu0 0
  %1074 = vmatpush2.bf16.msra.mxu0 0
  %1075 = vmatprep.subr.bf16.mxu0 0
  %1076 = vmatpush2.bf16.msra.mxu0 0
  %1077 = vmatprep.subr.bf16.mxu0 0
  %1078 = vmatpush2.bf16.msra.mxu0 0
  %1079 = vmatprep.subr.bf16.mxu0 0
  %1080 = vmatpush2.bf16.msra.mxu0 0
  %1081 = vmatprep.subr.bf16.mxu0 0
  %1082 = vmatpush2.bf16.msra.mxu0 0
  %1083 = vmatprep.subr.bf16.mxu0 0
  %1084 = vmatpush2.bf16.msra.mxu0 0
  %1085 = vmatprep.mubr.bf16.mxu0 0
  %1086 = vmatmul.mubr.bf16.gmra.mxu0 %v43
  %v1087 = vpop.f32.mrf.mxu0
  %v1088 = vadd.f32 0.0, %v1087
  %v1089 = vpop.f32.mrf.mxu0
  %v1090 = vpop.f32.mrf.mxu0
  %v1091 = vpop.f32.mrf.mxu0
  %1092 = vdwg.mxu0
  %v1093 = vadd.f32 %v1048, %v1088
  %1094 = vmatprep.subr.bf16.mxu0 0
  %1095 = vmatpush1.bf16.msra.mxu0 %v836
  %1096 = vmatprep.subr.bf16.mxu0 0
  %1097 = vmatpush1.bf16.msra.mxu0 %v835
  %1098 = vmatprep.subr.bf16.mxu0 0
  %1099 = vmatpush1.bf16.msra.mxu0 %v834
  %1100 = vmatprep.subr.bf16.mxu0 0
  %1101 = vmatpush1.bf16.msra.mxu0 %v833
  %1102 = vmatprep.subr.bf16.mxu0 0
  %1103 = vmatpush1.bf16.msra.mxu0 %v832
  %1104 = vmatprep.subr.bf16.mxu0 0
  %1105 = vmatpush1.bf16.msra.mxu0 %v831
  %1106 = vmatprep.subr.bf16.mxu0 0
  %1107 = vmatpush1.bf16.msra.mxu0 %v830
  %1108 = vmatprep.subr.bf16.mxu0 0
  %1109 = vmatpush1.bf16.msra.mxu0 %v829
  %1110 = vmatprep.subr.bf16.mxu0 0
  %1111 = vmatpush2.bf16.msra.mxu0 0
  %1112 = vmatprep.subr.bf16.mxu0 0
  %1113 = vmatpush2.bf16.msra.mxu0 0
  %1114 = vmatprep.subr.bf16.mxu0 0
  %1115 = vmatpush2.bf16.msra.mxu0 0
  %1116 = vmatprep.subr.bf16.mxu0 0
  %1117 = vmatpush2.bf16.msra.mxu0 0
  %1118 = vmatprep.subr.bf16.mxu0 0
  %1119 = vmatpush2.bf16.msra.mxu0 0
  %1120 = vmatprep.subr.bf16.mxu0 0
  %1121 = vmatpush2.bf16.msra.mxu0 0
  %1122 = vmatprep.subr.bf16.mxu0 0
  %1123 = vmatpush2.bf16.msra.mxu0 0
  %1124 = vmatprep.subr.bf16.mxu0 0
  %1125 = vmatpush2.bf16.msra.mxu0 0
  %1126 = vmatprep.mubr.bf16.mxu0 0
  %1127 = vmatmul.mubr.bf16.gmra.mxu0 %v55
  %v1128 = vpop.f32.mrf.mxu0
  %v1129 = vadd.f32 0.0, %v1128
  %v1130 = vpop.f32.mrf.mxu0
  %v1131 = vpop.f32.mrf.mxu0
  %v1132 = vpop.f32.mrf.mxu0
  %1133 = vdwg.mxu0
  %v1134 = vadd.f32 %v1093, %v1129
  %1135 = vmatprep.subr.bf16.mxu0 0
  %1136 = vmatpush1.bf16.msra.mxu0 %v426
  %1137 = vmatprep.subr.bf16.mxu0 0
  %1138 = vmatpush1.bf16.msra.mxu0 %v425
  %1139 = vmatprep.subr.bf16.mxu0 0
  %1140 = vmatpush1.bf16.msra.mxu0 %v424
  %1141 = vmatprep.subr.bf16.mxu0 0
  %1142 = vmatpush1.bf16.msra.mxu0 %v423
  %1143 = vmatprep.subr.bf16.mxu0 0
  %1144 = vmatpush1.bf16.msra.mxu0 %v422
  %1145 = vmatprep.subr.bf16.mxu0 0
  %1146 = vmatpush1.bf16.msra.mxu0 %v421
  %1147 = vmatprep.subr.bf16.mxu0 0
  %1148 = vmatpush1.bf16.msra.mxu0 %v420
  %1149 = vmatprep.subr.bf16.mxu0 0
  %1150 = vmatpush1.bf16.msra.mxu0 %v419
  %1151 = vmatprep.subr.bf16.mxu0 0
  %1152 = vmatpush2.bf16.msra.mxu0 0
  %1153 = vmatprep.subr.bf16.mxu0 0
  %1154 = vmatpush2.bf16.msra.mxu0 0
  %1155 = vmatprep.subr.bf16.mxu0 0
  %1156 = vmatpush2.bf16.msra.mxu0 0
  %1157 = vmatprep.subr.bf16.mxu0 0
  %1158 = vmatpush2.bf16.msra.mxu0 0
  %1159 = vmatprep.subr.bf16.mxu0 0
  %1160 = vmatpush2.bf16.msra.mxu0 0
  %1161 = vmatprep.subr.bf16.mxu0 0
  %1162 = vmatpush2.bf16.msra.mxu0 0
  %1163 = vmatprep.subr.bf16.mxu0 0
  %1164 = vmatpush2.bf16.msra.mxu0 0
  %1165 = vmatprep.subr.bf16.mxu0 0
  %1166 = vmatpush2.bf16.msra.mxu0 0
  %1167 = vmatprep.mubr.bf16.mxu0 0
  %1168 = vmatmul.mubr.bf16.gmra.mxu0 %v57
  %v1169 = vpop.f32.mrf.mxu0
  %v1170 = vadd.f32 0.0, %v1169
  %v1171 = vpop.f32.mrf.mxu0
  %v1172 = vpop.f32.mrf.mxu0
  %v1173 = vpop.f32.mrf.mxu0
  %1174 = vdwg.mxu0
  %v1175 = vadd.f32 %v1134, %v1170
  %1176 = vmatprep.subr.bf16.mxu0 0
  %1177 = vmatpush1.bf16.msra.mxu0 %v532
  %1178 = vmatprep.subr.bf16.mxu0 0
  %1179 = vmatpush1.bf16.msra.mxu0 %v531
  %1180 = vmatprep.subr.bf16.mxu0 0
  %1181 = vmatpush1.bf16.msra.mxu0 %v530
  %1182 = vmatprep.subr.bf16.mxu0 0
  %1183 = vmatpush1.bf16.msra.mxu0 %v529
  %1184 = vmatprep.subr.bf16.mxu0 0
  %1185 = vmatpush1.bf16.msra.mxu0 %v528
  %1186 = vmatprep.subr.bf16.mxu0 0
  %1187 = vmatpush1.bf16.msra.mxu0 %v527
  %1188 = vmatprep.subr.bf16.mxu0 0
  %1189 = vmatpush1.bf16.msra.mxu0 %v526
  %1190 = vmatprep.subr.bf16.mxu0 0
  %1191 = vmatpush1.bf16.msra.mxu0 %v525
  %1192 = vmatprep.subr.bf16.mxu0 0
  %1193 = vmatpush2.bf16.msra.mxu0 0
  %1194 = vmatprep.subr.bf16.mxu0 0
  %1195 = vmatpush2.bf16.msra.mxu0 0
  %1196 = vmatprep.subr.bf16.mxu0 0
  %1197 = vmatpush2.bf16.msra.mxu0 0
  %1198 = vmatprep.subr.bf16.mxu0 0
  %1199 = vmatpush2.bf16.msra.mxu0 0
  %1200 = vmatprep.subr.bf16.mxu0 0
  %1201 = vmatpush2.bf16.msra.mxu0 0
  %1202 = vmatprep.subr.bf16.mxu0 0
  %1203 = vmatpush2.bf16.msra.mxu0 0
  %1204 = vmatprep.subr.bf16.mxu0 0
  %1205 = vmatpush2.bf16.msra.mxu0 0
  %1206 = vmatprep.subr.bf16.mxu0 0
  %1207 = vmatpush2.bf16.msra.mxu0 0
  %1208 = vmatprep.mubr.bf16.mxu0 0
  %1209 = vmatmul.mubr.bf16.gmra.mxu0 %v59
  %v1210 = vpop.f32.mrf.mxu0
  %v1211 = vadd.f32 0.0, %v1210
  %v1212 = vpop.f32.mrf.mxu0
  %v1213 = vpop.f32.mrf.mxu0
  %v1214 = vpop.f32.mrf.mxu0
  %1215 = vdwg.mxu0
  %v1216 = vadd.f32 %v1175, %v1211
  %v1217 = vadd.f32 %v1216, %v587
  %vm1218 = vcmp.ge.f32.partialorder %v1217, 0.0
  %v1219 = vmul.f32 %v1217, 0.01
  %v1220 = vsel %vm1218, %v1217, %v1219
  %v1221 = vpack.c.bf16 %v1220, %v1220
  %1222 = vmatprep.subr.bf16.mxu0 0
  %1223 = vmatpush1.bf16.msra.mxu0 %v321
  %1224 = vmatprep.subr.bf16.mxu0 0
  %1225 = vmatpush1.bf16.msra.mxu0 %v320
  %1226 = vmatprep.subr.bf16.mxu0 0
  %1227 = vmatpush1.bf16.msra.mxu0 %v319
  %1228 = vmatprep.subr.bf16.mxu0 0
  %1229 = vmatpush1.bf16.msra.mxu0 %v318
  %1230 = vmatprep.subr.bf16.mxu0 0
  %1231 = vmatpush1.bf16.msra.mxu0 %v317
  %1232 = vmatprep.subr.bf16.mxu0 0
  %1233 = vmatpush1.bf16.msra.mxu0 %v316
  %1234 = vmatprep.subr.bf16.mxu0 0
  %1235 = vmatpush1.bf16.msra.mxu0 %v315
  %1236 = vmatprep.subr.bf16.mxu0 0
  %1237 = vmatpush1.bf16.msra.mxu0 %v314
  %1238 = vmatprep.subr.bf16.mxu0 0
  %1239 = vmatpush2.bf16.msra.mxu0 0
  %1240 = vmatprep.subr.bf16.mxu0 0
  %1241 = vmatpush2.bf16.msra.mxu0 0
  %1242 = vmatprep.subr.bf16.mxu0 0
  %1243 = vmatpush2.bf16.msra.mxu0 0
  %1244 = vmatprep.subr.bf16.mxu0 0
  %1245 = vmatpush2.bf16.msra.mxu0 0
  %1246 = vmatprep.subr.bf16.mxu0 0
  %1247 = vmatpush2.bf16.msra.mxu0 0
  %1248 = vmatprep.subr.bf16.mxu0 0
  %1249 = vmatpush2.bf16.msra.mxu0 0
  %1250 = vmatprep.subr.bf16.mxu0 0
  %1251 = vmatpush2.bf16.msra.mxu0 0
  %1252 = vmatprep.subr.bf16.mxu0 0
  %1253 = vmatpush2.bf16.msra.mxu0 0
  %1254 = vmatprep.mubr.bf16.mxu0 0
  %1255 = vmatmul.mubr.bf16.gmra.mxu0 %v45
  %v1256 = vpop.f32.mrf.mxu0
  %v1257 = vadd.f32 0.0, %v1256
  %v1258 = vpop.f32.mrf.mxu0
  %v1259 = vpop.f32.mrf.mxu0
  %v1260 = vpop.f32.mrf.mxu0
  %1261 = vdwg.mxu0
  %1262 = vmatprep.subr.bf16.mxu0 0
  %1263 = vmatpush1.bf16.msra.mxu0 %v690
  %1264 = vmatprep.subr.bf16.mxu0 0
  %1265 = vmatpush1.bf16.msra.mxu0 %v689
  %1266 = vmatprep.subr.bf16.mxu0 0
  %1267 = vmatpush1.bf16.msra.mxu0 %v688
  %1268 = vmatprep.subr.bf16.mxu0 0
  %1269 = vmatpush1.bf16.msra.mxu0 %v687
  %1270 = vmatprep.subr.bf16.mxu0 0
  %1271 = vmatpush1.bf16.msra.mxu0 %v686
  %1272 = vmatprep.subr.bf16.mxu0 0
  %1273 = vmatpush1.bf16.msra.mxu0 %v685
  %1274 = vmatprep.subr.bf16.mxu0 0
  %1275 = vmatpush1.bf16.msra.mxu0 %v684
  %1276 = vmatprep.subr.bf16.mxu0 0
  %1277 = vmatpush1.bf16.msra.mxu0 %v683
  %1278 = vmatprep.subr.bf16.mxu0 0
  %1279 = vmatpush2.bf16.msra.mxu0 0
  %1280 = vmatprep.subr.bf16.mxu0 0
  %1281 = vmatpush2.bf16.msra.mxu0 0
  %1282 = vmatprep.subr.bf16.mxu0 0
  %1283 = vmatpush2.bf16.msra.mxu0 0
  %1284 = vmatprep.subr.bf16.mxu0 0
  %1285 = vmatpush2.bf16.msra.mxu0 0
  %1286 = vmatprep.subr.bf16.mxu0 0
  %1287 = vmatpush2.bf16.msra.mxu0 0
  %1288 = vmatprep.subr.bf16.mxu0 0
  %1289 = vmatpush2.bf16.msra.mxu0 0
  %1290 = vmatprep.subr.bf16.mxu0 0
  %1291 = vmatpush2.bf16.msra.mxu0 0
  %1292 = vmatprep.subr.bf16.mxu0 0
  %1293 = vmatpush2.bf16.msra.mxu0 0
  %1294 = vmatprep.mubr.bf16.mxu0 0
  %1295 = vmatmul.mubr.bf16.gmra.mxu0 %v43
  %v1296 = vpop.f32.mrf.mxu0
  %v1297 = vadd.f32 %v1257, %v1296
  %v1298 = vpop.f32.mrf.mxu0
  %v1299 = vpop.f32.mrf.mxu0
  %v1300 = vpop.f32.mrf.mxu0
  %1301 = vdwg.mxu0
  %1302 = vmatprep.subr.bf16.mxu0 0
  %1303 = vmatpush1.bf16.msra.mxu0 %v233
  %1304 = vmatprep.subr.bf16.mxu0 0
  %1305 = vmatpush1.bf16.msra.mxu0 %v232
  %1306 = vmatprep.subr.bf16.mxu0 0
  %1307 = vmatpush1.bf16.msra.mxu0 %v231
  %1308 = vmatprep.subr.bf16.mxu0 0
  %1309 = vmatpush1.bf16.msra.mxu0 %v230
  %1310 = vmatprep.subr.bf16.mxu0 0
  %1311 = vmatpush1.bf16.msra.mxu0 %v229
  %1312 = vmatprep.subr.bf16.mxu0 0
  %1313 = vmatpush1.bf16.msra.mxu0 %v228
  %1314 = vmatprep.subr.bf16.mxu0 0
  %1315 = vmatpush1.bf16.msra.mxu0 %v227
  %1316 = vmatprep.subr.bf16.mxu0 0
  %1317 = vmatpush1.bf16.msra.mxu0 %v226
  %1318 = vmatprep.subr.bf16.mxu0 0
  %1319 = vmatpush2.bf16.msra.mxu0 0
  %1320 = vmatprep.subr.bf16.mxu0 0
  %1321 = vmatpush2.bf16.msra.mxu0 0
  %1322 = vmatprep.subr.bf16.mxu0 0
  %1323 = vmatpush2.bf16.msra.mxu0 0
  %1324 = vmatprep.subr.bf16.mxu0 0
  %1325 = vmatpush2.bf16.msra.mxu0 0
  %1326 = vmatprep.subr.bf16.mxu0 0
  %1327 = vmatpush2.bf16.msra.mxu0 0
  %1328 = vmatprep.subr.bf16.mxu0 0
  %1329 = vmatpush2.bf16.msra.mxu0 0
  %1330 = vmatprep.subr.bf16.mxu0 0
  %1331 = vmatpush2.bf16.msra.mxu0 0
  %1332 = vmatprep.subr.bf16.mxu0 0
  %1333 = vmatpush2.bf16.msra.mxu0 0
  %1334 = vmatprep.mubr.bf16.mxu0 0
  %1335 = vmatmul.mubr.bf16.gmra.mxu0 %v47
  %v1336 = vpop.f32.mrf.mxu0
  %v1337 = vadd.f32 0.0, %v1336
  %v1338 = vpop.f32.mrf.mxu0
  %v1339 = vpop.f32.mrf.mxu0
  %v1340 = vpop.f32.mrf.mxu0
  %1341 = vdwg.mxu0
  %v1342 = vadd.f32 %v1297, %v1337
  %1343 = vmatprep.subr.bf16.mxu0 0
  %1344 = vmatpush1.bf16.msra.mxu0 %v836
  %1345 = vmatprep.subr.bf16.mxu0 0
  %1346 = vmatpush1.bf16.msra.mxu0 %v835
  %1347 = vmatprep.subr.bf16.mxu0 0
  %1348 = vmatpush1.bf16.msra.mxu0 %v834
  %1349 = vmatprep.subr.bf16.mxu0 0
  %1350 = vmatpush1.bf16.msra.mxu0 %v833
  %1351 = vmatprep.subr.bf16.mxu0 0
  %1352 = vmatpush1.bf16.msra.mxu0 %v832
  %1353 = vmatprep.subr.bf16.mxu0 0
  %1354 = vmatpush1.bf16.msra.mxu0 %v831
  %1355 = vmatprep.subr.bf16.mxu0 0
  %1356 = vmatpush1.bf16.msra.mxu0 %v830
  %1357 = vmatprep.subr.bf16.mxu0 0
  %1358 = vmatpush1.bf16.msra.mxu0 %v829
  %1359 = vmatprep.subr.bf16.mxu0 0
  %1360 = vmatpush2.bf16.msra.mxu0 0
  %1361 = vmatprep.subr.bf16.mxu0 0
  %1362 = vmatpush2.bf16.msra.mxu0 0
  %1363 = vmatprep.subr.bf16.mxu0 0
  %1364 = vmatpush2.bf16.msra.mxu0 0
  %1365 = vmatprep.subr.bf16.mxu0 0
  %1366 = vmatpush2.bf16.msra.mxu0 0
  %1367 = vmatprep.subr.bf16.mxu0 0
  %1368 = vmatpush2.bf16.msra.mxu0 0
  %1369 = vmatprep.subr.bf16.mxu0 0
  %1370 = vmatpush2.bf16.msra.mxu0 0
  %1371 = vmatprep.subr.bf16.mxu0 0
  %1372 = vmatpush2.bf16.msra.mxu0 0
  %1373 = vmatprep.subr.bf16.mxu0 0
  %1374 = vmatpush2.bf16.msra.mxu0 0
  %1375 = vmatprep.mubr.bf16.mxu0 0
  %1376 = vmatmul.mubr.bf16.gmra.mxu0 %v59
  %v1377 = vpop.f32.mrf.mxu0
  %v1378 = vadd.f32 0.0, %v1377
  %v1379 = vpop.f32.mrf.mxu0
  %v1380 = vpop.f32.mrf.mxu0
  %v1381 = vpop.f32.mrf.mxu0
  %1382 = vdwg.mxu0
  %v1383 = vadd.f32 %v1342, %v1378
  %1384 = vmatprep.subr.bf16.mxu0 0
  %1385 = vmatpush1.bf16.msra.mxu0 %v426
  %1386 = vmatprep.subr.bf16.mxu0 0
  %1387 = vmatpush1.bf16.msra.mxu0 %v425
  %1388 = vmatprep.subr.bf16.mxu0 0
  %1389 = vmatpush1.bf16.msra.mxu0 %v424
  %1390 = vmatprep.subr.bf16.mxu0 0
  %1391 = vmatpush1.bf16.msra.mxu0 %v423
  %1392 = vmatprep.subr.bf16.mxu0 0
  %1393 = vmatpush1.bf16.msra.mxu0 %v422
  %1394 = vmatprep.subr.bf16.mxu0 0
  %1395 = vmatpush1.bf16.msra.mxu0 %v421
  %1396 = vmatprep.subr.bf16.mxu0 0
  %1397 = vmatpush1.bf16.msra.mxu0 %v420
  %1398 = vmatprep.subr.bf16.mxu0 0
  %1399 = vmatpush1.bf16.msra.mxu0 %v419
  %1400 = vmatprep.subr.bf16.mxu0 0
  %1401 = vmatpush2.bf16.msra.mxu0 0
  %1402 = vmatprep.subr.bf16.mxu0 0
  %1403 = vmatpush2.bf16.msra.mxu0 0
  %1404 = vmatprep.subr.bf16.mxu0 0
  %1405 = vmatpush2.bf16.msra.mxu0 0
  %1406 = vmatprep.subr.bf16.mxu0 0
  %1407 = vmatpush2.bf16.msra.mxu0 0
  %1408 = vmatprep.subr.bf16.mxu0 0
  %1409 = vmatpush2.bf16.msra.mxu0 0
  %1410 = vmatprep.subr.bf16.mxu0 0
  %1411 = vmatpush2.bf16.msra.mxu0 0
  %1412 = vmatprep.subr.bf16.mxu0 0
  %1413 = vmatpush2.bf16.msra.mxu0 0
  %1414 = vmatprep.subr.bf16.mxu0 0
  %1415 = vmatpush2.bf16.msra.mxu0 0
  %1416 = vmatprep.mubr.bf16.mxu0 0
  %1417 = vmatmul.mubr.bf16.gmra.mxu0 %v61
  %v1418 = vpop.f32.mrf.mxu0
  %v1419 = vadd.f32 0.0, %v1418
  %v1420 = vpop.f32.mrf.mxu0
  %v1421 = vpop.f32.mrf.mxu0
  %v1422 = vpop.f32.mrf.mxu0
  %1423 = vdwg.mxu0
  %v1424 = vadd.f32 %v1383, %v1419
  %1425 = vmatprep.subr.bf16.mxu0 0
  %1426 = vmatpush1.bf16.msra.mxu0 %v532
  %1427 = vmatprep.subr.bf16.mxu0 0
  %1428 = vmatpush1.bf16.msra.mxu0 %v531
  %1429 = vmatprep.subr.bf16.mxu0 0
  %1430 = vmatpush1.bf16.msra.mxu0 %v530
  %1431 = vmatprep.subr.bf16.mxu0 0
  %1432 = vmatpush1.bf16.msra.mxu0 %v529
  %1433 = vmatprep.subr.bf16.mxu0 0
  %1434 = vmatpush1.bf16.msra.mxu0 %v528
  %1435 = vmatprep.subr.bf16.mxu0 0
  %1436 = vmatpush1.bf16.msra.mxu0 %v527
  %1437 = vmatprep.subr.bf16.mxu0 0
  %1438 = vmatpush1.bf16.msra.mxu0 %v526
  %1439 = vmatprep.subr.bf16.mxu0 0
  %1440 = vmatpush1.bf16.msra.mxu0 %v525
  %1441 = vmatprep.subr.bf16.mxu0 0
  %1442 = vmatpush2.bf16.msra.mxu0 0
  %1443 = vmatprep.subr.bf16.mxu0 0
  %1444 = vmatpush2.bf16.msra.mxu0 0
  %1445 = vmatprep.subr.bf16.mxu0 0
  %1446 = vmatpush2.bf16.msra.mxu0 0
  %1447 = vmatprep.subr.bf16.mxu0 0
  %1448 = vmatpush2.bf16.msra.mxu0 0
  %1449 = vmatprep.subr.bf16.mxu0 0
  %1450 = vmatpush2.bf16.msra.mxu0 0
  %1451 = vmatprep.subr.bf16.mxu0 0
  %1452 = vmatpush2.bf16.msra.mxu0 0
  %1453 = vmatprep.subr.bf16.mxu0 0
  %1454 = vmatpush2.bf16.msra.mxu0 0
  %1455 = vmatprep.subr.bf16.mxu0 0
  %1456 = vmatpush2.bf16.msra.mxu0 0
  %1457 = vmatprep.mubr.bf16.mxu0 0
  %1458 = vmatmul.mubr.bf16.gmra.mxu0 %v63
  %v1459 = vpop.f32.mrf.mxu0
  %v1460 = vadd.f32 0.0, %v1459
  %v1461 = vpop.f32.mrf.mxu0
  %v1462 = vpop.f32.mrf.mxu0
  %v1463 = vpop.f32.mrf.mxu0
  %1464 = vdwg.mxu0
  %v1465 = vadd.f32 %v1424, %v1460
  %v1466 = vadd.f32 %v1465, %v587
  %vm1467 = vcmp.ge.f32.partialorder %v1466, 0.0
  %v1468 = vmul.f32 %v1466, 0.01
  %v1469 = vsel %vm1467, %v1466, %v1468
  %v1470 = vpack.c.bf16 %v1469, %v1469
  %s1471 = scalar_lea.vmem %s1, 64
  %v1472 = vld [vmem:[%s1471] sm:$0xf]
  %v1473 = vld [vmem:[%s1471 + $0x4] sm:$0xf]
  %v1474 = vld [vmem:[%s1471 + $0x8] sm:$0xf]
  %v1475 = vld [vmem:[%s1471 + $0xc] sm:$0xf]
  %v1476 = vld [vmem:[%s1471 + $0x10] sm:$0xf]
  %v1477 = vld [vmem:[%s1471 + $0x14] sm:$0xf]
  %v1478 = vld [vmem:[%s1471 + $0x18] sm:$0xf]
  %v1479 = vld [vmem:[%s1471 + $0x1c] sm:$0xf]
  %v1480 = vld [vmem:[%s1471 + $0x20] sm:$0xf]
  %v1481 = vld [vmem:[%s1471 + $0x24] sm:$0xf]
  %v1482 = vld [vmem:[%s1471 + $0x28] sm:$0xf]
  %v1483 = vld [vmem:[%s1471 + $0x2c] sm:$0xf]
  %v1484 = vld [vmem:[%s1471 + $0x30] sm:$0xf]
  %v1485 = vld [vmem:[%s1471 + $0x34] sm:$0xf]
  %v1486 = vld [vmem:[%s1471 + $0x38] sm:$0xf]
  %v1487 = vld [vmem:[%s1471 + $0x3c] sm:$0xf]
  %s1488 = scalar_lea.vmem %s1, 128
  %v1489 = vld [vmem:[%s1488] sm:$0xf]
  %v1490 = vld [vmem:[%s1488 + $0x4] sm:$0xf]
  %v1491 = vld [vmem:[%s1488 + $0x8] sm:$0xf]
  %v1492 = vld [vmem:[%s1488 + $0xc] sm:$0xf]
  %v1493 = vld [vmem:[%s1488 + $0x10] sm:$0xf]
  %v1494 = vld [vmem:[%s1488 + $0x14] sm:$0xf]
  %v1495 = vld [vmem:[%s1488 + $0x18] sm:$0xf]
  %v1496 = vld [vmem:[%s1488 + $0x1c] sm:$0xf]
  %v1497 = vld [vmem:[%s1488 + $0x20] sm:$0xf]
  %v1498 = vld [vmem:[%s1488 + $0x24] sm:$0xf]
  %v1499 = vld [vmem:[%s1488 + $0x28] sm:$0xf]
  %v1500 = vld [vmem:[%s1488 + $0x2c] sm:$0xf]
  %v1501 = vld [vmem:[%s1488 + $0x30] sm:$0xf]
  %v1502 = vld [vmem:[%s1488 + $0x34] sm:$0xf]
  %v1503 = vld [vmem:[%s1488 + $0x38] sm:$0xf]
  %v1504 = vld [vmem:[%s1488 + $0x3c] sm:$0xf]
  %v1521 = vunpack.c.l.b16 %v1489
  %v1522 = vunpack.c.l.b16 %v1490
  %v1523 = vunpack.c.l.b16 %v1491
  %v1524 = vunpack.c.l.b16 %v1492
  %v1525 = vunpack.c.l.b16 %v1493
  %v1526 = vunpack.c.l.b16 %v1494
  %v1527 = vunpack.c.l.b16 %v1495
  %v1528 = vunpack.c.l.b16 %v1496
  %v1529 = vunpack.c.l.b16 %v1497
  %v1530 = vunpack.c.l.b16 %v1498
  %v1531 = vunpack.c.l.b16 %v1499
  %v1532 = vunpack.c.l.b16 %v1500
  %v1533 = vunpack.c.l.b16 %v1501
  %v1534 = vunpack.c.l.b16 %v1502
  %v1535 = vunpack.c.l.b16 %v1503
  %v1536 = vunpack.c.l.b16 %v1504
  %v1537 = vpack.c.b16 %v1522, %v1521
  %v1538 = vpack.c.b16 %v1524, %v1523
  %v1539 = vpack.c.b16 %v1526, %v1525
  %v1540 = vpack.c.b16 %v1528, %v1527
  %v1541 = vpack.c.b16 %v1530, %v1529
  %v1542 = vpack.c.b16 %v1532, %v1531
  %v1543 = vpack.c.b16 %v1534, %v1533
  %v1544 = vpack.c.b16 %v1536, %v1535
  %1553 = vmatprep.subr.bf16.mxu0 0
  %1554 = vmatpush1.bf16.msra.mxu0 %v1544
  %1555 = vmatprep.subr.bf16.mxu0 0
  %1556 = vmatpush1.bf16.msra.mxu0 %v1543
  %1557 = vmatprep.subr.bf16.mxu0 0
  %1558 = vmatpush1.bf16.msra.mxu0 %v1542
  %1559 = vmatprep.subr.bf16.mxu0 0
  %1560 = vmatpush1.bf16.msra.mxu0 %v1541
  %1561 = vmatprep.subr.bf16.mxu0 0
  %1562 = vmatpush1.bf16.msra.mxu0 %v1540
  %1563 = vmatprep.subr.bf16.mxu0 0
  %1564 = vmatpush1.bf16.msra.mxu0 %v1539
  %1565 = vmatprep.subr.bf16.mxu0 0
  %1566 = vmatpush1.bf16.msra.mxu0 %v1538
  %1567 = vmatprep.subr.bf16.mxu0 0
  %1568 = vmatpush1.bf16.msra.mxu0 %v1537
  %1569 = vmatprep.subr.bf16.mxu0 0
  %1570 = vmatpush2.bf16.msra.mxu0 0
  %1571 = vmatprep.subr.bf16.mxu0 0
  %1572 = vmatpush2.bf16.msra.mxu0 0
  %1573 = vmatprep.subr.bf16.mxu0 0
  %1574 = vmatpush2.bf16.msra.mxu0 0
  %1575 = vmatprep.subr.bf16.mxu0 0
  %1576 = vmatpush2.bf16.msra.mxu0 0
  %1577 = vmatprep.subr.bf16.mxu0 0
  %1578 = vmatpush2.bf16.msra.mxu0 0
  %1579 = vmatprep.subr.bf16.mxu0 0
  %1580 = vmatpush2.bf16.msra.mxu0 0
  %1581 = vmatprep.subr.bf16.mxu0 0
  %1582 = vmatpush2.bf16.msra.mxu0 0
  %1583 = vmatprep.subr.bf16.mxu0 0
  %1584 = vmatpush2.bf16.msra.mxu0 0
  %1585 = vmatprep.mubr.bf16.mxu0 0
  %1586 = vmatmul.mubr.bf16.gmra.mxu0 %v51
  %v1587 = vpop.f32.mrf.mxu0
  %v1588 = vadd.f32 0.0, %v1587
  %v1589 = vpop.f32.mrf.mxu0
  %v1590 = vpop.f32.mrf.mxu0
  %v1591 = vpop.f32.mrf.mxu0
  %1592 = vdwg.mxu0
  %v1609 = vunpack.c.l.b16 %v1472
  %v1610 = vunpack.c.l.b16 %v1473
  %v1611 = vunpack.c.l.b16 %v1474
  %v1612 = vunpack.c.l.b16 %v1475
  %v1613 = vunpack.c.l.b16 %v1476
  %v1614 = vunpack.c.l.b16 %v1477
  %v1615 = vunpack.c.l.b16 %v1478
  %v1616 = vunpack.c.l.b16 %v1479
  %v1617 = vunpack.c.l.b16 %v1480
  %v1618 = vunpack.c.l.b16 %v1481
  %v1619 = vunpack.c.l.b16 %v1482
  %v1620 = vunpack.c.l.b16 %v1483
  %v1621 = vunpack.c.l.b16 %v1484
  %v1622 = vunpack.c.l.b16 %v1485
  %v1623 = vunpack.c.l.b16 %v1486
  %v1624 = vunpack.c.l.b16 %v1487
  %v1625 = vpack.c.b16 %v1610, %v1609
  %v1626 = vpack.c.b16 %v1612, %v1611
  %v1627 = vpack.c.b16 %v1614, %v1613
  %v1628 = vpack.c.b16 %v1616, %v1615
  %v1629 = vpack.c.b16 %v1618, %v1617
  %v1630 = vpack.c.b16 %v1620, %v1619
  %v1631 = vpack.c.b16 %v1622, %v1621
  %v1632 = vpack.c.b16 %v1624, %v1623
  %1641 = vmatprep.subr.bf16.mxu0 0
  %1642 = vmatpush1.bf16.msra.mxu0 %v1632
  %1643 = vmatprep.subr.bf16.mxu0 0
  %1644 = vmatpush1.bf16.msra.mxu0 %v1631
  %1645 = vmatprep.subr.bf16.mxu0 0
  %1646 = vmatpush1.bf16.msra.mxu0 %v1630
  %1647 = vmatprep.subr.bf16.mxu0 0
  %1648 = vmatpush1.bf16.msra.mxu0 %v1629
  %1649 = vmatprep.subr.bf16.mxu0 0
  %1650 = vmatpush1.bf16.msra.mxu0 %v1628
  %1651 = vmatprep.subr.bf16.mxu0 0
  %1652 = vmatpush1.bf16.msra.mxu0 %v1627
  %1653 = vmatprep.subr.bf16.mxu0 0
  %1654 = vmatpush1.bf16.msra.mxu0 %v1626
  %1655 = vmatprep.subr.bf16.mxu0 0
  %1656 = vmatpush1.bf16.msra.mxu0 %v1625
  %1657 = vmatprep.subr.bf16.mxu0 0
  %1658 = vmatpush2.bf16.msra.mxu0 0
  %1659 = vmatprep.subr.bf16.mxu0 0
  %1660 = vmatpush2.bf16.msra.mxu0 0
  %1661 = vmatprep.subr.bf16.mxu0 0
  %1662 = vmatpush2.bf16.msra.mxu0 0
  %1663 = vmatprep.subr.bf16.mxu0 0
  %1664 = vmatpush2.bf16.msra.mxu0 0
  %1665 = vmatprep.subr.bf16.mxu0 0
  %1666 = vmatpush2.bf16.msra.mxu0 0
  %1667 = vmatprep.subr.bf16.mxu0 0
  %1668 = vmatpush2.bf16.msra.mxu0 0
  %1669 = vmatprep.subr.bf16.mxu0 0
  %1670 = vmatpush2.bf16.msra.mxu0 0
  %1671 = vmatprep.subr.bf16.mxu0 0
  %1672 = vmatpush2.bf16.msra.mxu0 0
  %1673 = vmatprep.mubr.bf16.mxu0 0
  %1674 = vmatmul.mubr.bf16.gmra.mxu0 %v49
  %v1675 = vpop.f32.mrf.mxu0
  %v1676 = vadd.f32 %v1588, %v1675
  %v1677 = vpop.f32.mrf.mxu0
  %v1678 = vpop.f32.mrf.mxu0
  %v1679 = vpop.f32.mrf.mxu0
  %1680 = vdwg.mxu0
  %1681 = vmatprep.subr.bf16.mxu0 0
  %1682 = vmatpush1.bf16.msra.mxu0 %v321
  %1683 = vmatprep.subr.bf16.mxu0 0
  %1684 = vmatpush1.bf16.msra.mxu0 %v320
  %1685 = vmatprep.subr.bf16.mxu0 0
  %1686 = vmatpush1.bf16.msra.mxu0 %v319
  %1687 = vmatprep.subr.bf16.mxu0 0
  %1688 = vmatpush1.bf16.msra.mxu0 %v318
  %1689 = vmatprep.subr.bf16.mxu0 0
  %1690 = vmatpush1.bf16.msra.mxu0 %v317
  %1691 = vmatprep.subr.bf16.mxu0 0
  %1692 = vmatpush1.bf16.msra.mxu0 %v316
  %1693 = vmatprep.subr.bf16.mxu0 0
  %1694 = vmatpush1.bf16.msra.mxu0 %v315
  %1695 = vmatprep.subr.bf16.mxu0 0
  %1696 = vmatpush1.bf16.msra.mxu0 %v314
  %1697 = vmatprep.subr.bf16.mxu0 0
  %1698 = vmatpush2.bf16.msra.mxu0 0
  %1699 = vmatprep.subr.bf16.mxu0 0
  %1700 = vmatpush2.bf16.msra.mxu0 0
  %1701 = vmatprep.subr.bf16.mxu0 0
  %1702 = vmatpush2.bf16.msra.mxu0 0
  %1703 = vmatprep.subr.bf16.mxu0 0
  %1704 = vmatpush2.bf16.msra.mxu0 0
  %1705 = vmatprep.subr.bf16.mxu0 0
  %1706 = vmatpush2.bf16.msra.mxu0 0
  %1707 = vmatprep.subr.bf16.mxu0 0
  %1708 = vmatpush2.bf16.msra.mxu0 0
  %1709 = vmatprep.subr.bf16.mxu0 0
  %1710 = vmatpush2.bf16.msra.mxu0 0
  %1711 = vmatprep.subr.bf16.mxu0 0
  %1712 = vmatpush2.bf16.msra.mxu0 0
  %1713 = vmatprep.mubr.bf16.mxu0 0
  %1714 = vmatmul.mubr.bf16.gmra.mxu0 %v65
  %v1715 = vpop.f32.mrf.mxu0
  %v1716 = vadd.f32 0.0, %v1715
  %v1717 = vpop.f32.mrf.mxu0
  %v1718 = vpop.f32.mrf.mxu0
  %v1719 = vpop.f32.mrf.mxu0
  %1720 = vdwg.mxu0
  %v1721 = vadd.f32 %v1676, %v1716
  %1722 = vmatprep.subr.bf16.mxu0 0
  %1723 = vmatpush1.bf16.msra.mxu0 %v233
  %1724 = vmatprep.subr.bf16.mxu0 0
  %1725 = vmatpush1.bf16.msra.mxu0 %v232
  %1726 = vmatprep.subr.bf16.mxu0 0
  %1727 = vmatpush1.bf16.msra.mxu0 %v231
  %1728 = vmatprep.subr.bf16.mxu0 0
  %1729 = vmatpush1.bf16.msra.mxu0 %v230
  %1730 = vmatprep.subr.bf16.mxu0 0
  %1731 = vmatpush1.bf16.msra.mxu0 %v229
  %1732 = vmatprep.subr.bf16.mxu0 0
  %1733 = vmatpush1.bf16.msra.mxu0 %v228
  %1734 = vmatprep.subr.bf16.mxu0 0
  %1735 = vmatpush1.bf16.msra.mxu0 %v227
  %1736 = vmatprep.subr.bf16.mxu0 0
  %1737 = vmatpush1.bf16.msra.mxu0 %v226
  %1738 = vmatprep.subr.bf16.mxu0 0
  %1739 = vmatpush2.bf16.msra.mxu0 0
  %1740 = vmatprep.subr.bf16.mxu0 0
  %1741 = vmatpush2.bf16.msra.mxu0 0
  %1742 = vmatprep.subr.bf16.mxu0 0
  %1743 = vmatpush2.bf16.msra.mxu0 0
  %1744 = vmatprep.subr.bf16.mxu0 0
  %1745 = vmatpush2.bf16.msra.mxu0 0
  %1746 = vmatprep.subr.bf16.mxu0 0
  %1747 = vmatpush2.bf16.msra.mxu0 0
  %1748 = vmatprep.subr.bf16.mxu0 0
  %1749 = vmatpush2.bf16.msra.mxu0 0
  %1750 = vmatprep.subr.bf16.mxu0 0
  %1751 = vmatpush2.bf16.msra.mxu0 0
  %1752 = vmatprep.subr.bf16.mxu0 0
  %1753 = vmatpush2.bf16.msra.mxu0 0
  %1754 = vmatprep.mubr.bf16.mxu0 0
  %1755 = vmatmul.mubr.bf16.gmra.mxu0 %v67
  %v1756 = vpop.f32.mrf.mxu0
  %v1757 = vadd.f32 0.0, %v1756
  %v1758 = vpop.f32.mrf.mxu0
  %v1759 = vpop.f32.mrf.mxu0
  %v1760 = vpop.f32.mrf.mxu0
  %1761 = vdwg.mxu0
  %v1762 = vadd.f32 %v1721, %v1757
  %1763 = vmatprep.subr.bf16.mxu0 0
  %1764 = vmatpush1.bf16.msra.mxu0 %v426
  %1765 = vmatprep.subr.bf16.mxu0 0
  %1766 = vmatpush1.bf16.msra.mxu0 %v425
  %1767 = vmatprep.subr.bf16.mxu0 0
  %1768 = vmatpush1.bf16.msra.mxu0 %v424
  %1769 = vmatprep.subr.bf16.mxu0 0
  %1770 = vmatpush1.bf16.msra.mxu0 %v423
  %1771 = vmatprep.subr.bf16.mxu0 0
  %1772 = vmatpush1.bf16.msra.mxu0 %v422
  %1773 = vmatprep.subr.bf16.mxu0 0
  %1774 = vmatpush1.bf16.msra.mxu0 %v421
  %1775 = vmatprep.subr.bf16.mxu0 0
  %1776 = vmatpush1.bf16.msra.mxu0 %v420
  %1777 = vmatprep.subr.bf16.mxu0 0
  %1778 = vmatpush1.bf16.msra.mxu0 %v419
  %1779 = vmatprep.subr.bf16.mxu0 0
  %1780 = vmatpush2.bf16.msra.mxu0 0
  %1781 = vmatprep.subr.bf16.mxu0 0
  %1782 = vmatpush2.bf16.msra.mxu0 0
  %1783 = vmatprep.subr.bf16.mxu0 0
  %1784 = vmatpush2.bf16.msra.mxu0 0
  %1785 = vmatprep.subr.bf16.mxu0 0
  %1786 = vmatpush2.bf16.msra.mxu0 0
  %1787 = vmatprep.subr.bf16.mxu0 0
  %1788 = vmatpush2.bf16.msra.mxu0 0
  %1789 = vmatprep.subr.bf16.mxu0 0
  %1790 = vmatpush2.bf16.msra.mxu0 0
  %1791 = vmatprep.subr.bf16.mxu0 0
  %1792 = vmatpush2.bf16.msra.mxu0 0
  %1793 = vmatprep.subr.bf16.mxu0 0
  %1794 = vmatpush2.bf16.msra.mxu0 0
  %1795 = vmatprep.mubr.bf16.mxu0 0
  %1796 = vmatmul.mubr.bf16.gmra.mxu0 %v81
  %v1797 = vpop.f32.mrf.mxu0
  %v1798 = vadd.f32 0.0, %v1797
  %v1799 = vpop.f32.mrf.mxu0
  %v1800 = vpop.f32.mrf.mxu0
  %v1801 = vpop.f32.mrf.mxu0
  %1802 = vdwg.mxu0
  %v1803 = vadd.f32 %v1762, %v1798
  %1804 = vmatprep.subr.bf16.mxu0 0
  %1805 = vmatpush1.bf16.msra.mxu0 %v532
  %1806 = vmatprep.subr.bf16.mxu0 0
  %1807 = vmatpush1.bf16.msra.mxu0 %v531
  %1808 = vmatprep.subr.bf16.mxu0 0
  %1809 = vmatpush1.bf16.msra.mxu0 %v530
  %1810 = vmatprep.subr.bf16.mxu0 0
  %1811 = vmatpush1.bf16.msra.mxu0 %v529
  %1812 = vmatprep.subr.bf16.mxu0 0
  %1813 = vmatpush1.bf16.msra.mxu0 %v528
  %1814 = vmatprep.subr.bf16.mxu0 0
  %1815 = vmatpush1.bf16.msra.mxu0 %v527
  %1816 = vmatprep.subr.bf16.mxu0 0
  %1817 = vmatpush1.bf16.msra.mxu0 %v526
  %1818 = vmatprep.subr.bf16.mxu0 0
  %1819 = vmatpush1.bf16.msra.mxu0 %v525
  %1820 = vmatprep.subr.bf16.mxu0 0
  %1821 = vmatpush2.bf16.msra.mxu0 0
  %1822 = vmatprep.subr.bf16.mxu0 0
  %1823 = vmatpush2.bf16.msra.mxu0 0
  %1824 = vmatprep.subr.bf16.mxu0 0
  %1825 = vmatpush2.bf16.msra.mxu0 0
  %1826 = vmatprep.subr.bf16.mxu0 0
  %1827 = vmatpush2.bf16.msra.mxu0 0
  %1828 = vmatprep.subr.bf16.mxu0 0
  %1829 = vmatpush2.bf16.msra.mxu0 0
  %1830 = vmatprep.subr.bf16.mxu0 0
  %1831 = vmatpush2.bf16.msra.mxu0 0
  %1832 = vmatprep.subr.bf16.mxu0 0
  %1833 = vmatpush2.bf16.msra.mxu0 0
  %1834 = vmatprep.subr.bf16.mxu0 0
  %1835 = vmatpush2.bf16.msra.mxu0 0
  %1836 = vmatprep.mubr.bf16.mxu0 0
  %1837 = vmatmul.mubr.bf16.gmra.mxu0 %v83
  %v1838 = vpop.f32.mrf.mxu0
  %v1839 = vadd.f32 0.0, %v1838
  %v1840 = vpop.f32.mrf.mxu0
  %v1841 = vpop.f32.mrf.mxu0
  %v1842 = vpop.f32.mrf.mxu0
  %1843 = vdwg.mxu0
  %v1844 = vadd.f32 %v1803, %v1839
  %v1845 = vadd.f32 %v1844, %v587
  %vm1846 = vcmp.ge.f32.partialorder %v1845, 0.0
  %v1847 = vmul.f32 %v1845, 0.01
  %v1848 = vsel %vm1846, %v1845, %v1847
  %v1849 = vpack.c.bf16 %v1848, %v1848
  %v1850 = vld [vmem:[%s1] sm:$0xf]
  %v1851 = vld [vmem:[%s1 + $0x4] sm:$0xf]
  %v1852 = vld [vmem:[%s1 + $0x8] sm:$0xf]
  %v1853 = vld [vmem:[%s1 + $0xc] sm:$0xf]
  %v1854 = vld [vmem:[%s1 + $0x10] sm:$0xf]
  %v1855 = vld [vmem:[%s1 + $0x14] sm:$0xf]
  %v1856 = vld [vmem:[%s1 + $0x18] sm:$0xf]
  %v1857 = vld [vmem:[%s1 + $0x1c] sm:$0xf]
  %v1858 = vld [vmem:[%s1 + $0x20] sm:$0xf]
  %v1859 = vld [vmem:[%s1 + $0x24] sm:$0xf]
  %v1860 = vld [vmem:[%s1 + $0x28] sm:$0xf]
  %v1861 = vld [vmem:[%s1 + $0x2c] sm:$0xf]
  %v1862 = vld [vmem:[%s1 + $0x30] sm:$0xf]
  %v1863 = vld [vmem:[%s1 + $0x34] sm:$0xf]
  %v1864 = vld [vmem:[%s1 + $0x38] sm:$0xf]
  %v1865 = vld [vmem:[%s1 + $0x3c] sm:$0xf]
  %1866 = vmatprep.subr.bf16.mxu0 0
  %1867 = vmatpush1.bf16.msra.mxu0 %v1632
  %1868 = vmatprep.subr.bf16.mxu0 0
  %1869 = vmatpush1.bf16.msra.mxu0 %v1631
  %1870 = vmatprep.subr.bf16.mxu0 0
  %1871 = vmatpush1.bf16.msra.mxu0 %v1630
  %1872 = vmatprep.subr.bf16.mxu0 0
  %1873 = vmatpush1.bf16.msra.mxu0 %v1629
  %1874 = vmatprep.subr.bf16.mxu0 0
  %1875 = vmatpush1.bf16.msra.mxu0 %v1628
  %1876 = vmatprep.subr.bf16.mxu0 0
  %1877 = vmatpush1.bf16.msra.mxu0 %v1627
  %1878 = vmatprep.subr.bf16.mxu0 0
  %1879 = vmatpush1.bf16.msra.mxu0 %v1626
  %1880 = vmatprep.subr.bf16.mxu0 0
  %1881 = vmatpush1.bf16.msra.mxu0 %v1625
  %1882 = vmatprep.subr.bf16.mxu0 0
  %1883 = vmatpush2.bf16.msra.mxu0 0
  %1884 = vmatprep.subr.bf16.mxu0 0
  %1885 = vmatpush2.bf16.msra.mxu0 0
  %1886 = vmatprep.subr.bf16.mxu0 0
  %1887 = vmatpush2.bf16.msra.mxu0 0
  %1888 = vmatprep.subr.bf16.mxu0 0
  %1889 = vmatpush2.bf16.msra.mxu0 0
  %1890 = vmatprep.subr.bf16.mxu0 0
  %1891 = vmatpush2.bf16.msra.mxu0 0
  %1892 = vmatprep.subr.bf16.mxu0 0
  %1893 = vmatpush2.bf16.msra.mxu0 0
  %1894 = vmatprep.subr.bf16.mxu0 0
  %1895 = vmatpush2.bf16.msra.mxu0 0
  %1896 = vmatprep.subr.bf16.mxu0 0
  %1897 = vmatpush2.bf16.msra.mxu0 0
  %1898 = vmatprep.mubr.bf16.mxu0 0
  %1899 = vmatmul.mubr.bf16.gmra.mxu0 %v53
  %v1900 = vpop.f32.mrf.mxu0
  %v1901 = vadd.f32 0.0, %v1900
  %v1902 = vpop.f32.mrf.mxu0
  %v1903 = vpop.f32.mrf.mxu0
  %v1904 = vpop.f32.mrf.mxu0
  %1905 = vdwg.mxu0
  %v1922 = vunpack.c.l.b16 %v1850
  %v1923 = vunpack.c.l.b16 %v1851
  %v1924 = vunpack.c.l.b16 %v1852
  %v1925 = vunpack.c.l.b16 %v1853
  %v1926 = vunpack.c.l.b16 %v1854
  %v1927 = vunpack.c.l.b16 %v1855
  %v1928 = vunpack.c.l.b16 %v1856
  %v1929 = vunpack.c.l.b16 %v1857
  %v1930 = vunpack.c.l.b16 %v1858
  %v1931 = vunpack.c.l.b16 %v1859
  %v1932 = vunpack.c.l.b16 %v1860
  %v1933 = vunpack.c.l.b16 %v1861
  %v1934 = vunpack.c.l.b16 %v1862
  %v1935 = vunpack.c.l.b16 %v1863
  %v1936 = vunpack.c.l.b16 %v1864
  %v1937 = vunpack.c.l.b16 %v1865
  %v1938 = vpack.c.b16 %v1923, %v1922
  %v1939 = vpack.c.b16 %v1925, %v1924
  %v1940 = vpack.c.b16 %v1927, %v1926
  %v1941 = vpack.c.b16 %v1929, %v1928
  %v1942 = vpack.c.b16 %v1931, %v1930
  %v1943 = vpack.c.b16 %v1933, %v1932
  %v1944 = vpack.c.b16 %v1935, %v1934
  %v1945 = vpack.c.b16 %v1937, %v1936
  %1954 = vmatprep.subr.bf16.mxu0 0
  %1955 = vmatpush1.bf16.msra.mxu0 %v1945
  %1956 = vmatprep.subr.bf16.mxu0 0
  %1957 = vmatpush1.bf16.msra.mxu0 %v1944
  %1958 = vmatprep.subr.bf16.mxu0 0
  %1959 = vmatpush1.bf16.msra.mxu0 %v1943
  %1960 = vmatprep.subr.bf16.mxu0 0
  %1961 = vmatpush1.bf16.msra.mxu0 %v1942
  %1962 = vmatprep.subr.bf16.mxu0 0
  %1963 = vmatpush1.bf16.msra.mxu0 %v1941
  %1964 = vmatprep.subr.bf16.mxu0 0
  %1965 = vmatpush1.bf16.msra.mxu0 %v1940
  %1966 = vmatprep.subr.bf16.mxu0 0
  %1967 = vmatpush1.bf16.msra.mxu0 %v1939
  %1968 = vmatprep.subr.bf16.mxu0 0
  %1969 = vmatpush1.bf16.msra.mxu0 %v1938
  %1970 = vmatprep.subr.bf16.mxu0 0
  %1971 = vmatpush2.bf16.msra.mxu0 0
  %1972 = vmatprep.subr.bf16.mxu0 0
  %1973 = vmatpush2.bf16.msra.mxu0 0
  %1974 = vmatprep.subr.bf16.mxu0 0
  %1975 = vmatpush2.bf16.msra.mxu0 0
  %1976 = vmatprep.subr.bf16.mxu0 0
  %1977 = vmatpush2.bf16.msra.mxu0 0
  %1978 = vmatprep.subr.bf16.mxu0 0
  %1979 = vmatpush2.bf16.msra.mxu0 0
  %1980 = vmatprep.subr.bf16.mxu0 0
  %1981 = vmatpush2.bf16.msra.mxu0 0
  %1982 = vmatprep.subr.bf16.mxu0 0
  %1983 = vmatpush2.bf16.msra.mxu0 0
  %1984 = vmatprep.subr.bf16.mxu0 0
  %1985 = vmatpush2.bf16.msra.mxu0 0
  %1986 = vmatprep.mubr.bf16.mxu0 0
  %1987 = vmatmul.mubr.bf16.gmra.mxu0 %v51
  %v1988 = vpop.f32.mrf.mxu0
  %v1989 = vadd.f32 %v1901, %v1988
  %v1990 = vpop.f32.mrf.mxu0
  %v1991 = vpop.f32.mrf.mxu0
  %v1992 = vpop.f32.mrf.mxu0
  %1993 = vdwg.mxu0
  %1994 = vmatprep.subr.bf16.mxu0 0
  %1995 = vmatpush1.bf16.msra.mxu0 %v1544
  %1996 = vmatprep.subr.bf16.mxu0 0
  %1997 = vmatpush1.bf16.msra.mxu0 %v1543
  %1998 = vmatprep.subr.bf16.mxu0 0
  %1999 = vmatpush1.bf16.msra.mxu0 %v1542
  %2000 = vmatprep.subr.bf16.mxu0 0
  %2001 = vmatpush1.bf16.msra.mxu0 %v1541
  %2002 = vmatprep.subr.bf16.mxu0 0
  %2003 = vmatpush1.bf16.msra.mxu0 %v1540
  %2004 = vmatprep.subr.bf16.mxu0 0
  %2005 = vmatpush1.bf16.msra.mxu0 %v1539
  %2006 = vmatprep.subr.bf16.mxu0 0
  %2007 = vmatpush1.bf16.msra.mxu0 %v1538
  %2008 = vmatprep.subr.bf16.mxu0 0
  %2009 = vmatpush1.bf16.msra.mxu0 %v1537
  %2010 = vmatprep.subr.bf16.mxu0 0
  %2011 = vmatpush2.bf16.msra.mxu0 0
  %2012 = vmatprep.subr.bf16.mxu0 0
  %2013 = vmatpush2.bf16.msra.mxu0 0
  %2014 = vmatprep.subr.bf16.mxu0 0
  %2015 = vmatpush2.bf16.msra.mxu0 0
  %2016 = vmatprep.subr.bf16.mxu0 0
  %2017 = vmatpush2.bf16.msra.mxu0 0
  %2018 = vmatprep.subr.bf16.mxu0 0
  %2019 = vmatpush2.bf16.msra.mxu0 0
  %2020 = vmatprep.subr.bf16.mxu0 0
  %2021 = vmatpush2.bf16.msra.mxu0 0
  %2022 = vmatprep.subr.bf16.mxu0 0
  %2023 = vmatpush2.bf16.msra.mxu0 0
  %2024 = vmatprep.subr.bf16.mxu0 0
  %2025 = vmatpush2.bf16.msra.mxu0 0
  %2026 = vmatprep.mubr.bf16.mxu0 0
  %2027 = vmatmul.mubr.bf16.gmra.mxu0 %v55
  %v2028 = vpop.f32.mrf.mxu0
  %v2029 = vadd.f32 0.0, %v2028
  %v2030 = vpop.f32.mrf.mxu0
  %v2031 = vpop.f32.mrf.mxu0
  %v2032 = vpop.f32.mrf.mxu0
  %2033 = vdwg.mxu0
  %v2034 = vadd.f32 %v1989, %v2029
  %2035 = vmatprep.subr.bf16.mxu0 0
  %2036 = vmatpush1.bf16.msra.mxu0 %v690
  %2037 = vmatprep.subr.bf16.mxu0 0
  %2038 = vmatpush1.bf16.msra.mxu0 %v689
  %2039 = vmatprep.subr.bf16.mxu0 0
  %2040 = vmatpush1.bf16.msra.mxu0 %v688
  %2041 = vmatprep.subr.bf16.mxu0 0
  %2042 = vmatpush1.bf16.msra.mxu0 %v687
  %2043 = vmatprep.subr.bf16.mxu0 0
  %2044 = vmatpush1.bf16.msra.mxu0 %v686
  %2045 = vmatprep.subr.bf16.mxu0 0
  %2046 = vmatpush1.bf16.msra.mxu0 %v685
  %2047 = vmatprep.subr.bf16.mxu0 0
  %2048 = vmatpush1.bf16.msra.mxu0 %v684
  %2049 = vmatprep.subr.bf16.mxu0 0
  %2050 = vmatpush1.bf16.msra.mxu0 %v683
  %2051 = vmatprep.subr.bf16.mxu0 0
  %2052 = vmatpush2.bf16.msra.mxu0 0
  %2053 = vmatprep.subr.bf16.mxu0 0
  %2054 = vmatpush2.bf16.msra.mxu0 0
  %2055 = vmatprep.subr.bf16.mxu0 0
  %2056 = vmatpush2.bf16.msra.mxu0 0
  %2057 = vmatprep.subr.bf16.mxu0 0
  %2058 = vmatpush2.bf16.msra.mxu0 0
  %2059 = vmatprep.subr.bf16.mxu0 0
  %2060 = vmatpush2.bf16.msra.mxu0 0
  %2061 = vmatprep.subr.bf16.mxu0 0
  %2062 = vmatpush2.bf16.msra.mxu0 0
  %2063 = vmatprep.subr.bf16.mxu0 0
  %2064 = vmatpush2.bf16.msra.mxu0 0
  %2065 = vmatprep.subr.bf16.mxu0 0
  %2066 = vmatpush2.bf16.msra.mxu0 0
  %2067 = vmatprep.mubr.bf16.mxu0 0
  %2068 = vmatmul.mubr.bf16.gmra.mxu0 %v67
  %v2069 = vpop.f32.mrf.mxu0
  %v2070 = vadd.f32 0.0, %v2069
  %v2071 = vpop.f32.mrf.mxu0
  %v2072 = vpop.f32.mrf.mxu0
  %v2073 = vpop.f32.mrf.mxu0
  %2074 = vdwg.mxu0
  %v2075 = vadd.f32 %v2034, %v2070
  %2076 = vmatprep.subr.bf16.mxu0 0
  %2077 = vmatpush1.bf16.msra.mxu0 %v321
  %2078 = vmatprep.subr.bf16.mxu0 0
  %2079 = vmatpush1.bf16.msra.mxu0 %v320
  %2080 = vmatprep.subr.bf16.mxu0 0
  %2081 = vmatpush1.bf16.msra.mxu0 %v319
  %2082 = vmatprep.subr.bf16.mxu0 0
  %2083 = vmatpush1.bf16.msra.mxu0 %v318
  %2084 = vmatprep.subr.bf16.mxu0 0
  %2085 = vmatpush1.bf16.msra.mxu0 %v317
  %2086 = vmatprep.subr.bf16.mxu0 0
  %2087 = vmatpush1.bf16.msra.mxu0 %v316
  %2088 = vmatprep.subr.bf16.mxu0 0
  %2089 = vmatpush1.bf16.msra.mxu0 %v315
  %2090 = vmatprep.subr.bf16.mxu0 0
  %2091 = vmatpush1.bf16.msra.mxu0 %v314
  %2092 = vmatprep.subr.bf16.mxu0 0
  %2093 = vmatpush2.bf16.msra.mxu0 0
  %2094 = vmatprep.subr.bf16.mxu0 0
  %2095 = vmatpush2.bf16.msra.mxu0 0
  %2096 = vmatprep.subr.bf16.mxu0 0
  %2097 = vmatpush2.bf16.msra.mxu0 0
  %2098 = vmatprep.subr.bf16.mxu0 0
  %2099 = vmatpush2.bf16.msra.mxu0 0
  %2100 = vmatprep.subr.bf16.mxu0 0
  %2101 = vmatpush2.bf16.msra.mxu0 0
  %2102 = vmatprep.subr.bf16.mxu0 0
  %2103 = vmatpush2.bf16.msra.mxu0 0
  %2104 = vmatprep.subr.bf16.mxu0 0
  %2105 = vmatpush2.bf16.msra.mxu0 0
  %2106 = vmatprep.subr.bf16.mxu0 0
  %2107 = vmatpush2.bf16.msra.mxu0 0
  %2108 = vmatprep.mubr.bf16.mxu0 0
  %2109 = vmatmul.mubr.bf16.gmra.mxu0 %v69
  %v2110 = vpop.f32.mrf.mxu0
  %v2111 = vadd.f32 0.0, %v2110
  %v2112 = vpop.f32.mrf.mxu0
  %v2113 = vpop.f32.mrf.mxu0
  %v2114 = vpop.f32.mrf.mxu0
  %2115 = vdwg.mxu0
  %v2116 = vadd.f32 %v2075, %v2111
  %2117 = vmatprep.subr.bf16.mxu0 0
  %2118 = vmatpush1.bf16.msra.mxu0 %v233
  %2119 = vmatprep.subr.bf16.mxu0 0
  %2120 = vmatpush1.bf16.msra.mxu0 %v232
  %2121 = vmatprep.subr.bf16.mxu0 0
  %2122 = vmatpush1.bf16.msra.mxu0 %v231
  %2123 = vmatprep.subr.bf16.mxu0 0
  %2124 = vmatpush1.bf16.msra.mxu0 %v230
  %2125 = vmatprep.subr.bf16.mxu0 0
  %2126 = vmatpush1.bf16.msra.mxu0 %v229
  %2127 = vmatprep.subr.bf16.mxu0 0
  %2128 = vmatpush1.bf16.msra.mxu0 %v228
  %2129 = vmatprep.subr.bf16.mxu0 0
  %2130 = vmatpush1.bf16.msra.mxu0 %v227
  %2131 = vmatprep.subr.bf16.mxu0 0
  %2132 = vmatpush1.bf16.msra.mxu0 %v226
  %2133 = vmatprep.subr.bf16.mxu0 0
  %2134 = vmatpush2.bf16.msra.mxu0 0
  %2135 = vmatprep.subr.bf16.mxu0 0
  %2136 = vmatpush2.bf16.msra.mxu0 0
  %2137 = vmatprep.subr.bf16.mxu0 0
  %2138 = vmatpush2.bf16.msra.mxu0 0
  %2139 = vmatprep.subr.bf16.mxu0 0
  %2140 = vmatpush2.bf16.msra.mxu0 0
  %2141 = vmatprep.subr.bf16.mxu0 0
  %2142 = vmatpush2.bf16.msra.mxu0 0
  %2143 = vmatprep.subr.bf16.mxu0 0
  %2144 = vmatpush2.bf16.msra.mxu0 0
  %2145 = vmatprep.subr.bf16.mxu0 0
  %2146 = vmatpush2.bf16.msra.mxu0 0
  %2147 = vmatprep.subr.bf16.mxu0 0
  %2148 = vmatpush2.bf16.msra.mxu0 0
  %2149 = vmatprep.mubr.bf16.mxu0 0
  %2150 = vmatmul.mubr.bf16.gmra.mxu0 %v71
  %v2151 = vpop.f32.mrf.mxu0
  %v2152 = vadd.f32 0.0, %v2151
  %v2153 = vpop.f32.mrf.mxu0
  %v2154 = vpop.f32.mrf.mxu0
  %v2155 = vpop.f32.mrf.mxu0
  %2156 = vdwg.mxu0
  %v2157 = vadd.f32 %v2116, %v2152
  %2158 = vmatprep.subr.bf16.mxu0 0
  %2159 = vmatpush1.bf16.msra.mxu0 %v836
  %2160 = vmatprep.subr.bf16.mxu0 0
  %2161 = vmatpush1.bf16.msra.mxu0 %v835
  %2162 = vmatprep.subr.bf16.mxu0 0
  %2163 = vmatpush1.bf16.msra.mxu0 %v834
  %2164 = vmatprep.subr.bf16.mxu0 0
  %2165 = vmatpush1.bf16.msra.mxu0 %v833
  %2166 = vmatprep.subr.bf16.mxu0 0
  %2167 = vmatpush1.bf16.msra.mxu0 %v832
  %2168 = vmatprep.subr.bf16.mxu0 0
  %2169 = vmatpush1.bf16.msra.mxu0 %v831
  %2170 = vmatprep.subr.bf16.mxu0 0
  %2171 = vmatpush1.bf16.msra.mxu0 %v830
  %2172 = vmatprep.subr.bf16.mxu0 0
  %2173 = vmatpush1.bf16.msra.mxu0 %v829
  %2174 = vmatprep.subr.bf16.mxu0 0
  %2175 = vmatpush2.bf16.msra.mxu0 0
  %2176 = vmatprep.subr.bf16.mxu0 0
  %2177 = vmatpush2.bf16.msra.mxu0 0
  %2178 = vmatprep.subr.bf16.mxu0 0
  %2179 = vmatpush2.bf16.msra.mxu0 0
  %2180 = vmatprep.subr.bf16.mxu0 0
  %2181 = vmatpush2.bf16.msra.mxu0 0
  %2182 = vmatprep.subr.bf16.mxu0 0
  %2183 = vmatpush2.bf16.msra.mxu0 0
  %2184 = vmatprep.subr.bf16.mxu0 0
  %2185 = vmatpush2.bf16.msra.mxu0 0
  %2186 = vmatprep.subr.bf16.mxu0 0
  %2187 = vmatpush2.bf16.msra.mxu0 0
  %2188 = vmatprep.subr.bf16.mxu0 0
  %2189 = vmatpush2.bf16.msra.mxu0 0
  %2190 = vmatprep.mubr.bf16.mxu0 0
  %2191 = vmatmul.mubr.bf16.gmra.mxu0 %v83
  %v2192 = vpop.f32.mrf.mxu0
  %v2193 = vadd.f32 0.0, %v2192
  %v2194 = vpop.f32.mrf.mxu0
  %v2195 = vpop.f32.mrf.mxu0
  %v2196 = vpop.f32.mrf.mxu0
  %2197 = vdwg.mxu0
  %v2198 = vadd.f32 %v2157, %v2193
  %2199 = vmatprep.subr.bf16.mxu0 0
  %2200 = vmatpush1.bf16.msra.mxu0 %v426
  %2201 = vmatprep.subr.bf16.mxu0 0
  %2202 = vmatpush1.bf16.msra.mxu0 %v425
  %2203 = vmatprep.subr.bf16.mxu0 0
  %2204 = vmatpush1.bf16.msra.mxu0 %v424
  %2205 = vmatprep.subr.bf16.mxu0 0
  %2206 = vmatpush1.bf16.msra.mxu0 %v423
  %2207 = vmatprep.subr.bf16.mxu0 0
  %2208 = vmatpush1.bf16.msra.mxu0 %v422
  %2209 = vmatprep.subr.bf16.mxu0 0
  %2210 = vmatpush1.bf16.msra.mxu0 %v421
  %2211 = vmatprep.subr.bf16.mxu0 0
  %2212 = vmatpush1.bf16.msra.mxu0 %v420
  %2213 = vmatprep.subr.bf16.mxu0 0
  %2214 = vmatpush1.bf16.msra.mxu0 %v419
  %2215 = vmatprep.subr.bf16.mxu0 0
  %2216 = vmatpush2.bf16.msra.mxu0 0
  %2217 = vmatprep.subr.bf16.mxu0 0
  %2218 = vmatpush2.bf16.msra.mxu0 0
  %2219 = vmatprep.subr.bf16.mxu0 0
  %2220 = vmatpush2.bf16.msra.mxu0 0
  %2221 = vmatprep.subr.bf16.mxu0 0
  %2222 = vmatpush2.bf16.msra.mxu0 0
  %2223 = vmatprep.subr.bf16.mxu0 0
  %2224 = vmatpush2.bf16.msra.mxu0 0
  %2225 = vmatprep.subr.bf16.mxu0 0
  %2226 = vmatpush2.bf16.msra.mxu0 0
  %2227 = vmatprep.subr.bf16.mxu0 0
  %2228 = vmatpush2.bf16.msra.mxu0 0
  %2229 = vmatprep.subr.bf16.mxu0 0
  %2230 = vmatpush2.bf16.msra.mxu0 0
  %2231 = vmatprep.mubr.bf16.mxu0 0
  %2232 = vmatmul.mubr.bf16.gmra.mxu0 %v85
  %v2233 = vpop.f32.mrf.mxu0
  %v2234 = vadd.f32 0.0, %v2233
  %v2235 = vpop.f32.mrf.mxu0
  %v2236 = vpop.f32.mrf.mxu0
  %v2237 = vpop.f32.mrf.mxu0
  %2238 = vdwg.mxu0
  %v2239 = vadd.f32 %v2198, %v2234
  %2240 = vmatprep.subr.bf16.mxu0 0
  %2241 = vmatpush1.bf16.msra.mxu0 %v532
  %2242 = vmatprep.subr.bf16.mxu0 0
  %2243 = vmatpush1.bf16.msra.mxu0 %v531
  %2244 = vmatprep.subr.bf16.mxu0 0
  %2245 = vmatpush1.bf16.msra.mxu0 %v530
  %2246 = vmatprep.subr.bf16.mxu0 0
  %2247 = vmatpush1.bf16.msra.mxu0 %v529
  %2248 = vmatprep.subr.bf16.mxu0 0
  %2249 = vmatpush1.bf16.msra.mxu0 %v528
  %2250 = vmatprep.subr.bf16.mxu0 0
  %2251 = vmatpush1.bf16.msra.mxu0 %v527
  %2252 = vmatprep.subr.bf16.mxu0 0
  %2253 = vmatpush1.bf16.msra.mxu0 %v526
  %2254 = vmatprep.subr.bf16.mxu0 0
  %2255 = vmatpush1.bf16.msra.mxu0 %v525
  %2256 = vmatprep.subr.bf16.mxu0 0
  %2257 = vmatpush2.bf16.msra.mxu0 0
  %2258 = vmatprep.subr.bf16.mxu0 0
  %2259 = vmatpush2.bf16.msra.mxu0 0
  %2260 = vmatprep.subr.bf16.mxu0 0
  %2261 = vmatpush2.bf16.msra.mxu0 0
  %2262 = vmatprep.subr.bf16.mxu0 0
  %2263 = vmatpush2.bf16.msra.mxu0 0
  %2264 = vmatprep.subr.bf16.mxu0 0
  %2265 = vmatpush2.bf16.msra.mxu0 0
  %2266 = vmatprep.subr.bf16.mxu0 0
  %2267 = vmatpush2.bf16.msra.mxu0 0
  %2268 = vmatprep.subr.bf16.mxu0 0
  %2269 = vmatpush2.bf16.msra.mxu0 0
  %2270 = vmatprep.subr.bf16.mxu0 0
  %2271 = vmatpush2.bf16.msra.mxu0 0
  %2272 = vmatprep.mubr.bf16.mxu0 0
  %2273 = vmatmul.mubr.bf16.gmra.mxu0 %v87
  %v2274 = vpop.f32.mrf.mxu0
  %v2275 = vadd.f32 0.0, %v2274
  %v2276 = vpop.f32.mrf.mxu0
  %v2277 = vpop.f32.mrf.mxu0
  %v2278 = vpop.f32.mrf.mxu0
  %2279 = vdwg.mxu0
  %v2280 = vadd.f32 %v2239, %v2275
  %v2281 = vadd.f32 %v2280, %v587
  %vm2282 = vcmp.ge.f32.partialorder %v2281, 0.0
  %v2283 = vmul.f32 %v2281, 0.01
  %v2284 = vsel %vm2282, %v2281, %v2283
  %v2285 = vpack.c.bf16 %v2284, %v2284
  %2286 = vmatprep.subr.bf16.mxu0 0
  %2287 = vmatpush1.bf16.msra.mxu0 %v1632
  %2288 = vmatprep.subr.bf16.mxu0 0
  %2289 = vmatpush1.bf16.msra.mxu0 %v1631
  %2290 = vmatprep.subr.bf16.mxu0 0
  %2291 = vmatpush1.bf16.msra.mxu0 %v1630
  %2292 = vmatprep.subr.bf16.mxu0 0
  %2293 = vmatpush1.bf16.msra.mxu0 %v1629
  %2294 = vmatprep.subr.bf16.mxu0 0
  %2295 = vmatpush1.bf16.msra.mxu0 %v1628
  %2296 = vmatprep.subr.bf16.mxu0 0
  %2297 = vmatpush1.bf16.msra.mxu0 %v1627
  %2298 = vmatprep.subr.bf16.mxu0 0
  %2299 = vmatpush1.bf16.msra.mxu0 %v1626
  %2300 = vmatprep.subr.bf16.mxu0 0
  %2301 = vmatpush1.bf16.msra.mxu0 %v1625
  %2302 = vmatprep.subr.bf16.mxu0 0
  %2303 = vmatpush2.bf16.msra.mxu0 0
  %2304 = vmatprep.subr.bf16.mxu0 0
  %2305 = vmatpush2.bf16.msra.mxu0 0
  %2306 = vmatprep.subr.bf16.mxu0 0
  %2307 = vmatpush2.bf16.msra.mxu0 0
  %2308 = vmatprep.subr.bf16.mxu0 0
  %2309 = vmatpush2.bf16.msra.mxu0 0
  %2310 = vmatprep.subr.bf16.mxu0 0
  %2311 = vmatpush2.bf16.msra.mxu0 0
  %2312 = vmatprep.subr.bf16.mxu0 0
  %2313 = vmatpush2.bf16.msra.mxu0 0
  %2314 = vmatprep.subr.bf16.mxu0 0
  %2315 = vmatpush2.bf16.msra.mxu0 0
  %2316 = vmatprep.subr.bf16.mxu0 0
  %2317 = vmatpush2.bf16.msra.mxu0 0
  %2318 = vmatprep.mubr.bf16.mxu0 0
  %2319 = vmatmul.mubr.bf16.gmra.mxu0 %v57
  %v2320 = vpop.f32.mrf.mxu0
  %v2321 = vadd.f32 0.0, %v2320
  %v2322 = vpop.f32.mrf.mxu0
  %v2323 = vpop.f32.mrf.mxu0
  %v2324 = vpop.f32.mrf.mxu0
  %2325 = vdwg.mxu0
  %2326 = vmatprep.subr.bf16.mxu0 0
  %2327 = vmatpush1.bf16.msra.mxu0 %v1945
  %2328 = vmatprep.subr.bf16.mxu0 0
  %2329 = vmatpush1.bf16.msra.mxu0 %v1944
  %2330 = vmatprep.subr.bf16.mxu0 0
  %2331 = vmatpush1.bf16.msra.mxu0 %v1943
  %2332 = vmatprep.subr.bf16.mxu0 0
  %2333 = vmatpush1.bf16.msra.mxu0 %v1942
  %2334 = vmatprep.subr.bf16.mxu0 0
  %2335 = vmatpush1.bf16.msra.mxu0 %v1941
  %2336 = vmatprep.subr.bf16.mxu0 0
  %2337 = vmatpush1.bf16.msra.mxu0 %v1940
  %2338 = vmatprep.subr.bf16.mxu0 0
  %2339 = vmatpush1.bf16.msra.mxu0 %v1939
  %2340 = vmatprep.subr.bf16.mxu0 0
  %2341 = vmatpush1.bf16.msra.mxu0 %v1938
  %2342 = vmatprep.subr.bf16.mxu0 0
  %2343 = vmatpush2.bf16.msra.mxu0 0
  %2344 = vmatprep.subr.bf16.mxu0 0
  %2345 = vmatpush2.bf16.msra.mxu0 0
  %2346 = vmatprep.subr.bf16.mxu0 0
  %2347 = vmatpush2.bf16.msra.mxu0 0
  %2348 = vmatprep.subr.bf16.mxu0 0
  %2349 = vmatpush2.bf16.msra.mxu0 0
  %2350 = vmatprep.subr.bf16.mxu0 0
  %2351 = vmatpush2.bf16.msra.mxu0 0
  %2352 = vmatprep.subr.bf16.mxu0 0
  %2353 = vmatpush2.bf16.msra.mxu0 0
  %2354 = vmatprep.subr.bf16.mxu0 0
  %2355 = vmatpush2.bf16.msra.mxu0 0
  %2356 = vmatprep.subr.bf16.mxu0 0
  %2357 = vmatpush2.bf16.msra.mxu0 0
  %2358 = vmatprep.mubr.bf16.mxu0 0
  %2359 = vmatmul.mubr.bf16.gmra.mxu0 %v55
  %v2360 = vpop.f32.mrf.mxu0
  %v2361 = vadd.f32 %v2321, %v2360
  %v2362 = vpop.f32.mrf.mxu0
  %v2363 = vpop.f32.mrf.mxu0
  %v2364 = vpop.f32.mrf.mxu0
  %2365 = vdwg.mxu0
  %2366 = vmatprep.subr.bf16.mxu0 0
  %2367 = vmatpush1.bf16.msra.mxu0 %v1544
  %2368 = vmatprep.subr.bf16.mxu0 0
  %2369 = vmatpush1.bf16.msra.mxu0 %v1543
  %2370 = vmatprep.subr.bf16.mxu0 0
  %2371 = vmatpush1.bf16.msra.mxu0 %v1542
  %2372 = vmatprep.subr.bf16.mxu0 0
  %2373 = vmatpush1.bf16.msra.mxu0 %v1541
  %2374 = vmatprep.subr.bf16.mxu0 0
  %2375 = vmatpush1.bf16.msra.mxu0 %v1540
  %2376 = vmatprep.subr.bf16.mxu0 0
  %2377 = vmatpush1.bf16.msra.mxu0 %v1539
  %2378 = vmatprep.subr.bf16.mxu0 0
  %2379 = vmatpush1.bf16.msra.mxu0 %v1538
  %2380 = vmatprep.subr.bf16.mxu0 0
  %2381 = vmatpush1.bf16.msra.mxu0 %v1537
  %2382 = vmatprep.subr.bf16.mxu0 0
  %2383 = vmatpush2.bf16.msra.mxu0 0
  %2384 = vmatprep.subr.bf16.mxu0 0
  %2385 = vmatpush2.bf16.msra.mxu0 0
  %2386 = vmatprep.subr.bf16.mxu0 0
  %2387 = vmatpush2.bf16.msra.mxu0 0
  %2388 = vmatprep.subr.bf16.mxu0 0
  %2389 = vmatpush2.bf16.msra.mxu0 0
  %2390 = vmatprep.subr.bf16.mxu0 0
  %2391 = vmatpush2.bf16.msra.mxu0 0
  %2392 = vmatprep.subr.bf16.mxu0 0
  %2393 = vmatpush2.bf16.msra.mxu0 0
  %2394 = vmatprep.subr.bf16.mxu0 0
  %2395 = vmatpush2.bf16.msra.mxu0 0
  %2396 = vmatprep.subr.bf16.mxu0 0
  %2397 = vmatpush2.bf16.msra.mxu0 0
  %2398 = vmatprep.mubr.bf16.mxu0 0
  %2399 = vmatmul.mubr.bf16.gmra.mxu0 %v59
  %v2400 = vpop.f32.mrf.mxu0
  %v2401 = vadd.f32 0.0, %v2400
  %v2402 = vpop.f32.mrf.mxu0
  %v2403 = vpop.f32.mrf.mxu0
  %v2404 = vpop.f32.mrf.mxu0
  %2405 = vdwg.mxu0
  %v2406 = vadd.f32 %v2361, %v2401
  %2407 = vmatprep.subr.bf16.mxu0 0
  %2408 = vmatpush1.bf16.msra.mxu0 %v690
  %2409 = vmatprep.subr.bf16.mxu0 0
  %2410 = vmatpush1.bf16.msra.mxu0 %v689
  %2411 = vmatprep.subr.bf16.mxu0 0
  %2412 = vmatpush1.bf16.msra.mxu0 %v688
  %2413 = vmatprep.subr.bf16.mxu0 0
  %2414 = vmatpush1.bf16.msra.mxu0 %v687
  %2415 = vmatprep.subr.bf16.mxu0 0
  %2416 = vmatpush1.bf16.msra.mxu0 %v686
  %2417 = vmatprep.subr.bf16.mxu0 0
  %2418 = vmatpush1.bf16.msra.mxu0 %v685
  %2419 = vmatprep.subr.bf16.mxu0 0
  %2420 = vmatpush1.bf16.msra.mxu0 %v684
  %2421 = vmatprep.subr.bf16.mxu0 0
  %2422 = vmatpush1.bf16.msra.mxu0 %v683
  %2423 = vmatprep.subr.bf16.mxu0 0
  %2424 = vmatpush2.bf16.msra.mxu0 0
  %2425 = vmatprep.subr.bf16.mxu0 0
  %2426 = vmatpush2.bf16.msra.mxu0 0
  %2427 = vmatprep.subr.bf16.mxu0 0
  %2428 = vmatpush2.bf16.msra.mxu0 0
  %2429 = vmatprep.subr.bf16.mxu0 0
  %2430 = vmatpush2.bf16.msra.mxu0 0
  %2431 = vmatprep.subr.bf16.mxu0 0
  %2432 = vmatpush2.bf16.msra.mxu0 0
  %2433 = vmatprep.subr.bf16.mxu0 0
  %2434 = vmatpush2.bf16.msra.mxu0 0
  %2435 = vmatprep.subr.bf16.mxu0 0
  %2436 = vmatpush2.bf16.msra.mxu0 0
  %2437 = vmatprep.subr.bf16.mxu0 0
  %2438 = vmatpush2.bf16.msra.mxu0 0
  %2439 = vmatprep.mubr.bf16.mxu0 0
  %2440 = vmatmul.mubr.bf16.gmra.mxu0 %v71
  %v2441 = vpop.f32.mrf.mxu0
  %v2442 = vadd.f32 0.0, %v2441
  %v2443 = vpop.f32.mrf.mxu0
  %v2444 = vpop.f32.mrf.mxu0
  %v2445 = vpop.f32.mrf.mxu0
  %2446 = vdwg.mxu0
  %v2447 = vadd.f32 %v2406, %v2442
  %2448 = vmatprep.subr.bf16.mxu0 0
  %2449 = vmatpush1.bf16.msra.mxu0 %v321
  %2450 = vmatprep.subr.bf16.mxu0 0
  %2451 = vmatpush1.bf16.msra.mxu0 %v320
  %2452 = vmatprep.subr.bf16.mxu0 0
  %2453 = vmatpush1.bf16.msra.mxu0 %v319
  %2454 = vmatprep.subr.bf16.mxu0 0
  %2455 = vmatpush1.bf16.msra.mxu0 %v318
  %2456 = vmatprep.subr.bf16.mxu0 0
  %2457 = vmatpush1.bf16.msra.mxu0 %v317
  %2458 = vmatprep.subr.bf16.mxu0 0
  %2459 = vmatpush1.bf16.msra.mxu0 %v316
  %2460 = vmatprep.subr.bf16.mxu0 0
  %2461 = vmatpush1.bf16.msra.mxu0 %v315
  %2462 = vmatprep.subr.bf16.mxu0 0
  %2463 = vmatpush1.bf16.msra.mxu0 %v314
  %2464 = vmatprep.subr.bf16.mxu0 0
  %2465 = vmatpush2.bf16.msra.mxu0 0
  %2466 = vmatprep.subr.bf16.mxu0 0
  %2467 = vmatpush2.bf16.msra.mxu0 0
  %2468 = vmatprep.subr.bf16.mxu0 0
  %2469 = vmatpush2.bf16.msra.mxu0 0
  %2470 = vmatprep.subr.bf16.mxu0 0
  %2471 = vmatpush2.bf16.msra.mxu0 0
  %2472 = vmatprep.subr.bf16.mxu0 0
  %2473 = vmatpush2.bf16.msra.mxu0 0
  %2474 = vmatprep.subr.bf16.mxu0 0
  %2475 = vmatpush2.bf16.msra.mxu0 0
  %2476 = vmatprep.subr.bf16.mxu0 0
  %2477 = vmatpush2.bf16.msra.mxu0 0
  %2478 = vmatprep.subr.bf16.mxu0 0
  %2479 = vmatpush2.bf16.msra.mxu0 0
  %2480 = vmatprep.mubr.bf16.mxu0 0
  %2481 = vmatmul.mubr.bf16.gmra.mxu0 %v73
  %v2482 = vpop.f32.mrf.mxu0
  %v2483 = vadd.f32 0.0, %v2482
  %v2484 = vpop.f32.mrf.mxu0
  %v2485 = vpop.f32.mrf.mxu0
  %v2486 = vpop.f32.mrf.mxu0
  %2487 = vdwg.mxu0
  %v2488 = vadd.f32 %v2447, %v2483
  %2489 = vmatprep.subr.bf16.mxu0 0
  %2490 = vmatpush1.bf16.msra.mxu0 %v233
  %2491 = vmatprep.subr.bf16.mxu0 0
  %2492 = vmatpush1.bf16.msra.mxu0 %v232
  %2493 = vmatprep.subr.bf16.mxu0 0
  %2494 = vmatpush1.bf16.msra.mxu0 %v231
  %2495 = vmatprep.subr.bf16.mxu0 0
  %2496 = vmatpush1.bf16.msra.mxu0 %v230
  %2497 = vmatprep.subr.bf16.mxu0 0
  %2498 = vmatpush1.bf16.msra.mxu0 %v229
  %2499 = vmatprep.subr.bf16.mxu0 0
  %2500 = vmatpush1.bf16.msra.mxu0 %v228
  %2501 = vmatprep.subr.bf16.mxu0 0
  %2502 = vmatpush1.bf16.msra.mxu0 %v227
  %2503 = vmatprep.subr.bf16.mxu0 0
  %2504 = vmatpush1.bf16.msra.mxu0 %v226
  %2505 = vmatprep.subr.bf16.mxu0 0
  %2506 = vmatpush2.bf16.msra.mxu0 0
  %2507 = vmatprep.subr.bf16.mxu0 0
  %2508 = vmatpush2.bf16.msra.mxu0 0
  %2509 = vmatprep.subr.bf16.mxu0 0
  %2510 = vmatpush2.bf16.msra.mxu0 0
  %2511 = vmatprep.subr.bf16.mxu0 0
  %2512 = vmatpush2.bf16.msra.mxu0 0
  %2513 = vmatprep.subr.bf16.mxu0 0
  %2514 = vmatpush2.bf16.msra.mxu0 0
  %2515 = vmatprep.subr.bf16.mxu0 0
  %2516 = vmatpush2.bf16.msra.mxu0 0
  %2517 = vmatprep.subr.bf16.mxu0 0
  %2518 = vmatpush2.bf16.msra.mxu0 0
  %2519 = vmatprep.subr.bf16.mxu0 0
  %2520 = vmatpush2.bf16.msra.mxu0 0
  %2521 = vmatprep.mubr.bf16.mxu0 0
  %2522 = vmatmul.mubr.bf16.gmra.mxu0 %v75
  %v2523 = vpop.f32.mrf.mxu0
  %v2524 = vadd.f32 0.0, %v2523
  %v2525 = vpop.f32.mrf.mxu0
  %v2526 = vpop.f32.mrf.mxu0
  %v2527 = vpop.f32.mrf.mxu0
  %2528 = vdwg.mxu0
  %v2529 = vadd.f32 %v2488, %v2524
  %2530 = vmatprep.subr.bf16.mxu0 0
  %2531 = vmatpush1.bf16.msra.mxu0 %v836
  %2532 = vmatprep.subr.bf16.mxu0 0
  %2533 = vmatpush1.bf16.msra.mxu0 %v835
  %2534 = vmatprep.subr.bf16.mxu0 0
  %2535 = vmatpush1.bf16.msra.mxu0 %v834
  %2536 = vmatprep.subr.bf16.mxu0 0
  %2537 = vmatpush1.bf16.msra.mxu0 %v833
  %2538 = vmatprep.subr.bf16.mxu0 0
  %2539 = vmatpush1.bf16.msra.mxu0 %v832
  %2540 = vmatprep.subr.bf16.mxu0 0
  %2541 = vmatpush1.bf16.msra.mxu0 %v831
  %2542 = vmatprep.subr.bf16.mxu0 0
  %2543 = vmatpush1.bf16.msra.mxu0 %v830
  %2544 = vmatprep.subr.bf16.mxu0 0
  %2545 = vmatpush1.bf16.msra.mxu0 %v829
  %2546 = vmatprep.subr.bf16.mxu0 0
  %2547 = vmatpush2.bf16.msra.mxu0 0
  %2548 = vmatprep.subr.bf16.mxu0 0
  %2549 = vmatpush2.bf16.msra.mxu0 0
  %2550 = vmatprep.subr.bf16.mxu0 0
  %2551 = vmatpush2.bf16.msra.mxu0 0
  %2552 = vmatprep.subr.bf16.mxu0 0
  %2553 = vmatpush2.bf16.msra.mxu0 0
  %2554 = vmatprep.subr.bf16.mxu0 0
  %2555 = vmatpush2.bf16.msra.mxu0 0
  %2556 = vmatprep.subr.bf16.mxu0 0
  %2557 = vmatpush2.bf16.msra.mxu0 0
  %2558 = vmatprep.subr.bf16.mxu0 0
  %2559 = vmatpush2.bf16.msra.mxu0 0
  %2560 = vmatprep.subr.bf16.mxu0 0
  %2561 = vmatpush2.bf16.msra.mxu0 0
  %2562 = vmatprep.mubr.bf16.mxu0 0
  %2563 = vmatmul.mubr.bf16.gmra.mxu0 %v87
  %v2564 = vpop.f32.mrf.mxu0
  %v2565 = vadd.f32 0.0, %v2564
  %v2566 = vpop.f32.mrf.mxu0
  %v2567 = vpop.f32.mrf.mxu0
  %v2568 = vpop.f32.mrf.mxu0
  %2569 = vdwg.mxu0
  %v2570 = vadd.f32 %v2529, %v2565
  %2571 = vmatprep.subr.bf16.mxu0 0
  %2572 = vmatpush1.bf16.msra.mxu0 %v426
  %2573 = vmatprep.subr.bf16.mxu0 0
  %2574 = vmatpush1.bf16.msra.mxu0 %v425
  %2575 = vmatprep.subr.bf16.mxu0 0
  %2576 = vmatpush1.bf16.msra.mxu0 %v424
  %2577 = vmatprep.subr.bf16.mxu0 0
  %2578 = vmatpush1.bf16.msra.mxu0 %v423
  %2579 = vmatprep.subr.bf16.mxu0 0
  %2580 = vmatpush1.bf16.msra.mxu0 %v422
  %2581 = vmatprep.subr.bf16.mxu0 0
  %2582 = vmatpush1.bf16.msra.mxu0 %v421
  %2583 = vmatprep.subr.bf16.mxu0 0
  %2584 = vmatpush1.bf16.msra.mxu0 %v420
  %2585 = vmatprep.subr.bf16.mxu0 0
  %2586 = vmatpush1.bf16.msra.mxu0 %v419
  %2587 = vmatprep.subr.bf16.mxu0 0
  %2588 = vmatpush2.bf16.msra.mxu0 0
  %2589 = vmatprep.subr.bf16.mxu0 0
  %2590 = vmatpush2.bf16.msra.mxu0 0
  %2591 = vmatprep.subr.bf16.mxu0 0
  %2592 = vmatpush2.bf16.msra.mxu0 0
  %2593 = vmatprep.subr.bf16.mxu0 0
  %2594 = vmatpush2.bf16.msra.mxu0 0
  %2595 = vmatprep.subr.bf16.mxu0 0
  %2596 = vmatpush2.bf16.msra.mxu0 0
  %2597 = vmatprep.subr.bf16.mxu0 0
  %2598 = vmatpush2.bf16.msra.mxu0 0
  %2599 = vmatprep.subr.bf16.mxu0 0
  %2600 = vmatpush2.bf16.msra.mxu0 0
  %2601 = vmatprep.subr.bf16.mxu0 0
  %2602 = vmatpush2.bf16.msra.mxu0 0
  %2603 = vmatprep.mubr.bf16.mxu0 0
  %2604 = vmatmul.mubr.bf16.gmra.mxu0 %v89
  %v2605 = vpop.f32.mrf.mxu0
  %v2606 = vadd.f32 0.0, %v2605
  %v2607 = vpop.f32.mrf.mxu0
  %v2608 = vpop.f32.mrf.mxu0
  %v2609 = vpop.f32.mrf.mxu0
  %2610 = vdwg.mxu0
  %v2611 = vadd.f32 %v2570, %v2606
  %2612 = vmatprep.subr.bf16.mxu0 0
  %2613 = vmatpush1.bf16.msra.mxu0 %v532
  %2614 = vmatprep.subr.bf16.mxu0 0
  %2615 = vmatpush1.bf16.msra.mxu0 %v531
  %2616 = vmatprep.subr.bf16.mxu0 0
  %2617 = vmatpush1.bf16.msra.mxu0 %v530
  %2618 = vmatprep.subr.bf16.mxu0 0
  %2619 = vmatpush1.bf16.msra.mxu0 %v529
  %2620 = vmatprep.subr.bf16.mxu0 0
  %2621 = vmatpush1.bf16.msra.mxu0 %v528
  %2622 = vmatprep.subr.bf16.mxu0 0
  %2623 = vmatpush1.bf16.msra.mxu0 %v527
  %2624 = vmatprep.subr.bf16.mxu0 0
  %2625 = vmatpush1.bf16.msra.mxu0 %v526
  %2626 = vmatprep.subr.bf16.mxu0 0
  %2627 = vmatpush1.bf16.msra.mxu0 %v525
  %2628 = vmatprep.subr.bf16.mxu0 0
  %2629 = vmatpush2.bf16.msra.mxu0 0
  %2630 = vmatprep.subr.bf16.mxu0 0
  %2631 = vmatpush2.bf16.msra.mxu0 0
  %2632 = vmatprep.subr.bf16.mxu0 0
  %2633 = vmatpush2.bf16.msra.mxu0 0
  %2634 = vmatprep.subr.bf16.mxu0 0
  %2635 = vmatpush2.bf16.msra.mxu0 0
  %2636 = vmatprep.subr.bf16.mxu0 0
  %2637 = vmatpush2.bf16.msra.mxu0 0
  %2638 = vmatprep.subr.bf16.mxu0 0
  %2639 = vmatpush2.bf16.msra.mxu0 0
  %2640 = vmatprep.subr.bf16.mxu0 0
  %2641 = vmatpush2.bf16.msra.mxu0 0
  %2642 = vmatprep.subr.bf16.mxu0 0
  %2643 = vmatpush2.bf16.msra.mxu0 0
  %2644 = vmatprep.mubr.bf16.mxu0 0
  %2645 = vmatmul.mubr.bf16.gmra.mxu0 %v91
  %v2646 = vpop.f32.mrf.mxu0
  %v2647 = vadd.f32 0.0, %v2646
  %v2648 = vpop.f32.mrf.mxu0
  %v2649 = vpop.f32.mrf.mxu0
  %v2650 = vpop.f32.mrf.mxu0
  %2651 = vdwg.mxu0
  %v2652 = vadd.f32 %v2611, %v2647
  %v2653 = vadd.f32 %v2652, %v587
  %vm2654 = vcmp.ge.f32.partialorder %v2653, 0.0
  %v2655 = vmul.f32 %v2653, 0.01
  %v2656 = vsel %vm2654, %v2653, %v2655
  %v2657 = vpack.c.bf16 %v2656, %v2656
  %2658 = vmatprep.subr.bf16.mxu0 0
  %2659 = vmatpush1.bf16.msra.mxu0 %v1632
  %2660 = vmatprep.subr.bf16.mxu0 0
  %2661 = vmatpush1.bf16.msra.mxu0 %v1631
  %2662 = vmatprep.subr.bf16.mxu0 0
  %2663 = vmatpush1.bf16.msra.mxu0 %v1630
  %2664 = vmatprep.subr.bf16.mxu0 0
  %2665 = vmatpush1.bf16.msra.mxu0 %v1629
  %2666 = vmatprep.subr.bf16.mxu0 0
  %2667 = vmatpush1.bf16.msra.mxu0 %v1628
  %2668 = vmatprep.subr.bf16.mxu0 0
  %2669 = vmatpush1.bf16.msra.mxu0 %v1627
  %2670 = vmatprep.subr.bf16.mxu0 0
  %2671 = vmatpush1.bf16.msra.mxu0 %v1626
  %2672 = vmatprep.subr.bf16.mxu0 0
  %2673 = vmatpush1.bf16.msra.mxu0 %v1625
  %2674 = vmatprep.subr.bf16.mxu0 0
  %2675 = vmatpush2.bf16.msra.mxu0 0
  %2676 = vmatprep.subr.bf16.mxu0 0
  %2677 = vmatpush2.bf16.msra.mxu0 0
  %2678 = vmatprep.subr.bf16.mxu0 0
  %2679 = vmatpush2.bf16.msra.mxu0 0
  %2680 = vmatprep.subr.bf16.mxu0 0
  %2681 = vmatpush2.bf16.msra.mxu0 0
  %2682 = vmatprep.subr.bf16.mxu0 0
  %2683 = vmatpush2.bf16.msra.mxu0 0
  %2684 = vmatprep.subr.bf16.mxu0 0
  %2685 = vmatpush2.bf16.msra.mxu0 0
  %2686 = vmatprep.subr.bf16.mxu0 0
  %2687 = vmatpush2.bf16.msra.mxu0 0
  %2688 = vmatprep.subr.bf16.mxu0 0
  %2689 = vmatpush2.bf16.msra.mxu0 0
  %2690 = vmatprep.mubr.bf16.mxu0 0
  %2691 = vmatmul.mubr.bf16.gmra.mxu0 %v61
  %v2692 = vpop.f32.mrf.mxu0
  %v2693 = vadd.f32 0.0, %v2692
  %v2694 = vpop.f32.mrf.mxu0
  %v2695 = vpop.f32.mrf.mxu0
  %v2696 = vpop.f32.mrf.mxu0
  %2697 = vdwg.mxu0
  %2698 = vmatprep.subr.bf16.mxu0 0
  %2699 = vmatpush1.bf16.msra.mxu0 %v1945
  %2700 = vmatprep.subr.bf16.mxu0 0
  %2701 = vmatpush1.bf16.msra.mxu0 %v1944
  %2702 = vmatprep.subr.bf16.mxu0 0
  %2703 = vmatpush1.bf16.msra.mxu0 %v1943
  %2704 = vmatprep.subr.bf16.mxu0 0
  %2705 = vmatpush1.bf16.msra.mxu0 %v1942
  %2706 = vmatprep.subr.bf16.mxu0 0
  %2707 = vmatpush1.bf16.msra.mxu0 %v1941
  %2708 = vmatprep.subr.bf16.mxu0 0
  %2709 = vmatpush1.bf16.msra.mxu0 %v1940
  %2710 = vmatprep.subr.bf16.mxu0 0
  %2711 = vmatpush1.bf16.msra.mxu0 %v1939
  %2712 = vmatprep.subr.bf16.mxu0 0
  %2713 = vmatpush1.bf16.msra.mxu0 %v1938
  %2714 = vmatprep.subr.bf16.mxu0 0
  %2715 = vmatpush2.bf16.msra.mxu0 0
  %2716 = vmatprep.subr.bf16.mxu0 0
  %2717 = vmatpush2.bf16.msra.mxu0 0
  %2718 = vmatprep.subr.bf16.mxu0 0
  %2719 = vmatpush2.bf16.msra.mxu0 0
  %2720 = vmatprep.subr.bf16.mxu0 0
  %2721 = vmatpush2.bf16.msra.mxu0 0
  %2722 = vmatprep.subr.bf16.mxu0 0
  %2723 = vmatpush2.bf16.msra.mxu0 0
  %2724 = vmatprep.subr.bf16.mxu0 0
  %2725 = vmatpush2.bf16.msra.mxu0 0
  %2726 = vmatprep.subr.bf16.mxu0 0
  %2727 = vmatpush2.bf16.msra.mxu0 0
  %2728 = vmatprep.subr.bf16.mxu0 0
  %2729 = vmatpush2.bf16.msra.mxu0 0
  %2730 = vmatprep.mubr.bf16.mxu0 0
  %2731 = vmatmul.mubr.bf16.gmra.mxu0 %v59
  %v2732 = vpop.f32.mrf.mxu0
  %v2733 = vadd.f32 %v2693, %v2732
  %v2734 = vpop.f32.mrf.mxu0
  %v2735 = vpop.f32.mrf.mxu0
  %v2736 = vpop.f32.mrf.mxu0
  %2737 = vdwg.mxu0
  %2738 = vmatprep.subr.bf16.mxu0 0
  %2739 = vmatpush1.bf16.msra.mxu0 %v1544
  %2740 = vmatprep.subr.bf16.mxu0 0
  %2741 = vmatpush1.bf16.msra.mxu0 %v1543
  %2742 = vmatprep.subr.bf16.mxu0 0
  %2743 = vmatpush1.bf16.msra.mxu0 %v1542
  %2744 = vmatprep.subr.bf16.mxu0 0
  %2745 = vmatpush1.bf16.msra.mxu0 %v1541
  %2746 = vmatprep.subr.bf16.mxu0 0
  %2747 = vmatpush1.bf16.msra.mxu0 %v1540
  %2748 = vmatprep.subr.bf16.mxu0 0
  %2749 = vmatpush1.bf16.msra.mxu0 %v1539
  %2750 = vmatprep.subr.bf16.mxu0 0
  %2751 = vmatpush1.bf16.msra.mxu0 %v1538
  %2752 = vmatprep.subr.bf16.mxu0 0
  %2753 = vmatpush1.bf16.msra.mxu0 %v1537
  %2754 = vmatprep.subr.bf16.mxu0 0
  %2755 = vmatpush2.bf16.msra.mxu0 0
  %2756 = vmatprep.subr.bf16.mxu0 0
  %2757 = vmatpush2.bf16.msra.mxu0 0
  %2758 = vmatprep.subr.bf16.mxu0 0
  %2759 = vmatpush2.bf16.msra.mxu0 0
  %2760 = vmatprep.subr.bf16.mxu0 0
  %2761 = vmatpush2.bf16.msra.mxu0 0
  %2762 = vmatprep.subr.bf16.mxu0 0
  %2763 = vmatpush2.bf16.msra.mxu0 0
  %2764 = vmatprep.subr.bf16.mxu0 0
  %2765 = vmatpush2.bf16.msra.mxu0 0
  %2766 = vmatprep.subr.bf16.mxu0 0
  %2767 = vmatpush2.bf16.msra.mxu0 0
  %2768 = vmatprep.subr.bf16.mxu0 0
  %2769 = vmatpush2.bf16.msra.mxu0 0
  %2770 = vmatprep.mubr.bf16.mxu0 0
  %2771 = vmatmul.mubr.bf16.gmra.mxu0 %v63
  %v2772 = vpop.f32.mrf.mxu0
  %v2773 = vadd.f32 0.0, %v2772
  %v2774 = vpop.f32.mrf.mxu0
  %v2775 = vpop.f32.mrf.mxu0
  %v2776 = vpop.f32.mrf.mxu0
  %2777 = vdwg.mxu0
  %v2778 = vadd.f32 %v2733, %v2773
  %2779 = vmatprep.subr.bf16.mxu0 0
  %2780 = vmatpush1.bf16.msra.mxu0 %v690
  %2781 = vmatprep.subr.bf16.mxu0 0
  %2782 = vmatpush1.bf16.msra.mxu0 %v689
  %2783 = vmatprep.subr.bf16.mxu0 0
  %2784 = vmatpush1.bf16.msra.mxu0 %v688
  %2785 = vmatprep.subr.bf16.mxu0 0
  %2786 = vmatpush1.bf16.msra.mxu0 %v687
  %2787 = vmatprep.subr.bf16.mxu0 0
  %2788 = vmatpush1.bf16.msra.mxu0 %v686
  %2789 = vmatprep.subr.bf16.mxu0 0
  %2790 = vmatpush1.bf16.msra.mxu0 %v685
  %2791 = vmatprep.subr.bf16.mxu0 0
  %2792 = vmatpush1.bf16.msra.mxu0 %v684
  %2793 = vmatprep.subr.bf16.mxu0 0
  %2794 = vmatpush1.bf16.msra.mxu0 %v683
  %2795 = vmatprep.subr.bf16.mxu0 0
  %2796 = vmatpush2.bf16.msra.mxu0 0
  %2797 = vmatprep.subr.bf16.mxu0 0
  %2798 = vmatpush2.bf16.msra.mxu0 0
  %2799 = vmatprep.subr.bf16.mxu0 0
  %2800 = vmatpush2.bf16.msra.mxu0 0
  %2801 = vmatprep.subr.bf16.mxu0 0
  %2802 = vmatpush2.bf16.msra.mxu0 0
  %2803 = vmatprep.subr.bf16.mxu0 0
  %2804 = vmatpush2.bf16.msra.mxu0 0
  %2805 = vmatprep.subr.bf16.mxu0 0
  %2806 = vmatpush2.bf16.msra.mxu0 0
  %2807 = vmatprep.subr.bf16.mxu0 0
  %2808 = vmatpush2.bf16.msra.mxu0 0
  %2809 = vmatprep.subr.bf16.mxu0 0
  %2810 = vmatpush2.bf16.msra.mxu0 0
  %2811 = vmatprep.mubr.bf16.mxu0 0
  %2812 = vmatmul.mubr.bf16.gmra.mxu0 %v75
  %v2813 = vpop.f32.mrf.mxu0
  %v2814 = vadd.f32 0.0, %v2813
  %v2815 = vpop.f32.mrf.mxu0
  %v2816 = vpop.f32.mrf.mxu0
  %v2817 = vpop.f32.mrf.mxu0
  %2818 = vdwg.mxu0
  %v2819 = vadd.f32 %v2778, %v2814
  %2820 = vmatprep.subr.bf16.mxu0 0
  %2821 = vmatpush1.bf16.msra.mxu0 %v321
  %2822 = vmatprep.subr.bf16.mxu0 0
  %2823 = vmatpush1.bf16.msra.mxu0 %v320
  %2824 = vmatprep.subr.bf16.mxu0 0
  %2825 = vmatpush1.bf16.msra.mxu0 %v319
  %2826 = vmatprep.subr.bf16.mxu0 0
  %2827 = vmatpush1.bf16.msra.mxu0 %v318
  %2828 = vmatprep.subr.bf16.mxu0 0
  %2829 = vmatpush1.bf16.msra.mxu0 %v317
  %2830 = vmatprep.subr.bf16.mxu0 0
  %2831 = vmatpush1.bf16.msra.mxu0 %v316
  %2832 = vmatprep.subr.bf16.mxu0 0
  %2833 = vmatpush1.bf16.msra.mxu0 %v315
  %2834 = vmatprep.subr.bf16.mxu0 0
  %2835 = vmatpush1.bf16.msra.mxu0 %v314
  %2836 = vmatprep.subr.bf16.mxu0 0
  %2837 = vmatpush2.bf16.msra.mxu0 0
  %2838 = vmatprep.subr.bf16.mxu0 0
  %2839 = vmatpush2.bf16.msra.mxu0 0
  %2840 = vmatprep.subr.bf16.mxu0 0
  %2841 = vmatpush2.bf16.msra.mxu0 0
  %2842 = vmatprep.subr.bf16.mxu0 0
  %2843 = vmatpush2.bf16.msra.mxu0 0
  %2844 = vmatprep.subr.bf16.mxu0 0
  %2845 = vmatpush2.bf16.msra.mxu0 0
  %2846 = vmatprep.subr.bf16.mxu0 0
  %2847 = vmatpush2.bf16.msra.mxu0 0
  %2848 = vmatprep.subr.bf16.mxu0 0
  %2849 = vmatpush2.bf16.msra.mxu0 0
  %2850 = vmatprep.subr.bf16.mxu0 0
  %2851 = vmatpush2.bf16.msra.mxu0 0
  %2852 = vmatprep.mubr.bf16.mxu0 0
  %2853 = vmatmul.mubr.bf16.gmra.mxu0 %v77
  %v2854 = vpop.f32.mrf.mxu0
  %v2855 = vadd.f32 0.0, %v2854
  %v2856 = vpop.f32.mrf.mxu0
  %v2857 = vpop.f32.mrf.mxu0
  %v2858 = vpop.f32.mrf.mxu0
  %2859 = vdwg.mxu0
  %v2860 = vadd.f32 %v2819, %v2855
  %2861 = vmatprep.subr.bf16.mxu0 0
  %2862 = vmatpush1.bf16.msra.mxu0 %v233
  %2863 = vmatprep.subr.bf16.mxu0 0
  %2864 = vmatpush1.bf16.msra.mxu0 %v232
  %2865 = vmatprep.subr.bf16.mxu0 0
  %2866 = vmatpush1.bf16.msra.mxu0 %v231
  %2867 = vmatprep.subr.bf16.mxu0 0
  %2868 = vmatpush1.bf16.msra.mxu0 %v230
  %2869 = vmatprep.subr.bf16.mxu0 0
  %2870 = vmatpush1.bf16.msra.mxu0 %v229
  %2871 = vmatprep.subr.bf16.mxu0 0
  %2872 = vmatpush1.bf16.msra.mxu0 %v228
  %2873 = vmatprep.subr.bf16.mxu0 0
  %2874 = vmatpush1.bf16.msra.mxu0 %v227
  %2875 = vmatprep.subr.bf16.mxu0 0
  %2876 = vmatpush1.bf16.msra.mxu0 %v226
  %2877 = vmatprep.subr.bf16.mxu0 0
  %2878 = vmatpush2.bf16.msra.mxu0 0
  %2879 = vmatprep.subr.bf16.mxu0 0
  %2880 = vmatpush2.bf16.msra.mxu0 0
  %2881 = vmatprep.subr.bf16.mxu0 0
  %2882 = vmatpush2.bf16.msra.mxu0 0
  %2883 = vmatprep.subr.bf16.mxu0 0
  %2884 = vmatpush2.bf16.msra.mxu0 0
  %2885 = vmatprep.subr.bf16.mxu0 0
  %2886 = vmatpush2.bf16.msra.mxu0 0
  %2887 = vmatprep.subr.bf16.mxu0 0
  %2888 = vmatpush2.bf16.msra.mxu0 0
  %2889 = vmatprep.subr.bf16.mxu0 0
  %2890 = vmatpush2.bf16.msra.mxu0 0
  %2891 = vmatprep.subr.bf16.mxu0 0
  %2892 = vmatpush2.bf16.msra.mxu0 0
  %2893 = vmatprep.mubr.bf16.mxu0 0
  %2894 = vmatmul.mubr.bf16.gmra.mxu0 %v79
  %v2895 = vpop.f32.mrf.mxu0
  %v2896 = vadd.f32 0.0, %v2895
  %v2897 = vpop.f32.mrf.mxu0
  %v2898 = vpop.f32.mrf.mxu0
  %v2899 = vpop.f32.mrf.mxu0
  %2900 = vdwg.mxu0
  %v2901 = vadd.f32 %v2860, %v2896
  %2902 = vmatprep.subr.bf16.mxu0 0
  %2903 = vmatpush1.bf16.msra.mxu0 %v836
  %2904 = vmatprep.subr.bf16.mxu0 0
  %2905 = vmatpush1.bf16.msra.mxu0 %v835
  %2906 = vmatprep.subr.bf16.mxu0 0
  %2907 = vmatpush1.bf16.msra.mxu0 %v834
  %2908 = vmatprep.subr.bf16.mxu0 0
  %2909 = vmatpush1.bf16.msra.mxu0 %v833
  %2910 = vmatprep.subr.bf16.mxu0 0
  %2911 = vmatpush1.bf16.msra.mxu0 %v832
  %2912 = vmatprep.subr.bf16.mxu0 0
  %2913 = vmatpush1.bf16.msra.mxu0 %v831
  %2914 = vmatprep.subr.bf16.mxu0 0
  %2915 = vmatpush1.bf16.msra.mxu0 %v830
  %2916 = vmatprep.subr.bf16.mxu0 0
  %2917 = vmatpush1.bf16.msra.mxu0 %v829
  %2918 = vmatprep.subr.bf16.mxu0 0
  %2919 = vmatpush2.bf16.msra.mxu0 0
  %2920 = vmatprep.subr.bf16.mxu0 0
  %2921 = vmatpush2.bf16.msra.mxu0 0
  %2922 = vmatprep.subr.bf16.mxu0 0
  %2923 = vmatpush2.bf16.msra.mxu0 0
  %2924 = vmatprep.subr.bf16.mxu0 0
  %2925 = vmatpush2.bf16.msra.mxu0 0
  %2926 = vmatprep.subr.bf16.mxu0 0
  %2927 = vmatpush2.bf16.msra.mxu0 0
  %2928 = vmatprep.subr.bf16.mxu0 0
  %2929 = vmatpush2.bf16.msra.mxu0 0
  %2930 = vmatprep.subr.bf16.mxu0 0
  %2931 = vmatpush2.bf16.msra.mxu0 0
  %2932 = vmatprep.subr.bf16.mxu0 0
  %2933 = vmatpush2.bf16.msra.mxu0 0
  %2934 = vmatprep.mubr.bf16.mxu0 0
  %2935 = vmatmul.mubr.bf16.gmra.mxu0 %v91
  %v2936 = vpop.f32.mrf.mxu0
  %v2937 = vadd.f32 0.0, %v2936
  %v2938 = vpop.f32.mrf.mxu0
  %v2939 = vpop.f32.mrf.mxu0
  %v2940 = vpop.f32.mrf.mxu0
  %2941 = vdwg.mxu0
  %v2942 = vadd.f32 %v2901, %v2937
  %2943 = vmatprep.subr.bf16.mxu0 0
  %2944 = vmatpush1.bf16.msra.mxu0 %v426
  %2945 = vmatprep.subr.bf16.mxu0 0
  %2946 = vmatpush1.bf16.msra.mxu0 %v425
  %2947 = vmatprep.subr.bf16.mxu0 0
  %2948 = vmatpush1.bf16.msra.mxu0 %v424
  %2949 = vmatprep.subr.bf16.mxu0 0
  %2950 = vmatpush1.bf16.msra.mxu0 %v423
  %2951 = vmatprep.subr.bf16.mxu0 0
  %2952 = vmatpush1.bf16.msra.mxu0 %v422
  %2953 = vmatprep.subr.bf16.mxu0 0
  %2954 = vmatpush1.bf16.msra.mxu0 %v421
  %2955 = vmatprep.subr.bf16.mxu0 0
  %2956 = vmatpush1.bf16.msra.mxu0 %v420
  %2957 = vmatprep.subr.bf16.mxu0 0
  %2958 = vmatpush1.bf16.msra.mxu0 %v419
  %2959 = vmatprep.subr.bf16.mxu0 0
  %2960 = vmatpush2.bf16.msra.mxu0 0
  %2961 = vmatprep.subr.bf16.mxu0 0
  %2962 = vmatpush2.bf16.msra.mxu0 0
  %2963 = vmatprep.subr.bf16.mxu0 0
  %2964 = vmatpush2.bf16.msra.mxu0 0
  %2965 = vmatprep.subr.bf16.mxu0 0
  %2966 = vmatpush2.bf16.msra.mxu0 0
  %2967 = vmatprep.subr.bf16.mxu0 0
  %2968 = vmatpush2.bf16.msra.mxu0 0
  %2969 = vmatprep.subr.bf16.mxu0 0
  %2970 = vmatpush2.bf16.msra.mxu0 0
  %2971 = vmatprep.subr.bf16.mxu0 0
  %2972 = vmatpush2.bf16.msra.mxu0 0
  %2973 = vmatprep.subr.bf16.mxu0 0
  %2974 = vmatpush2.bf16.msra.mxu0 0
  %2975 = vmatprep.mubr.bf16.mxu0 0
  %2976 = vmatmul.mubr.bf16.gmra.mxu0 %v93
  %v2977 = vpop.f32.mrf.mxu0
  %v2978 = vadd.f32 0.0, %v2977
  %v2979 = vpop.f32.mrf.mxu0
  %v2980 = vpop.f32.mrf.mxu0
  %v2981 = vpop.f32.mrf.mxu0
  %2982 = vdwg.mxu0
  %v2983 = vadd.f32 %v2942, %v2978
  %2984 = vmatprep.subr.bf16.mxu0 0
  %2985 = vmatpush1.bf16.msra.mxu0 %v532
  %2986 = vmatprep.subr.bf16.mxu0 0
  %2987 = vmatpush1.bf16.msra.mxu0 %v531
  %2988 = vmatprep.subr.bf16.mxu0 0
  %2989 = vmatpush1.bf16.msra.mxu0 %v530
  %2990 = vmatprep.subr.bf16.mxu0 0
  %2991 = vmatpush1.bf16.msra.mxu0 %v529
  %2992 = vmatprep.subr.bf16.mxu0 0
  %2993 = vmatpush1.bf16.msra.mxu0 %v528
  %2994 = vmatprep.subr.bf16.mxu0 0
  %2995 = vmatpush1.bf16.msra.mxu0 %v527
  %2996 = vmatprep.subr.bf16.mxu0 0
  %2997 = vmatpush1.bf16.msra.mxu0 %v526
  %2998 = vmatprep.subr.bf16.mxu0 0
  %2999 = vmatpush1.bf16.msra.mxu0 %v525
  %3000 = vmatprep.subr.bf16.mxu0 0
  %3001 = vmatpush2.bf16.msra.mxu0 0
  %3002 = vmatprep.subr.bf16.mxu0 0
  %3003 = vmatpush2.bf16.msra.mxu0 0
  %3004 = vmatprep.subr.bf16.mxu0 0
  %3005 = vmatpush2.bf16.msra.mxu0 0
  %3006 = vmatprep.subr.bf16.mxu0 0
  %3007 = vmatpush2.bf16.msra.mxu0 0
  %3008 = vmatprep.subr.bf16.mxu0 0
  %3009 = vmatpush2.bf16.msra.mxu0 0
  %3010 = vmatprep.subr.bf16.mxu0 0
  %3011 = vmatpush2.bf16.msra.mxu0 0
  %3012 = vmatprep.subr.bf16.mxu0 0
  %3013 = vmatpush2.bf16.msra.mxu0 0
  %3014 = vmatprep.subr.bf16.mxu0 0
  %3015 = vmatpush2.bf16.msra.mxu0 0
  %3016 = vmatprep.mubr.bf16.mxu0 0
  %3017 = vmatmul.mubr.bf16.gmra.mxu0 %v95
  %v3018 = vpop.f32.mrf.mxu0
  %v3019 = vadd.f32 0.0, %v3018
  %v3020 = vpop.f32.mrf.mxu0
  %v3021 = vpop.f32.mrf.mxu0
  %v3022 = vpop.f32.mrf.mxu0
  %3023 = vdwg.mxu0
  %v3024 = vadd.f32 %v2983, %v3019
  %v3025 = vadd.f32 %v3024, %v587
  %vm3026 = vcmp.ge.f32.partialorder %v3025, 0.0
  %v3027 = vmul.f32 %v3025, 0.01
  %v3028 = vsel %vm3026, %v3025, %v3027
  %v3029 = vpack.c.bf16 %v3028, %v3028
  %3030 = vmatprep.subr.bf16.mxu0 0
  %3031 = vmatpush1.bf16.msra.mxu0 %v1544
  %3032 = vmatprep.subr.bf16.mxu0 0
  %3033 = vmatpush1.bf16.msra.mxu0 %v1543
  %3034 = vmatprep.subr.bf16.mxu0 0
  %3035 = vmatpush1.bf16.msra.mxu0 %v1542
  %3036 = vmatprep.subr.bf16.mxu0 0
  %3037 = vmatpush1.bf16.msra.mxu0 %v1541
  %3038 = vmatprep.subr.bf16.mxu0 0
  %3039 = vmatpush1.bf16.msra.mxu0 %v1540
  %3040 = vmatprep.subr.bf16.mxu0 0
  %3041 = vmatpush1.bf16.msra.mxu0 %v1539
  %3042 = vmatprep.subr.bf16.mxu0 0
  %3043 = vmatpush1.bf16.msra.mxu0 %v1538
  %3044 = vmatprep.subr.bf16.mxu0 0
  %3045 = vmatpush1.bf16.msra.mxu0 %v1537
  %3046 = vmatprep.subr.bf16.mxu0 0
  %3047 = vmatpush2.bf16.msra.mxu0 0
  %3048 = vmatprep.subr.bf16.mxu0 0
  %3049 = vmatpush2.bf16.msra.mxu0 0
  %3050 = vmatprep.subr.bf16.mxu0 0
  %3051 = vmatpush2.bf16.msra.mxu0 0
  %3052 = vmatprep.subr.bf16.mxu0 0
  %3053 = vmatpush2.bf16.msra.mxu0 0
  %3054 = vmatprep.subr.bf16.mxu0 0
  %3055 = vmatpush2.bf16.msra.mxu0 0
  %3056 = vmatprep.subr.bf16.mxu0 0
  %3057 = vmatpush2.bf16.msra.mxu0 0
  %3058 = vmatprep.subr.bf16.mxu0 0
  %3059 = vmatpush2.bf16.msra.mxu0 0
  %3060 = vmatprep.subr.bf16.mxu0 0
  %3061 = vmatpush2.bf16.msra.mxu0 0
  %3062 = vmatprep.mubr.bf16.mxu0 0
  %3063 = vmatmul.mubr.bf16.gmra.mxu0 %v83
  %v3064 = vpop.f32.mrf.mxu0
  %v3065 = vadd.f32 0.0, %v3064
  %v3066 = vpop.f32.mrf.mxu0
  %v3067 = vpop.f32.mrf.mxu0
  %v3068 = vpop.f32.mrf.mxu0
  %3069 = vdwg.mxu0
  %3070 = vmatprep.subr.bf16.mxu0 0
  %3071 = vmatpush1.bf16.msra.mxu0 %v1632
  %3072 = vmatprep.subr.bf16.mxu0 0
  %3073 = vmatpush1.bf16.msra.mxu0 %v1631
  %3074 = vmatprep.subr.bf16.mxu0 0
  %3075 = vmatpush1.bf16.msra.mxu0 %v1630
  %3076 = vmatprep.subr.bf16.mxu0 0
  %3077 = vmatpush1.bf16.msra.mxu0 %v1629
  %3078 = vmatprep.subr.bf16.mxu0 0
  %3079 = vmatpush1.bf16.msra.mxu0 %v1628
  %3080 = vmatprep.subr.bf16.mxu0 0
  %3081 = vmatpush1.bf16.msra.mxu0 %v1627
  %3082 = vmatprep.subr.bf16.mxu0 0
  %3083 = vmatpush1.bf16.msra.mxu0 %v1626
  %3084 = vmatprep.subr.bf16.mxu0 0
  %3085 = vmatpush1.bf16.msra.mxu0 %v1625
  %3086 = vmatprep.subr.bf16.mxu0 0
  %3087 = vmatpush2.bf16.msra.mxu0 0
  %3088 = vmatprep.subr.bf16.mxu0 0
  %3089 = vmatpush2.bf16.msra.mxu0 0
  %3090 = vmatprep.subr.bf16.mxu0 0
  %3091 = vmatpush2.bf16.msra.mxu0 0
  %3092 = vmatprep.subr.bf16.mxu0 0
  %3093 = vmatpush2.bf16.msra.mxu0 0
  %3094 = vmatprep.subr.bf16.mxu0 0
  %3095 = vmatpush2.bf16.msra.mxu0 0
  %3096 = vmatprep.subr.bf16.mxu0 0
  %3097 = vmatpush2.bf16.msra.mxu0 0
  %3098 = vmatprep.subr.bf16.mxu0 0
  %3099 = vmatpush2.bf16.msra.mxu0 0
  %3100 = vmatprep.subr.bf16.mxu0 0
  %3101 = vmatpush2.bf16.msra.mxu0 0
  %3102 = vmatprep.mubr.bf16.mxu0 0
  %3103 = vmatmul.mubr.bf16.gmra.mxu0 %v81
  %v3104 = vpop.f32.mrf.mxu0
  %v3105 = vadd.f32 %v3065, %v3104
  %v3106 = vpop.f32.mrf.mxu0
  %v3107 = vpop.f32.mrf.mxu0
  %v3108 = vpop.f32.mrf.mxu0
  %3109 = vdwg.mxu0
  %3110 = vmatprep.subr.bf16.mxu0 0
  %3111 = vmatpush1.bf16.msra.mxu0 %v321
  %3112 = vmatprep.subr.bf16.mxu0 0
  %3113 = vmatpush1.bf16.msra.mxu0 %v320
  %3114 = vmatprep.subr.bf16.mxu0 0
  %3115 = vmatpush1.bf16.msra.mxu0 %v319
  %3116 = vmatprep.subr.bf16.mxu0 0
  %3117 = vmatpush1.bf16.msra.mxu0 %v318
  %3118 = vmatprep.subr.bf16.mxu0 0
  %3119 = vmatpush1.bf16.msra.mxu0 %v317
  %3120 = vmatprep.subr.bf16.mxu0 0
  %3121 = vmatpush1.bf16.msra.mxu0 %v316
  %3122 = vmatprep.subr.bf16.mxu0 0
  %3123 = vmatpush1.bf16.msra.mxu0 %v315
  %3124 = vmatprep.subr.bf16.mxu0 0
  %3125 = vmatpush1.bf16.msra.mxu0 %v314
  %3126 = vmatprep.subr.bf16.mxu0 0
  %3127 = vmatpush2.bf16.msra.mxu0 0
  %3128 = vmatprep.subr.bf16.mxu0 0
  %3129 = vmatpush2.bf16.msra.mxu0 0
  %3130 = vmatprep.subr.bf16.mxu0 0
  %3131 = vmatpush2.bf16.msra.mxu0 0
  %3132 = vmatprep.subr.bf16.mxu0 0
  %3133 = vmatpush2.bf16.msra.mxu0 0
  %3134 = vmatprep.subr.bf16.mxu0 0
  %3135 = vmatpush2.bf16.msra.mxu0 0
  %3136 = vmatprep.subr.bf16.mxu0 0
  %3137 = vmatpush2.bf16.msra.mxu0 0
  %3138 = vmatprep.subr.bf16.mxu0 0
  %3139 = vmatpush2.bf16.msra.mxu0 0
  %3140 = vmatprep.subr.bf16.mxu0 0
  %3141 = vmatpush2.bf16.msra.mxu0 0
  %3142 = vmatprep.mubr.bf16.mxu0 0
  %3143 = vmatmul.mubr.bf16.gmra.mxu0 %v97
  %v3144 = vpop.f32.mrf.mxu0
  %v3145 = vadd.f32 0.0, %v3144
  %v3146 = vpop.f32.mrf.mxu0
  %v3147 = vpop.f32.mrf.mxu0
  %v3148 = vpop.f32.mrf.mxu0
  %3149 = vdwg.mxu0
  %v3150 = vadd.f32 %v3105, %v3145
  %3151 = vmatprep.subr.bf16.mxu0 0
  %3152 = vmatpush1.bf16.msra.mxu0 %v233
  %3153 = vmatprep.subr.bf16.mxu0 0
  %3154 = vmatpush1.bf16.msra.mxu0 %v232
  %3155 = vmatprep.subr.bf16.mxu0 0
  %3156 = vmatpush1.bf16.msra.mxu0 %v231
  %3157 = vmatprep.subr.bf16.mxu0 0
  %3158 = vmatpush1.bf16.msra.mxu0 %v230
  %3159 = vmatprep.subr.bf16.mxu0 0
  %3160 = vmatpush1.bf16.msra.mxu0 %v229
  %3161 = vmatprep.subr.bf16.mxu0 0
  %3162 = vmatpush1.bf16.msra.mxu0 %v228
  %3163 = vmatprep.subr.bf16.mxu0 0
  %3164 = vmatpush1.bf16.msra.mxu0 %v227
  %3165 = vmatprep.subr.bf16.mxu0 0
  %3166 = vmatpush1.bf16.msra.mxu0 %v226
  %3167 = vmatprep.subr.bf16.mxu0 0
  %3168 = vmatpush2.bf16.msra.mxu0 0
  %3169 = vmatprep.subr.bf16.mxu0 0
  %3170 = vmatpush2.bf16.msra.mxu0 0
  %3171 = vmatprep.subr.bf16.mxu0 0
  %3172 = vmatpush2.bf16.msra.mxu0 0
  %3173 = vmatprep.subr.bf16.mxu0 0
  %3174 = vmatpush2.bf16.msra.mxu0 0
  %3175 = vmatprep.subr.bf16.mxu0 0
  %3176 = vmatpush2.bf16.msra.mxu0 0
  %3177 = vmatprep.subr.bf16.mxu0 0
  %3178 = vmatpush2.bf16.msra.mxu0 0
  %3179 = vmatprep.subr.bf16.mxu0 0
  %3180 = vmatpush2.bf16.msra.mxu0 0
  %3181 = vmatprep.subr.bf16.mxu0 0
  %3182 = vmatpush2.bf16.msra.mxu0 0
  %3183 = vmatprep.mubr.bf16.mxu0 0
  %3184 = vmatmul.mubr.bf16.gmra.mxu0 %v99
  %v3185 = vpop.f32.mrf.mxu0
  %v3186 = vadd.f32 0.0, %v3185
  %v3187 = vpop.f32.mrf.mxu0
  %v3188 = vpop.f32.mrf.mxu0
  %v3189 = vpop.f32.mrf.mxu0
  %3190 = vdwg.mxu0
  %v3191 = vadd.f32 %v3150, %v3186
  %3192 = vmatprep.subr.bf16.mxu0 0
  %3193 = vmatpush1.bf16.msra.mxu0 %v426
  %3194 = vmatprep.subr.bf16.mxu0 0
  %3195 = vmatpush1.bf16.msra.mxu0 %v425
  %3196 = vmatprep.subr.bf16.mxu0 0
  %3197 = vmatpush1.bf16.msra.mxu0 %v424
  %3198 = vmatprep.subr.bf16.mxu0 0
  %3199 = vmatpush1.bf16.msra.mxu0 %v423
  %3200 = vmatprep.subr.bf16.mxu0 0
  %3201 = vmatpush1.bf16.msra.mxu0 %v422
  %3202 = vmatprep.subr.bf16.mxu0 0
  %3203 = vmatpush1.bf16.msra.mxu0 %v421
  %3204 = vmatprep.subr.bf16.mxu0 0
  %3205 = vmatpush1.bf16.msra.mxu0 %v420
  %3206 = vmatprep.subr.bf16.mxu0 0
  %3207 = vmatpush1.bf16.msra.mxu0 %v419
  %3208 = vmatprep.subr.bf16.mxu0 0
  %3209 = vmatpush2.bf16.msra.mxu0 0
  %3210 = vmatprep.subr.bf16.mxu0 0
  %3211 = vmatpush2.bf16.msra.mxu0 0
  %3212 = vmatprep.subr.bf16.mxu0 0
  %3213 = vmatpush2.bf16.msra.mxu0 0
  %3214 = vmatprep.subr.bf16.mxu0 0
  %3215 = vmatpush2.bf16.msra.mxu0 0
  %3216 = vmatprep.subr.bf16.mxu0 0
  %3217 = vmatpush2.bf16.msra.mxu0 0
  %3218 = vmatprep.subr.bf16.mxu0 0
  %3219 = vmatpush2.bf16.msra.mxu0 0
  %3220 = vmatprep.subr.bf16.mxu0 0
  %3221 = vmatpush2.bf16.msra.mxu0 0
  %3222 = vmatprep.subr.bf16.mxu0 0
  %3223 = vmatpush2.bf16.msra.mxu0 0
  %3224 = vmatprep.mubr.bf16.mxu0 0
  %3225 = vmatmul.mubr.bf16.gmra.mxu0 %v113
  %v3226 = vpop.f32.mrf.mxu0
  %v3227 = vadd.f32 0.0, %v3226
  %v3228 = vpop.f32.mrf.mxu0
  %v3229 = vpop.f32.mrf.mxu0
  %v3230 = vpop.f32.mrf.mxu0
  %3231 = vdwg.mxu0
  %v3232 = vadd.f32 %v3191, %v3227
  %3233 = vmatprep.subr.bf16.mxu0 0
  %3234 = vmatpush1.bf16.msra.mxu0 %v532
  %3235 = vmatprep.subr.bf16.mxu0 0
  %3236 = vmatpush1.bf16.msra.mxu0 %v531
  %3237 = vmatprep.subr.bf16.mxu0 0
  %3238 = vmatpush1.bf16.msra.mxu0 %v530
  %3239 = vmatprep.subr.bf16.mxu0 0
  %3240 = vmatpush1.bf16.msra.mxu0 %v529
  %3241 = vmatprep.subr.bf16.mxu0 0
  %3242 = vmatpush1.bf16.msra.mxu0 %v528
  %3243 = vmatprep.subr.bf16.mxu0 0
  %3244 = vmatpush1.bf16.msra.mxu0 %v527
  %3245 = vmatprep.subr.bf16.mxu0 0
  %3246 = vmatpush1.bf16.msra.mxu0 %v526
  %3247 = vmatprep.subr.bf16.mxu0 0
  %3248 = vmatpush1.bf16.msra.mxu0 %v525
  %3249 = vmatprep.subr.bf16.mxu0 0
  %3250 = vmatpush2.bf16.msra.mxu0 0
  %3251 = vmatprep.subr.bf16.mxu0 0
  %3252 = vmatpush2.bf16.msra.mxu0 0
  %3253 = vmatprep.subr.bf16.mxu0 0
  %3254 = vmatpush2.bf16.msra.mxu0 0
  %3255 = vmatprep.subr.bf16.mxu0 0
  %3256 = vmatpush2.bf16.msra.mxu0 0
  %3257 = vmatprep.subr.bf16.mxu0 0
  %3258 = vmatpush2.bf16.msra.mxu0 0
  %3259 = vmatprep.subr.bf16.mxu0 0
  %3260 = vmatpush2.bf16.msra.mxu0 0
  %3261 = vmatprep.subr.bf16.mxu0 0
  %3262 = vmatpush2.bf16.msra.mxu0 0
  %3263 = vmatprep.subr.bf16.mxu0 0
  %3264 = vmatpush2.bf16.msra.mxu0 0
  %3265 = vmatprep.mubr.bf16.mxu0 0
  %3266 = vmatmul.mubr.bf16.gmra.mxu0 %v115
  %v3267 = vpop.f32.mrf.mxu0
  %v3268 = vadd.f32 0.0, %v3267
  %v3269 = vpop.f32.mrf.mxu0
  %v3270 = vpop.f32.mrf.mxu0
  %v3271 = vpop.f32.mrf.mxu0
  %3272 = vdwg.mxu0
  %v3273 = vadd.f32 %v3232, %v3268
  %v3274 = vadd.f32 %v3273, %v587
  %vm3275 = vcmp.ge.f32.partialorder %v3274, 0.0
  %v3276 = vmul.f32 %v3274, 0.01
  %v3277 = vsel %vm3275, %v3274, %v3276
  %v3278 = vpack.c.bf16 %v3277, %v3277
  %3279 = vmatprep.subr.bf16.mxu0 0
  %3280 = vmatpush1.bf16.msra.mxu0 %v1632
  %3281 = vmatprep.subr.bf16.mxu0 0
  %3282 = vmatpush1.bf16.msra.mxu0 %v1631
  %3283 = vmatprep.subr.bf16.mxu0 0
  %3284 = vmatpush1.bf16.msra.mxu0 %v1630
  %3285 = vmatprep.subr.bf16.mxu0 0
  %3286 = vmatpush1.bf16.msra.mxu0 %v1629
  %3287 = vmatprep.subr.bf16.mxu0 0
  %3288 = vmatpush1.bf16.msra.mxu0 %v1628
  %3289 = vmatprep.subr.bf16.mxu0 0
  %3290 = vmatpush1.bf16.msra.mxu0 %v1627
  %3291 = vmatprep.subr.bf16.mxu0 0
  %3292 = vmatpush1.bf16.msra.mxu0 %v1626
  %3293 = vmatprep.subr.bf16.mxu0 0
  %3294 = vmatpush1.bf16.msra.mxu0 %v1625
  %3295 = vmatprep.subr.bf16.mxu0 0
  %3296 = vmatpush2.bf16.msra.mxu0 0
  %3297 = vmatprep.subr.bf16.mxu0 0
  %3298 = vmatpush2.bf16.msra.mxu0 0
  %3299 = vmatprep.subr.bf16.mxu0 0
  %3300 = vmatpush2.bf16.msra.mxu0 0
  %3301 = vmatprep.subr.bf16.mxu0 0
  %3302 = vmatpush2.bf16.msra.mxu0 0
  %3303 = vmatprep.subr.bf16.mxu0 0
  %3304 = vmatpush2.bf16.msra.mxu0 0
  %3305 = vmatprep.subr.bf16.mxu0 0
  %3306 = vmatpush2.bf16.msra.mxu0 0
  %3307 = vmatprep.subr.bf16.mxu0 0
  %3308 = vmatpush2.bf16.msra.mxu0 0
  %3309 = vmatprep.subr.bf16.mxu0 0
  %3310 = vmatpush2.bf16.msra.mxu0 0
  %3311 = vmatprep.mubr.bf16.mxu0 0
  %3312 = vmatmul.mubr.bf16.gmra.mxu0 %v85
  %v3313 = vpop.f32.mrf.mxu0
  %v3314 = vadd.f32 0.0, %v3313
  %v3315 = vpop.f32.mrf.mxu0
  %v3316 = vpop.f32.mrf.mxu0
  %v3317 = vpop.f32.mrf.mxu0
  %3318 = vdwg.mxu0
  %3319 = vmatprep.subr.bf16.mxu0 0
  %3320 = vmatpush1.bf16.msra.mxu0 %v1945
  %3321 = vmatprep.subr.bf16.mxu0 0
  %3322 = vmatpush1.bf16.msra.mxu0 %v1944
  %3323 = vmatprep.subr.bf16.mxu0 0
  %3324 = vmatpush1.bf16.msra.mxu0 %v1943
  %3325 = vmatprep.subr.bf16.mxu0 0
  %3326 = vmatpush1.bf16.msra.mxu0 %v1942
  %3327 = vmatprep.subr.bf16.mxu0 0
  %3328 = vmatpush1.bf16.msra.mxu0 %v1941
  %3329 = vmatprep.subr.bf16.mxu0 0
  %3330 = vmatpush1.bf16.msra.mxu0 %v1940
  %3331 = vmatprep.subr.bf16.mxu0 0
  %3332 = vmatpush1.bf16.msra.mxu0 %v1939
  %3333 = vmatprep.subr.bf16.mxu0 0
  %3334 = vmatpush1.bf16.msra.mxu0 %v1938
  %3335 = vmatprep.subr.bf16.mxu0 0
  %3336 = vmatpush2.bf16.msra.mxu0 0
  %3337 = vmatprep.subr.bf16.mxu0 0
  %3338 = vmatpush2.bf16.msra.mxu0 0
  %3339 = vmatprep.subr.bf16.mxu0 0
  %3340 = vmatpush2.bf16.msra.mxu0 0
  %3341 = vmatprep.subr.bf16.mxu0 0
  %3342 = vmatpush2.bf16.msra.mxu0 0
  %3343 = vmatprep.subr.bf16.mxu0 0
  %3344 = vmatpush2.bf16.msra.mxu0 0
  %3345 = vmatprep.subr.bf16.mxu0 0
  %3346 = vmatpush2.bf16.msra.mxu0 0
  %3347 = vmatprep.subr.bf16.mxu0 0
  %3348 = vmatpush2.bf16.msra.mxu0 0
  %3349 = vmatprep.subr.bf16.mxu0 0
  %3350 = vmatpush2.bf16.msra.mxu0 0
  %3351 = vmatprep.mubr.bf16.mxu0 0
  %3352 = vmatmul.mubr.bf16.gmra.mxu0 %v83
  %v3353 = vpop.f32.mrf.mxu0
  %v3354 = vadd.f32 %v3314, %v3353
  %v3355 = vpop.f32.mrf.mxu0
  %v3356 = vpop.f32.mrf.mxu0
  %v3357 = vpop.f32.mrf.mxu0
  %3358 = vdwg.mxu0
  %3359 = vmatprep.subr.bf16.mxu0 0
  %3360 = vmatpush1.bf16.msra.mxu0 %v1544
  %3361 = vmatprep.subr.bf16.mxu0 0
  %3362 = vmatpush1.bf16.msra.mxu0 %v1543
  %3363 = vmatprep.subr.bf16.mxu0 0
  %3364 = vmatpush1.bf16.msra.mxu0 %v1542
  %3365 = vmatprep.subr.bf16.mxu0 0
  %3366 = vmatpush1.bf16.msra.mxu0 %v1541
  %3367 = vmatprep.subr.bf16.mxu0 0
  %3368 = vmatpush1.bf16.msra.mxu0 %v1540
  %3369 = vmatprep.subr.bf16.mxu0 0
  %3370 = vmatpush1.bf16.msra.mxu0 %v1539
  %3371 = vmatprep.subr.bf16.mxu0 0
  %3372 = vmatpush1.bf16.msra.mxu0 %v1538
  %3373 = vmatprep.subr.bf16.mxu0 0
  %3374 = vmatpush1.bf16.msra.mxu0 %v1537
  %3375 = vmatprep.subr.bf16.mxu0 0
  %3376 = vmatpush2.bf16.msra.mxu0 0
  %3377 = vmatprep.subr.bf16.mxu0 0
  %3378 = vmatpush2.bf16.msra.mxu0 0
  %3379 = vmatprep.subr.bf16.mxu0 0
  %3380 = vmatpush2.bf16.msra.mxu0 0
  %3381 = vmatprep.subr.bf16.mxu0 0
  %3382 = vmatpush2.bf16.msra.mxu0 0
  %3383 = vmatprep.subr.bf16.mxu0 0
  %3384 = vmatpush2.bf16.msra.mxu0 0
  %3385 = vmatprep.subr.bf16.mxu0 0
  %3386 = vmatpush2.bf16.msra.mxu0 0
  %3387 = vmatprep.subr.bf16.mxu0 0
  %3388 = vmatpush2.bf16.msra.mxu0 0
  %3389 = vmatprep.subr.bf16.mxu0 0
  %3390 = vmatpush2.bf16.msra.mxu0 0
  %3391 = vmatprep.mubr.bf16.mxu0 0
  %3392 = vmatmul.mubr.bf16.gmra.mxu0 %v87
  %v3393 = vpop.f32.mrf.mxu0
  %v3394 = vadd.f32 0.0, %v3393
  %v3395 = vpop.f32.mrf.mxu0
  %v3396 = vpop.f32.mrf.mxu0
  %v3397 = vpop.f32.mrf.mxu0
  %3398 = vdwg.mxu0
  %v3399 = vadd.f32 %v3354, %v3394
  %3400 = vmatprep.subr.bf16.mxu0 0
  %3401 = vmatpush1.bf16.msra.mxu0 %v690
  %3402 = vmatprep.subr.bf16.mxu0 0
  %3403 = vmatpush1.bf16.msra.mxu0 %v689
  %3404 = vmatprep.subr.bf16.mxu0 0
  %3405 = vmatpush1.bf16.msra.mxu0 %v688
  %3406 = vmatprep.subr.bf16.mxu0 0
  %3407 = vmatpush1.bf16.msra.mxu0 %v687
  %3408 = vmatprep.subr.bf16.mxu0 0
  %3409 = vmatpush1.bf16.msra.mxu0 %v686
  %3410 = vmatprep.subr.bf16.mxu0 0
  %3411 = vmatpush1.bf16.msra.mxu0 %v685
  %3412 = vmatprep.subr.bf16.mxu0 0
  %3413 = vmatpush1.bf16.msra.mxu0 %v684
  %3414 = vmatprep.subr.bf16.mxu0 0
  %3415 = vmatpush1.bf16.msra.mxu0 %v683
  %3416 = vmatprep.subr.bf16.mxu0 0
  %3417 = vmatpush2.bf16.msra.mxu0 0
  %3418 = vmatprep.subr.bf16.mxu0 0
  %3419 = vmatpush2.bf16.msra.mxu0 0
  %3420 = vmatprep.subr.bf16.mxu0 0
  %3421 = vmatpush2.bf16.msra.mxu0 0
  %3422 = vmatprep.subr.bf16.mxu0 0
  %3423 = vmatpush2.bf16.msra.mxu0 0
  %3424 = vmatprep.subr.bf16.mxu0 0
  %3425 = vmatpush2.bf16.msra.mxu0 0
  %3426 = vmatprep.subr.bf16.mxu0 0
  %3427 = vmatpush2.bf16.msra.mxu0 0
  %3428 = vmatprep.subr.bf16.mxu0 0
  %3429 = vmatpush2.bf16.msra.mxu0 0
  %3430 = vmatprep.subr.bf16.mxu0 0
  %3431 = vmatpush2.bf16.msra.mxu0 0
  %3432 = vmatprep.mubr.bf16.mxu0 0
  %3433 = vmatmul.mubr.bf16.gmra.mxu0 %v99
  %v3434 = vpop.f32.mrf.mxu0
  %v3435 = vadd.f32 0.0, %v3434
  %v3436 = vpop.f32.mrf.mxu0
  %v3437 = vpop.f32.mrf.mxu0
  %v3438 = vpop.f32.mrf.mxu0
  %3439 = vdwg.mxu0
  %v3440 = vadd.f32 %v3399, %v3435
  %3441 = vmatprep.subr.bf16.mxu0 0
  %3442 = vmatpush1.bf16.msra.mxu0 %v321
  %3443 = vmatprep.subr.bf16.mxu0 0
  %3444 = vmatpush1.bf16.msra.mxu0 %v320
  %3445 = vmatprep.subr.bf16.mxu0 0
  %3446 = vmatpush1.bf16.msra.mxu0 %v319
  %3447 = vmatprep.subr.bf16.mxu0 0
  %3448 = vmatpush1.bf16.msra.mxu0 %v318
  %3449 = vmatprep.subr.bf16.mxu0 0
  %3450 = vmatpush1.bf16.msra.mxu0 %v317
  %3451 = vmatprep.subr.bf16.mxu0 0
  %3452 = vmatpush1.bf16.msra.mxu0 %v316
  %3453 = vmatprep.subr.bf16.mxu0 0
  %3454 = vmatpush1.bf16.msra.mxu0 %v315
  %3455 = vmatprep.subr.bf16.mxu0 0
  %3456 = vmatpush1.bf16.msra.mxu0 %v314
  %3457 = vmatprep.subr.bf16.mxu0 0
  %3458 = vmatpush2.bf16.msra.mxu0 0
  %3459 = vmatprep.subr.bf16.mxu0 0
  %3460 = vmatpush2.bf16.msra.mxu0 0
  %3461 = vmatprep.subr.bf16.mxu0 0
  %3462 = vmatpush2.bf16.msra.mxu0 0
  %3463 = vmatprep.subr.bf16.mxu0 0
  %3464 = vmatpush2.bf16.msra.mxu0 0
  %3465 = vmatprep.subr.bf16.mxu0 0
  %3466 = vmatpush2.bf16.msra.mxu0 0
  %3467 = vmatprep.subr.bf16.mxu0 0
  %3468 = vmatpush2.bf16.msra.mxu0 0
  %3469 = vmatprep.subr.bf16.mxu0 0
  %3470 = vmatpush2.bf16.msra.mxu0 0
  %3471 = vmatprep.subr.bf16.mxu0 0
  %3472 = vmatpush2.bf16.msra.mxu0 0
  %3473 = vmatprep.mubr.bf16.mxu0 0
  %3474 = vmatmul.mubr.bf16.gmra.mxu0 %v101
  %v3475 = vpop.f32.mrf.mxu0
  %v3476 = vadd.f32 0.0, %v3475
  %v3477 = vpop.f32.mrf.mxu0
  %v3478 = vpop.f32.mrf.mxu0
  %v3479 = vpop.f32.mrf.mxu0
  %3480 = vdwg.mxu0
  %v3481 = vadd.f32 %v3440, %v3476
  %3482 = vmatprep.subr.bf16.mxu0 0
  %3483 = vmatpush1.bf16.msra.mxu0 %v233
  %3484 = vmatprep.subr.bf16.mxu0 0
  %3485 = vmatpush1.bf16.msra.mxu0 %v232
  %3486 = vmatprep.subr.bf16.mxu0 0
  %3487 = vmatpush1.bf16.msra.mxu0 %v231
  %3488 = vmatprep.subr.bf16.mxu0 0
  %3489 = vmatpush1.bf16.msra.mxu0 %v230
  %3490 = vmatprep.subr.bf16.mxu0 0
  %3491 = vmatpush1.bf16.msra.mxu0 %v229
  %3492 = vmatprep.subr.bf16.mxu0 0
  %3493 = vmatpush1.bf16.msra.mxu0 %v228
  %3494 = vmatprep.subr.bf16.mxu0 0
  %3495 = vmatpush1.bf16.msra.mxu0 %v227
  %3496 = vmatprep.subr.bf16.mxu0 0
  %3497 = vmatpush1.bf16.msra.mxu0 %v226
  %3498 = vmatprep.subr.bf16.mxu0 0
  %3499 = vmatpush2.bf16.msra.mxu0 0
  %3500 = vmatprep.subr.bf16.mxu0 0
  %3501 = vmatpush2.bf16.msra.mxu0 0
  %3502 = vmatprep.subr.bf16.mxu0 0
  %3503 = vmatpush2.bf16.msra.mxu0 0
  %3504 = vmatprep.subr.bf16.mxu0 0
  %3505 = vmatpush2.bf16.msra.mxu0 0
  %3506 = vmatprep.subr.bf16.mxu0 0
  %3507 = vmatpush2.bf16.msra.mxu0 0
  %3508 = vmatprep.subr.bf16.mxu0 0
  %3509 = vmatpush2.bf16.msra.mxu0 0
  %3510 = vmatprep.subr.bf16.mxu0 0
  %3511 = vmatpush2.bf16.msra.mxu0 0
  %3512 = vmatprep.subr.bf16.mxu0 0
  %3513 = vmatpush2.bf16.msra.mxu0 0
  %3514 = vmatprep.mubr.bf16.mxu0 0
  %3515 = vmatmul.mubr.bf16.gmra.mxu0 %v103
  %v3516 = vpop.f32.mrf.mxu0
  %v3517 = vadd.f32 0.0, %v3516
  %v3518 = vpop.f32.mrf.mxu0
  %v3519 = vpop.f32.mrf.mxu0
  %v3520 = vpop.f32.mrf.mxu0
  %3521 = vdwg.mxu0
  %v3522 = vadd.f32 %v3481, %v3517
  %3523 = vmatprep.subr.bf16.mxu0 0
  %3524 = vmatpush1.bf16.msra.mxu0 %v836
  %3525 = vmatprep.subr.bf16.mxu0 0
  %3526 = vmatpush1.bf16.msra.mxu0 %v835
  %3527 = vmatprep.subr.bf16.mxu0 0
  %3528 = vmatpush1.bf16.msra.mxu0 %v834
  %3529 = vmatprep.subr.bf16.mxu0 0
  %3530 = vmatpush1.bf16.msra.mxu0 %v833
  %3531 = vmatprep.subr.bf16.mxu0 0
  %3532 = vmatpush1.bf16.msra.mxu0 %v832
  %3533 = vmatprep.subr.bf16.mxu0 0
  %3534 = vmatpush1.bf16.msra.mxu0 %v831
  %3535 = vmatprep.subr.bf16.mxu0 0
  %3536 = vmatpush1.bf16.msra.mxu0 %v830
  %3537 = vmatprep.subr.bf16.mxu0 0
  %3538 = vmatpush1.bf16.msra.mxu0 %v829
  %3539 = vmatprep.subr.bf16.mxu0 0
  %3540 = vmatpush2.bf16.msra.mxu0 0
  %3541 = vmatprep.subr.bf16.mxu0 0
  %3542 = vmatpush2.bf16.msra.mxu0 0
  %3543 = vmatprep.subr.bf16.mxu0 0
  %3544 = vmatpush2.bf16.msra.mxu0 0
  %3545 = vmatprep.subr.bf16.mxu0 0
  %3546 = vmatpush2.bf16.msra.mxu0 0
  %3547 = vmatprep.subr.bf16.mxu0 0
  %3548 = vmatpush2.bf16.msra.mxu0 0
  %3549 = vmatprep.subr.bf16.mxu0 0
  %3550 = vmatpush2.bf16.msra.mxu0 0
  %3551 = vmatprep.subr.bf16.mxu0 0
  %3552 = vmatpush2.bf16.msra.mxu0 0
  %3553 = vmatprep.subr.bf16.mxu0 0
  %3554 = vmatpush2.bf16.msra.mxu0 0
  %3555 = vmatprep.mubr.bf16.mxu0 0
  %3556 = vmatmul.mubr.bf16.gmra.mxu0 %v115
  %v3557 = vpop.f32.mrf.mxu0
  %v3558 = vadd.f32 0.0, %v3557
  %v3559 = vpop.f32.mrf.mxu0
  %v3560 = vpop.f32.mrf.mxu0
  %v3561 = vpop.f32.mrf.mxu0
  %3562 = vdwg.mxu0
  %v3563 = vadd.f32 %v3522, %v3558
  %3564 = vmatprep.subr.bf16.mxu0 0
  %3565 = vmatpush1.bf16.msra.mxu0 %v426
  %3566 = vmatprep.subr.bf16.mxu0 0
  %3567 = vmatpush1.bf16.msra.mxu0 %v425
  %3568 = vmatprep.subr.bf16.mxu0 0
  %3569 = vmatpush1.bf16.msra.mxu0 %v424
  %3570 = vmatprep.subr.bf16.mxu0 0
  %3571 = vmatpush1.bf16.msra.mxu0 %v423
  %3572 = vmatprep.subr.bf16.mxu0 0
  %3573 = vmatpush1.bf16.msra.mxu0 %v422
  %3574 = vmatprep.subr.bf16.mxu0 0
  %3575 = vmatpush1.bf16.msra.mxu0 %v421
  %3576 = vmatprep.subr.bf16.mxu0 0
  %3577 = vmatpush1.bf16.msra.mxu0 %v420
  %3578 = vmatprep.subr.bf16.mxu0 0
  %3579 = vmatpush1.bf16.msra.mxu0 %v419
  %3580 = vmatprep.subr.bf16.mxu0 0
  %3581 = vmatpush2.bf16.msra.mxu0 0
  %3582 = vmatprep.subr.bf16.mxu0 0
  %3583 = vmatpush2.bf16.msra.mxu0 0
  %3584 = vmatprep.subr.bf16.mxu0 0
  %3585 = vmatpush2.bf16.msra.mxu0 0
  %3586 = vmatprep.subr.bf16.mxu0 0
  %3587 = vmatpush2.bf16.msra.mxu0 0
  %3588 = vmatprep.subr.bf16.mxu0 0
  %3589 = vmatpush2.bf16.msra.mxu0 0
  %3590 = vmatprep.subr.bf16.mxu0 0
  %3591 = vmatpush2.bf16.msra.mxu0 0
  %3592 = vmatprep.subr.bf16.mxu0 0
  %3593 = vmatpush2.bf16.msra.mxu0 0
  %3594 = vmatprep.subr.bf16.mxu0 0
  %3595 = vmatpush2.bf16.msra.mxu0 0
  %3596 = vmatprep.mubr.bf16.mxu0 0
  %3597 = vmatmul.mubr.bf16.gmra.mxu0 %v117
  %v3598 = vpop.f32.mrf.mxu0
  %v3599 = vadd.f32 0.0, %v3598
  %v3600 = vpop.f32.mrf.mxu0
  %v3601 = vpop.f32.mrf.mxu0
  %v3602 = vpop.f32.mrf.mxu0
  %3603 = vdwg.mxu0
  %v3604 = vadd.f32 %v3563, %v3599
  %3605 = vmatprep.subr.bf16.mxu0 0
  %3606 = vmatpush1.bf16.msra.mxu0 %v532
  %3607 = vmatprep.subr.bf16.mxu0 0
  %3608 = vmatpush1.bf16.msra.mxu0 %v531
  %3609 = vmatprep.subr.bf16.mxu0 0
  %3610 = vmatpush1.bf16.msra.mxu0 %v530
  %3611 = vmatprep.subr.bf16.mxu0 0
  %3612 = vmatpush1.bf16.msra.mxu0 %v529
  %3613 = vmatprep.subr.bf16.mxu0 0
  %3614 = vmatpush1.bf16.msra.mxu0 %v528
  %3615 = vmatprep.subr.bf16.mxu0 0
  %3616 = vmatpush1.bf16.msra.mxu0 %v527
  %3617 = vmatprep.subr.bf16.mxu0 0
  %3618 = vmatpush1.bf16.msra.mxu0 %v526
  %3619 = vmatprep.subr.bf16.mxu0 0
  %3620 = vmatpush1.bf16.msra.mxu0 %v525
  %3621 = vmatprep.subr.bf16.mxu0 0
  %3622 = vmatpush2.bf16.msra.mxu0 0
  %3623 = vmatprep.subr.bf16.mxu0 0
  %3624 = vmatpush2.bf16.msra.mxu0 0
  %3625 = vmatprep.subr.bf16.mxu0 0
  %3626 = vmatpush2.bf16.msra.mxu0 0
  %3627 = vmatprep.subr.bf16.mxu0 0
  %3628 = vmatpush2.bf16.msra.mxu0 0
  %3629 = vmatprep.subr.bf16.mxu0 0
  %3630 = vmatpush2.bf16.msra.mxu0 0
  %3631 = vmatprep.subr.bf16.mxu0 0
  %3632 = vmatpush2.bf16.msra.mxu0 0
  %3633 = vmatprep.subr.bf16.mxu0 0
  %3634 = vmatpush2.bf16.msra.mxu0 0
  %3635 = vmatprep.subr.bf16.mxu0 0
  %3636 = vmatpush2.bf16.msra.mxu0 0
  %3637 = vmatprep.mubr.bf16.mxu0 0
  %3638 = vmatmul.mubr.bf16.gmra.mxu0 %v119
  %v3639 = vpop.f32.mrf.mxu0
  %v3640 = vadd.f32 0.0, %v3639
  %v3641 = vpop.f32.mrf.mxu0
  %v3642 = vpop.f32.mrf.mxu0
  %v3643 = vpop.f32.mrf.mxu0
  %3644 = vdwg.mxu0
  %v3645 = vadd.f32 %v3604, %v3640
  %v3646 = vadd.f32 %v3645, %v587
  %vm3647 = vcmp.ge.f32.partialorder %v3646, 0.0
  %v3648 = vmul.f32 %v3646, 0.01
  %v3649 = vsel %vm3647, %v3646, %v3648
  %v3650 = vpack.c.bf16 %v3649, %v3649
  %3651 = vmatprep.subr.bf16.mxu0 0
  %3652 = vmatpush1.bf16.msra.mxu0 %v1632
  %3653 = vmatprep.subr.bf16.mxu0 0
  %3654 = vmatpush1.bf16.msra.mxu0 %v1631
  %3655 = vmatprep.subr.bf16.mxu0 0
  %3656 = vmatpush1.bf16.msra.mxu0 %v1630
  %3657 = vmatprep.subr.bf16.mxu0 0
  %3658 = vmatpush1.bf16.msra.mxu0 %v1629
  %3659 = vmatprep.subr.bf16.mxu0 0
  %3660 = vmatpush1.bf16.msra.mxu0 %v1628
  %3661 = vmatprep.subr.bf16.mxu0 0
  %3662 = vmatpush1.bf16.msra.mxu0 %v1627
  %3663 = vmatprep.subr.bf16.mxu0 0
  %3664 = vmatpush1.bf16.msra.mxu0 %v1626
  %3665 = vmatprep.subr.bf16.mxu0 0
  %3666 = vmatpush1.bf16.msra.mxu0 %v1625
  %3667 = vmatprep.subr.bf16.mxu0 0
  %3668 = vmatpush2.bf16.msra.mxu0 0
  %3669 = vmatprep.subr.bf16.mxu0 0
  %3670 = vmatpush2.bf16.msra.mxu0 0
  %3671 = vmatprep.subr.bf16.mxu0 0
  %3672 = vmatpush2.bf16.msra.mxu0 0
  %3673 = vmatprep.subr.bf16.mxu0 0
  %3674 = vmatpush2.bf16.msra.mxu0 0
  %3675 = vmatprep.subr.bf16.mxu0 0
  %3676 = vmatpush2.bf16.msra.mxu0 0
  %3677 = vmatprep.subr.bf16.mxu0 0
  %3678 = vmatpush2.bf16.msra.mxu0 0
  %3679 = vmatprep.subr.bf16.mxu0 0
  %3680 = vmatpush2.bf16.msra.mxu0 0
  %3681 = vmatprep.subr.bf16.mxu0 0
  %3682 = vmatpush2.bf16.msra.mxu0 0
  %3683 = vmatprep.mubr.bf16.mxu0 0
  %3684 = vmatmul.mubr.bf16.gmra.mxu0 %v89
  %v3685 = vpop.f32.mrf.mxu0
  %v3686 = vadd.f32 0.0, %v3685
  %v3687 = vpop.f32.mrf.mxu0
  %v3688 = vpop.f32.mrf.mxu0
  %v3689 = vpop.f32.mrf.mxu0
  %3690 = vdwg.mxu0
  %3691 = vmatprep.subr.bf16.mxu0 0
  %3692 = vmatpush1.bf16.msra.mxu0 %v1945
  %3693 = vmatprep.subr.bf16.mxu0 0
  %3694 = vmatpush1.bf16.msra.mxu0 %v1944
  %3695 = vmatprep.subr.bf16.mxu0 0
  %3696 = vmatpush1.bf16.msra.mxu0 %v1943
  %3697 = vmatprep.subr.bf16.mxu0 0
  %3698 = vmatpush1.bf16.msra.mxu0 %v1942
  %3699 = vmatprep.subr.bf16.mxu0 0
  %3700 = vmatpush1.bf16.msra.mxu0 %v1941
  %3701 = vmatprep.subr.bf16.mxu0 0
  %3702 = vmatpush1.bf16.msra.mxu0 %v1940
  %3703 = vmatprep.subr.bf16.mxu0 0
  %3704 = vmatpush1.bf16.msra.mxu0 %v1939
  %3705 = vmatprep.subr.bf16.mxu0 0
  %3706 = vmatpush1.bf16.msra.mxu0 %v1938
  %3707 = vmatprep.subr.bf16.mxu0 0
  %3708 = vmatpush2.bf16.msra.mxu0 0
  %3709 = vmatprep.subr.bf16.mxu0 0
  %3710 = vmatpush2.bf16.msra.mxu0 0
  %3711 = vmatprep.subr.bf16.mxu0 0
  %3712 = vmatpush2.bf16.msra.mxu0 0
  %3713 = vmatprep.subr.bf16.mxu0 0
  %3714 = vmatpush2.bf16.msra.mxu0 0
  %3715 = vmatprep.subr.bf16.mxu0 0
  %3716 = vmatpush2.bf16.msra.mxu0 0
  %3717 = vmatprep.subr.bf16.mxu0 0
  %3718 = vmatpush2.bf16.msra.mxu0 0
  %3719 = vmatprep.subr.bf16.mxu0 0
  %3720 = vmatpush2.bf16.msra.mxu0 0
  %3721 = vmatprep.subr.bf16.mxu0 0
  %3722 = vmatpush2.bf16.msra.mxu0 0
  %3723 = vmatprep.mubr.bf16.mxu0 0
  %3724 = vmatmul.mubr.bf16.gmra.mxu0 %v87
  %v3725 = vpop.f32.mrf.mxu0
  %v3726 = vadd.f32 %v3686, %v3725
  %v3727 = vpop.f32.mrf.mxu0
  %v3728 = vpop.f32.mrf.mxu0
  %v3729 = vpop.f32.mrf.mxu0
  %3730 = vdwg.mxu0
  %3731 = vmatprep.subr.bf16.mxu0 0
  %3732 = vmatpush1.bf16.msra.mxu0 %v1544
  %3733 = vmatprep.subr.bf16.mxu0 0
  %3734 = vmatpush1.bf16.msra.mxu0 %v1543
  %3735 = vmatprep.subr.bf16.mxu0 0
  %3736 = vmatpush1.bf16.msra.mxu0 %v1542
  %3737 = vmatprep.subr.bf16.mxu0 0
  %3738 = vmatpush1.bf16.msra.mxu0 %v1541
  %3739 = vmatprep.subr.bf16.mxu0 0
  %3740 = vmatpush1.bf16.msra.mxu0 %v1540
  %3741 = vmatprep.subr.bf16.mxu0 0
  %3742 = vmatpush1.bf16.msra.mxu0 %v1539
  %3743 = vmatprep.subr.bf16.mxu0 0
  %3744 = vmatpush1.bf16.msra.mxu0 %v1538
  %3745 = vmatprep.subr.bf16.mxu0 0
  %3746 = vmatpush1.bf16.msra.mxu0 %v1537
  %3747 = vmatprep.subr.bf16.mxu0 0
  %3748 = vmatpush2.bf16.msra.mxu0 0
  %3749 = vmatprep.subr.bf16.mxu0 0
  %3750 = vmatpush2.bf16.msra.mxu0 0
  %3751 = vmatprep.subr.bf16.mxu0 0
  %3752 = vmatpush2.bf16.msra.mxu0 0
  %3753 = vmatprep.subr.bf16.mxu0 0
  %3754 = vmatpush2.bf16.msra.mxu0 0
  %3755 = vmatprep.subr.bf16.mxu0 0
  %3756 = vmatpush2.bf16.msra.mxu0 0
  %3757 = vmatprep.subr.bf16.mxu0 0
  %3758 = vmatpush2.bf16.msra.mxu0 0
  %3759 = vmatprep.subr.bf16.mxu0 0
  %3760 = vmatpush2.bf16.msra.mxu0 0
  %3761 = vmatprep.subr.bf16.mxu0 0
  %3762 = vmatpush2.bf16.msra.mxu0 0
  %3763 = vmatprep.mubr.bf16.mxu0 0
  %3764 = vmatmul.mubr.bf16.gmra.mxu0 %v91
  %v3765 = vpop.f32.mrf.mxu0
  %v3766 = vadd.f32 0.0, %v3765
  %v3767 = vpop.f32.mrf.mxu0
  %v3768 = vpop.f32.mrf.mxu0
  %v3769 = vpop.f32.mrf.mxu0
  %3770 = vdwg.mxu0
  %v3771 = vadd.f32 %v3726, %v3766
  %3772 = vmatprep.subr.bf16.mxu0 0
  %3773 = vmatpush1.bf16.msra.mxu0 %v690
  %3774 = vmatprep.subr.bf16.mxu0 0
  %3775 = vmatpush1.bf16.msra.mxu0 %v689
  %3776 = vmatprep.subr.bf16.mxu0 0
  %3777 = vmatpush1.bf16.msra.mxu0 %v688
  %3778 = vmatprep.subr.bf16.mxu0 0
  %3779 = vmatpush1.bf16.msra.mxu0 %v687
  %3780 = vmatprep.subr.bf16.mxu0 0
  %3781 = vmatpush1.bf16.msra.mxu0 %v686
  %3782 = vmatprep.subr.bf16.mxu0 0
  %3783 = vmatpush1.bf16.msra.mxu0 %v685
  %3784 = vmatprep.subr.bf16.mxu0 0
  %3785 = vmatpush1.bf16.msra.mxu0 %v684
  %3786 = vmatprep.subr.bf16.mxu0 0
  %3787 = vmatpush1.bf16.msra.mxu0 %v683
  %3788 = vmatprep.subr.bf16.mxu0 0
  %3789 = vmatpush2.bf16.msra.mxu0 0
  %3790 = vmatprep.subr.bf16.mxu0 0
  %3791 = vmatpush2.bf16.msra.mxu0 0
  %3792 = vmatprep.subr.bf16.mxu0 0
  %3793 = vmatpush2.bf16.msra.mxu0 0
  %3794 = vmatprep.subr.bf16.mxu0 0
  %3795 = vmatpush2.bf16.msra.mxu0 0
  %3796 = vmatprep.subr.bf16.mxu0 0
  %3797 = vmatpush2.bf16.msra.mxu0 0
  %3798 = vmatprep.subr.bf16.mxu0 0
  %3799 = vmatpush2.bf16.msra.mxu0 0
  %3800 = vmatprep.subr.bf16.mxu0 0
  %3801 = vmatpush2.bf16.msra.mxu0 0
  %3802 = vmatprep.subr.bf16.mxu0 0
  %3803 = vmatpush2.bf16.msra.mxu0 0
  %3804 = vmatprep.mubr.bf16.mxu0 0
  %3805 = vmatmul.mubr.bf16.gmra.mxu0 %v103
  %v3806 = vpop.f32.mrf.mxu0
  %v3807 = vadd.f32 0.0, %v3806
  %v3808 = vpop.f32.mrf.mxu0
  %v3809 = vpop.f32.mrf.mxu0
  %v3810 = vpop.f32.mrf.mxu0
  %3811 = vdwg.mxu0
  %v3812 = vadd.f32 %v3771, %v3807
  %3813 = vmatprep.subr.bf16.mxu0 0
  %3814 = vmatpush1.bf16.msra.mxu0 %v321
  %3815 = vmatprep.subr.bf16.mxu0 0
  %3816 = vmatpush1.bf16.msra.mxu0 %v320
  %3817 = vmatprep.subr.bf16.mxu0 0
  %3818 = vmatpush1.bf16.msra.mxu0 %v319
  %3819 = vmatprep.subr.bf16.mxu0 0
  %3820 = vmatpush1.bf16.msra.mxu0 %v318
  %3821 = vmatprep.subr.bf16.mxu0 0
  %3822 = vmatpush1.bf16.msra.mxu0 %v317
  %3823 = vmatprep.subr.bf16.mxu0 0
  %3824 = vmatpush1.bf16.msra.mxu0 %v316
  %3825 = vmatprep.subr.bf16.mxu0 0
  %3826 = vmatpush1.bf16.msra.mxu0 %v315
  %3827 = vmatprep.subr.bf16.mxu0 0
  %3828 = vmatpush1.bf16.msra.mxu0 %v314
  %3829 = vmatprep.subr.bf16.mxu0 0
  %3830 = vmatpush2.bf16.msra.mxu0 0
  %3831 = vmatprep.subr.bf16.mxu0 0
  %3832 = vmatpush2.bf16.msra.mxu0 0
  %3833 = vmatprep.subr.bf16.mxu0 0
  %3834 = vmatpush2.bf16.msra.mxu0 0
  %3835 = vmatprep.subr.bf16.mxu0 0
  %3836 = vmatpush2.bf16.msra.mxu0 0
  %3837 = vmatprep.subr.bf16.mxu0 0
  %3838 = vmatpush2.bf16.msra.mxu0 0
  %3839 = vmatprep.subr.bf16.mxu0 0
  %3840 = vmatpush2.bf16.msra.mxu0 0
  %3841 = vmatprep.subr.bf16.mxu0 0
  %3842 = vmatpush2.bf16.msra.mxu0 0
  %3843 = vmatprep.subr.bf16.mxu0 0
  %3844 = vmatpush2.bf16.msra.mxu0 0
  %3845 = vmatprep.mubr.bf16.mxu0 0
  %3846 = vmatmul.mubr.bf16.gmra.mxu0 %v105
  %v3847 = vpop.f32.mrf.mxu0
  %v3848 = vadd.f32 0.0, %v3847
  %v3849 = vpop.f32.mrf.mxu0
  %v3850 = vpop.f32.mrf.mxu0
  %v3851 = vpop.f32.mrf.mxu0
  %3852 = vdwg.mxu0
  %v3853 = vadd.f32 %v3812, %v3848
  %3854 = vmatprep.subr.bf16.mxu0 0
  %3855 = vmatpush1.bf16.msra.mxu0 %v233
  %3856 = vmatprep.subr.bf16.mxu0 0
  %3857 = vmatpush1.bf16.msra.mxu0 %v232
  %3858 = vmatprep.subr.bf16.mxu0 0
  %3859 = vmatpush1.bf16.msra.mxu0 %v231
  %3860 = vmatprep.subr.bf16.mxu0 0
  %3861 = vmatpush1.bf16.msra.mxu0 %v230
  %3862 = vmatprep.subr.bf16.mxu0 0
  %3863 = vmatpush1.bf16.msra.mxu0 %v229
  %3864 = vmatprep.subr.bf16.mxu0 0
  %3865 = vmatpush1.bf16.msra.mxu0 %v228
  %3866 = vmatprep.subr.bf16.mxu0 0
  %3867 = vmatpush1.bf16.msra.mxu0 %v227
  %3868 = vmatprep.subr.bf16.mxu0 0
  %3869 = vmatpush1.bf16.msra.mxu0 %v226
  %3870 = vmatprep.subr.bf16.mxu0 0
  %3871 = vmatpush2.bf16.msra.mxu0 0
  %3872 = vmatprep.subr.bf16.mxu0 0
  %3873 = vmatpush2.bf16.msra.mxu0 0
  %3874 = vmatprep.subr.bf16.mxu0 0
  %3875 = vmatpush2.bf16.msra.mxu0 0
  %3876 = vmatprep.subr.bf16.mxu0 0
  %3877 = vmatpush2.bf16.msra.mxu0 0
  %3878 = vmatprep.subr.bf16.mxu0 0
  %3879 = vmatpush2.bf16.msra.mxu0 0
  %3880 = vmatprep.subr.bf16.mxu0 0
  %3881 = vmatpush2.bf16.msra.mxu0 0
  %3882 = vmatprep.subr.bf16.mxu0 0
  %3883 = vmatpush2.bf16.msra.mxu0 0
  %3884 = vmatprep.subr.bf16.mxu0 0
  %3885 = vmatpush2.bf16.msra.mxu0 0
  %3886 = vmatprep.mubr.bf16.mxu0 0
  %3887 = vmatmul.mubr.bf16.gmra.mxu0 %v107
  %v3888 = vpop.f32.mrf.mxu0
  %v3889 = vadd.f32 0.0, %v3888
  %v3890 = vpop.f32.mrf.mxu0
  %v3891 = vpop.f32.mrf.mxu0
  %v3892 = vpop.f32.mrf.mxu0
  %3893 = vdwg.mxu0
  %v3894 = vadd.f32 %v3853, %v3889
  %3895 = vmatprep.subr.bf16.mxu0 0
  %3896 = vmatpush1.bf16.msra.mxu0 %v836
  %3897 = vmatprep.subr.bf16.mxu0 0
  %3898 = vmatpush1.bf16.msra.mxu0 %v835
  %3899 = vmatprep.subr.bf16.mxu0 0
  %3900 = vmatpush1.bf16.msra.mxu0 %v834
  %3901 = vmatprep.subr.bf16.mxu0 0
  %3902 = vmatpush1.bf16.msra.mxu0 %v833
  %3903 = vmatprep.subr.bf16.mxu0 0
  %3904 = vmatpush1.bf16.msra.mxu0 %v832
  %3905 = vmatprep.subr.bf16.mxu0 0
  %3906 = vmatpush1.bf16.msra.mxu0 %v831
  %3907 = vmatprep.subr.bf16.mxu0 0
  %3908 = vmatpush1.bf16.msra.mxu0 %v830
  %3909 = vmatprep.subr.bf16.mxu0 0
  %3910 = vmatpush1.bf16.msra.mxu0 %v829
  %3911 = vmatprep.subr.bf16.mxu0 0
  %3912 = vmatpush2.bf16.msra.mxu0 0
  %3913 = vmatprep.subr.bf16.mxu0 0
  %3914 = vmatpush2.bf16.msra.mxu0 0
  %3915 = vmatprep.subr.bf16.mxu0 0
  %3916 = vmatpush2.bf16.msra.mxu0 0
  %3917 = vmatprep.subr.bf16.mxu0 0
  %3918 = vmatpush2.bf16.msra.mxu0 0
  %3919 = vmatprep.subr.bf16.mxu0 0
  %3920 = vmatpush2.bf16.msra.mxu0 0
  %3921 = vmatprep.subr.bf16.mxu0 0
  %3922 = vmatpush2.bf16.msra.mxu0 0
  %3923 = vmatprep.subr.bf16.mxu0 0
  %3924 = vmatpush2.bf16.msra.mxu0 0
  %3925 = vmatprep.subr.bf16.mxu0 0
  %3926 = vmatpush2.bf16.msra.mxu0 0
  %3927 = vmatprep.mubr.bf16.mxu0 0
  %3928 = vmatmul.mubr.bf16.gmra.mxu0 %v119
  %v3929 = vpop.f32.mrf.mxu0
  %v3930 = vadd.f32 0.0, %v3929
  %v3931 = vpop.f32.mrf.mxu0
  %v3932 = vpop.f32.mrf.mxu0
  %v3933 = vpop.f32.mrf.mxu0
  %3934 = vdwg.mxu0
  %v3935 = vadd.f32 %v3894, %v3930
  %3936 = vmatprep.subr.bf16.mxu0 0
  %3937 = vmatpush1.bf16.msra.mxu0 %v426
  %3938 = vmatprep.subr.bf16.mxu0 0
  %3939 = vmatpush1.bf16.msra.mxu0 %v425
  %3940 = vmatprep.subr.bf16.mxu0 0
  %3941 = vmatpush1.bf16.msra.mxu0 %v424
  %3942 = vmatprep.subr.bf16.mxu0 0
  %3943 = vmatpush1.bf16.msra.mxu0 %v423
  %3944 = vmatprep.subr.bf16.mxu0 0
  %3945 = vmatpush1.bf16.msra.mxu0 %v422
  %3946 = vmatprep.subr.bf16.mxu0 0
  %3947 = vmatpush1.bf16.msra.mxu0 %v421
  %3948 = vmatprep.subr.bf16.mxu0 0
  %3949 = vmatpush1.bf16.msra.mxu0 %v420
  %3950 = vmatprep.subr.bf16.mxu0 0
  %3951 = vmatpush1.bf16.msra.mxu0 %v419
  %3952 = vmatprep.subr.bf16.mxu0 0
  %3953 = vmatpush2.bf16.msra.mxu0 0
  %3954 = vmatprep.subr.bf16.mxu0 0
  %3955 = vmatpush2.bf16.msra.mxu0 0
  %3956 = vmatprep.subr.bf16.mxu0 0
  %3957 = vmatpush2.bf16.msra.mxu0 0
  %3958 = vmatprep.subr.bf16.mxu0 0
  %3959 = vmatpush2.bf16.msra.mxu0 0
  %3960 = vmatprep.subr.bf16.mxu0 0
  %3961 = vmatpush2.bf16.msra.mxu0 0
  %3962 = vmatprep.subr.bf16.mxu0 0
  %3963 = vmatpush2.bf16.msra.mxu0 0
  %3964 = vmatprep.subr.bf16.mxu0 0
  %3965 = vmatpush2.bf16.msra.mxu0 0
  %3966 = vmatprep.subr.bf16.mxu0 0
  %3967 = vmatpush2.bf16.msra.mxu0 0
  %3968 = vmatprep.mubr.bf16.mxu0 0
  %3969 = vmatmul.mubr.bf16.gmra.mxu0 %v121
  %v3970 = vpop.f32.mrf.mxu0
  %v3971 = vadd.f32 0.0, %v3970
  %v3972 = vpop.f32.mrf.mxu0
  %v3973 = vpop.f32.mrf.mxu0
  %v3974 = vpop.f32.mrf.mxu0
  %3975 = vdwg.mxu0
  %v3976 = vadd.f32 %v3935, %v3971
  %3977 = vmatprep.subr.bf16.mxu0 0
  %3978 = vmatpush1.bf16.msra.mxu0 %v532
  %3979 = vmatprep.subr.bf16.mxu0 0
  %3980 = vmatpush1.bf16.msra.mxu0 %v531
  %3981 = vmatprep.subr.bf16.mxu0 0
  %3982 = vmatpush1.bf16.msra.mxu0 %v530
  %3983 = vmatprep.subr.bf16.mxu0 0
  %3984 = vmatpush1.bf16.msra.mxu0 %v529
  %3985 = vmatprep.subr.bf16.mxu0 0
  %3986 = vmatpush1.bf16.msra.mxu0 %v528
  %3987 = vmatprep.subr.bf16.mxu0 0
  %3988 = vmatpush1.bf16.msra.mxu0 %v527
  %3989 = vmatprep.subr.bf16.mxu0 0
  %3990 = vmatpush1.bf16.msra.mxu0 %v526
  %3991 = vmatprep.subr.bf16.mxu0 0
  %3992 = vmatpush1.bf16.msra.mxu0 %v525
  %3993 = vmatprep.subr.bf16.mxu0 0
  %3994 = vmatpush2.bf16.msra.mxu0 0
  %3995 = vmatprep.subr.bf16.mxu0 0
  %3996 = vmatpush2.bf16.msra.mxu0 0
  %3997 = vmatprep.subr.bf16.mxu0 0
  %3998 = vmatpush2.bf16.msra.mxu0 0
  %3999 = vmatprep.subr.bf16.mxu0 0
  %4000 = vmatpush2.bf16.msra.mxu0 0
  %4001 = vmatprep.subr.bf16.mxu0 0
  %4002 = vmatpush2.bf16.msra.mxu0 0
  %4003 = vmatprep.subr.bf16.mxu0 0
  %4004 = vmatpush2.bf16.msra.mxu0 0
  %4005 = vmatprep.subr.bf16.mxu0 0
  %4006 = vmatpush2.bf16.msra.mxu0 0
  %4007 = vmatprep.subr.bf16.mxu0 0
  %4008 = vmatpush2.bf16.msra.mxu0 0
  %4009 = vmatprep.mubr.bf16.mxu0 0
  %4010 = vmatmul.mubr.bf16.gmra.mxu0 %v123
  %v4011 = vpop.f32.mrf.mxu0
  %v4012 = vadd.f32 0.0, %v4011
  %v4013 = vpop.f32.mrf.mxu0
  %v4014 = vpop.f32.mrf.mxu0
  %v4015 = vpop.f32.mrf.mxu0
  %4016 = vdwg.mxu0
  %v4017 = vadd.f32 %v3976, %v4012
  %v4018 = vadd.f32 %v4017, %v587
  %vm4019 = vcmp.ge.f32.partialorder %v4018, 0.0
  %v4020 = vmul.f32 %v4018, 0.01
  %v4021 = vsel %vm4019, %v4018, %v4020
  %v4022 = vpack.c.bf16 %v4021, %v4021
  %4023 = vmatprep.subr.bf16.mxu0 0
  %4024 = vmatpush1.bf16.msra.mxu0 %v1632
  %4025 = vmatprep.subr.bf16.mxu0 0
  %4026 = vmatpush1.bf16.msra.mxu0 %v1631
  %4027 = vmatprep.subr.bf16.mxu0 0
  %4028 = vmatpush1.bf16.msra.mxu0 %v1630
  %4029 = vmatprep.subr.bf16.mxu0 0
  %4030 = vmatpush1.bf16.msra.mxu0 %v1629
  %4031 = vmatprep.subr.bf16.mxu0 0
  %4032 = vmatpush1.bf16.msra.mxu0 %v1628
  %4033 = vmatprep.subr.bf16.mxu0 0
  %4034 = vmatpush1.bf16.msra.mxu0 %v1627
  %4035 = vmatprep.subr.bf16.mxu0 0
  %4036 = vmatpush1.bf16.msra.mxu0 %v1626
  %4037 = vmatprep.subr.bf16.mxu0 0
  %4038 = vmatpush1.bf16.msra.mxu0 %v1625
  %4039 = vmatprep.subr.bf16.mxu0 0
  %4040 = vmatpush2.bf16.msra.mxu0 0
  %4041 = vmatprep.subr.bf16.mxu0 0
  %4042 = vmatpush2.bf16.msra.mxu0 0
  %4043 = vmatprep.subr.bf16.mxu0 0
  %4044 = vmatpush2.bf16.msra.mxu0 0
  %4045 = vmatprep.subr.bf16.mxu0 0
  %4046 = vmatpush2.bf16.msra.mxu0 0
  %4047 = vmatprep.subr.bf16.mxu0 0
  %4048 = vmatpush2.bf16.msra.mxu0 0
  %4049 = vmatprep.subr.bf16.mxu0 0
  %4050 = vmatpush2.bf16.msra.mxu0 0
  %4051 = vmatprep.subr.bf16.mxu0 0
  %4052 = vmatpush2.bf16.msra.mxu0 0
  %4053 = vmatprep.subr.bf16.mxu0 0
  %4054 = vmatpush2.bf16.msra.mxu0 0
  %4055 = vmatprep.mubr.bf16.mxu0 0
  %4056 = vmatmul.mubr.bf16.gmra.mxu0 %v93
  %v4057 = vpop.f32.mrf.mxu0
  %v4058 = vadd.f32 0.0, %v4057
  %v4059 = vpop.f32.mrf.mxu0
  %v4060 = vpop.f32.mrf.mxu0
  %v4061 = vpop.f32.mrf.mxu0
  %4062 = vdwg.mxu0
  %4063 = vmatprep.subr.bf16.mxu0 0
  %4064 = vmatpush1.bf16.msra.mxu0 %v1945
  %4065 = vmatprep.subr.bf16.mxu0 0
  %4066 = vmatpush1.bf16.msra.mxu0 %v1944
  %4067 = vmatprep.subr.bf16.mxu0 0
  %4068 = vmatpush1.bf16.msra.mxu0 %v1943
  %4069 = vmatprep.subr.bf16.mxu0 0
  %4070 = vmatpush1.bf16.msra.mxu0 %v1942
  %4071 = vmatprep.subr.bf16.mxu0 0
  %4072 = vmatpush1.bf16.msra.mxu0 %v1941
  %4073 = vmatprep.subr.bf16.mxu0 0
  %4074 = vmatpush1.bf16.msra.mxu0 %v1940
  %4075 = vmatprep.subr.bf16.mxu0 0
  %4076 = vmatpush1.bf16.msra.mxu0 %v1939
  %4077 = vmatprep.subr.bf16.mxu0 0
  %4078 = vmatpush1.bf16.msra.mxu0 %v1938
  %4079 = vmatprep.subr.bf16.mxu0 0
  %4080 = vmatpush2.bf16.msra.mxu0 0
  %4081 = vmatprep.subr.bf16.mxu0 0
  %4082 = vmatpush2.bf16.msra.mxu0 0
  %4083 = vmatprep.subr.bf16.mxu0 0
  %4084 = vmatpush2.bf16.msra.mxu0 0
  %4085 = vmatprep.subr.bf16.mxu0 0
  %4086 = vmatpush2.bf16.msra.mxu0 0
  %4087 = vmatprep.subr.bf16.mxu0 0
  %4088 = vmatpush2.bf16.msra.mxu0 0
  %4089 = vmatprep.subr.bf16.mxu0 0
  %4090 = vmatpush2.bf16.msra.mxu0 0
  %4091 = vmatprep.subr.bf16.mxu0 0
  %4092 = vmatpush2.bf16.msra.mxu0 0
  %4093 = vmatprep.subr.bf16.mxu0 0
  %4094 = vmatpush2.bf16.msra.mxu0 0
  %4095 = vmatprep.mubr.bf16.mxu0 0
  %4096 = vmatmul.mubr.bf16.gmra.mxu0 %v91
  %v4097 = vpop.f32.mrf.mxu0
  %v4098 = vadd.f32 %v4058, %v4097
  %v4099 = vpop.f32.mrf.mxu0
  %v4100 = vpop.f32.mrf.mxu0
  %v4101 = vpop.f32.mrf.mxu0
  %4102 = vdwg.mxu0
  %4103 = vmatprep.subr.bf16.mxu0 0
  %4104 = vmatpush1.bf16.msra.mxu0 %v1544
  %4105 = vmatprep.subr.bf16.mxu0 0
  %4106 = vmatpush1.bf16.msra.mxu0 %v1543
  %4107 = vmatprep.subr.bf16.mxu0 0
  %4108 = vmatpush1.bf16.msra.mxu0 %v1542
  %4109 = vmatprep.subr.bf16.mxu0 0
  %4110 = vmatpush1.bf16.msra.mxu0 %v1541
  %4111 = vmatprep.subr.bf16.mxu0 0
  %4112 = vmatpush1.bf16.msra.mxu0 %v1540
  %4113 = vmatprep.subr.bf16.mxu0 0
  %4114 = vmatpush1.bf16.msra.mxu0 %v1539
  %4115 = vmatprep.subr.bf16.mxu0 0
  %4116 = vmatpush1.bf16.msra.mxu0 %v1538
  %4117 = vmatprep.subr.bf16.mxu0 0
  %4118 = vmatpush1.bf16.msra.mxu0 %v1537
  %4119 = vmatprep.subr.bf16.mxu0 0
  %4120 = vmatpush2.bf16.msra.mxu0 0
  %4121 = vmatprep.subr.bf16.mxu0 0
  %4122 = vmatpush2.bf16.msra.mxu0 0
  %4123 = vmatprep.subr.bf16.mxu0 0
  %4124 = vmatpush2.bf16.msra.mxu0 0
  %4125 = vmatprep.subr.bf16.mxu0 0
  %4126 = vmatpush2.bf16.msra.mxu0 0
  %4127 = vmatprep.subr.bf16.mxu0 0
  %4128 = vmatpush2.bf16.msra.mxu0 0
  %4129 = vmatprep.subr.bf16.mxu0 0
  %4130 = vmatpush2.bf16.msra.mxu0 0
  %4131 = vmatprep.subr.bf16.mxu0 0
  %4132 = vmatpush2.bf16.msra.mxu0 0
  %4133 = vmatprep.subr.bf16.mxu0 0
  %4134 = vmatpush2.bf16.msra.mxu0 0
  %4135 = vmatprep.mubr.bf16.mxu0 0
  %4136 = vmatmul.mubr.bf16.gmra.mxu0 %v95
  %v4137 = vpop.f32.mrf.mxu0
  %v4138 = vadd.f32 0.0, %v4137
  %v4139 = vpop.f32.mrf.mxu0
  %v4140 = vpop.f32.mrf.mxu0
  %v4141 = vpop.f32.mrf.mxu0
  %4142 = vdwg.mxu0
  %v4143 = vadd.f32 %v4098, %v4138
  %4144 = vmatprep.subr.bf16.mxu0 0
  %4145 = vmatpush1.bf16.msra.mxu0 %v690
  %4146 = vmatprep.subr.bf16.mxu0 0
  %4147 = vmatpush1.bf16.msra.mxu0 %v689
  %4148 = vmatprep.subr.bf16.mxu0 0
  %4149 = vmatpush1.bf16.msra.mxu0 %v688
  %4150 = vmatprep.subr.bf16.mxu0 0
  %4151 = vmatpush1.bf16.msra.mxu0 %v687
  %4152 = vmatprep.subr.bf16.mxu0 0
  %4153 = vmatpush1.bf16.msra.mxu0 %v686
  %4154 = vmatprep.subr.bf16.mxu0 0
  %4155 = vmatpush1.bf16.msra.mxu0 %v685
  %4156 = vmatprep.subr.bf16.mxu0 0
  %4157 = vmatpush1.bf16.msra.mxu0 %v684
  %4158 = vmatprep.subr.bf16.mxu0 0
  %4159 = vmatpush1.bf16.msra.mxu0 %v683
  %4160 = vmatprep.subr.bf16.mxu0 0
  %4161 = vmatpush2.bf16.msra.mxu0 0
  %4162 = vmatprep.subr.bf16.mxu0 0
  %4163 = vmatpush2.bf16.msra.mxu0 0
  %4164 = vmatprep.subr.bf16.mxu0 0
  %4165 = vmatpush2.bf16.msra.mxu0 0
  %4166 = vmatprep.subr.bf16.mxu0 0
  %4167 = vmatpush2.bf16.msra.mxu0 0
  %4168 = vmatprep.subr.bf16.mxu0 0
  %4169 = vmatpush2.bf16.msra.mxu0 0
  %4170 = vmatprep.subr.bf16.mxu0 0
  %4171 = vmatpush2.bf16.msra.mxu0 0
  %4172 = vmatprep.subr.bf16.mxu0 0
  %4173 = vmatpush2.bf16.msra.mxu0 0
  %4174 = vmatprep.subr.bf16.mxu0 0
  %4175 = vmatpush2.bf16.msra.mxu0 0
  %4176 = vmatprep.mubr.bf16.mxu0 0
  %4177 = vmatmul.mubr.bf16.gmra.mxu0 %v107
  %v4178 = vpop.f32.mrf.mxu0
  %v4179 = vadd.f32 0.0, %v4178
  %v4180 = vpop.f32.mrf.mxu0
  %v4181 = vpop.f32.mrf.mxu0
  %v4182 = vpop.f32.mrf.mxu0
  %4183 = vdwg.mxu0
  %v4184 = vadd.f32 %v4143, %v4179
  %4185 = vmatprep.subr.bf16.mxu0 0
  %4186 = vmatpush1.bf16.msra.mxu0 %v321
  %4187 = vmatprep.subr.bf16.mxu0 0
  %4188 = vmatpush1.bf16.msra.mxu0 %v320
  %4189 = vmatprep.subr.bf16.mxu0 0
  %4190 = vmatpush1.bf16.msra.mxu0 %v319
  %4191 = vmatprep.subr.bf16.mxu0 0
  %4192 = vmatpush1.bf16.msra.mxu0 %v318
  %4193 = vmatprep.subr.bf16.mxu0 0
  %4194 = vmatpush1.bf16.msra.mxu0 %v317
  %4195 = vmatprep.subr.bf16.mxu0 0
  %4196 = vmatpush1.bf16.msra.mxu0 %v316
  %4197 = vmatprep.subr.bf16.mxu0 0
  %4198 = vmatpush1.bf16.msra.mxu0 %v315
  %4199 = vmatprep.subr.bf16.mxu0 0
  %4200 = vmatpush1.bf16.msra.mxu0 %v314
  %4201 = vmatprep.subr.bf16.mxu0 0
  %4202 = vmatpush2.bf16.msra.mxu0 0
  %4203 = vmatprep.subr.bf16.mxu0 0
  %4204 = vmatpush2.bf16.msra.mxu0 0
  %4205 = vmatprep.subr.bf16.mxu0 0
  %4206 = vmatpush2.bf16.msra.mxu0 0
  %4207 = vmatprep.subr.bf16.mxu0 0
  %4208 = vmatpush2.bf16.msra.mxu0 0
  %4209 = vmatprep.subr.bf16.mxu0 0
  %4210 = vmatpush2.bf16.msra.mxu0 0
  %4211 = vmatprep.subr.bf16.mxu0 0
  %4212 = vmatpush2.bf16.msra.mxu0 0
  %4213 = vmatprep.subr.bf16.mxu0 0
  %4214 = vmatpush2.bf16.msra.mxu0 0
  %4215 = vmatprep.subr.bf16.mxu0 0
  %4216 = vmatpush2.bf16.msra.mxu0 0
  %4217 = vmatprep.mubr.bf16.mxu0 0
  %4218 = vmatmul.mubr.bf16.gmra.mxu0 %v109
  %v4219 = vpop.f32.mrf.mxu0
  %v4220 = vadd.f32 0.0, %v4219
  %v4221 = vpop.f32.mrf.mxu0
  %v4222 = vpop.f32.mrf.mxu0
  %v4223 = vpop.f32.mrf.mxu0
  %4224 = vdwg.mxu0
  %v4225 = vadd.f32 %v4184, %v4220
  %4226 = vmatprep.subr.bf16.mxu0 0
  %4227 = vmatpush1.bf16.msra.mxu0 %v233
  %4228 = vmatprep.subr.bf16.mxu0 0
  %4229 = vmatpush1.bf16.msra.mxu0 %v232
  %4230 = vmatprep.subr.bf16.mxu0 0
  %4231 = vmatpush1.bf16.msra.mxu0 %v231
  %4232 = vmatprep.subr.bf16.mxu0 0
  %4233 = vmatpush1.bf16.msra.mxu0 %v230
  %4234 = vmatprep.subr.bf16.mxu0 0
  %4235 = vmatpush1.bf16.msra.mxu0 %v229
  %4236 = vmatprep.subr.bf16.mxu0 0
  %4237 = vmatpush1.bf16.msra.mxu0 %v228
  %4238 = vmatprep.subr.bf16.mxu0 0
  %4239 = vmatpush1.bf16.msra.mxu0 %v227
  %4240 = vmatprep.subr.bf16.mxu0 0
  %4241 = vmatpush1.bf16.msra.mxu0 %v226
  %4242 = vmatprep.subr.bf16.mxu0 0
  %4243 = vmatpush2.bf16.msra.mxu0 0
  %4244 = vmatprep.subr.bf16.mxu0 0
  %4245 = vmatpush2.bf16.msra.mxu0 0
  %4246 = vmatprep.subr.bf16.mxu0 0
  %4247 = vmatpush2.bf16.msra.mxu0 0
  %4248 = vmatprep.subr.bf16.mxu0 0
  %4249 = vmatpush2.bf16.msra.mxu0 0
  %4250 = vmatprep.subr.bf16.mxu0 0
  %4251 = vmatpush2.bf16.msra.mxu0 0
  %4252 = vmatprep.subr.bf16.mxu0 0
  %4253 = vmatpush2.bf16.msra.mxu0 0
  %4254 = vmatprep.subr.bf16.mxu0 0
  %4255 = vmatpush2.bf16.msra.mxu0 0
  %4256 = vmatprep.subr.bf16.mxu0 0
  %4257 = vmatpush2.bf16.msra.mxu0 0
  %4258 = vmatprep.mubr.bf16.mxu0 0
  %4259 = vmatmul.mubr.bf16.gmra.mxu0 %v111
  %v4260 = vpop.f32.mrf.mxu0
  %v4261 = vadd.f32 0.0, %v4260
  %v4262 = vpop.f32.mrf.mxu0
  %v4263 = vpop.f32.mrf.mxu0
  %v4264 = vpop.f32.mrf.mxu0
  %4265 = vdwg.mxu0
  %v4266 = vadd.f32 %v4225, %v4261
  %4267 = vmatprep.subr.bf16.mxu0 0
  %4268 = vmatpush1.bf16.msra.mxu0 %v836
  %4269 = vmatprep.subr.bf16.mxu0 0
  %4270 = vmatpush1.bf16.msra.mxu0 %v835
  %4271 = vmatprep.subr.bf16.mxu0 0
  %4272 = vmatpush1.bf16.msra.mxu0 %v834
  %4273 = vmatprep.subr.bf16.mxu0 0
  %4274 = vmatpush1.bf16.msra.mxu0 %v833
  %4275 = vmatprep.subr.bf16.mxu0 0
  %4276 = vmatpush1.bf16.msra.mxu0 %v832
  %4277 = vmatprep.subr.bf16.mxu0 0
  %4278 = vmatpush1.bf16.msra.mxu0 %v831
  %4279 = vmatprep.subr.bf16.mxu0 0
  %4280 = vmatpush1.bf16.msra.mxu0 %v830
  %4281 = vmatprep.subr.bf16.mxu0 0
  %4282 = vmatpush1.bf16.msra.mxu0 %v829
  %4283 = vmatprep.subr.bf16.mxu0 0
  %4284 = vmatpush2.bf16.msra.mxu0 0
  %4285 = vmatprep.subr.bf16.mxu0 0
  %4286 = vmatpush2.bf16.msra.mxu0 0
  %4287 = vmatprep.subr.bf16.mxu0 0
  %4288 = vmatpush2.bf16.msra.mxu0 0
  %4289 = vmatprep.subr.bf16.mxu0 0
  %4290 = vmatpush2.bf16.msra.mxu0 0
  %4291 = vmatprep.subr.bf16.mxu0 0
  %4292 = vmatpush2.bf16.msra.mxu0 0
  %4293 = vmatprep.subr.bf16.mxu0 0
  %4294 = vmatpush2.bf16.msra.mxu0 0
  %4295 = vmatprep.subr.bf16.mxu0 0
  %4296 = vmatpush2.bf16.msra.mxu0 0
  %4297 = vmatprep.subr.bf16.mxu0 0
  %4298 = vmatpush2.bf16.msra.mxu0 0
  %4299 = vmatprep.mubr.bf16.mxu0 0
  %4300 = vmatmul.mubr.bf16.gmra.mxu0 %v123
  %v4301 = vpop.f32.mrf.mxu0
  %v4302 = vadd.f32 0.0, %v4301
  %v4303 = vpop.f32.mrf.mxu0
  %v4304 = vpop.f32.mrf.mxu0
  %v4305 = vpop.f32.mrf.mxu0
  %4306 = vdwg.mxu0
  %v4307 = vadd.f32 %v4266, %v4302
  %4308 = vmatprep.subr.bf16.mxu0 0
  %4309 = vmatpush1.bf16.msra.mxu0 %v426
  %4310 = vmatprep.subr.bf16.mxu0 0
  %4311 = vmatpush1.bf16.msra.mxu0 %v425
  %4312 = vmatprep.subr.bf16.mxu0 0
  %4313 = vmatpush1.bf16.msra.mxu0 %v424
  %4314 = vmatprep.subr.bf16.mxu0 0
  %4315 = vmatpush1.bf16.msra.mxu0 %v423
  %4316 = vmatprep.subr.bf16.mxu0 0
  %4317 = vmatpush1.bf16.msra.mxu0 %v422
  %4318 = vmatprep.subr.bf16.mxu0 0
  %4319 = vmatpush1.bf16.msra.mxu0 %v421
  %4320 = vmatprep.subr.bf16.mxu0 0
  %4321 = vmatpush1.bf16.msra.mxu0 %v420
  %4322 = vmatprep.subr.bf16.mxu0 0
  %4323 = vmatpush1.bf16.msra.mxu0 %v419
  %4324 = vmatprep.subr.bf16.mxu0 0
  %4325 = vmatpush2.bf16.msra.mxu0 0
  %4326 = vmatprep.subr.bf16.mxu0 0
  %4327 = vmatpush2.bf16.msra.mxu0 0
  %4328 = vmatprep.subr.bf16.mxu0 0
  %4329 = vmatpush2.bf16.msra.mxu0 0
  %4330 = vmatprep.subr.bf16.mxu0 0
  %4331 = vmatpush2.bf16.msra.mxu0 0
  %4332 = vmatprep.subr.bf16.mxu0 0
  %4333 = vmatpush2.bf16.msra.mxu0 0
  %4334 = vmatprep.subr.bf16.mxu0 0
  %4335 = vmatpush2.bf16.msra.mxu0 0
  %4336 = vmatprep.subr.bf16.mxu0 0
  %4337 = vmatpush2.bf16.msra.mxu0 0
  %4338 = vmatprep.subr.bf16.mxu0 0
  %4339 = vmatpush2.bf16.msra.mxu0 0
  %4340 = vmatprep.mubr.bf16.mxu0 0
  %4341 = vmatmul.mubr.bf16.gmra.mxu0 %v125
  %v4342 = vpop.f32.mrf.mxu0
  %v4343 = vadd.f32 0.0, %v4342
  %v4344 = vpop.f32.mrf.mxu0
  %v4345 = vpop.f32.mrf.mxu0
  %v4346 = vpop.f32.mrf.mxu0
  %4347 = vdwg.mxu0
  %v4348 = vadd.f32 %v4307, %v4343
  %4349 = vmatprep.subr.bf16.mxu0 0
  %4350 = vmatpush1.bf16.msra.mxu0 %v532
  %4351 = vmatprep.subr.bf16.mxu0 0
  %4352 = vmatpush1.bf16.msra.mxu0 %v531
  %4353 = vmatprep.subr.bf16.mxu0 0
  %4354 = vmatpush1.bf16.msra.mxu0 %v530
  %4355 = vmatprep.subr.bf16.mxu0 0
  %4356 = vmatpush1.bf16.msra.mxu0 %v529
  %4357 = vmatprep.subr.bf16.mxu0 0
  %4358 = vmatpush1.bf16.msra.mxu0 %v528
  %4359 = vmatprep.subr.bf16.mxu0 0
  %4360 = vmatpush1.bf16.msra.mxu0 %v527
  %4361 = vmatprep.subr.bf16.mxu0 0
  %4362 = vmatpush1.bf16.msra.mxu0 %v526
  %4363 = vmatprep.subr.bf16.mxu0 0
  %4364 = vmatpush1.bf16.msra.mxu0 %v525
  %4365 = vmatprep.subr.bf16.mxu0 0
  %4366 = vmatpush2.bf16.msra.mxu0 0
  %4367 = vmatprep.subr.bf16.mxu0 0
  %4368 = vmatpush2.bf16.msra.mxu0 0
  %4369 = vmatprep.subr.bf16.mxu0 0
  %4370 = vmatpush2.bf16.msra.mxu0 0
  %4371 = vmatprep.subr.bf16.mxu0 0
  %4372 = vmatpush2.bf16.msra.mxu0 0
  %4373 = vmatprep.subr.bf16.mxu0 0
  %4374 = vmatpush2.bf16.msra.mxu0 0
  %4375 = vmatprep.subr.bf16.mxu0 0
  %4376 = vmatpush2.bf16.msra.mxu0 0
  %4377 = vmatprep.subr.bf16.mxu0 0
  %4378 = vmatpush2.bf16.msra.mxu0 0
  %4379 = vmatprep.subr.bf16.mxu0 0
  %4380 = vmatpush2.bf16.msra.mxu0 0
  %4381 = vmatprep.mubr.bf16.mxu0 0
  %4382 = vmatmul.mubr.bf16.gmra.mxu0 %v127
  %v4383 = vpop.f32.mrf.mxu0
  %v4384 = vadd.f32 0.0, %v4383
  %v4385 = vpop.f32.mrf.mxu0
  %v4386 = vpop.f32.mrf.mxu0
  %v4387 = vpop.f32.mrf.mxu0
  %4388 = vdwg.mxu0
  %v4389 = vadd.f32 %v4348, %v4384
  %v4390 = vadd.f32 %v4389, %v587
  %vm4391 = vcmp.ge.f32.partialorder %v4390, 0.0
  %v4392 = vmul.f32 %v4390, 0.01
  %v4393 = vsel %vm4391, %v4390, %v4392
  %v4394 = vpack.c.bf16 %v4393, %v4393
  %4395 = vmatprep.subr.bf16.mxu0 0
  %4396 = vmatpush1.bf16.msra.mxu0 %v1544
  %4397 = vmatprep.subr.bf16.mxu0 0
  %4398 = vmatpush1.bf16.msra.mxu0 %v1543
  %4399 = vmatprep.subr.bf16.mxu0 0
  %4400 = vmatpush1.bf16.msra.mxu0 %v1542
  %4401 = vmatprep.subr.bf16.mxu0 0
  %4402 = vmatpush1.bf16.msra.mxu0 %v1541
  %4403 = vmatprep.subr.bf16.mxu0 0
  %4404 = vmatpush1.bf16.msra.mxu0 %v1540
  %4405 = vmatprep.subr.bf16.mxu0 0
  %4406 = vmatpush1.bf16.msra.mxu0 %v1539
  %4407 = vmatprep.subr.bf16.mxu0 0
  %4408 = vmatpush1.bf16.msra.mxu0 %v1538
  %4409 = vmatprep.subr.bf16.mxu0 0
  %4410 = vmatpush1.bf16.msra.mxu0 %v1537
  %4411 = vmatprep.subr.bf16.mxu0 0
  %4412 = vmatpush2.bf16.msra.mxu0 0
  %4413 = vmatprep.subr.bf16.mxu0 0
  %4414 = vmatpush2.bf16.msra.mxu0 0
  %4415 = vmatprep.subr.bf16.mxu0 0
  %4416 = vmatpush2.bf16.msra.mxu0 0
  %4417 = vmatprep.subr.bf16.mxu0 0
  %4418 = vmatpush2.bf16.msra.mxu0 0
  %4419 = vmatprep.subr.bf16.mxu0 0
  %4420 = vmatpush2.bf16.msra.mxu0 0
  %4421 = vmatprep.subr.bf16.mxu0 0
  %4422 = vmatpush2.bf16.msra.mxu0 0
  %4423 = vmatprep.subr.bf16.mxu0 0
  %4424 = vmatpush2.bf16.msra.mxu0 0
  %4425 = vmatprep.subr.bf16.mxu0 0
  %4426 = vmatpush2.bf16.msra.mxu0 0
  %4427 = vmatprep.mubr.bf16.mxu0 0
  %4428 = vmatmul.mubr.bf16.gmra.mxu0 %v115
  %v4429 = vpop.f32.mrf.mxu0
  %v4430 = vadd.f32 0.0, %v4429
  %v4431 = vpop.f32.mrf.mxu0
  %v4432 = vpop.f32.mrf.mxu0
  %v4433 = vpop.f32.mrf.mxu0
  %4434 = vdwg.mxu0
  %4435 = vmatprep.subr.bf16.mxu0 0
  %4436 = vmatpush1.bf16.msra.mxu0 %v1632
  %4437 = vmatprep.subr.bf16.mxu0 0
  %4438 = vmatpush1.bf16.msra.mxu0 %v1631
  %4439 = vmatprep.subr.bf16.mxu0 0
  %4440 = vmatpush1.bf16.msra.mxu0 %v1630
  %4441 = vmatprep.subr.bf16.mxu0 0
  %4442 = vmatpush1.bf16.msra.mxu0 %v1629
  %4443 = vmatprep.subr.bf16.mxu0 0
  %4444 = vmatpush1.bf16.msra.mxu0 %v1628
  %4445 = vmatprep.subr.bf16.mxu0 0
  %4446 = vmatpush1.bf16.msra.mxu0 %v1627
  %4447 = vmatprep.subr.bf16.mxu0 0
  %4448 = vmatpush1.bf16.msra.mxu0 %v1626
  %4449 = vmatprep.subr.bf16.mxu0 0
  %4450 = vmatpush1.bf16.msra.mxu0 %v1625
  %4451 = vmatprep.subr.bf16.mxu0 0
  %4452 = vmatpush2.bf16.msra.mxu0 0
  %4453 = vmatprep.subr.bf16.mxu0 0
  %4454 = vmatpush2.bf16.msra.mxu0 0
  %4455 = vmatprep.subr.bf16.mxu0 0
  %4456 = vmatpush2.bf16.msra.mxu0 0
  %4457 = vmatprep.subr.bf16.mxu0 0
  %4458 = vmatpush2.bf16.msra.mxu0 0
  %4459 = vmatprep.subr.bf16.mxu0 0
  %4460 = vmatpush2.bf16.msra.mxu0 0
  %4461 = vmatprep.subr.bf16.mxu0 0
  %4462 = vmatpush2.bf16.msra.mxu0 0
  %4463 = vmatprep.subr.bf16.mxu0 0
  %4464 = vmatpush2.bf16.msra.mxu0 0
  %4465 = vmatprep.subr.bf16.mxu0 0
  %4466 = vmatpush2.bf16.msra.mxu0 0
  %4467 = vmatprep.mubr.bf16.mxu0 0
  %4468 = vmatmul.mubr.bf16.gmra.mxu0 %v113
  %v4469 = vpop.f32.mrf.mxu0
  %v4470 = vadd.f32 %v4430, %v4469
  %v4471 = vpop.f32.mrf.mxu0
  %v4472 = vpop.f32.mrf.mxu0
  %v4473 = vpop.f32.mrf.mxu0
  %4474 = vdwg.mxu0
  %4475 = vmatprep.subr.bf16.mxu0 0
  %4476 = vmatpush1.bf16.msra.mxu0 %v321
  %4477 = vmatprep.subr.bf16.mxu0 0
  %4478 = vmatpush1.bf16.msra.mxu0 %v320
  %4479 = vmatprep.subr.bf16.mxu0 0
  %4480 = vmatpush1.bf16.msra.mxu0 %v319
  %4481 = vmatprep.subr.bf16.mxu0 0
  %4482 = vmatpush1.bf16.msra.mxu0 %v318
  %4483 = vmatprep.subr.bf16.mxu0 0
  %4484 = vmatpush1.bf16.msra.mxu0 %v317
  %4485 = vmatprep.subr.bf16.mxu0 0
  %4486 = vmatpush1.bf16.msra.mxu0 %v316
  %4487 = vmatprep.subr.bf16.mxu0 0
  %4488 = vmatpush1.bf16.msra.mxu0 %v315
  %4489 = vmatprep.subr.bf16.mxu0 0
  %4490 = vmatpush1.bf16.msra.mxu0 %v314
  %4491 = vmatprep.subr.bf16.mxu0 0
  %4492 = vmatpush2.bf16.msra.mxu0 0
  %4493 = vmatprep.subr.bf16.mxu0 0
  %4494 = vmatpush2.bf16.msra.mxu0 0
  %4495 = vmatprep.subr.bf16.mxu0 0
  %4496 = vmatpush2.bf16.msra.mxu0 0
  %4497 = vmatprep.subr.bf16.mxu0 0
  %4498 = vmatpush2.bf16.msra.mxu0 0
  %4499 = vmatprep.subr.bf16.mxu0 0
  %4500 = vmatpush2.bf16.msra.mxu0 0
  %4501 = vmatprep.subr.bf16.mxu0 0
  %4502 = vmatpush2.bf16.msra.mxu0 0
  %4503 = vmatprep.subr.bf16.mxu0 0
  %4504 = vmatpush2.bf16.msra.mxu0 0
  %4505 = vmatprep.subr.bf16.mxu0 0
  %4506 = vmatpush2.bf16.msra.mxu0 0
  %4507 = vmatprep.mubr.bf16.mxu0 0
  %4508 = vmatmul.mubr.bf16.gmra.mxu0 %v129
  %v4509 = vpop.f32.mrf.mxu0
  %v4510 = vadd.f32 0.0, %v4509
  %v4511 = vpop.f32.mrf.mxu0
  %v4512 = vpop.f32.mrf.mxu0
  %v4513 = vpop.f32.mrf.mxu0
  %4514 = vdwg.mxu0
  %v4515 = vadd.f32 %v4470, %v4510
  %4516 = vmatprep.subr.bf16.mxu0 0
  %4517 = vmatpush1.bf16.msra.mxu0 %v233
  %4518 = vmatprep.subr.bf16.mxu0 0
  %4519 = vmatpush1.bf16.msra.mxu0 %v232
  %4520 = vmatprep.subr.bf16.mxu0 0
  %4521 = vmatpush1.bf16.msra.mxu0 %v231
  %4522 = vmatprep.subr.bf16.mxu0 0
  %4523 = vmatpush1.bf16.msra.mxu0 %v230
  %4524 = vmatprep.subr.bf16.mxu0 0
  %4525 = vmatpush1.bf16.msra.mxu0 %v229
  %4526 = vmatprep.subr.bf16.mxu0 0
  %4527 = vmatpush1.bf16.msra.mxu0 %v228
  %4528 = vmatprep.subr.bf16.mxu0 0
  %4529 = vmatpush1.bf16.msra.mxu0 %v227
  %4530 = vmatprep.subr.bf16.mxu0 0
  %4531 = vmatpush1.bf16.msra.mxu0 %v226
  %4532 = vmatprep.subr.bf16.mxu0 0
  %4533 = vmatpush2.bf16.msra.mxu0 0
  %4534 = vmatprep.subr.bf16.mxu0 0
  %4535 = vmatpush2.bf16.msra.mxu0 0
  %4536 = vmatprep.subr.bf16.mxu0 0
  %4537 = vmatpush2.bf16.msra.mxu0 0
  %4538 = vmatprep.subr.bf16.mxu0 0
  %4539 = vmatpush2.bf16.msra.mxu0 0
  %4540 = vmatprep.subr.bf16.mxu0 0
  %4541 = vmatpush2.bf16.msra.mxu0 0
  %4542 = vmatprep.subr.bf16.mxu0 0
  %4543 = vmatpush2.bf16.msra.mxu0 0
  %4544 = vmatprep.subr.bf16.mxu0 0
  %4545 = vmatpush2.bf16.msra.mxu0 0
  %4546 = vmatprep.subr.bf16.mxu0 0
  %4547 = vmatpush2.bf16.msra.mxu0 0
  %4548 = vmatprep.mubr.bf16.mxu0 0
  %4549 = vmatmul.mubr.bf16.gmra.mxu0 %v131
  %v4550 = vpop.f32.mrf.mxu0
  %v4551 = vadd.f32 0.0, %v4550
  %v4552 = vpop.f32.mrf.mxu0
  %v4553 = vpop.f32.mrf.mxu0
  %v4554 = vpop.f32.mrf.mxu0
  %4555 = vdwg.mxu0
  %v4556 = vadd.f32 %v4515, %v4551
  %4557 = vmatprep.subr.bf16.mxu0 0
  %4558 = vmatpush1.bf16.msra.mxu0 %v426
  %4559 = vmatprep.subr.bf16.mxu0 0
  %4560 = vmatpush1.bf16.msra.mxu0 %v425
  %4561 = vmatprep.subr.bf16.mxu0 0
  %4562 = vmatpush1.bf16.msra.mxu0 %v424
  %4563 = vmatprep.subr.bf16.mxu0 0
  %4564 = vmatpush1.bf16.msra.mxu0 %v423
  %4565 = vmatprep.subr.bf16.mxu0 0
  %4566 = vmatpush1.bf16.msra.mxu0 %v422
  %4567 = vmatprep.subr.bf16.mxu0 0
  %4568 = vmatpush1.bf16.msra.mxu0 %v421
  %4569 = vmatprep.subr.bf16.mxu0 0
  %4570 = vmatpush1.bf16.msra.mxu0 %v420
  %4571 = vmatprep.subr.bf16.mxu0 0
  %4572 = vmatpush1.bf16.msra.mxu0 %v419
  %4573 = vmatprep.subr.bf16.mxu0 0
  %4574 = vmatpush2.bf16.msra.mxu0 0
  %4575 = vmatprep.subr.bf16.mxu0 0
  %4576 = vmatpush2.bf16.msra.mxu0 0
  %4577 = vmatprep.subr.bf16.mxu0 0
  %4578 = vmatpush2.bf16.msra.mxu0 0
  %4579 = vmatprep.subr.bf16.mxu0 0
  %4580 = vmatpush2.bf16.msra.mxu0 0
  %4581 = vmatprep.subr.bf16.mxu0 0
  %4582 = vmatpush2.bf16.msra.mxu0 0
  %4583 = vmatprep.subr.bf16.mxu0 0
  %4584 = vmatpush2.bf16.msra.mxu0 0
  %4585 = vmatprep.subr.bf16.mxu0 0
  %4586 = vmatpush2.bf16.msra.mxu0 0
  %4587 = vmatprep.subr.bf16.mxu0 0
  %4588 = vmatpush2.bf16.msra.mxu0 0
  %4589 = vmatprep.mubr.bf16.mxu0 0
  %4590 = vmatmul.mubr.bf16.gmra.mxu0 %v145
  %v4591 = vpop.f32.mrf.mxu0
  %v4592 = vadd.f32 0.0, %v4591
  %v4593 = vpop.f32.mrf.mxu0
  %v4594 = vpop.f32.mrf.mxu0
  %v4595 = vpop.f32.mrf.mxu0
  %4596 = vdwg.mxu0
  %v4597 = vadd.f32 %v4556, %v4592
  %4598 = vmatprep.subr.bf16.mxu0 0
  %4599 = vmatpush1.bf16.msra.mxu0 %v532
  %4600 = vmatprep.subr.bf16.mxu0 0
  %4601 = vmatpush1.bf16.msra.mxu0 %v531
  %4602 = vmatprep.subr.bf16.mxu0 0
  %4603 = vmatpush1.bf16.msra.mxu0 %v530
  %4604 = vmatprep.subr.bf16.mxu0 0
  %4605 = vmatpush1.bf16.msra.mxu0 %v529
  %4606 = vmatprep.subr.bf16.mxu0 0
  %4607 = vmatpush1.bf16.msra.mxu0 %v528
  %4608 = vmatprep.subr.bf16.mxu0 0
  %4609 = vmatpush1.bf16.msra.mxu0 %v527
  %4610 = vmatprep.subr.bf16.mxu0 0
  %4611 = vmatpush1.bf16.msra.mxu0 %v526
  %4612 = vmatprep.subr.bf16.mxu0 0
  %4613 = vmatpush1.bf16.msra.mxu0 %v525
  %4614 = vmatprep.subr.bf16.mxu0 0
  %4615 = vmatpush2.bf16.msra.mxu0 0
  %4616 = vmatprep.subr.bf16.mxu0 0
  %4617 = vmatpush2.bf16.msra.mxu0 0
  %4618 = vmatprep.subr.bf16.mxu0 0
  %4619 = vmatpush2.bf16.msra.mxu0 0
  %4620 = vmatprep.subr.bf16.mxu0 0
  %4621 = vmatpush2.bf16.msra.mxu0 0
  %4622 = vmatprep.subr.bf16.mxu0 0
  %4623 = vmatpush2.bf16.msra.mxu0 0
  %4624 = vmatprep.subr.bf16.mxu0 0
  %4625 = vmatpush2.bf16.msra.mxu0 0
  %4626 = vmatprep.subr.bf16.mxu0 0
  %4627 = vmatpush2.bf16.msra.mxu0 0
  %4628 = vmatprep.subr.bf16.mxu0 0
  %4629 = vmatpush2.bf16.msra.mxu0 0
  %4630 = vmatprep.mubr.bf16.mxu0 0
  %4631 = vmatmul.mubr.bf16.gmra.mxu0 %v147
  %v4632 = vpop.f32.mrf.mxu0
  %v4633 = vadd.f32 0.0, %v4632
  %v4634 = vpop.f32.mrf.mxu0
  %v4635 = vpop.f32.mrf.mxu0
  %v4636 = vpop.f32.mrf.mxu0
  %4637 = vdwg.mxu0
  %v4638 = vadd.f32 %v4597, %v4633
  %v4639 = vadd.f32 %v4638, %v587
  %vm4640 = vcmp.ge.f32.partialorder %v4639, 0.0
  %v4641 = vmul.f32 %v4639, 0.01
  %v4642 = vsel %vm4640, %v4639, %v4641
  %v4643 = vpack.c.bf16 %v4642, %v4642
  %4644 = vmatprep.subr.bf16.mxu0 0
  %4645 = vmatpush1.bf16.msra.mxu0 %v1632
  %4646 = vmatprep.subr.bf16.mxu0 0
  %4647 = vmatpush1.bf16.msra.mxu0 %v1631
  %4648 = vmatprep.subr.bf16.mxu0 0
  %4649 = vmatpush1.bf16.msra.mxu0 %v1630
  %4650 = vmatprep.subr.bf16.mxu0 0
  %4651 = vmatpush1.bf16.msra.mxu0 %v1629
  %4652 = vmatprep.subr.bf16.mxu0 0
  %4653 = vmatpush1.bf16.msra.mxu0 %v1628
  %4654 = vmatprep.subr.bf16.mxu0 0
  %4655 = vmatpush1.bf16.msra.mxu0 %v1627
  %4656 = vmatprep.subr.bf16.mxu0 0
  %4657 = vmatpush1.bf16.msra.mxu0 %v1626
  %4658 = vmatprep.subr.bf16.mxu0 0
  %4659 = vmatpush1.bf16.msra.mxu0 %v1625
  %4660 = vmatprep.subr.bf16.mxu0 0
  %4661 = vmatpush2.bf16.msra.mxu0 0
  %4662 = vmatprep.subr.bf16.mxu0 0
  %4663 = vmatpush2.bf16.msra.mxu0 0
  %4664 = vmatprep.subr.bf16.mxu0 0
  %4665 = vmatpush2.bf16.msra.mxu0 0
  %4666 = vmatprep.subr.bf16.mxu0 0
  %4667 = vmatpush2.bf16.msra.mxu0 0
  %4668 = vmatprep.subr.bf16.mxu0 0
  %4669 = vmatpush2.bf16.msra.mxu0 0
  %4670 = vmatprep.subr.bf16.mxu0 0
  %4671 = vmatpush2.bf16.msra.mxu0 0
  %4672 = vmatprep.subr.bf16.mxu0 0
  %4673 = vmatpush2.bf16.msra.mxu0 0
  %4674 = vmatprep.subr.bf16.mxu0 0
  %4675 = vmatpush2.bf16.msra.mxu0 0
  %4676 = vmatprep.mubr.bf16.mxu0 0
  %4677 = vmatmul.mubr.bf16.gmra.mxu0 %v117
  %v4678 = vpop.f32.mrf.mxu0
  %v4679 = vadd.f32 0.0, %v4678
  %v4680 = vpop.f32.mrf.mxu0
  %v4681 = vpop.f32.mrf.mxu0
  %v4682 = vpop.f32.mrf.mxu0
  %4683 = vdwg.mxu0
  %4684 = vmatprep.subr.bf16.mxu0 0
  %4685 = vmatpush1.bf16.msra.mxu0 %v1945
  %4686 = vmatprep.subr.bf16.mxu0 0
  %4687 = vmatpush1.bf16.msra.mxu0 %v1944
  %4688 = vmatprep.subr.bf16.mxu0 0
  %4689 = vmatpush1.bf16.msra.mxu0 %v1943
  %4690 = vmatprep.subr.bf16.mxu0 0
  %4691 = vmatpush1.bf16.msra.mxu0 %v1942
  %4692 = vmatprep.subr.bf16.mxu0 0
  %4693 = vmatpush1.bf16.msra.mxu0 %v1941
  %4694 = vmatprep.subr.bf16.mxu0 0
  %4695 = vmatpush1.bf16.msra.mxu0 %v1940
  %4696 = vmatprep.subr.bf16.mxu0 0
  %4697 = vmatpush1.bf16.msra.mxu0 %v1939
  %4698 = vmatprep.subr.bf16.mxu0 0
  %4699 = vmatpush1.bf16.msra.mxu0 %v1938
  %4700 = vmatprep.subr.bf16.mxu0 0
  %4701 = vmatpush2.bf16.msra.mxu0 0
  %4702 = vmatprep.subr.bf16.mxu0 0
  %4703 = vmatpush2.bf16.msra.mxu0 0
  %4704 = vmatprep.subr.bf16.mxu0 0
  %4705 = vmatpush2.bf16.msra.mxu0 0
  %4706 = vmatprep.subr.bf16.mxu0 0
  %4707 = vmatpush2.bf16.msra.mxu0 0
  %4708 = vmatprep.subr.bf16.mxu0 0
  %4709 = vmatpush2.bf16.msra.mxu0 0
  %4710 = vmatprep.subr.bf16.mxu0 0
  %4711 = vmatpush2.bf16.msra.mxu0 0
  %4712 = vmatprep.subr.bf16.mxu0 0
  %4713 = vmatpush2.bf16.msra.mxu0 0
  %4714 = vmatprep.subr.bf16.mxu0 0
  %4715 = vmatpush2.bf16.msra.mxu0 0
  %4716 = vmatprep.mubr.bf16.mxu0 0
  %4717 = vmatmul.mubr.bf16.gmra.mxu0 %v115
  %v4718 = vpop.f32.mrf.mxu0
  %v4719 = vadd.f32 %v4679, %v4718
  %v4720 = vpop.f32.mrf.mxu0
  %v4721 = vpop.f32.mrf.mxu0
  %v4722 = vpop.f32.mrf.mxu0
  %4723 = vdwg.mxu0
  %4724 = vmatprep.subr.bf16.mxu0 0
  %4725 = vmatpush1.bf16.msra.mxu0 %v1544
  %4726 = vmatprep.subr.bf16.mxu0 0
  %4727 = vmatpush1.bf16.msra.mxu0 %v1543
  %4728 = vmatprep.subr.bf16.mxu0 0
  %4729 = vmatpush1.bf16.msra.mxu0 %v1542
  %4730 = vmatprep.subr.bf16.mxu0 0
  %4731 = vmatpush1.bf16.msra.mxu0 %v1541
  %4732 = vmatprep.subr.bf16.mxu0 0
  %4733 = vmatpush1.bf16.msra.mxu0 %v1540
  %4734 = vmatprep.subr.bf16.mxu0 0
  %4735 = vmatpush1.bf16.msra.mxu0 %v1539
  %4736 = vmatprep.subr.bf16.mxu0 0
  %4737 = vmatpush1.bf16.msra.mxu0 %v1538
  %4738 = vmatprep.subr.bf16.mxu0 0
  %4739 = vmatpush1.bf16.msra.mxu0 %v1537
  %4740 = vmatprep.subr.bf16.mxu0 0
  %4741 = vmatpush2.bf16.msra.mxu0 0
  %4742 = vmatprep.subr.bf16.mxu0 0
  %4743 = vmatpush2.bf16.msra.mxu0 0
  %4744 = vmatprep.subr.bf16.mxu0 0
  %4745 = vmatpush2.bf16.msra.mxu0 0
  %4746 = vmatprep.subr.bf16.mxu0 0
  %4747 = vmatpush2.bf16.msra.mxu0 0
  %4748 = vmatprep.subr.bf16.mxu0 0
  %4749 = vmatpush2.bf16.msra.mxu0 0
  %4750 = vmatprep.subr.bf16.mxu0 0
  %4751 = vmatpush2.bf16.msra.mxu0 0
  %4752 = vmatprep.subr.bf16.mxu0 0
  %4753 = vmatpush2.bf16.msra.mxu0 0
  %4754 = vmatprep.subr.bf16.mxu0 0
  %4755 = vmatpush2.bf16.msra.mxu0 0
  %4756 = vmatprep.mubr.bf16.mxu0 0
  %4757 = vmatmul.mubr.bf16.gmra.mxu0 %v119
  %v4758 = vpop.f32.mrf.mxu0
  %v4759 = vadd.f32 0.0, %v4758
  %v4760 = vpop.f32.mrf.mxu0
  %v4761 = vpop.f32.mrf.mxu0
  %v4762 = vpop.f32.mrf.mxu0
  %4763 = vdwg.mxu0
  %v4764 = vadd.f32 %v4719, %v4759
  %4765 = vmatprep.subr.bf16.mxu0 0
  %4766 = vmatpush1.bf16.msra.mxu0 %v690
  %4767 = vmatprep.subr.bf16.mxu0 0
  %4768 = vmatpush1.bf16.msra.mxu0 %v689
  %4769 = vmatprep.subr.bf16.mxu0 0
  %4770 = vmatpush1.bf16.msra.mxu0 %v688
  %4771 = vmatprep.subr.bf16.mxu0 0
  %4772 = vmatpush1.bf16.msra.mxu0 %v687
  %4773 = vmatprep.subr.bf16.mxu0 0
  %4774 = vmatpush1.bf16.msra.mxu0 %v686
  %4775 = vmatprep.subr.bf16.mxu0 0
  %4776 = vmatpush1.bf16.msra.mxu0 %v685
  %4777 = vmatprep.subr.bf16.mxu0 0
  %4778 = vmatpush1.bf16.msra.mxu0 %v684
  %4779 = vmatprep.subr.bf16.mxu0 0
  %4780 = vmatpush1.bf16.msra.mxu0 %v683
  %4781 = vmatprep.subr.bf16.mxu0 0
  %4782 = vmatpush2.bf16.msra.mxu0 0
  %4783 = vmatprep.subr.bf16.mxu0 0
  %4784 = vmatpush2.bf16.msra.mxu0 0
  %4785 = vmatprep.subr.bf16.mxu0 0
  %4786 = vmatpush2.bf16.msra.mxu0 0
  %4787 = vmatprep.subr.bf16.mxu0 0
  %4788 = vmatpush2.bf16.msra.mxu0 0
  %4789 = vmatprep.subr.bf16.mxu0 0
  %4790 = vmatpush2.bf16.msra.mxu0 0
  %4791 = vmatprep.subr.bf16.mxu0 0
  %4792 = vmatpush2.bf16.msra.mxu0 0
  %4793 = vmatprep.subr.bf16.mxu0 0
  %4794 = vmatpush2.bf16.msra.mxu0 0
  %4795 = vmatprep.subr.bf16.mxu0 0
  %4796 = vmatpush2.bf16.msra.mxu0 0
  %4797 = vmatprep.mubr.bf16.mxu0 0
  %4798 = vmatmul.mubr.bf16.gmra.mxu0 %v131
  %v4799 = vpop.f32.mrf.mxu0
  %v4800 = vadd.f32 0.0, %v4799
  %v4801 = vpop.f32.mrf.mxu0
  %v4802 = vpop.f32.mrf.mxu0
  %v4803 = vpop.f32.mrf.mxu0
  %4804 = vdwg.mxu0
  %v4805 = vadd.f32 %v4764, %v4800
  %4806 = vmatprep.subr.bf16.mxu0 0
  %4807 = vmatpush1.bf16.msra.mxu0 %v321
  %4808 = vmatprep.subr.bf16.mxu0 0
  %4809 = vmatpush1.bf16.msra.mxu0 %v320
  %4810 = vmatprep.subr.bf16.mxu0 0
  %4811 = vmatpush1.bf16.msra.mxu0 %v319
  %4812 = vmatprep.subr.bf16.mxu0 0
  %4813 = vmatpush1.bf16.msra.mxu0 %v318
  %4814 = vmatprep.subr.bf16.mxu0 0
  %4815 = vmatpush1.bf16.msra.mxu0 %v317
  %4816 = vmatprep.subr.bf16.mxu0 0
  %4817 = vmatpush1.bf16.msra.mxu0 %v316
  %4818 = vmatprep.subr.bf16.mxu0 0
  %4819 = vmatpush1.bf16.msra.mxu0 %v315
  %4820 = vmatprep.subr.bf16.mxu0 0
  %4821 = vmatpush1.bf16.msra.mxu0 %v314
  %4822 = vmatprep.subr.bf16.mxu0 0
  %4823 = vmatpush2.bf16.msra.mxu0 0
  %4824 = vmatprep.subr.bf16.mxu0 0
  %4825 = vmatpush2.bf16.msra.mxu0 0
  %4826 = vmatprep.subr.bf16.mxu0 0
  %4827 = vmatpush2.bf16.msra.mxu0 0
  %4828 = vmatprep.subr.bf16.mxu0 0
  %4829 = vmatpush2.bf16.msra.mxu0 0
  %4830 = vmatprep.subr.bf16.mxu0 0
  %4831 = vmatpush2.bf16.msra.mxu0 0
  %4832 = vmatprep.subr.bf16.mxu0 0
  %4833 = vmatpush2.bf16.msra.mxu0 0
  %4834 = vmatprep.subr.bf16.mxu0 0
  %4835 = vmatpush2.bf16.msra.mxu0 0
  %4836 = vmatprep.subr.bf16.mxu0 0
  %4837 = vmatpush2.bf16.msra.mxu0 0
  %4838 = vmatprep.mubr.bf16.mxu0 0
  %4839 = vmatmul.mubr.bf16.gmra.mxu0 %v133
  %v4840 = vpop.f32.mrf.mxu0
  %v4841 = vadd.f32 0.0, %v4840
  %v4842 = vpop.f32.mrf.mxu0
  %v4843 = vpop.f32.mrf.mxu0
  %v4844 = vpop.f32.mrf.mxu0
  %4845 = vdwg.mxu0
  %v4846 = vadd.f32 %v4805, %v4841
  %4847 = vmatprep.subr.bf16.mxu0 0
  %4848 = vmatpush1.bf16.msra.mxu0 %v233
  %4849 = vmatprep.subr.bf16.mxu0 0
  %4850 = vmatpush1.bf16.msra.mxu0 %v232
  %4851 = vmatprep.subr.bf16.mxu0 0
  %4852 = vmatpush1.bf16.msra.mxu0 %v231
  %4853 = vmatprep.subr.bf16.mxu0 0
  %4854 = vmatpush1.bf16.msra.mxu0 %v230
  %4855 = vmatprep.subr.bf16.mxu0 0
  %4856 = vmatpush1.bf16.msra.mxu0 %v229
  %4857 = vmatprep.subr.bf16.mxu0 0
  %4858 = vmatpush1.bf16.msra.mxu0 %v228
  %4859 = vmatprep.subr.bf16.mxu0 0
  %4860 = vmatpush1.bf16.msra.mxu0 %v227
  %4861 = vmatprep.subr.bf16.mxu0 0
  %4862 = vmatpush1.bf16.msra.mxu0 %v226
  %4863 = vmatprep.subr.bf16.mxu0 0
  %4864 = vmatpush2.bf16.msra.mxu0 0
  %4865 = vmatprep.subr.bf16.mxu0 0
  %4866 = vmatpush2.bf16.msra.mxu0 0
  %4867 = vmatprep.subr.bf16.mxu0 0
  %4868 = vmatpush2.bf16.msra.mxu0 0
  %4869 = vmatprep.subr.bf16.mxu0 0
  %4870 = vmatpush2.bf16.msra.mxu0 0
  %4871 = vmatprep.subr.bf16.mxu0 0
  %4872 = vmatpush2.bf16.msra.mxu0 0
  %4873 = vmatprep.subr.bf16.mxu0 0
  %4874 = vmatpush2.bf16.msra.mxu0 0
  %4875 = vmatprep.subr.bf16.mxu0 0
  %4876 = vmatpush2.bf16.msra.mxu0 0
  %4877 = vmatprep.subr.bf16.mxu0 0
  %4878 = vmatpush2.bf16.msra.mxu0 0
  %4879 = vmatprep.mubr.bf16.mxu0 0
  %4880 = vmatmul.mubr.bf16.gmra.mxu0 %v135
  %v4881 = vpop.f32.mrf.mxu0
  %v4882 = vadd.f32 0.0, %v4881
  %v4883 = vpop.f32.mrf.mxu0
  %v4884 = vpop.f32.mrf.mxu0
  %v4885 = vpop.f32.mrf.mxu0
  %4886 = vdwg.mxu0
  %v4887 = vadd.f32 %v4846, %v4882
  %4888 = vmatprep.subr.bf16.mxu0 0
  %4889 = vmatpush1.bf16.msra.mxu0 %v836
  %4890 = vmatprep.subr.bf16.mxu0 0
  %4891 = vmatpush1.bf16.msra.mxu0 %v835
  %4892 = vmatprep.subr.bf16.mxu0 0
  %4893 = vmatpush1.bf16.msra.mxu0 %v834
  %4894 = vmatprep.subr.bf16.mxu0 0
  %4895 = vmatpush1.bf16.msra.mxu0 %v833
  %4896 = vmatprep.subr.bf16.mxu0 0
  %4897 = vmatpush1.bf16.msra.mxu0 %v832
  %4898 = vmatprep.subr.bf16.mxu0 0
  %4899 = vmatpush1.bf16.msra.mxu0 %v831
  %4900 = vmatprep.subr.bf16.mxu0 0
  %4901 = vmatpush1.bf16.msra.mxu0 %v830
  %4902 = vmatprep.subr.bf16.mxu0 0
  %4903 = vmatpush1.bf16.msra.mxu0 %v829
  %4904 = vmatprep.subr.bf16.mxu0 0
  %4905 = vmatpush2.bf16.msra.mxu0 0
  %4906 = vmatprep.subr.bf16.mxu0 0
  %4907 = vmatpush2.bf16.msra.mxu0 0
  %4908 = vmatprep.subr.bf16.mxu0 0
  %4909 = vmatpush2.bf16.msra.mxu0 0
  %4910 = vmatprep.subr.bf16.mxu0 0
  %4911 = vmatpush2.bf16.msra.mxu0 0
  %4912 = vmatprep.subr.bf16.mxu0 0
  %4913 = vmatpush2.bf16.msra.mxu0 0
  %4914 = vmatprep.subr.bf16.mxu0 0
  %4915 = vmatpush2.bf16.msra.mxu0 0
  %4916 = vmatprep.subr.bf16.mxu0 0
  %4917 = vmatpush2.bf16.msra.mxu0 0
  %4918 = vmatprep.subr.bf16.mxu0 0
  %4919 = vmatpush2.bf16.msra.mxu0 0
  %4920 = vmatprep.mubr.bf16.mxu0 0
  %4921 = vmatmul.mubr.bf16.gmra.mxu0 %v147
  %v4922 = vpop.f32.mrf.mxu0
  %v4923 = vadd.f32 0.0, %v4922
  %v4924 = vpop.f32.mrf.mxu0
  %v4925 = vpop.f32.mrf.mxu0
  %v4926 = vpop.f32.mrf.mxu0
  %4927 = vdwg.mxu0
  %v4928 = vadd.f32 %v4887, %v4923
  %4929 = vmatprep.subr.bf16.mxu0 0
  %4930 = vmatpush1.bf16.msra.mxu0 %v426
  %4931 = vmatprep.subr.bf16.mxu0 0
  %4932 = vmatpush1.bf16.msra.mxu0 %v425
  %4933 = vmatprep.subr.bf16.mxu0 0
  %4934 = vmatpush1.bf16.msra.mxu0 %v424
  %4935 = vmatprep.subr.bf16.mxu0 0
  %4936 = vmatpush1.bf16.msra.mxu0 %v423
  %4937 = vmatprep.subr.bf16.mxu0 0
  %4938 = vmatpush1.bf16.msra.mxu0 %v422
  %4939 = vmatprep.subr.bf16.mxu0 0
  %4940 = vmatpush1.bf16.msra.mxu0 %v421
  %4941 = vmatprep.subr.bf16.mxu0 0
  %4942 = vmatpush1.bf16.msra.mxu0 %v420
  %4943 = vmatprep.subr.bf16.mxu0 0
  %4944 = vmatpush1.bf16.msra.mxu0 %v419
  %4945 = vmatprep.subr.bf16.mxu0 0
  %4946 = vmatpush2.bf16.msra.mxu0 0
  %4947 = vmatprep.subr.bf16.mxu0 0
  %4948 = vmatpush2.bf16.msra.mxu0 0
  %4949 = vmatprep.subr.bf16.mxu0 0
  %4950 = vmatpush2.bf16.msra.mxu0 0
  %4951 = vmatprep.subr.bf16.mxu0 0
  %4952 = vmatpush2.bf16.msra.mxu0 0
  %4953 = vmatprep.subr.bf16.mxu0 0
  %4954 = vmatpush2.bf16.msra.mxu0 0
  %4955 = vmatprep.subr.bf16.mxu0 0
  %4956 = vmatpush2.bf16.msra.mxu0 0
  %4957 = vmatprep.subr.bf16.mxu0 0
  %4958 = vmatpush2.bf16.msra.mxu0 0
  %4959 = vmatprep.subr.bf16.mxu0 0
  %4960 = vmatpush2.bf16.msra.mxu0 0
  %4961 = vmatprep.mubr.bf16.mxu0 0
  %4962 = vmatmul.mubr.bf16.gmra.mxu0 %v149
  %v4963 = vpop.f32.mrf.mxu0
  %v4964 = vadd.f32 0.0, %v4963
  %v4965 = vpop.f32.mrf.mxu0
  %v4966 = vpop.f32.mrf.mxu0
  %v4967 = vpop.f32.mrf.mxu0
  %4968 = vdwg.mxu0
  %v4969 = vadd.f32 %v4928, %v4964
  %4970 = vmatprep.subr.bf16.mxu0 0
  %4971 = vmatpush1.bf16.msra.mxu0 %v532
  %4972 = vmatprep.subr.bf16.mxu0 0
  %4973 = vmatpush1.bf16.msra.mxu0 %v531
  %4974 = vmatprep.subr.bf16.mxu0 0
  %4975 = vmatpush1.bf16.msra.mxu0 %v530
  %4976 = vmatprep.subr.bf16.mxu0 0
  %4977 = vmatpush1.bf16.msra.mxu0 %v529
  %4978 = vmatprep.subr.bf16.mxu0 0
  %4979 = vmatpush1.bf16.msra.mxu0 %v528
  %4980 = vmatprep.subr.bf16.mxu0 0
  %4981 = vmatpush1.bf16.msra.mxu0 %v527
  %4982 = vmatprep.subr.bf16.mxu0 0
  %4983 = vmatpush1.bf16.msra.mxu0 %v526
  %4984 = vmatprep.subr.bf16.mxu0 0
  %4985 = vmatpush1.bf16.msra.mxu0 %v525
  %4986 = vmatprep.subr.bf16.mxu0 0
  %4987 = vmatpush2.bf16.msra.mxu0 0
  %4988 = vmatprep.subr.bf16.mxu0 0
  %4989 = vmatpush2.bf16.msra.mxu0 0
  %4990 = vmatprep.subr.bf16.mxu0 0
  %4991 = vmatpush2.bf16.msra.mxu0 0
  %4992 = vmatprep.subr.bf16.mxu0 0
  %4993 = vmatpush2.bf16.msra.mxu0 0
  %4994 = vmatprep.subr.bf16.mxu0 0
  %4995 = vmatpush2.bf16.msra.mxu0 0
  %4996 = vmatprep.subr.bf16.mxu0 0
  %4997 = vmatpush2.bf16.msra.mxu0 0
  %4998 = vmatprep.subr.bf16.mxu0 0
  %4999 = vmatpush2.bf16.msra.mxu0 0
  %5000 = vmatprep.subr.bf16.mxu0 0
  %5001 = vmatpush2.bf16.msra.mxu0 0
  %5002 = vmatprep.mubr.bf16.mxu0 0
  %5003 = vmatmul.mubr.bf16.gmra.mxu0 %v151
  %v5004 = vpop.f32.mrf.mxu0
  %v5005 = vadd.f32 0.0, %v5004
  %v5006 = vpop.f32.mrf.mxu0
  %v5007 = vpop.f32.mrf.mxu0
  %v5008 = vpop.f32.mrf.mxu0
  %5009 = vdwg.mxu0
  %v5010 = vadd.f32 %v4969, %v5005
  %v5011 = vadd.f32 %v5010, %v587
  %vm5012 = vcmp.ge.f32.partialorder %v5011, 0.0
  %v5013 = vmul.f32 %v5011, 0.01
  %v5014 = vsel %vm5012, %v5011, %v5013
  %v5015 = vpack.c.bf16 %v5014, %v5014
  %5016 = vmatprep.subr.bf16.mxu0 0
  %5017 = vmatpush1.bf16.msra.mxu0 %v1632
  %5018 = vmatprep.subr.bf16.mxu0 0
  %5019 = vmatpush1.bf16.msra.mxu0 %v1631
  %5020 = vmatprep.subr.bf16.mxu0 0
  %5021 = vmatpush1.bf16.msra.mxu0 %v1630
  %5022 = vmatprep.subr.bf16.mxu0 0
  %5023 = vmatpush1.bf16.msra.mxu0 %v1629
  %5024 = vmatprep.subr.bf16.mxu0 0
  %5025 = vmatpush1.bf16.msra.mxu0 %v1628
  %5026 = vmatprep.subr.bf16.mxu0 0
  %5027 = vmatpush1.bf16.msra.mxu0 %v1627
  %5028 = vmatprep.subr.bf16.mxu0 0
  %5029 = vmatpush1.bf16.msra.mxu0 %v1626
  %5030 = vmatprep.subr.bf16.mxu0 0
  %5031 = vmatpush1.bf16.msra.mxu0 %v1625
  %5032 = vmatprep.subr.bf16.mxu0 0
  %5033 = vmatpush2.bf16.msra.mxu0 0
  %5034 = vmatprep.subr.bf16.mxu0 0
  %5035 = vmatpush2.bf16.msra.mxu0 0
  %5036 = vmatprep.subr.bf16.mxu0 0
  %5037 = vmatpush2.bf16.msra.mxu0 0
  %5038 = vmatprep.subr.bf16.mxu0 0
  %5039 = vmatpush2.bf16.msra.mxu0 0
  %5040 = vmatprep.subr.bf16.mxu0 0
  %5041 = vmatpush2.bf16.msra.mxu0 0
  %5042 = vmatprep.subr.bf16.mxu0 0
  %5043 = vmatpush2.bf16.msra.mxu0 0
  %5044 = vmatprep.subr.bf16.mxu0 0
  %5045 = vmatpush2.bf16.msra.mxu0 0
  %5046 = vmatprep.subr.bf16.mxu0 0
  %5047 = vmatpush2.bf16.msra.mxu0 0
  %5048 = vmatprep.mubr.bf16.mxu0 0
  %5049 = vmatmul.mubr.bf16.gmra.mxu0 %v121
  %v5050 = vpop.f32.mrf.mxu0
  %v5051 = vadd.f32 0.0, %v5050
  %v5052 = vpop.f32.mrf.mxu0
  %v5053 = vpop.f32.mrf.mxu0
  %v5054 = vpop.f32.mrf.mxu0
  %5055 = vdwg.mxu0
  %5056 = vmatprep.subr.bf16.mxu0 0
  %5057 = vmatpush1.bf16.msra.mxu0 %v1945
  %5058 = vmatprep.subr.bf16.mxu0 0
  %5059 = vmatpush1.bf16.msra.mxu0 %v1944
  %5060 = vmatprep.subr.bf16.mxu0 0
  %5061 = vmatpush1.bf16.msra.mxu0 %v1943
  %5062 = vmatprep.subr.bf16.mxu0 0
  %5063 = vmatpush1.bf16.msra.mxu0 %v1942
  %5064 = vmatprep.subr.bf16.mxu0 0
  %5065 = vmatpush1.bf16.msra.mxu0 %v1941
  %5066 = vmatprep.subr.bf16.mxu0 0
  %5067 = vmatpush1.bf16.msra.mxu0 %v1940
  %5068 = vmatprep.subr.bf16.mxu0 0
  %5069 = vmatpush1.bf16.msra.mxu0 %v1939
  %5070 = vmatprep.subr.bf16.mxu0 0
  %5071 = vmatpush1.bf16.msra.mxu0 %v1938
  %5072 = vmatprep.subr.bf16.mxu0 0
  %5073 = vmatpush2.bf16.msra.mxu0 0
  %5074 = vmatprep.subr.bf16.mxu0 0
  %5075 = vmatpush2.bf16.msra.mxu0 0
  %5076 = vmatprep.subr.bf16.mxu0 0
  %5077 = vmatpush2.bf16.msra.mxu0 0
  %5078 = vmatprep.subr.bf16.mxu0 0
  %5079 = vmatpush2.bf16.msra.mxu0 0
  %5080 = vmatprep.subr.bf16.mxu0 0
  %5081 = vmatpush2.bf16.msra.mxu0 0
  %5082 = vmatprep.subr.bf16.mxu0 0
  %5083 = vmatpush2.bf16.msra.mxu0 0
  %5084 = vmatprep.subr.bf16.mxu0 0
  %5085 = vmatpush2.bf16.msra.mxu0 0
  %5086 = vmatprep.subr.bf16.mxu0 0
  %5087 = vmatpush2.bf16.msra.mxu0 0
  %5088 = vmatprep.mubr.bf16.mxu0 0
  %5089 = vmatmul.mubr.bf16.gmra.mxu0 %v119
  %v5090 = vpop.f32.mrf.mxu0
  %v5091 = vadd.f32 %v5051, %v5090
  %v5092 = vpop.f32.mrf.mxu0
  %v5093 = vpop.f32.mrf.mxu0
  %v5094 = vpop.f32.mrf.mxu0
  %5095 = vdwg.mxu0
  %5096 = vmatprep.subr.bf16.mxu0 0
  %5097 = vmatpush1.bf16.msra.mxu0 %v1544
  %5098 = vmatprep.subr.bf16.mxu0 0
  %5099 = vmatpush1.bf16.msra.mxu0 %v1543
  %5100 = vmatprep.subr.bf16.mxu0 0
  %5101 = vmatpush1.bf16.msra.mxu0 %v1542
  %5102 = vmatprep.subr.bf16.mxu0 0
  %5103 = vmatpush1.bf16.msra.mxu0 %v1541
  %5104 = vmatprep.subr.bf16.mxu0 0
  %5105 = vmatpush1.bf16.msra.mxu0 %v1540
  %5106 = vmatprep.subr.bf16.mxu0 0
  %5107 = vmatpush1.bf16.msra.mxu0 %v1539
  %5108 = vmatprep.subr.bf16.mxu0 0
  %5109 = vmatpush1.bf16.msra.mxu0 %v1538
  %5110 = vmatprep.subr.bf16.mxu0 0
  %5111 = vmatpush1.bf16.msra.mxu0 %v1537
  %5112 = vmatprep.subr.bf16.mxu0 0
  %5113 = vmatpush2.bf16.msra.mxu0 0
  %5114 = vmatprep.subr.bf16.mxu0 0
  %5115 = vmatpush2.bf16.msra.mxu0 0
  %5116 = vmatprep.subr.bf16.mxu0 0
  %5117 = vmatpush2.bf16.msra.mxu0 0
  %5118 = vmatprep.subr.bf16.mxu0 0
  %5119 = vmatpush2.bf16.msra.mxu0 0
  %5120 = vmatprep.subr.bf16.mxu0 0
  %5121 = vmatpush2.bf16.msra.mxu0 0
  %5122 = vmatprep.subr.bf16.mxu0 0
  %5123 = vmatpush2.bf16.msra.mxu0 0
  %5124 = vmatprep.subr.bf16.mxu0 0
  %5125 = vmatpush2.bf16.msra.mxu0 0
  %5126 = vmatprep.subr.bf16.mxu0 0
  %5127 = vmatpush2.bf16.msra.mxu0 0
  %5128 = vmatprep.mubr.bf16.mxu0 0
  %5129 = vmatmul.mubr.bf16.gmra.mxu0 %v123
  %v5130 = vpop.f32.mrf.mxu0
  %v5131 = vadd.f32 0.0, %v5130
  %v5132 = vpop.f32.mrf.mxu0
  %v5133 = vpop.f32.mrf.mxu0
  %v5134 = vpop.f32.mrf.mxu0
  %5135 = vdwg.mxu0
  %v5136 = vadd.f32 %v5091, %v5131
  %5137 = vmatprep.subr.bf16.mxu0 0
  %5138 = vmatpush1.bf16.msra.mxu0 %v690
  %5139 = vmatprep.subr.bf16.mxu0 0
  %5140 = vmatpush1.bf16.msra.mxu0 %v689
  %5141 = vmatprep.subr.bf16.mxu0 0
  %5142 = vmatpush1.bf16.msra.mxu0 %v688
  %5143 = vmatprep.subr.bf16.mxu0 0
  %5144 = vmatpush1.bf16.msra.mxu0 %v687
  %5145 = vmatprep.subr.bf16.mxu0 0
  %5146 = vmatpush1.bf16.msra.mxu0 %v686
  %5147 = vmatprep.subr.bf16.mxu0 0
  %5148 = vmatpush1.bf16.msra.mxu0 %v685
  %5149 = vmatprep.subr.bf16.mxu0 0
  %5150 = vmatpush1.bf16.msra.mxu0 %v684
  %5151 = vmatprep.subr.bf16.mxu0 0
  %5152 = vmatpush1.bf16.msra.mxu0 %v683
  %5153 = vmatprep.subr.bf16.mxu0 0
  %5154 = vmatpush2.bf16.msra.mxu0 0
  %5155 = vmatprep.subr.bf16.mxu0 0
  %5156 = vmatpush2.bf16.msra.mxu0 0
  %5157 = vmatprep.subr.bf16.mxu0 0
  %5158 = vmatpush2.bf16.msra.mxu0 0
  %5159 = vmatprep.subr.bf16.mxu0 0
  %5160 = vmatpush2.bf16.msra.mxu0 0
  %5161 = vmatprep.subr.bf16.mxu0 0
  %5162 = vmatpush2.bf16.msra.mxu0 0
  %5163 = vmatprep.subr.bf16.mxu0 0
  %5164 = vmatpush2.bf16.msra.mxu0 0
  %5165 = vmatprep.subr.bf16.mxu0 0
  %5166 = vmatpush2.bf16.msra.mxu0 0
  %5167 = vmatprep.subr.bf16.mxu0 0
  %5168 = vmatpush2.bf16.msra.mxu0 0
  %5169 = vmatprep.mubr.bf16.mxu0 0
  %5170 = vmatmul.mubr.bf16.gmra.mxu0 %v135
  %v5171 = vpop.f32.mrf.mxu0
  %v5172 = vadd.f32 0.0, %v5171
  %v5173 = vpop.f32.mrf.mxu0
  %v5174 = vpop.f32.mrf.mxu0
  %v5175 = vpop.f32.mrf.mxu0
  %5176 = vdwg.mxu0
  %v5177 = vadd.f32 %v5136, %v5172
  %5178 = vmatprep.subr.bf16.mxu0 0
  %5179 = vmatpush1.bf16.msra.mxu0 %v321
  %5180 = vmatprep.subr.bf16.mxu0 0
  %5181 = vmatpush1.bf16.msra.mxu0 %v320
  %5182 = vmatprep.subr.bf16.mxu0 0
  %5183 = vmatpush1.bf16.msra.mxu0 %v319
  %5184 = vmatprep.subr.bf16.mxu0 0
  %5185 = vmatpush1.bf16.msra.mxu0 %v318
  %5186 = vmatprep.subr.bf16.mxu0 0
  %5187 = vmatpush1.bf16.msra.mxu0 %v317
  %5188 = vmatprep.subr.bf16.mxu0 0
  %5189 = vmatpush1.bf16.msra.mxu0 %v316
  %5190 = vmatprep.subr.bf16.mxu0 0
  %5191 = vmatpush1.bf16.msra.mxu0 %v315
  %5192 = vmatprep.subr.bf16.mxu0 0
  %5193 = vmatpush1.bf16.msra.mxu0 %v314
  %5194 = vmatprep.subr.bf16.mxu0 0
  %5195 = vmatpush2.bf16.msra.mxu0 0
  %5196 = vmatprep.subr.bf16.mxu0 0
  %5197 = vmatpush2.bf16.msra.mxu0 0
  %5198 = vmatprep.subr.bf16.mxu0 0
  %5199 = vmatpush2.bf16.msra.mxu0 0
  %5200 = vmatprep.subr.bf16.mxu0 0
  %5201 = vmatpush2.bf16.msra.mxu0 0
  %5202 = vmatprep.subr.bf16.mxu0 0
  %5203 = vmatpush2.bf16.msra.mxu0 0
  %5204 = vmatprep.subr.bf16.mxu0 0
  %5205 = vmatpush2.bf16.msra.mxu0 0
  %5206 = vmatprep.subr.bf16.mxu0 0
  %5207 = vmatpush2.bf16.msra.mxu0 0
  %5208 = vmatprep.subr.bf16.mxu0 0
  %5209 = vmatpush2.bf16.msra.mxu0 0
  %5210 = vmatprep.mubr.bf16.mxu0 0
  %5211 = vmatmul.mubr.bf16.gmra.mxu0 %v137
  %v5212 = vpop.f32.mrf.mxu0
  %v5213 = vadd.f32 0.0, %v5212
  %v5214 = vpop.f32.mrf.mxu0
  %v5215 = vpop.f32.mrf.mxu0
  %v5216 = vpop.f32.mrf.mxu0
  %5217 = vdwg.mxu0
  %v5218 = vadd.f32 %v5177, %v5213
  %5219 = vmatprep.subr.bf16.mxu0 0
  %5220 = vmatpush1.bf16.msra.mxu0 %v233
  %5221 = vmatprep.subr.bf16.mxu0 0
  %5222 = vmatpush1.bf16.msra.mxu0 %v232
  %5223 = vmatprep.subr.bf16.mxu0 0
  %5224 = vmatpush1.bf16.msra.mxu0 %v231
  %5225 = vmatprep.subr.bf16.mxu0 0
  %5226 = vmatpush1.bf16.msra.mxu0 %v230
  %5227 = vmatprep.subr.bf16.mxu0 0
  %5228 = vmatpush1.bf16.msra.mxu0 %v229
  %5229 = vmatprep.subr.bf16.mxu0 0
  %5230 = vmatpush1.bf16.msra.mxu0 %v228
  %5231 = vmatprep.subr.bf16.mxu0 0
  %5232 = vmatpush1.bf16.msra.mxu0 %v227
  %5233 = vmatprep.subr.bf16.mxu0 0
  %5234 = vmatpush1.bf16.msra.mxu0 %v226
  %5235 = vmatprep.subr.bf16.mxu0 0
  %5236 = vmatpush2.bf16.msra.mxu0 0
  %5237 = vmatprep.subr.bf16.mxu0 0
  %5238 = vmatpush2.bf16.msra.mxu0 0
  %5239 = vmatprep.subr.bf16.mxu0 0
  %5240 = vmatpush2.bf16.msra.mxu0 0
  %5241 = vmatprep.subr.bf16.mxu0 0
  %5242 = vmatpush2.bf16.msra.mxu0 0
  %5243 = vmatprep.subr.bf16.mxu0 0
  %5244 = vmatpush2.bf16.msra.mxu0 0
  %5245 = vmatprep.subr.bf16.mxu0 0
  %5246 = vmatpush2.bf16.msra.mxu0 0
  %5247 = vmatprep.subr.bf16.mxu0 0
  %5248 = vmatpush2.bf16.msra.mxu0 0
  %5249 = vmatprep.subr.bf16.mxu0 0
  %5250 = vmatpush2.bf16.msra.mxu0 0
  %5251 = vmatprep.mubr.bf16.mxu0 0
  %5252 = vmatmul.mubr.bf16.gmra.mxu0 %v139
  %v5253 = vpop.f32.mrf.mxu0
  %v5254 = vadd.f32 0.0, %v5253
  %v5255 = vpop.f32.mrf.mxu0
  %v5256 = vpop.f32.mrf.mxu0
  %v5257 = vpop.f32.mrf.mxu0
  %5258 = vdwg.mxu0
  %v5259 = vadd.f32 %v5218, %v5254
  %5260 = vmatprep.subr.bf16.mxu0 0
  %5261 = vmatpush1.bf16.msra.mxu0 %v836
  %5262 = vmatprep.subr.bf16.mxu0 0
  %5263 = vmatpush1.bf16.msra.mxu0 %v835
  %5264 = vmatprep.subr.bf16.mxu0 0
  %5265 = vmatpush1.bf16.msra.mxu0 %v834
  %5266 = vmatprep.subr.bf16.mxu0 0
  %5267 = vmatpush1.bf16.msra.mxu0 %v833
  %5268 = vmatprep.subr.bf16.mxu0 0
  %5269 = vmatpush1.bf16.msra.mxu0 %v832
  %5270 = vmatprep.subr.bf16.mxu0 0
  %5271 = vmatpush1.bf16.msra.mxu0 %v831
  %5272 = vmatprep.subr.bf16.mxu0 0
  %5273 = vmatpush1.bf16.msra.mxu0 %v830
  %5274 = vmatprep.subr.bf16.mxu0 0
  %5275 = vmatpush1.bf16.msra.mxu0 %v829
  %5276 = vmatprep.subr.bf16.mxu0 0
  %5277 = vmatpush2.bf16.msra.mxu0 0
  %5278 = vmatprep.subr.bf16.mxu0 0
  %5279 = vmatpush2.bf16.msra.mxu0 0
  %5280 = vmatprep.subr.bf16.mxu0 0
  %5281 = vmatpush2.bf16.msra.mxu0 0
  %5282 = vmatprep.subr.bf16.mxu0 0
  %5283 = vmatpush2.bf16.msra.mxu0 0
  %5284 = vmatprep.subr.bf16.mxu0 0
  %5285 = vmatpush2.bf16.msra.mxu0 0
  %5286 = vmatprep.subr.bf16.mxu0 0
  %5287 = vmatpush2.bf16.msra.mxu0 0
  %5288 = vmatprep.subr.bf16.mxu0 0
  %5289 = vmatpush2.bf16.msra.mxu0 0
  %5290 = vmatprep.subr.bf16.mxu0 0
  %5291 = vmatpush2.bf16.msra.mxu0 0
  %5292 = vmatprep.mubr.bf16.mxu0 0
  %5293 = vmatmul.mubr.bf16.gmra.mxu0 %v151
  %v5294 = vpop.f32.mrf.mxu0
  %v5295 = vadd.f32 0.0, %v5294
  %v5296 = vpop.f32.mrf.mxu0
  %v5297 = vpop.f32.mrf.mxu0
  %v5298 = vpop.f32.mrf.mxu0
  %5299 = vdwg.mxu0
  %v5300 = vadd.f32 %v5259, %v5295
  %5301 = vmatprep.subr.bf16.mxu0 0
  %5302 = vmatpush1.bf16.msra.mxu0 %v426
  %5303 = vmatprep.subr.bf16.mxu0 0
  %5304 = vmatpush1.bf16.msra.mxu0 %v425
  %5305 = vmatprep.subr.bf16.mxu0 0
  %5306 = vmatpush1.bf16.msra.mxu0 %v424
  %5307 = vmatprep.subr.bf16.mxu0 0
  %5308 = vmatpush1.bf16.msra.mxu0 %v423
  %5309 = vmatprep.subr.bf16.mxu0 0
  %5310 = vmatpush1.bf16.msra.mxu0 %v422
  %5311 = vmatprep.subr.bf16.mxu0 0
  %5312 = vmatpush1.bf16.msra.mxu0 %v421
  %5313 = vmatprep.subr.bf16.mxu0 0
  %5314 = vmatpush1.bf16.msra.mxu0 %v420
  %5315 = vmatprep.subr.bf16.mxu0 0
  %5316 = vmatpush1.bf16.msra.mxu0 %v419
  %5317 = vmatprep.subr.bf16.mxu0 0
  %5318 = vmatpush2.bf16.msra.mxu0 0
  %5319 = vmatprep.subr.bf16.mxu0 0
  %5320 = vmatpush2.bf16.msra.mxu0 0
  %5321 = vmatprep.subr.bf16.mxu0 0
  %5322 = vmatpush2.bf16.msra.mxu0 0
  %5323 = vmatprep.subr.bf16.mxu0 0
  %5324 = vmatpush2.bf16.msra.mxu0 0
  %5325 = vmatprep.subr.bf16.mxu0 0
  %5326 = vmatpush2.bf16.msra.mxu0 0
  %5327 = vmatprep.subr.bf16.mxu0 0
  %5328 = vmatpush2.bf16.msra.mxu0 0
  %5329 = vmatprep.subr.bf16.mxu0 0
  %5330 = vmatpush2.bf16.msra.mxu0 0
  %5331 = vmatprep.subr.bf16.mxu0 0
  %5332 = vmatpush2.bf16.msra.mxu0 0
  %5333 = vmatprep.mubr.bf16.mxu0 0
  %5334 = vmatmul.mubr.bf16.gmra.mxu0 %v153
  %v5335 = vpop.f32.mrf.mxu0
  %v5336 = vadd.f32 0.0, %v5335
  %v5337 = vpop.f32.mrf.mxu0
  %v5338 = vpop.f32.mrf.mxu0
  %v5339 = vpop.f32.mrf.mxu0
  %5340 = vdwg.mxu0
  %v5341 = vadd.f32 %v5300, %v5336
  %5342 = vmatprep.subr.bf16.mxu0 0
  %5343 = vmatpush1.bf16.msra.mxu0 %v532
  %5344 = vmatprep.subr.bf16.mxu0 0
  %5345 = vmatpush1.bf16.msra.mxu0 %v531
  %5346 = vmatprep.subr.bf16.mxu0 0
  %5347 = vmatpush1.bf16.msra.mxu0 %v530
  %5348 = vmatprep.subr.bf16.mxu0 0
  %5349 = vmatpush1.bf16.msra.mxu0 %v529
  %5350 = vmatprep.subr.bf16.mxu0 0
  %5351 = vmatpush1.bf16.msra.mxu0 %v528
  %5352 = vmatprep.subr.bf16.mxu0 0
  %5353 = vmatpush1.bf16.msra.mxu0 %v527
  %5354 = vmatprep.subr.bf16.mxu0 0
  %5355 = vmatpush1.bf16.msra.mxu0 %v526
  %5356 = vmatprep.subr.bf16.mxu0 0
  %5357 = vmatpush1.bf16.msra.mxu0 %v525
  %5358 = vmatprep.subr.bf16.mxu0 0
  %5359 = vmatpush2.bf16.msra.mxu0 0
  %5360 = vmatprep.subr.bf16.mxu0 0
  %5361 = vmatpush2.bf16.msra.mxu0 0
  %5362 = vmatprep.subr.bf16.mxu0 0
  %5363 = vmatpush2.bf16.msra.mxu0 0
  %5364 = vmatprep.subr.bf16.mxu0 0
  %5365 = vmatpush2.bf16.msra.mxu0 0
  %5366 = vmatprep.subr.bf16.mxu0 0
  %5367 = vmatpush2.bf16.msra.mxu0 0
  %5368 = vmatprep.subr.bf16.mxu0 0
  %5369 = vmatpush2.bf16.msra.mxu0 0
  %5370 = vmatprep.subr.bf16.mxu0 0
  %5371 = vmatpush2.bf16.msra.mxu0 0
  %5372 = vmatprep.subr.bf16.mxu0 0
  %5373 = vmatpush2.bf16.msra.mxu0 0
  %5374 = vmatprep.mubr.bf16.mxu0 0
  %5375 = vmatmul.mubr.bf16.gmra.mxu0 %v155
  %v5376 = vpop.f32.mrf.mxu0
  %v5377 = vadd.f32 0.0, %v5376
  %v5378 = vpop.f32.mrf.mxu0
  %v5379 = vpop.f32.mrf.mxu0
  %v5380 = vpop.f32.mrf.mxu0
  %5381 = vdwg.mxu0
  %v5382 = vadd.f32 %v5341, %v5377
  %v5383 = vadd.f32 %v5382, %v587
  %vm5384 = vcmp.ge.f32.partialorder %v5383, 0.0
  %v5385 = vmul.f32 %v5383, 0.01
  %v5386 = vsel %vm5384, %v5383, %v5385
  %v5387 = vpack.c.bf16 %v5386, %v5386
  %5388 = vmatprep.subr.bf16.mxu0 0
  %5389 = vmatpush1.bf16.msra.mxu0 %v1632
  %5390 = vmatprep.subr.bf16.mxu0 0
  %5391 = vmatpush1.bf16.msra.mxu0 %v1631
  %5392 = vmatprep.subr.bf16.mxu0 0
  %5393 = vmatpush1.bf16.msra.mxu0 %v1630
  %5394 = vmatprep.subr.bf16.mxu0 0
  %5395 = vmatpush1.bf16.msra.mxu0 %v1629
  %5396 = vmatprep.subr.bf16.mxu0 0
  %5397 = vmatpush1.bf16.msra.mxu0 %v1628
  %5398 = vmatprep.subr.bf16.mxu0 0
  %5399 = vmatpush1.bf16.msra.mxu0 %v1627
  %5400 = vmatprep.subr.bf16.mxu0 0
  %5401 = vmatpush1.bf16.msra.mxu0 %v1626
  %5402 = vmatprep.subr.bf16.mxu0 0
  %5403 = vmatpush1.bf16.msra.mxu0 %v1625
  %5404 = vmatprep.subr.bf16.mxu0 0
  %5405 = vmatpush2.bf16.msra.mxu0 0
  %5406 = vmatprep.subr.bf16.mxu0 0
  %5407 = vmatpush2.bf16.msra.mxu0 0
  %5408 = vmatprep.subr.bf16.mxu0 0
  %5409 = vmatpush2.bf16.msra.mxu0 0
  %5410 = vmatprep.subr.bf16.mxu0 0
  %5411 = vmatpush2.bf16.msra.mxu0 0
  %5412 = vmatprep.subr.bf16.mxu0 0
  %5413 = vmatpush2.bf16.msra.mxu0 0
  %5414 = vmatprep.subr.bf16.mxu0 0
  %5415 = vmatpush2.bf16.msra.mxu0 0
  %5416 = vmatprep.subr.bf16.mxu0 0
  %5417 = vmatpush2.bf16.msra.mxu0 0
  %5418 = vmatprep.subr.bf16.mxu0 0
  %5419 = vmatpush2.bf16.msra.mxu0 0
  %5420 = vmatprep.mubr.bf16.mxu0 0
  %5421 = vmatmul.mubr.bf16.gmra.mxu0 %v125
  %v5422 = vpop.f32.mrf.mxu0
  %v5423 = vadd.f32 0.0, %v5422
  %v5424 = vpop.f32.mrf.mxu0
  %v5425 = vpop.f32.mrf.mxu0
  %v5426 = vpop.f32.mrf.mxu0
  %5427 = vdwg.mxu0
  %5428 = vmatprep.subr.bf16.mxu0 0
  %5429 = vmatpush1.bf16.msra.mxu0 %v1945
  %5430 = vmatprep.subr.bf16.mxu0 0
  %5431 = vmatpush1.bf16.msra.mxu0 %v1944
  %5432 = vmatprep.subr.bf16.mxu0 0
  %5433 = vmatpush1.bf16.msra.mxu0 %v1943
  %5434 = vmatprep.subr.bf16.mxu0 0
  %5435 = vmatpush1.bf16.msra.mxu0 %v1942
  %5436 = vmatprep.subr.bf16.mxu0 0
  %5437 = vmatpush1.bf16.msra.mxu0 %v1941
  %5438 = vmatprep.subr.bf16.mxu0 0
  %5439 = vmatpush1.bf16.msra.mxu0 %v1940
  %5440 = vmatprep.subr.bf16.mxu0 0
  %5441 = vmatpush1.bf16.msra.mxu0 %v1939
  %5442 = vmatprep.subr.bf16.mxu0 0
  %5443 = vmatpush1.bf16.msra.mxu0 %v1938
  %5444 = vmatprep.subr.bf16.mxu0 0
  %5445 = vmatpush2.bf16.msra.mxu0 0
  %5446 = vmatprep.subr.bf16.mxu0 0
  %5447 = vmatpush2.bf16.msra.mxu0 0
  %5448 = vmatprep.subr.bf16.mxu0 0
  %5449 = vmatpush2.bf16.msra.mxu0 0
  %5450 = vmatprep.subr.bf16.mxu0 0
  %5451 = vmatpush2.bf16.msra.mxu0 0
  %5452 = vmatprep.subr.bf16.mxu0 0
  %5453 = vmatpush2.bf16.msra.mxu0 0
  %5454 = vmatprep.subr.bf16.mxu0 0
  %5455 = vmatpush2.bf16.msra.mxu0 0
  %5456 = vmatprep.subr.bf16.mxu0 0
  %5457 = vmatpush2.bf16.msra.mxu0 0
  %5458 = vmatprep.subr.bf16.mxu0 0
  %5459 = vmatpush2.bf16.msra.mxu0 0
  %5460 = vmatprep.mubr.bf16.mxu0 0
  %5461 = vmatmul.mubr.bf16.gmra.mxu0 %v123
  %v5462 = vpop.f32.mrf.mxu0
  %v5463 = vadd.f32 %v5423, %v5462
  %v5464 = vpop.f32.mrf.mxu0
  %v5465 = vpop.f32.mrf.mxu0
  %v5466 = vpop.f32.mrf.mxu0
  %5467 = vdwg.mxu0
  %5468 = vmatprep.subr.bf16.mxu0 0
  %5469 = vmatpush1.bf16.msra.mxu0 %v1544
  %5470 = vmatprep.subr.bf16.mxu0 0
  %5471 = vmatpush1.bf16.msra.mxu0 %v1543
  %5472 = vmatprep.subr.bf16.mxu0 0
  %5473 = vmatpush1.bf16.msra.mxu0 %v1542
  %5474 = vmatprep.subr.bf16.mxu0 0
  %5475 = vmatpush1.bf16.msra.mxu0 %v1541
  %5476 = vmatprep.subr.bf16.mxu0 0
  %5477 = vmatpush1.bf16.msra.mxu0 %v1540
  %5478 = vmatprep.subr.bf16.mxu0 0
  %5479 = vmatpush1.bf16.msra.mxu0 %v1539
  %5480 = vmatprep.subr.bf16.mxu0 0
  %5481 = vmatpush1.bf16.msra.mxu0 %v1538
  %5482 = vmatprep.subr.bf16.mxu0 0
  %5483 = vmatpush1.bf16.msra.mxu0 %v1537
  %5484 = vmatprep.subr.bf16.mxu0 0
  %5485 = vmatpush2.bf16.msra.mxu0 0
  %5486 = vmatprep.subr.bf16.mxu0 0
  %5487 = vmatpush2.bf16.msra.mxu0 0
  %5488 = vmatprep.subr.bf16.mxu0 0
  %5489 = vmatpush2.bf16.msra.mxu0 0
  %5490 = vmatprep.subr.bf16.mxu0 0
  %5491 = vmatpush2.bf16.msra.mxu0 0
  %5492 = vmatprep.subr.bf16.mxu0 0
  %5493 = vmatpush2.bf16.msra.mxu0 0
  %5494 = vmatprep.subr.bf16.mxu0 0
  %5495 = vmatpush2.bf16.msra.mxu0 0
  %5496 = vmatprep.subr.bf16.mxu0 0
  %5497 = vmatpush2.bf16.msra.mxu0 0
  %5498 = vmatprep.subr.bf16.mxu0 0
  %5499 = vmatpush2.bf16.msra.mxu0 0
  %5500 = vmatprep.mubr.bf16.mxu0 0
  %5501 = vmatmul.mubr.bf16.gmra.mxu0 %v127
  %v5502 = vpop.f32.mrf.mxu0
  %v5503 = vadd.f32 0.0, %v5502
  %v5504 = vpop.f32.mrf.mxu0
  %v5505 = vpop.f32.mrf.mxu0
  %v5506 = vpop.f32.mrf.mxu0
  %5507 = vdwg.mxu0
  %v5508 = vadd.f32 %v5463, %v5503
  %5509 = vmatprep.subr.bf16.mxu0 0
  %5510 = vmatpush1.bf16.msra.mxu0 %v690
  %5511 = vmatprep.subr.bf16.mxu0 0
  %5512 = vmatpush1.bf16.msra.mxu0 %v689
  %5513 = vmatprep.subr.bf16.mxu0 0
  %5514 = vmatpush1.bf16.msra.mxu0 %v688
  %5515 = vmatprep.subr.bf16.mxu0 0
  %5516 = vmatpush1.bf16.msra.mxu0 %v687
  %5517 = vmatprep.subr.bf16.mxu0 0
  %5518 = vmatpush1.bf16.msra.mxu0 %v686
  %5519 = vmatprep.subr.bf16.mxu0 0
  %5520 = vmatpush1.bf16.msra.mxu0 %v685
  %5521 = vmatprep.subr.bf16.mxu0 0
  %5522 = vmatpush1.bf16.msra.mxu0 %v684
  %5523 = vmatprep.subr.bf16.mxu0 0
  %5524 = vmatpush1.bf16.msra.mxu0 %v683
  %5525 = vmatprep.subr.bf16.mxu0 0
  %5526 = vmatpush2.bf16.msra.mxu0 0
  %5527 = vmatprep.subr.bf16.mxu0 0
  %5528 = vmatpush2.bf16.msra.mxu0 0
  %5529 = vmatprep.subr.bf16.mxu0 0
  %5530 = vmatpush2.bf16.msra.mxu0 0
  %5531 = vmatprep.subr.bf16.mxu0 0
  %5532 = vmatpush2.bf16.msra.mxu0 0
  %5533 = vmatprep.subr.bf16.mxu0 0
  %5534 = vmatpush2.bf16.msra.mxu0 0
  %5535 = vmatprep.subr.bf16.mxu0 0
  %5536 = vmatpush2.bf16.msra.mxu0 0
  %5537 = vmatprep.subr.bf16.mxu0 0
  %5538 = vmatpush2.bf16.msra.mxu0 0
  %5539 = vmatprep.subr.bf16.mxu0 0
  %5540 = vmatpush2.bf16.msra.mxu0 0
  %5541 = vmatprep.mubr.bf16.mxu0 0
  %5542 = vmatmul.mubr.bf16.gmra.mxu0 %v139
  %v5543 = vpop.f32.mrf.mxu0
  %v5544 = vadd.f32 0.0, %v5543
  %v5545 = vpop.f32.mrf.mxu0
  %v5546 = vpop.f32.mrf.mxu0
  %v5547 = vpop.f32.mrf.mxu0
  %5548 = vdwg.mxu0
  %v5549 = vadd.f32 %v5508, %v5544
  %5550 = vmatprep.subr.bf16.mxu0 0
  %5551 = vmatpush1.bf16.msra.mxu0 %v321
  %5552 = vmatprep.subr.bf16.mxu0 0
  %5553 = vmatpush1.bf16.msra.mxu0 %v320
  %5554 = vmatprep.subr.bf16.mxu0 0
  %5555 = vmatpush1.bf16.msra.mxu0 %v319
  %5556 = vmatprep.subr.bf16.mxu0 0
  %5557 = vmatpush1.bf16.msra.mxu0 %v318
  %5558 = vmatprep.subr.bf16.mxu0 0
  %5559 = vmatpush1.bf16.msra.mxu0 %v317
  %5560 = vmatprep.subr.bf16.mxu0 0
  %5561 = vmatpush1.bf16.msra.mxu0 %v316
  %5562 = vmatprep.subr.bf16.mxu0 0
  %5563 = vmatpush1.bf16.msra.mxu0 %v315
  %5564 = vmatprep.subr.bf16.mxu0 0
  %5565 = vmatpush1.bf16.msra.mxu0 %v314
  %5566 = vmatprep.subr.bf16.mxu0 0
  %5567 = vmatpush2.bf16.msra.mxu0 0
  %5568 = vmatprep.subr.bf16.mxu0 0
  %5569 = vmatpush2.bf16.msra.mxu0 0
  %5570 = vmatprep.subr.bf16.mxu0 0
  %5571 = vmatpush2.bf16.msra.mxu0 0
  %5572 = vmatprep.subr.bf16.mxu0 0
  %5573 = vmatpush2.bf16.msra.mxu0 0
  %5574 = vmatprep.subr.bf16.mxu0 0
  %5575 = vmatpush2.bf16.msra.mxu0 0
  %5576 = vmatprep.subr.bf16.mxu0 0
  %5577 = vmatpush2.bf16.msra.mxu0 0
  %5578 = vmatprep.subr.bf16.mxu0 0
  %5579 = vmatpush2.bf16.msra.mxu0 0
  %5580 = vmatprep.subr.bf16.mxu0 0
  %5581 = vmatpush2.bf16.msra.mxu0 0
  %5582 = vmatprep.mubr.bf16.mxu0 0
  %5583 = vmatmul.mubr.bf16.gmra.mxu0 %v141
  %v5584 = vpop.f32.mrf.mxu0
  %v5585 = vadd.f32 0.0, %v5584
  %v5586 = vpop.f32.mrf.mxu0
  %v5587 = vpop.f32.mrf.mxu0
  %v5588 = vpop.f32.mrf.mxu0
  %5589 = vdwg.mxu0
  %v5590 = vadd.f32 %v5549, %v5585
  %5591 = vmatprep.subr.bf16.mxu0 0
  %5592 = vmatpush1.bf16.msra.mxu0 %v233
  %5593 = vmatprep.subr.bf16.mxu0 0
  %5594 = vmatpush1.bf16.msra.mxu0 %v232
  %5595 = vmatprep.subr.bf16.mxu0 0
  %5596 = vmatpush1.bf16.msra.mxu0 %v231
  %5597 = vmatprep.subr.bf16.mxu0 0
  %5598 = vmatpush1.bf16.msra.mxu0 %v230
  %5599 = vmatprep.subr.bf16.mxu0 0
  %5600 = vmatpush1.bf16.msra.mxu0 %v229
  %5601 = vmatprep.subr.bf16.mxu0 0
  %5602 = vmatpush1.bf16.msra.mxu0 %v228
  %5603 = vmatprep.subr.bf16.mxu0 0
  %5604 = vmatpush1.bf16.msra.mxu0 %v227
  %5605 = vmatprep.subr.bf16.mxu0 0
  %5606 = vmatpush1.bf16.msra.mxu0 %v226
  %5607 = vmatprep.subr.bf16.mxu0 0
  %5608 = vmatpush2.bf16.msra.mxu0 0
  %5609 = vmatprep.subr.bf16.mxu0 0
  %5610 = vmatpush2.bf16.msra.mxu0 0
  %5611 = vmatprep.subr.bf16.mxu0 0
  %5612 = vmatpush2.bf16.msra.mxu0 0
  %5613 = vmatprep.subr.bf16.mxu0 0
  %5614 = vmatpush2.bf16.msra.mxu0 0
  %5615 = vmatprep.subr.bf16.mxu0 0
  %5616 = vmatpush2.bf16.msra.mxu0 0
  %5617 = vmatprep.subr.bf16.mxu0 0
  %5618 = vmatpush2.bf16.msra.mxu0 0
  %5619 = vmatprep.subr.bf16.mxu0 0
  %5620 = vmatpush2.bf16.msra.mxu0 0
  %5621 = vmatprep.subr.bf16.mxu0 0
  %5622 = vmatpush2.bf16.msra.mxu0 0
  %5623 = vmatprep.mubr.bf16.mxu0 0
  %5624 = vmatmul.mubr.bf16.gmra.mxu0 %v143
  %v5625 = vpop.f32.mrf.mxu0
  %v5626 = vadd.f32 0.0, %v5625
  %v5627 = vpop.f32.mrf.mxu0
  %v5628 = vpop.f32.mrf.mxu0
  %v5629 = vpop.f32.mrf.mxu0
  %5630 = vdwg.mxu0
  %v5631 = vadd.f32 %v5590, %v5626
  %5632 = vmatprep.subr.bf16.mxu0 0
  %5633 = vmatpush1.bf16.msra.mxu0 %v836
  %5634 = vmatprep.subr.bf16.mxu0 0
  %5635 = vmatpush1.bf16.msra.mxu0 %v835
  %5636 = vmatprep.subr.bf16.mxu0 0
  %5637 = vmatpush1.bf16.msra.mxu0 %v834
  %5638 = vmatprep.subr.bf16.mxu0 0
  %5639 = vmatpush1.bf16.msra.mxu0 %v833
  %5640 = vmatprep.subr.bf16.mxu0 0
  %5641 = vmatpush1.bf16.msra.mxu0 %v832
  %5642 = vmatprep.subr.bf16.mxu0 0
  %5643 = vmatpush1.bf16.msra.mxu0 %v831
  %5644 = vmatprep.subr.bf16.mxu0 0
  %5645 = vmatpush1.bf16.msra.mxu0 %v830
  %5646 = vmatprep.subr.bf16.mxu0 0
  %5647 = vmatpush1.bf16.msra.mxu0 %v829
  %5648 = vmatprep.subr.bf16.mxu0 0
  %5649 = vmatpush2.bf16.msra.mxu0 0
  %5650 = vmatprep.subr.bf16.mxu0 0
  %5651 = vmatpush2.bf16.msra.mxu0 0
  %5652 = vmatprep.subr.bf16.mxu0 0
  %5653 = vmatpush2.bf16.msra.mxu0 0
  %5654 = vmatprep.subr.bf16.mxu0 0
  %5655 = vmatpush2.bf16.msra.mxu0 0
  %5656 = vmatprep.subr.bf16.mxu0 0
  %5657 = vmatpush2.bf16.msra.mxu0 0
  %5658 = vmatprep.subr.bf16.mxu0 0
  %5659 = vmatpush2.bf16.msra.mxu0 0
  %5660 = vmatprep.subr.bf16.mxu0 0
  %5661 = vmatpush2.bf16.msra.mxu0 0
  %5662 = vmatprep.subr.bf16.mxu0 0
  %5663 = vmatpush2.bf16.msra.mxu0 0
  %5664 = vmatprep.mubr.bf16.mxu0 0
  %5665 = vmatmul.mubr.bf16.gmra.mxu0 %v155
  %v5666 = vpop.f32.mrf.mxu0
  %v5667 = vadd.f32 0.0, %v5666
  %v5668 = vpop.f32.mrf.mxu0
  %v5669 = vpop.f32.mrf.mxu0
  %v5670 = vpop.f32.mrf.mxu0
  %5671 = vdwg.mxu0
  %v5672 = vadd.f32 %v5631, %v5667
  %5673 = vmatprep.subr.bf16.mxu0 0
  %5674 = vmatpush1.bf16.msra.mxu0 %v426
  %5675 = vmatprep.subr.bf16.mxu0 0
  %5676 = vmatpush1.bf16.msra.mxu0 %v425
  %5677 = vmatprep.subr.bf16.mxu0 0
  %5678 = vmatpush1.bf16.msra.mxu0 %v424
  %5679 = vmatprep.subr.bf16.mxu0 0
  %5680 = vmatpush1.bf16.msra.mxu0 %v423
  %5681 = vmatprep.subr.bf16.mxu0 0
  %5682 = vmatpush1.bf16.msra.mxu0 %v422
  %5683 = vmatprep.subr.bf16.mxu0 0
  %5684 = vmatpush1.bf16.msra.mxu0 %v421
  %5685 = vmatprep.subr.bf16.mxu0 0
  %5686 = vmatpush1.bf16.msra.mxu0 %v420
  %5687 = vmatprep.subr.bf16.mxu0 0
  %5688 = vmatpush1.bf16.msra.mxu0 %v419
  %5689 = vmatprep.subr.bf16.mxu0 0
  %5690 = vmatpush2.bf16.msra.mxu0 0
  %5691 = vmatprep.subr.bf16.mxu0 0
  %5692 = vmatpush2.bf16.msra.mxu0 0
  %5693 = vmatprep.subr.bf16.mxu0 0
  %5694 = vmatpush2.bf16.msra.mxu0 0
  %5695 = vmatprep.subr.bf16.mxu0 0
  %5696 = vmatpush2.bf16.msra.mxu0 0
  %5697 = vmatprep.subr.bf16.mxu0 0
  %5698 = vmatpush2.bf16.msra.mxu0 0
  %5699 = vmatprep.subr.bf16.mxu0 0
  %5700 = vmatpush2.bf16.msra.mxu0 0
  %5701 = vmatprep.subr.bf16.mxu0 0
  %5702 = vmatpush2.bf16.msra.mxu0 0
  %5703 = vmatprep.subr.bf16.mxu0 0
  %5704 = vmatpush2.bf16.msra.mxu0 0
  %5705 = vmatprep.mubr.bf16.mxu0 0
  %5706 = vmatmul.mubr.bf16.gmra.mxu0 %v157
  %v5707 = vpop.f32.mrf.mxu0
  %v5708 = vadd.f32 0.0, %v5707
  %v5709 = vpop.f32.mrf.mxu0
  %v5710 = vpop.f32.mrf.mxu0
  %v5711 = vpop.f32.mrf.mxu0
  %5712 = vdwg.mxu0
  %v5713 = vadd.f32 %v5672, %v5708
  %5714 = vmatprep.subr.bf16.mxu0 0
  %5715 = vmatpush1.bf16.msra.mxu0 %v532
  %5716 = vmatprep.subr.bf16.mxu0 0
  %5717 = vmatpush1.bf16.msra.mxu0 %v531
  %5718 = vmatprep.subr.bf16.mxu0 0
  %5719 = vmatpush1.bf16.msra.mxu0 %v530
  %5720 = vmatprep.subr.bf16.mxu0 0
  %5721 = vmatpush1.bf16.msra.mxu0 %v529
  %5722 = vmatprep.subr.bf16.mxu0 0
  %5723 = vmatpush1.bf16.msra.mxu0 %v528
  %5724 = vmatprep.subr.bf16.mxu0 0
  %5725 = vmatpush1.bf16.msra.mxu0 %v527
  %5726 = vmatprep.subr.bf16.mxu0 0
  %5727 = vmatpush1.bf16.msra.mxu0 %v526
  %5728 = vmatprep.subr.bf16.mxu0 0
  %5729 = vmatpush1.bf16.msra.mxu0 %v525
  %5730 = vmatprep.subr.bf16.mxu0 0
  %5731 = vmatpush2.bf16.msra.mxu0 0
  %5732 = vmatprep.subr.bf16.mxu0 0
  %5733 = vmatpush2.bf16.msra.mxu0 0
  %5734 = vmatprep.subr.bf16.mxu0 0
  %5735 = vmatpush2.bf16.msra.mxu0 0
  %5736 = vmatprep.subr.bf16.mxu0 0
  %5737 = vmatpush2.bf16.msra.mxu0 0
  %5738 = vmatprep.subr.bf16.mxu0 0
  %5739 = vmatpush2.bf16.msra.mxu0 0
  %5740 = vmatprep.subr.bf16.mxu0 0
  %5741 = vmatpush2.bf16.msra.mxu0 0
  %5742 = vmatprep.subr.bf16.mxu0 0
  %5743 = vmatpush2.bf16.msra.mxu0 0
  %5744 = vmatprep.subr.bf16.mxu0 0
  %5745 = vmatpush2.bf16.msra.mxu0 0
  %5746 = vmatprep.mubr.bf16.mxu0 0
  %5747 = vmatmul.mubr.bf16.gmra.mxu0 %v159
  %v5748 = vpop.f32.mrf.mxu0
  %v5749 = vadd.f32 0.0, %v5748
  %v5750 = vpop.f32.mrf.mxu0
  %v5751 = vpop.f32.mrf.mxu0
  %v5752 = vpop.f32.mrf.mxu0
  %5753 = vdwg.mxu0
  %v5754 = vadd.f32 %v5713, %v5749
  %v5755 = vadd.f32 %v5754, %v587
  %vm5756 = vcmp.ge.f32.partialorder %v5755, 0.0
  %v5757 = vmul.f32 %v5755, 0.01
  %v5758 = vsel %vm5756, %v5755, %v5757
  %v5759 = vpack.c.bf16 %v5758, %v5758
  %s5760 = scalar_lea.vmem %s3, 256
  %v5761 = vld [vmem:[%s5760] sm:$0xf]
  %v5762 = vld [vmem:[%s5760 + $0x4] sm:$0xf]
  %v5763 = vld [vmem:[%s5760 + $0x8] sm:$0xf]
  %v5764 = vld [vmem:[%s5760 + $0xc] sm:$0xf]
  %v5765 = vld [vmem:[%s5760 + $0x10] sm:$0xf]
  %v5766 = vld [vmem:[%s5760 + $0x14] sm:$0xf]
  %v5767 = vld [vmem:[%s5760 + $0x18] sm:$0xf]
  %v5768 = vld [vmem:[%s5760 + $0x1c] sm:$0xf]
  %v5769 = vld [vmem:[%s5760 + $0x20] sm:$0xf]
  %v5770 = vld [vmem:[%s5760 + $0x24] sm:$0xf]
  %v5771 = vld [vmem:[%s5760 + $0x28] sm:$0xf]
  %v5772 = vld [vmem:[%s5760 + $0x2c] sm:$0xf]
  %v5773 = vld [vmem:[%s5760 + $0x30] sm:$0xf]
  %v5774 = vld [vmem:[%s5760 + $0x34] sm:$0xf]
  %v5775 = vld [vmem:[%s5760 + $0x38] sm:$0xf]
  %v5776 = vld [vmem:[%s5760 + $0x3c] sm:$0xf]
  %s5777 = scalar_lea.vmem %s3, 320
  %v5778 = vld [vmem:[%s5777] sm:$0xf]
  %v5779 = vld [vmem:[%s5777 + $0x4] sm:$0xf]
  %v5780 = vld [vmem:[%s5777 + $0x8] sm:$0xf]
  %v5781 = vld [vmem:[%s5777 + $0xc] sm:$0xf]
  %v5782 = vld [vmem:[%s5777 + $0x10] sm:$0xf]
  %v5783 = vld [vmem:[%s5777 + $0x14] sm:$0xf]
  %v5784 = vld [vmem:[%s5777 + $0x18] sm:$0xf]
  %v5785 = vld [vmem:[%s5777 + $0x1c] sm:$0xf]
  %v5786 = vld [vmem:[%s5777 + $0x20] sm:$0xf]
  %v5787 = vld [vmem:[%s5777 + $0x24] sm:$0xf]
  %v5788 = vld [vmem:[%s5777 + $0x28] sm:$0xf]
  %v5789 = vld [vmem:[%s5777 + $0x2c] sm:$0xf]
  %v5790 = vld [vmem:[%s5777 + $0x30] sm:$0xf]
  %v5791 = vld [vmem:[%s5777 + $0x34] sm:$0xf]
  %v5792 = vld [vmem:[%s5777 + $0x38] sm:$0xf]
  %v5793 = vld [vmem:[%s5777 + $0x3c] sm:$0xf]
  %v5810 = vunpack.c.l.b16 %v5778
  %v5811 = vunpack.c.l.b16 %v5779
  %v5812 = vunpack.c.l.b16 %v5780
  %v5813 = vunpack.c.l.b16 %v5781
  %v5814 = vunpack.c.l.b16 %v5782
  %v5815 = vunpack.c.l.b16 %v5783
  %v5816 = vunpack.c.l.b16 %v5784
  %v5817 = vunpack.c.l.b16 %v5785
  %v5818 = vunpack.c.l.b16 %v5786
  %v5819 = vunpack.c.l.b16 %v5787
  %v5820 = vunpack.c.l.b16 %v5788
  %v5821 = vunpack.c.l.b16 %v5789
  %v5822 = vunpack.c.l.b16 %v5790
  %v5823 = vunpack.c.l.b16 %v5791
  %v5824 = vunpack.c.l.b16 %v5792
  %v5825 = vunpack.c.l.b16 %v5793
  %v5826 = vpack.c.b16 %v5811, %v5810
  %v5827 = vpack.c.b16 %v5813, %v5812
  %v5828 = vpack.c.b16 %v5815, %v5814
  %v5829 = vpack.c.b16 %v5817, %v5816
  %v5830 = vpack.c.b16 %v5819, %v5818
  %v5831 = vpack.c.b16 %v5821, %v5820
  %v5832 = vpack.c.b16 %v5823, %v5822
  %v5833 = vpack.c.b16 %v5825, %v5824
  %5842 = vmatprep.subr.bf16.mxu0 0
  %5843 = vmatpush1.bf16.msra.mxu0 %v5833
  %5844 = vmatprep.subr.bf16.mxu0 0
  %5845 = vmatpush1.bf16.msra.mxu0 %v5832
  %5846 = vmatprep.subr.bf16.mxu0 0
  %5847 = vmatpush1.bf16.msra.mxu0 %v5831
  %5848 = vmatprep.subr.bf16.mxu0 0
  %5849 = vmatpush1.bf16.msra.mxu0 %v5830
  %5850 = vmatprep.subr.bf16.mxu0 0
  %5851 = vmatpush1.bf16.msra.mxu0 %v5829
  %5852 = vmatprep.subr.bf16.mxu0 0
  %5853 = vmatpush1.bf16.msra.mxu0 %v5828
  %5854 = vmatprep.subr.bf16.mxu0 0
  %5855 = vmatpush1.bf16.msra.mxu0 %v5827
  %5856 = vmatprep.subr.bf16.mxu0 0
  %5857 = vmatpush1.bf16.msra.mxu0 %v5826
  %5858 = vmatprep.subr.bf16.mxu0 0
  %5859 = vmatpush2.bf16.msra.mxu0 0
  %5860 = vmatprep.subr.bf16.mxu0 0
  %5861 = vmatpush2.bf16.msra.mxu0 0
  %5862 = vmatprep.subr.bf16.mxu0 0
  %5863 = vmatpush2.bf16.msra.mxu0 0
  %5864 = vmatprep.subr.bf16.mxu0 0
  %5865 = vmatpush2.bf16.msra.mxu0 0
  %5866 = vmatprep.subr.bf16.mxu0 0
  %5867 = vmatpush2.bf16.msra.mxu0 0
  %5868 = vmatprep.subr.bf16.mxu0 0
  %5869 = vmatpush2.bf16.msra.mxu0 0
  %5870 = vmatprep.subr.bf16.mxu0 0
  %5871 = vmatpush2.bf16.msra.mxu0 0
  %5872 = vmatprep.subr.bf16.mxu0 0
  %5873 = vmatpush2.bf16.msra.mxu0 0
  %5874 = vmatprep.mubr.bf16.mxu0 0
  %5875 = vmatmul.mubr.bf16.gmra.mxu0 %v972
  %v5876 = vpop.f32.mrf.mxu0
  %v5877 = vadd.f32 0.0, %v5876
  %v5878 = vpop.f32.mrf.mxu0
  %v5879 = vpop.f32.mrf.mxu0
  %v5880 = vpop.f32.mrf.mxu0
  %5881 = vdwg.mxu0
  %v5898 = vunpack.c.l.b16 %v5761
  %v5899 = vunpack.c.l.b16 %v5762
  %v5900 = vunpack.c.l.b16 %v5763
  %v5901 = vunpack.c.l.b16 %v5764
  %v5902 = vunpack.c.l.b16 %v5765
  %v5903 = vunpack.c.l.b16 %v5766
  %v5904 = vunpack.c.l.b16 %v5767
  %v5905 = vunpack.c.l.b16 %v5768
  %v5906 = vunpack.c.l.b16 %v5769
  %v5907 = vunpack.c.l.b16 %v5770
  %v5908 = vunpack.c.l.b16 %v5771
  %v5909 = vunpack.c.l.b16 %v5772
  %v5910 = vunpack.c.l.b16 %v5773
  %v5911 = vunpack.c.l.b16 %v5774
  %v5912 = vunpack.c.l.b16 %v5775
  %v5913 = vunpack.c.l.b16 %v5776
  %v5914 = vpack.c.b16 %v5899, %v5898
  %v5915 = vpack.c.b16 %v5901, %v5900
  %v5916 = vpack.c.b16 %v5903, %v5902
  %v5917 = vpack.c.b16 %v5905, %v5904
  %v5918 = vpack.c.b16 %v5907, %v5906
  %v5919 = vpack.c.b16 %v5909, %v5908
  %v5920 = vpack.c.b16 %v5911, %v5910
  %v5921 = vpack.c.b16 %v5913, %v5912
  %5930 = vmatprep.subr.bf16.mxu0 0
  %5931 = vmatpush1.bf16.msra.mxu0 %v5921
  %5932 = vmatprep.subr.bf16.mxu0 0
  %5933 = vmatpush1.bf16.msra.mxu0 %v5920
  %5934 = vmatprep.subr.bf16.mxu0 0
  %5935 = vmatpush1.bf16.msra.mxu0 %v5919
  %5936 = vmatprep.subr.bf16.mxu0 0
  %5937 = vmatpush1.bf16.msra.mxu0 %v5918
  %5938 = vmatprep.subr.bf16.mxu0 0
  %5939 = vmatpush1.bf16.msra.mxu0 %v5917
  %5940 = vmatprep.subr.bf16.mxu0 0
  %5941 = vmatpush1.bf16.msra.mxu0 %v5916
  %5942 = vmatprep.subr.bf16.mxu0 0
  %5943 = vmatpush1.bf16.msra.mxu0 %v5915
  %5944 = vmatprep.subr.bf16.mxu0 0
  %5945 = vmatpush1.bf16.msra.mxu0 %v5914
  %5946 = vmatprep.subr.bf16.mxu0 0
  %5947 = vmatpush2.bf16.msra.mxu0 0
  %5948 = vmatprep.subr.bf16.mxu0 0
  %5949 = vmatpush2.bf16.msra.mxu0 0
  %5950 = vmatprep.subr.bf16.mxu0 0
  %5951 = vmatpush2.bf16.msra.mxu0 0
  %5952 = vmatprep.subr.bf16.mxu0 0
  %5953 = vmatpush2.bf16.msra.mxu0 0
  %5954 = vmatprep.subr.bf16.mxu0 0
  %5955 = vmatpush2.bf16.msra.mxu0 0
  %5956 = vmatprep.subr.bf16.mxu0 0
  %5957 = vmatpush2.bf16.msra.mxu0 0
  %5958 = vmatprep.subr.bf16.mxu0 0
  %5959 = vmatpush2.bf16.msra.mxu0 0
  %5960 = vmatprep.subr.bf16.mxu0 0
  %5961 = vmatpush2.bf16.msra.mxu0 0
  %5962 = vmatprep.mubr.bf16.mxu0 0
  %5963 = vmatmul.mubr.bf16.gmra.mxu0 %v593
  %v5964 = vpop.f32.mrf.mxu0
  %v5965 = vadd.f32 %v5877, %v5964
  %v5966 = vpop.f32.mrf.mxu0
  %v5967 = vpop.f32.mrf.mxu0
  %v5968 = vpop.f32.mrf.mxu0
  %5969 = vdwg.mxu0
  %s5970 = scalar_lea.vmem %s3, 448
  %v5971 = vld [vmem:[%s5970] sm:$0xf]
  %v5972 = vld [vmem:[%s5970 + $0x4] sm:$0xf]
  %v5973 = vld [vmem:[%s5970 + $0x8] sm:$0xf]
  %v5974 = vld [vmem:[%s5970 + $0xc] sm:$0xf]
  %v5975 = vld [vmem:[%s5970 + $0x10] sm:$0xf]
  %v5976 = vld [vmem:[%s5970 + $0x14] sm:$0xf]
  %v5977 = vld [vmem:[%s5970 + $0x18] sm:$0xf]
  %v5978 = vld [vmem:[%s5970 + $0x1c] sm:$0xf]
  %v5979 = vld [vmem:[%s5970 + $0x20] sm:$0xf]
  %v5980 = vld [vmem:[%s5970 + $0x24] sm:$0xf]
  %v5981 = vld [vmem:[%s5970 + $0x28] sm:$0xf]
  %v5982 = vld [vmem:[%s5970 + $0x2c] sm:$0xf]
  %v5983 = vld [vmem:[%s5970 + $0x30] sm:$0xf]
  %v5984 = vld [vmem:[%s5970 + $0x34] sm:$0xf]
  %v5985 = vld [vmem:[%s5970 + $0x38] sm:$0xf]
  %v5986 = vld [vmem:[%s5970 + $0x3c] sm:$0xf]
  %v6003 = vunpack.c.l.b16 %v5971
  %v6004 = vunpack.c.l.b16 %v5972
  %v6005 = vunpack.c.l.b16 %v5973
  %v6006 = vunpack.c.l.b16 %v5974
  %v6007 = vunpack.c.l.b16 %v5975
  %v6008 = vunpack.c.l.b16 %v5976
  %v6009 = vunpack.c.l.b16 %v5977
  %v6010 = vunpack.c.l.b16 %v5978
  %v6011 = vunpack.c.l.b16 %v5979
  %v6012 = vunpack.c.l.b16 %v5980
  %v6013 = vunpack.c.l.b16 %v5981
  %v6014 = vunpack.c.l.b16 %v5982
  %v6015 = vunpack.c.l.b16 %v5983
  %v6016 = vunpack.c.l.b16 %v5984
  %v6017 = vunpack.c.l.b16 %v5985
  %v6018 = vunpack.c.l.b16 %v5986
  %v6019 = vpack.c.b16 %v6004, %v6003
  %v6020 = vpack.c.b16 %v6006, %v6005
  %v6021 = vpack.c.b16 %v6008, %v6007
  %v6022 = vpack.c.b16 %v6010, %v6009
  %v6023 = vpack.c.b16 %v6012, %v6011
  %v6024 = vpack.c.b16 %v6014, %v6013
  %v6025 = vpack.c.b16 %v6016, %v6015
  %v6026 = vpack.c.b16 %v6018, %v6017
  %6035 = vmatprep.subr.bf16.mxu0 0
  %6036 = vmatpush1.bf16.msra.mxu0 %v6026
  %6037 = vmatprep.subr.bf16.mxu0 0
  %6038 = vmatpush1.bf16.msra.mxu0 %v6025
  %6039 = vmatprep.subr.bf16.mxu0 0
  %6040 = vmatpush1.bf16.msra.mxu0 %v6024
  %6041 = vmatprep.subr.bf16.mxu0 0
  %6042 = vmatpush1.bf16.msra.mxu0 %v6023
  %6043 = vmatprep.subr.bf16.mxu0 0
  %6044 = vmatpush1.bf16.msra.mxu0 %v6022
  %6045 = vmatprep.subr.bf16.mxu0 0
  %6046 = vmatpush1.bf16.msra.mxu0 %v6021
  %6047 = vmatprep.subr.bf16.mxu0 0
  %6048 = vmatpush1.bf16.msra.mxu0 %v6020
  %6049 = vmatprep.subr.bf16.mxu0 0
  %6050 = vmatpush1.bf16.msra.mxu0 %v6019
  %6051 = vmatprep.subr.bf16.mxu0 0
  %6052 = vmatpush2.bf16.msra.mxu0 0
  %6053 = vmatprep.subr.bf16.mxu0 0
  %6054 = vmatpush2.bf16.msra.mxu0 0
  %6055 = vmatprep.subr.bf16.mxu0 0
  %6056 = vmatpush2.bf16.msra.mxu0 0
  %6057 = vmatprep.subr.bf16.mxu0 0
  %6058 = vmatpush2.bf16.msra.mxu0 0
  %6059 = vmatprep.subr.bf16.mxu0 0
  %6060 = vmatpush2.bf16.msra.mxu0 0
  %6061 = vmatprep.subr.bf16.mxu0 0
  %6062 = vmatpush2.bf16.msra.mxu0 0
  %6063 = vmatprep.subr.bf16.mxu0 0
  %6064 = vmatpush2.bf16.msra.mxu0 0
  %6065 = vmatprep.subr.bf16.mxu0 0
  %6066 = vmatpush2.bf16.msra.mxu0 0
  %6067 = vmatprep.mubr.bf16.mxu0 0
  %6068 = vmatmul.mubr.bf16.gmra.mxu0 %v1849
  %v6069 = vpop.f32.mrf.mxu0
  %v6070 = vadd.f32 0.0, %v6069
  %v6071 = vpop.f32.mrf.mxu0
  %v6072 = vpop.f32.mrf.mxu0
  %v6073 = vpop.f32.mrf.mxu0
  %6074 = vdwg.mxu0
  %v6075 = vadd.f32 %v5965, %v6070
  %s6076 = scalar_lea.vmem %s3, 512
  %v6077 = vld [vmem:[%s6076] sm:$0xf]
  %v6078 = vld [vmem:[%s6076 + $0x4] sm:$0xf]
  %v6079 = vld [vmem:[%s6076 + $0x8] sm:$0xf]
  %v6080 = vld [vmem:[%s6076 + $0xc] sm:$0xf]
  %v6081 = vld [vmem:[%s6076 + $0x10] sm:$0xf]
  %v6082 = vld [vmem:[%s6076 + $0x14] sm:$0xf]
  %v6083 = vld [vmem:[%s6076 + $0x18] sm:$0xf]
  %v6084 = vld [vmem:[%s6076 + $0x1c] sm:$0xf]
  %v6085 = vld [vmem:[%s6076 + $0x20] sm:$0xf]
  %v6086 = vld [vmem:[%s6076 + $0x24] sm:$0xf]
  %v6087 = vld [vmem:[%s6076 + $0x28] sm:$0xf]
  %v6088 = vld [vmem:[%s6076 + $0x2c] sm:$0xf]
  %v6089 = vld [vmem:[%s6076 + $0x30] sm:$0xf]
  %v6090 = vld [vmem:[%s6076 + $0x34] sm:$0xf]
  %v6091 = vld [vmem:[%s6076 + $0x38] sm:$0xf]
  %v6092 = vld [vmem:[%s6076 + $0x3c] sm:$0xf]
  %v6109 = vunpack.c.l.b16 %v6077
  %v6110 = vunpack.c.l.b16 %v6078
  %v6111 = vunpack.c.l.b16 %v6079
  %v6112 = vunpack.c.l.b16 %v6080
  %v6113 = vunpack.c.l.b16 %v6081
  %v6114 = vunpack.c.l.b16 %v6082
  %v6115 = vunpack.c.l.b16 %v6083
  %v6116 = vunpack.c.l.b16 %v6084
  %v6117 = vunpack.c.l.b16 %v6085
  %v6118 = vunpack.c.l.b16 %v6086
  %v6119 = vunpack.c.l.b16 %v6087
  %v6120 = vunpack.c.l.b16 %v6088
  %v6121 = vunpack.c.l.b16 %v6089
  %v6122 = vunpack.c.l.b16 %v6090
  %v6123 = vunpack.c.l.b16 %v6091
  %v6124 = vunpack.c.l.b16 %v6092
  %v6125 = vpack.c.b16 %v6110, %v6109
  %v6126 = vpack.c.b16 %v6112, %v6111
  %v6127 = vpack.c.b16 %v6114, %v6113
  %v6128 = vpack.c.b16 %v6116, %v6115
  %v6129 = vpack.c.b16 %v6118, %v6117
  %v6130 = vpack.c.b16 %v6120, %v6119
  %v6131 = vpack.c.b16 %v6122, %v6121
  %v6132 = vpack.c.b16 %v6124, %v6123
  %6141 = vmatprep.subr.bf16.mxu0 0
  %6142 = vmatpush1.bf16.msra.mxu0 %v6132
  %6143 = vmatprep.subr.bf16.mxu0 0
  %6144 = vmatpush1.bf16.msra.mxu0 %v6131
  %6145 = vmatprep.subr.bf16.mxu0 0
  %6146 = vmatpush1.bf16.msra.mxu0 %v6130
  %6147 = vmatprep.subr.bf16.mxu0 0
  %6148 = vmatpush1.bf16.msra.mxu0 %v6129
  %6149 = vmatprep.subr.bf16.mxu0 0
  %6150 = vmatpush1.bf16.msra.mxu0 %v6128
  %6151 = vmatprep.subr.bf16.mxu0 0
  %6152 = vmatpush1.bf16.msra.mxu0 %v6127
  %6153 = vmatprep.subr.bf16.mxu0 0
  %6154 = vmatpush1.bf16.msra.mxu0 %v6126
  %6155 = vmatprep.subr.bf16.mxu0 0
  %6156 = vmatpush1.bf16.msra.mxu0 %v6125
  %6157 = vmatprep.subr.bf16.mxu0 0
  %6158 = vmatpush2.bf16.msra.mxu0 0
  %6159 = vmatprep.subr.bf16.mxu0 0
  %6160 = vmatpush2.bf16.msra.mxu0 0
  %6161 = vmatprep.subr.bf16.mxu0 0
  %6162 = vmatpush2.bf16.msra.mxu0 0
  %6163 = vmatprep.subr.bf16.mxu0 0
  %6164 = vmatpush2.bf16.msra.mxu0 0
  %6165 = vmatprep.subr.bf16.mxu0 0
  %6166 = vmatpush2.bf16.msra.mxu0 0
  %6167 = vmatprep.subr.bf16.mxu0 0
  %6168 = vmatpush2.bf16.msra.mxu0 0
  %6169 = vmatprep.subr.bf16.mxu0 0
  %6170 = vmatpush2.bf16.msra.mxu0 0
  %6171 = vmatprep.subr.bf16.mxu0 0
  %6172 = vmatpush2.bf16.msra.mxu0 0
  %6173 = vmatprep.mubr.bf16.mxu0 0
  %6174 = vmatmul.mubr.bf16.gmra.mxu0 %v2285
  %v6175 = vpop.f32.mrf.mxu0
  %v6176 = vadd.f32 0.0, %v6175
  %v6177 = vpop.f32.mrf.mxu0
  %v6178 = vpop.f32.mrf.mxu0
  %v6179 = vpop.f32.mrf.mxu0
  %6180 = vdwg.mxu0
  %v6181 = vadd.f32 %v6075, %v6176
  %v6182 = vld [vmem:[%s4] sm:$0x1]
  %v6184 = vlaneseq
  %v6185 = vshrl.u32 %v6184, 7
  %v6186 = vsub.s32 0, %v6185
  %v6187 = vrot.slane %v6182, %v6186
  %v6189 = vadd.f32 %v6181, %v6187
  %vm6190 = vcmp.ge.f32.partialorder %v6189, 0.0
  %v6191 = vmul.f32 %v6189, 0.01
  %v6192 = vsel %vm6190, %v6189, %v6191
  %v6193 = vpack.c.bf16 %v6192, %v6192
  %s6194 = scalar_lea.vmem %s3, 192
  %v6195 = vld [vmem:[%s6194] sm:$0xf]
  %v6196 = vld [vmem:[%s6194 + $0x4] sm:$0xf]
  %v6197 = vld [vmem:[%s6194 + $0x8] sm:$0xf]
  %v6198 = vld [vmem:[%s6194 + $0xc] sm:$0xf]
  %v6199 = vld [vmem:[%s6194 + $0x10] sm:$0xf]
  %v6200 = vld [vmem:[%s6194 + $0x14] sm:$0xf]
  %v6201 = vld [vmem:[%s6194 + $0x18] sm:$0xf]
  %v6202 = vld [vmem:[%s6194 + $0x1c] sm:$0xf]
  %v6203 = vld [vmem:[%s6194 + $0x20] sm:$0xf]
  %v6204 = vld [vmem:[%s6194 + $0x24] sm:$0xf]
  %v6205 = vld [vmem:[%s6194 + $0x28] sm:$0xf]
  %v6206 = vld [vmem:[%s6194 + $0x2c] sm:$0xf]
  %v6207 = vld [vmem:[%s6194 + $0x30] sm:$0xf]
  %v6208 = vld [vmem:[%s6194 + $0x34] sm:$0xf]
  %v6209 = vld [vmem:[%s6194 + $0x38] sm:$0xf]
  %v6210 = vld [vmem:[%s6194 + $0x3c] sm:$0xf]
  %6211 = vmatprep.subr.bf16.mxu0 0
  %6212 = vmatpush1.bf16.msra.mxu0 %v5921
  %6213 = vmatprep.subr.bf16.mxu0 0
  %6214 = vmatpush1.bf16.msra.mxu0 %v5920
  %6215 = vmatprep.subr.bf16.mxu0 0
  %6216 = vmatpush1.bf16.msra.mxu0 %v5919
  %6217 = vmatprep.subr.bf16.mxu0 0
  %6218 = vmatpush1.bf16.msra.mxu0 %v5918
  %6219 = vmatprep.subr.bf16.mxu0 0
  %6220 = vmatpush1.bf16.msra.mxu0 %v5917
  %6221 = vmatprep.subr.bf16.mxu0 0
  %6222 = vmatpush1.bf16.msra.mxu0 %v5916
  %6223 = vmatprep.subr.bf16.mxu0 0
  %6224 = vmatpush1.bf16.msra.mxu0 %v5915
  %6225 = vmatprep.subr.bf16.mxu0 0
  %6226 = vmatpush1.bf16.msra.mxu0 %v5914
  %6227 = vmatprep.subr.bf16.mxu0 0
  %6228 = vmatpush2.bf16.msra.mxu0 0
  %6229 = vmatprep.subr.bf16.mxu0 0
  %6230 = vmatpush2.bf16.msra.mxu0 0
  %6231 = vmatprep.subr.bf16.mxu0 0
  %6232 = vmatpush2.bf16.msra.mxu0 0
  %6233 = vmatprep.subr.bf16.mxu0 0
  %6234 = vmatpush2.bf16.msra.mxu0 0
  %6235 = vmatprep.subr.bf16.mxu0 0
  %6236 = vmatpush2.bf16.msra.mxu0 0
  %6237 = vmatprep.subr.bf16.mxu0 0
  %6238 = vmatpush2.bf16.msra.mxu0 0
  %6239 = vmatprep.subr.bf16.mxu0 0
  %6240 = vmatpush2.bf16.msra.mxu0 0
  %6241 = vmatprep.subr.bf16.mxu0 0
  %6242 = vmatpush2.bf16.msra.mxu0 0
  %6243 = vmatprep.mubr.bf16.mxu0 0
  %6244 = vmatmul.mubr.bf16.gmra.mxu0 %v1221
  %v6245 = vpop.f32.mrf.mxu0
  %v6246 = vadd.f32 0.0, %v6245
  %v6247 = vpop.f32.mrf.mxu0
  %v6248 = vpop.f32.mrf.mxu0
  %v6249 = vpop.f32.mrf.mxu0
  %6250 = vdwg.mxu0
  %v6267 = vunpack.c.l.b16 %v6195
  %v6268 = vunpack.c.l.b16 %v6196
  %v6269 = vunpack.c.l.b16 %v6197
  %v6270 = vunpack.c.l.b16 %v6198
  %v6271 = vunpack.c.l.b16 %v6199
  %v6272 = vunpack.c.l.b16 %v6200
  %v6273 = vunpack.c.l.b16 %v6201
  %v6274 = vunpack.c.l.b16 %v6202
  %v6275 = vunpack.c.l.b16 %v6203
  %v6276 = vunpack.c.l.b16 %v6204
  %v6277 = vunpack.c.l.b16 %v6205
  %v6278 = vunpack.c.l.b16 %v6206
  %v6279 = vunpack.c.l.b16 %v6207
  %v6280 = vunpack.c.l.b16 %v6208
  %v6281 = vunpack.c.l.b16 %v6209
  %v6282 = vunpack.c.l.b16 %v6210
  %v6283 = vpack.c.b16 %v6268, %v6267
  %v6284 = vpack.c.b16 %v6270, %v6269
  %v6285 = vpack.c.b16 %v6272, %v6271
  %v6286 = vpack.c.b16 %v6274, %v6273
  %v6287 = vpack.c.b16 %v6276, %v6275
  %v6288 = vpack.c.b16 %v6278, %v6277
  %v6289 = vpack.c.b16 %v6280, %v6279
  %v6290 = vpack.c.b16 %v6282, %v6281
  %6299 = vmatprep.subr.bf16.mxu0 0
  %6300 = vmatpush1.bf16.msra.mxu0 %v6290
  %6301 = vmatprep.subr.bf16.mxu0 0
  %6302 = vmatpush1.bf16.msra.mxu0 %v6289
  %6303 = vmatprep.subr.bf16.mxu0 0
  %6304 = vmatpush1.bf16.msra.mxu0 %v6288
  %6305 = vmatprep.subr.bf16.mxu0 0
  %6306 = vmatpush1.bf16.msra.mxu0 %v6287
  %6307 = vmatprep.subr.bf16.mxu0 0
  %6308 = vmatpush1.bf16.msra.mxu0 %v6286
  %6309 = vmatprep.subr.bf16.mxu0 0
  %6310 = vmatpush1.bf16.msra.mxu0 %v6285
  %6311 = vmatprep.subr.bf16.mxu0 0
  %6312 = vmatpush1.bf16.msra.mxu0 %v6284
  %6313 = vmatprep.subr.bf16.mxu0 0
  %6314 = vmatpush1.bf16.msra.mxu0 %v6283
  %6315 = vmatprep.subr.bf16.mxu0 0
  %6316 = vmatpush2.bf16.msra.mxu0 0
  %6317 = vmatprep.subr.bf16.mxu0 0
  %6318 = vmatpush2.bf16.msra.mxu0 0
  %6319 = vmatprep.subr.bf16.mxu0 0
  %6320 = vmatpush2.bf16.msra.mxu0 0
  %6321 = vmatprep.subr.bf16.mxu0 0
  %6322 = vmatpush2.bf16.msra.mxu0 0
  %6323 = vmatprep.subr.bf16.mxu0 0
  %6324 = vmatpush2.bf16.msra.mxu0 0
  %6325 = vmatprep.subr.bf16.mxu0 0
  %6326 = vmatpush2.bf16.msra.mxu0 0
  %6327 = vmatprep.subr.bf16.mxu0 0
  %6328 = vmatpush2.bf16.msra.mxu0 0
  %6329 = vmatprep.subr.bf16.mxu0 0
  %6330 = vmatpush2.bf16.msra.mxu0 0
  %6331 = vmatprep.mubr.bf16.mxu0 0
  %6332 = vmatmul.mubr.bf16.gmra.mxu0 %v972
  %v6333 = vpop.f32.mrf.mxu0
  %v6334 = vadd.f32 %v6246, %v6333
  %v6335 = vpop.f32.mrf.mxu0
  %v6336 = vpop.f32.mrf.mxu0
  %v6337 = vpop.f32.mrf.mxu0
  %6338 = vdwg.mxu0
  %6339 = vmatprep.subr.bf16.mxu0 0
  %6340 = vmatpush1.bf16.msra.mxu0 %v5833
  %6341 = vmatprep.subr.bf16.mxu0 0
  %6342 = vmatpush1.bf16.msra.mxu0 %v5832
  %6343 = vmatprep.subr.bf16.mxu0 0
  %6344 = vmatpush1.bf16.msra.mxu0 %v5831
  %6345 = vmatprep.subr.bf16.mxu0 0
  %6346 = vmatpush1.bf16.msra.mxu0 %v5830
  %6347 = vmatprep.subr.bf16.mxu0 0
  %6348 = vmatpush1.bf16.msra.mxu0 %v5829
  %6349 = vmatprep.subr.bf16.mxu0 0
  %6350 = vmatpush1.bf16.msra.mxu0 %v5828
  %6351 = vmatprep.subr.bf16.mxu0 0
  %6352 = vmatpush1.bf16.msra.mxu0 %v5827
  %6353 = vmatprep.subr.bf16.mxu0 0
  %6354 = vmatpush1.bf16.msra.mxu0 %v5826
  %6355 = vmatprep.subr.bf16.mxu0 0
  %6356 = vmatpush2.bf16.msra.mxu0 0
  %6357 = vmatprep.subr.bf16.mxu0 0
  %6358 = vmatpush2.bf16.msra.mxu0 0
  %6359 = vmatprep.subr.bf16.mxu0 0
  %6360 = vmatpush2.bf16.msra.mxu0 0
  %6361 = vmatprep.subr.bf16.mxu0 0
  %6362 = vmatpush2.bf16.msra.mxu0 0
  %6363 = vmatprep.subr.bf16.mxu0 0
  %6364 = vmatpush2.bf16.msra.mxu0 0
  %6365 = vmatprep.subr.bf16.mxu0 0
  %6366 = vmatpush2.bf16.msra.mxu0 0
  %6367 = vmatprep.subr.bf16.mxu0 0
  %6368 = vmatpush2.bf16.msra.mxu0 0
  %6369 = vmatprep.subr.bf16.mxu0 0
  %6370 = vmatpush2.bf16.msra.mxu0 0
  %6371 = vmatprep.mubr.bf16.mxu0 0
  %6372 = vmatmul.mubr.bf16.gmra.mxu0 %v1470
  %v6373 = vpop.f32.mrf.mxu0
  %v6374 = vadd.f32 0.0, %v6373
  %v6375 = vpop.f32.mrf.mxu0
  %v6376 = vpop.f32.mrf.mxu0
  %v6377 = vpop.f32.mrf.mxu0
  %6378 = vdwg.mxu0
  %v6379 = vadd.f32 %v6334, %v6374
  %s6380 = scalar_lea.vmem %s3, 384
  %v6381 = vld [vmem:[%s6380] sm:$0xf]
  %v6382 = vld [vmem:[%s6380 + $0x4] sm:$0xf]
  %v6383 = vld [vmem:[%s6380 + $0x8] sm:$0xf]
  %v6384 = vld [vmem:[%s6380 + $0xc] sm:$0xf]
  %v6385 = vld [vmem:[%s6380 + $0x10] sm:$0xf]
  %v6386 = vld [vmem:[%s6380 + $0x14] sm:$0xf]
  %v6387 = vld [vmem:[%s6380 + $0x18] sm:$0xf]
  %v6388 = vld [vmem:[%s6380 + $0x1c] sm:$0xf]
  %v6389 = vld [vmem:[%s6380 + $0x20] sm:$0xf]
  %v6390 = vld [vmem:[%s6380 + $0x24] sm:$0xf]
  %v6391 = vld [vmem:[%s6380 + $0x28] sm:$0xf]
  %v6392 = vld [vmem:[%s6380 + $0x2c] sm:$0xf]
  %v6393 = vld [vmem:[%s6380 + $0x30] sm:$0xf]
  %v6394 = vld [vmem:[%s6380 + $0x34] sm:$0xf]
  %v6395 = vld [vmem:[%s6380 + $0x38] sm:$0xf]
  %v6396 = vld [vmem:[%s6380 + $0x3c] sm:$0xf]
  %v6413 = vunpack.c.l.b16 %v6381
  %v6414 = vunpack.c.l.b16 %v6382
  %v6415 = vunpack.c.l.b16 %v6383
  %v6416 = vunpack.c.l.b16 %v6384
  %v6417 = vunpack.c.l.b16 %v6385
  %v6418 = vunpack.c.l.b16 %v6386
  %v6419 = vunpack.c.l.b16 %v6387
  %v6420 = vunpack.c.l.b16 %v6388
  %v6421 = vunpack.c.l.b16 %v6389
  %v6422 = vunpack.c.l.b16 %v6390
  %v6423 = vunpack.c.l.b16 %v6391
  %v6424 = vunpack.c.l.b16 %v6392
  %v6425 = vunpack.c.l.b16 %v6393
  %v6426 = vunpack.c.l.b16 %v6394
  %v6427 = vunpack.c.l.b16 %v6395
  %v6428 = vunpack.c.l.b16 %v6396
  %v6429 = vpack.c.b16 %v6414, %v6413
  %v6430 = vpack.c.b16 %v6416, %v6415
  %v6431 = vpack.c.b16 %v6418, %v6417
  %v6432 = vpack.c.b16 %v6420, %v6419
  %v6433 = vpack.c.b16 %v6422, %v6421
  %v6434 = vpack.c.b16 %v6424, %v6423
  %v6435 = vpack.c.b16 %v6426, %v6425
  %v6436 = vpack.c.b16 %v6428, %v6427
  %6445 = vmatprep.subr.bf16.mxu0 0
  %6446 = vmatpush1.bf16.msra.mxu0 %v6436
  %6447 = vmatprep.subr.bf16.mxu0 0
  %6448 = vmatpush1.bf16.msra.mxu0 %v6435
  %6449 = vmatprep.subr.bf16.mxu0 0
  %6450 = vmatpush1.bf16.msra.mxu0 %v6434
  %6451 = vmatprep.subr.bf16.mxu0 0
  %6452 = vmatpush1.bf16.msra.mxu0 %v6433
  %6453 = vmatprep.subr.bf16.mxu0 0
  %6454 = vmatpush1.bf16.msra.mxu0 %v6432
  %6455 = vmatprep.subr.bf16.mxu0 0
  %6456 = vmatpush1.bf16.msra.mxu0 %v6431
  %6457 = vmatprep.subr.bf16.mxu0 0
  %6458 = vmatpush1.bf16.msra.mxu0 %v6430
  %6459 = vmatprep.subr.bf16.mxu0 0
  %6460 = vmatpush1.bf16.msra.mxu0 %v6429
  %6461 = vmatprep.subr.bf16.mxu0 0
  %6462 = vmatpush2.bf16.msra.mxu0 0
  %6463 = vmatprep.subr.bf16.mxu0 0
  %6464 = vmatpush2.bf16.msra.mxu0 0
  %6465 = vmatprep.subr.bf16.mxu0 0
  %6466 = vmatpush2.bf16.msra.mxu0 0
  %6467 = vmatprep.subr.bf16.mxu0 0
  %6468 = vmatpush2.bf16.msra.mxu0 0
  %6469 = vmatprep.subr.bf16.mxu0 0
  %6470 = vmatpush2.bf16.msra.mxu0 0
  %6471 = vmatprep.subr.bf16.mxu0 0
  %6472 = vmatpush2.bf16.msra.mxu0 0
  %6473 = vmatprep.subr.bf16.mxu0 0
  %6474 = vmatpush2.bf16.msra.mxu0 0
  %6475 = vmatprep.subr.bf16.mxu0 0
  %6476 = vmatpush2.bf16.msra.mxu0 0
  %6477 = vmatprep.mubr.bf16.mxu0 0
  %6478 = vmatmul.mubr.bf16.gmra.mxu0 %v2285
  %v6479 = vpop.f32.mrf.mxu0
  %v6480 = vadd.f32 0.0, %v6479
  %v6481 = vpop.f32.mrf.mxu0
  %v6482 = vpop.f32.mrf.mxu0
  %v6483 = vpop.f32.mrf.mxu0
  %6484 = vdwg.mxu0
  %v6485 = vadd.f32 %v6379, %v6480
  %6486 = vmatprep.subr.bf16.mxu0 0
  %6487 = vmatpush1.bf16.msra.mxu0 %v6026
  %6488 = vmatprep.subr.bf16.mxu0 0
  %6489 = vmatpush1.bf16.msra.mxu0 %v6025
  %6490 = vmatprep.subr.bf16.mxu0 0
  %6491 = vmatpush1.bf16.msra.mxu0 %v6024
  %6492 = vmatprep.subr.bf16.mxu0 0
  %6493 = vmatpush1.bf16.msra.mxu0 %v6023
  %6494 = vmatprep.subr.bf16.mxu0 0
  %6495 = vmatpush1.bf16.msra.mxu0 %v6022
  %6496 = vmatprep.subr.bf16.mxu0 0
  %6497 = vmatpush1.bf16.msra.mxu0 %v6021
  %6498 = vmatprep.subr.bf16.mxu0 0
  %6499 = vmatpush1.bf16.msra.mxu0 %v6020
  %6500 = vmatprep.subr.bf16.mxu0 0
  %6501 = vmatpush1.bf16.msra.mxu0 %v6019
  %6502 = vmatprep.subr.bf16.mxu0 0
  %6503 = vmatpush2.bf16.msra.mxu0 0
  %6504 = vmatprep.subr.bf16.mxu0 0
  %6505 = vmatpush2.bf16.msra.mxu0 0
  %6506 = vmatprep.subr.bf16.mxu0 0
  %6507 = vmatpush2.bf16.msra.mxu0 0
  %6508 = vmatprep.subr.bf16.mxu0 0
  %6509 = vmatpush2.bf16.msra.mxu0 0
  %6510 = vmatprep.subr.bf16.mxu0 0
  %6511 = vmatpush2.bf16.msra.mxu0 0
  %6512 = vmatprep.subr.bf16.mxu0 0
  %6513 = vmatpush2.bf16.msra.mxu0 0
  %6514 = vmatprep.subr.bf16.mxu0 0
  %6515 = vmatpush2.bf16.msra.mxu0 0
  %6516 = vmatprep.subr.bf16.mxu0 0
  %6517 = vmatpush2.bf16.msra.mxu0 0
  %6518 = vmatprep.mubr.bf16.mxu0 0
  %6519 = vmatmul.mubr.bf16.gmra.mxu0 %v2657
  %v6520 = vpop.f32.mrf.mxu0
  %v6521 = vadd.f32 0.0, %v6520
  %v6522 = vpop.f32.mrf.mxu0
  %v6523 = vpop.f32.mrf.mxu0
  %v6524 = vpop.f32.mrf.mxu0
  %6525 = vdwg.mxu0
  %v6526 = vadd.f32 %v6485, %v6521
  %6527 = vmatprep.subr.bf16.mxu0 0
  %6528 = vmatpush1.bf16.msra.mxu0 %v6132
  %6529 = vmatprep.subr.bf16.mxu0 0
  %6530 = vmatpush1.bf16.msra.mxu0 %v6131
  %6531 = vmatprep.subr.bf16.mxu0 0
  %6532 = vmatpush1.bf16.msra.mxu0 %v6130
  %6533 = vmatprep.subr.bf16.mxu0 0
  %6534 = vmatpush1.bf16.msra.mxu0 %v6129
  %6535 = vmatprep.subr.bf16.mxu0 0
  %6536 = vmatpush1.bf16.msra.mxu0 %v6128
  %6537 = vmatprep.subr.bf16.mxu0 0
  %6538 = vmatpush1.bf16.msra.mxu0 %v6127
  %6539 = vmatprep.subr.bf16.mxu0 0
  %6540 = vmatpush1.bf16.msra.mxu0 %v6126
  %6541 = vmatprep.subr.bf16.mxu0 0
  %6542 = vmatpush1.bf16.msra.mxu0 %v6125
  %6543 = vmatprep.subr.bf16.mxu0 0
  %6544 = vmatpush2.bf16.msra.mxu0 0
  %6545 = vmatprep.subr.bf16.mxu0 0
  %6546 = vmatpush2.bf16.msra.mxu0 0
  %6547 = vmatprep.subr.bf16.mxu0 0
  %6548 = vmatpush2.bf16.msra.mxu0 0
  %6549 = vmatprep.subr.bf16.mxu0 0
  %6550 = vmatpush2.bf16.msra.mxu0 0
  %6551 = vmatprep.subr.bf16.mxu0 0
  %6552 = vmatpush2.bf16.msra.mxu0 0
  %6553 = vmatprep.subr.bf16.mxu0 0
  %6554 = vmatpush2.bf16.msra.mxu0 0
  %6555 = vmatprep.subr.bf16.mxu0 0
  %6556 = vmatpush2.bf16.msra.mxu0 0
  %6557 = vmatprep.subr.bf16.mxu0 0
  %6558 = vmatpush2.bf16.msra.mxu0 0
  %6559 = vmatprep.mubr.bf16.mxu0 0
  %6560 = vmatmul.mubr.bf16.gmra.mxu0 %v3029
  %v6561 = vpop.f32.mrf.mxu0
  %v6562 = vadd.f32 0.0, %v6561
  %v6563 = vpop.f32.mrf.mxu0
  %v6564 = vpop.f32.mrf.mxu0
  %v6565 = vpop.f32.mrf.mxu0
  %6566 = vdwg.mxu0
  %v6567 = vadd.f32 %v6526, %v6562
  %v6568 = vadd.f32 %v6567, %v6187
  %vm6569 = vcmp.ge.f32.partialorder %v6568, 0.0
  %v6570 = vmul.f32 %v6568, 0.01
  %v6571 = vsel %vm6569, %v6568, %v6570
  %v6572 = vpack.c.bf16 %v6571, %v6571
  %s6573 = scalar_lea.vmem %s3, 64
  %v6574 = vld [vmem:[%s6573] sm:$0xf]
  %v6575 = vld [vmem:[%s6573 + $0x4] sm:$0xf]
  %v6576 = vld [vmem:[%s6573 + $0x8] sm:$0xf]
  %v6577 = vld [vmem:[%s6573 + $0xc] sm:$0xf]
  %v6578 = vld [vmem:[%s6573 + $0x10] sm:$0xf]
  %v6579 = vld [vmem:[%s6573 + $0x14] sm:$0xf]
  %v6580 = vld [vmem:[%s6573 + $0x18] sm:$0xf]
  %v6581 = vld [vmem:[%s6573 + $0x1c] sm:$0xf]
  %v6582 = vld [vmem:[%s6573 + $0x20] sm:$0xf]
  %v6583 = vld [vmem:[%s6573 + $0x24] sm:$0xf]
  %v6584 = vld [vmem:[%s6573 + $0x28] sm:$0xf]
  %v6585 = vld [vmem:[%s6573 + $0x2c] sm:$0xf]
  %v6586 = vld [vmem:[%s6573 + $0x30] sm:$0xf]
  %v6587 = vld [vmem:[%s6573 + $0x34] sm:$0xf]
  %v6588 = vld [vmem:[%s6573 + $0x38] sm:$0xf]
  %v6589 = vld [vmem:[%s6573 + $0x3c] sm:$0xf]
  %s6590 = scalar_lea.vmem %s3, 128
  %v6591 = vld [vmem:[%s6590] sm:$0xf]
  %v6592 = vld [vmem:[%s6590 + $0x4] sm:$0xf]
  %v6593 = vld [vmem:[%s6590 + $0x8] sm:$0xf]
  %v6594 = vld [vmem:[%s6590 + $0xc] sm:$0xf]
  %v6595 = vld [vmem:[%s6590 + $0x10] sm:$0xf]
  %v6596 = vld [vmem:[%s6590 + $0x14] sm:$0xf]
  %v6597 = vld [vmem:[%s6590 + $0x18] sm:$0xf]
  %v6598 = vld [vmem:[%s6590 + $0x1c] sm:$0xf]
  %v6599 = vld [vmem:[%s6590 + $0x20] sm:$0xf]
  %v6600 = vld [vmem:[%s6590 + $0x24] sm:$0xf]
  %v6601 = vld [vmem:[%s6590 + $0x28] sm:$0xf]
  %v6602 = vld [vmem:[%s6590 + $0x2c] sm:$0xf]
  %v6603 = vld [vmem:[%s6590 + $0x30] sm:$0xf]
  %v6604 = vld [vmem:[%s6590 + $0x34] sm:$0xf]
  %v6605 = vld [vmem:[%s6590 + $0x38] sm:$0xf]
  %v6606 = vld [vmem:[%s6590 + $0x3c] sm:$0xf]
  %v6623 = vunpack.c.l.b16 %v6591
  %v6624 = vunpack.c.l.b16 %v6592
  %v6625 = vunpack.c.l.b16 %v6593
  %v6626 = vunpack.c.l.b16 %v6594
  %v6627 = vunpack.c.l.b16 %v6595
  %v6628 = vunpack.c.l.b16 %v6596
  %v6629 = vunpack.c.l.b16 %v6597
  %v6630 = vunpack.c.l.b16 %v6598
  %v6631 = vunpack.c.l.b16 %v6599
  %v6632 = vunpack.c.l.b16 %v6600
  %v6633 = vunpack.c.l.b16 %v6601
  %v6634 = vunpack.c.l.b16 %v6602
  %v6635 = vunpack.c.l.b16 %v6603
  %v6636 = vunpack.c.l.b16 %v6604
  %v6637 = vunpack.c.l.b16 %v6605
  %v6638 = vunpack.c.l.b16 %v6606
  %v6639 = vpack.c.b16 %v6624, %v6623
  %v6640 = vpack.c.b16 %v6626, %v6625
  %v6641 = vpack.c.b16 %v6628, %v6627
  %v6642 = vpack.c.b16 %v6630, %v6629
  %v6643 = vpack.c.b16 %v6632, %v6631
  %v6644 = vpack.c.b16 %v6634, %v6633
  %v6645 = vpack.c.b16 %v6636, %v6635
  %v6646 = vpack.c.b16 %v6638, %v6637
  %6655 = vmatprep.subr.bf16.mxu0 0
  %6656 = vmatpush1.bf16.msra.mxu0 %v6646
  %6657 = vmatprep.subr.bf16.mxu0 0
  %6658 = vmatpush1.bf16.msra.mxu0 %v6645
  %6659 = vmatprep.subr.bf16.mxu0 0
  %6660 = vmatpush1.bf16.msra.mxu0 %v6644
  %6661 = vmatprep.subr.bf16.mxu0 0
  %6662 = vmatpush1.bf16.msra.mxu0 %v6643
  %6663 = vmatprep.subr.bf16.mxu0 0
  %6664 = vmatpush1.bf16.msra.mxu0 %v6642
  %6665 = vmatprep.subr.bf16.mxu0 0
  %6666 = vmatpush1.bf16.msra.mxu0 %v6641
  %6667 = vmatprep.subr.bf16.mxu0 0
  %6668 = vmatpush1.bf16.msra.mxu0 %v6640
  %6669 = vmatprep.subr.bf16.mxu0 0
  %6670 = vmatpush1.bf16.msra.mxu0 %v6639
  %6671 = vmatprep.subr.bf16.mxu0 0
  %6672 = vmatpush2.bf16.msra.mxu0 0
  %6673 = vmatprep.subr.bf16.mxu0 0
  %6674 = vmatpush2.bf16.msra.mxu0 0
  %6675 = vmatprep.subr.bf16.mxu0 0
  %6676 = vmatpush2.bf16.msra.mxu0 0
  %6677 = vmatprep.subr.bf16.mxu0 0
  %6678 = vmatpush2.bf16.msra.mxu0 0
  %6679 = vmatprep.subr.bf16.mxu0 0
  %6680 = vmatpush2.bf16.msra.mxu0 0
  %6681 = vmatprep.subr.bf16.mxu0 0
  %6682 = vmatpush2.bf16.msra.mxu0 0
  %6683 = vmatprep.subr.bf16.mxu0 0
  %6684 = vmatpush2.bf16.msra.mxu0 0
  %6685 = vmatprep.subr.bf16.mxu0 0
  %6686 = vmatpush2.bf16.msra.mxu0 0
  %6687 = vmatprep.mubr.bf16.mxu0 0
  %6688 = vmatmul.mubr.bf16.gmra.mxu0 %v2285
  %v6689 = vpop.f32.mrf.mxu0
  %v6690 = vadd.f32 0.0, %v6689
  %v6691 = vpop.f32.mrf.mxu0
  %v6692 = vpop.f32.mrf.mxu0
  %v6693 = vpop.f32.mrf.mxu0
  %6694 = vdwg.mxu0
  %v6711 = vunpack.c.l.b16 %v6574
  %v6712 = vunpack.c.l.b16 %v6575
  %v6713 = vunpack.c.l.b16 %v6576
  %v6714 = vunpack.c.l.b16 %v6577
  %v6715 = vunpack.c.l.b16 %v6578
  %v6716 = vunpack.c.l.b16 %v6579
  %v6717 = vunpack.c.l.b16 %v6580
  %v6718 = vunpack.c.l.b16 %v6581
  %v6719 = vunpack.c.l.b16 %v6582
  %v6720 = vunpack.c.l.b16 %v6583
  %v6721 = vunpack.c.l.b16 %v6584
  %v6722 = vunpack.c.l.b16 %v6585
  %v6723 = vunpack.c.l.b16 %v6586
  %v6724 = vunpack.c.l.b16 %v6587
  %v6725 = vunpack.c.l.b16 %v6588
  %v6726 = vunpack.c.l.b16 %v6589
  %v6727 = vpack.c.b16 %v6712, %v6711
  %v6728 = vpack.c.b16 %v6714, %v6713
  %v6729 = vpack.c.b16 %v6716, %v6715
  %v6730 = vpack.c.b16 %v6718, %v6717
  %v6731 = vpack.c.b16 %v6720, %v6719
  %v6732 = vpack.c.b16 %v6722, %v6721
  %v6733 = vpack.c.b16 %v6724, %v6723
  %v6734 = vpack.c.b16 %v6726, %v6725
  %6743 = vmatprep.subr.bf16.mxu0 0
  %6744 = vmatpush1.bf16.msra.mxu0 %v6734
  %6745 = vmatprep.subr.bf16.mxu0 0
  %6746 = vmatpush1.bf16.msra.mxu0 %v6733
  %6747 = vmatprep.subr.bf16.mxu0 0
  %6748 = vmatpush1.bf16.msra.mxu0 %v6732
  %6749 = vmatprep.subr.bf16.mxu0 0
  %6750 = vmatpush1.bf16.msra.mxu0 %v6731
  %6751 = vmatprep.subr.bf16.mxu0 0
  %6752 = vmatpush1.bf16.msra.mxu0 %v6730
  %6753 = vmatprep.subr.bf16.mxu0 0
  %6754 = vmatpush1.bf16.msra.mxu0 %v6729
  %6755 = vmatprep.subr.bf16.mxu0 0
  %6756 = vmatpush1.bf16.msra.mxu0 %v6728
  %6757 = vmatprep.subr.bf16.mxu0 0
  %6758 = vmatpush1.bf16.msra.mxu0 %v6727
  %6759 = vmatprep.subr.bf16.mxu0 0
  %6760 = vmatpush2.bf16.msra.mxu0 0
  %6761 = vmatprep.subr.bf16.mxu0 0
  %6762 = vmatpush2.bf16.msra.mxu0 0
  %6763 = vmatprep.subr.bf16.mxu0 0
  %6764 = vmatpush2.bf16.msra.mxu0 0
  %6765 = vmatprep.subr.bf16.mxu0 0
  %6766 = vmatpush2.bf16.msra.mxu0 0
  %6767 = vmatprep.subr.bf16.mxu0 0
  %6768 = vmatpush2.bf16.msra.mxu0 0
  %6769 = vmatprep.subr.bf16.mxu0 0
  %6770 = vmatpush2.bf16.msra.mxu0 0
  %6771 = vmatprep.subr.bf16.mxu0 0
  %6772 = vmatpush2.bf16.msra.mxu0 0
  %6773 = vmatprep.subr.bf16.mxu0 0
  %6774 = vmatpush2.bf16.msra.mxu0 0
  %6775 = vmatprep.mubr.bf16.mxu0 0
  %6776 = vmatmul.mubr.bf16.gmra.mxu0 %v1849
  %v6777 = vpop.f32.mrf.mxu0
  %v6778 = vadd.f32 %v6690, %v6777
  %v6779 = vpop.f32.mrf.mxu0
  %v6780 = vpop.f32.mrf.mxu0
  %v6781 = vpop.f32.mrf.mxu0
  %6782 = vdwg.mxu0
  %6783 = vmatprep.subr.bf16.mxu0 0
  %6784 = vmatpush1.bf16.msra.mxu0 %v5921
  %6785 = vmatprep.subr.bf16.mxu0 0
  %6786 = vmatpush1.bf16.msra.mxu0 %v5920
  %6787 = vmatprep.subr.bf16.mxu0 0
  %6788 = vmatpush1.bf16.msra.mxu0 %v5919
  %6789 = vmatprep.subr.bf16.mxu0 0
  %6790 = vmatpush1.bf16.msra.mxu0 %v5918
  %6791 = vmatprep.subr.bf16.mxu0 0
  %6792 = vmatpush1.bf16.msra.mxu0 %v5917
  %6793 = vmatprep.subr.bf16.mxu0 0
  %6794 = vmatpush1.bf16.msra.mxu0 %v5916
  %6795 = vmatprep.subr.bf16.mxu0 0
  %6796 = vmatpush1.bf16.msra.mxu0 %v5915
  %6797 = vmatprep.subr.bf16.mxu0 0
  %6798 = vmatpush1.bf16.msra.mxu0 %v5914
  %6799 = vmatprep.subr.bf16.mxu0 0
  %6800 = vmatpush2.bf16.msra.mxu0 0
  %6801 = vmatprep.subr.bf16.mxu0 0
  %6802 = vmatpush2.bf16.msra.mxu0 0
  %6803 = vmatprep.subr.bf16.mxu0 0
  %6804 = vmatpush2.bf16.msra.mxu0 0
  %6805 = vmatprep.subr.bf16.mxu0 0
  %6806 = vmatpush2.bf16.msra.mxu0 0
  %6807 = vmatprep.subr.bf16.mxu0 0
  %6808 = vmatpush2.bf16.msra.mxu0 0
  %6809 = vmatprep.subr.bf16.mxu0 0
  %6810 = vmatpush2.bf16.msra.mxu0 0
  %6811 = vmatprep.subr.bf16.mxu0 0
  %6812 = vmatpush2.bf16.msra.mxu0 0
  %6813 = vmatprep.subr.bf16.mxu0 0
  %6814 = vmatpush2.bf16.msra.mxu0 0
  %6815 = vmatprep.mubr.bf16.mxu0 0
  %6816 = vmatmul.mubr.bf16.gmra.mxu0 %v3278
  %v6817 = vpop.f32.mrf.mxu0
  %v6818 = vadd.f32 0.0, %v6817
  %v6819 = vpop.f32.mrf.mxu0
  %v6820 = vpop.f32.mrf.mxu0
  %v6821 = vpop.f32.mrf.mxu0
  %6822 = vdwg.mxu0
  %v6823 = vadd.f32 %v6778, %v6818
  %6824 = vmatprep.subr.bf16.mxu0 0
  %6825 = vmatpush1.bf16.msra.mxu0 %v5833
  %6826 = vmatprep.subr.bf16.mxu0 0
  %6827 = vmatpush1.bf16.msra.mxu0 %v5832
  %6828 = vmatprep.subr.bf16.mxu0 0
  %6829 = vmatpush1.bf16.msra.mxu0 %v5831
  %6830 = vmatprep.subr.bf16.mxu0 0
  %6831 = vmatpush1.bf16.msra.mxu0 %v5830
  %6832 = vmatprep.subr.bf16.mxu0 0
  %6833 = vmatpush1.bf16.msra.mxu0 %v5829
  %6834 = vmatprep.subr.bf16.mxu0 0
  %6835 = vmatpush1.bf16.msra.mxu0 %v5828
  %6836 = vmatprep.subr.bf16.mxu0 0
  %6837 = vmatpush1.bf16.msra.mxu0 %v5827
  %6838 = vmatprep.subr.bf16.mxu0 0
  %6839 = vmatpush1.bf16.msra.mxu0 %v5826
  %6840 = vmatprep.subr.bf16.mxu0 0
  %6841 = vmatpush2.bf16.msra.mxu0 0
  %6842 = vmatprep.subr.bf16.mxu0 0
  %6843 = vmatpush2.bf16.msra.mxu0 0
  %6844 = vmatprep.subr.bf16.mxu0 0
  %6845 = vmatpush2.bf16.msra.mxu0 0
  %6846 = vmatprep.subr.bf16.mxu0 0
  %6847 = vmatpush2.bf16.msra.mxu0 0
  %6848 = vmatprep.subr.bf16.mxu0 0
  %6849 = vmatpush2.bf16.msra.mxu0 0
  %6850 = vmatprep.subr.bf16.mxu0 0
  %6851 = vmatpush2.bf16.msra.mxu0 0
  %6852 = vmatprep.subr.bf16.mxu0 0
  %6853 = vmatpush2.bf16.msra.mxu0 0
  %6854 = vmatprep.subr.bf16.mxu0 0
  %6855 = vmatpush2.bf16.msra.mxu0 0
  %6856 = vmatprep.mubr.bf16.mxu0 0
  %6857 = vmatmul.mubr.bf16.gmra.mxu0 %v3650
  %v6858 = vpop.f32.mrf.mxu0
  %v6859 = vadd.f32 0.0, %v6858
  %v6860 = vpop.f32.mrf.mxu0
  %v6861 = vpop.f32.mrf.mxu0
  %v6862 = vpop.f32.mrf.mxu0
  %6863 = vdwg.mxu0
  %v6864 = vadd.f32 %v6823, %v6859
  %6865 = vmatprep.subr.bf16.mxu0 0
  %6866 = vmatpush1.bf16.msra.mxu0 %v6026
  %6867 = vmatprep.subr.bf16.mxu0 0
  %6868 = vmatpush1.bf16.msra.mxu0 %v6025
  %6869 = vmatprep.subr.bf16.mxu0 0
  %6870 = vmatpush1.bf16.msra.mxu0 %v6024
  %6871 = vmatprep.subr.bf16.mxu0 0
  %6872 = vmatpush1.bf16.msra.mxu0 %v6023
  %6873 = vmatprep.subr.bf16.mxu0 0
  %6874 = vmatpush1.bf16.msra.mxu0 %v6022
  %6875 = vmatprep.subr.bf16.mxu0 0
  %6876 = vmatpush1.bf16.msra.mxu0 %v6021
  %6877 = vmatprep.subr.bf16.mxu0 0
  %6878 = vmatpush1.bf16.msra.mxu0 %v6020
  %6879 = vmatprep.subr.bf16.mxu0 0
  %6880 = vmatpush1.bf16.msra.mxu0 %v6019
  %6881 = vmatprep.subr.bf16.mxu0 0
  %6882 = vmatpush2.bf16.msra.mxu0 0
  %6883 = vmatprep.subr.bf16.mxu0 0
  %6884 = vmatpush2.bf16.msra.mxu0 0
  %6885 = vmatprep.subr.bf16.mxu0 0
  %6886 = vmatpush2.bf16.msra.mxu0 0
  %6887 = vmatprep.subr.bf16.mxu0 0
  %6888 = vmatpush2.bf16.msra.mxu0 0
  %6889 = vmatprep.subr.bf16.mxu0 0
  %6890 = vmatpush2.bf16.msra.mxu0 0
  %6891 = vmatprep.subr.bf16.mxu0 0
  %6892 = vmatpush2.bf16.msra.mxu0 0
  %6893 = vmatprep.subr.bf16.mxu0 0
  %6894 = vmatpush2.bf16.msra.mxu0 0
  %6895 = vmatprep.subr.bf16.mxu0 0
  %6896 = vmatpush2.bf16.msra.mxu0 0
  %6897 = vmatprep.mubr.bf16.mxu0 0
  %6898 = vmatmul.mubr.bf16.gmra.mxu0 %v4643
  %v6899 = vpop.f32.mrf.mxu0
  %v6900 = vadd.f32 0.0, %v6899
  %v6901 = vpop.f32.mrf.mxu0
  %v6902 = vpop.f32.mrf.mxu0
  %v6903 = vpop.f32.mrf.mxu0
  %6904 = vdwg.mxu0
  %v6905 = vadd.f32 %v6864, %v6900
  %6906 = vmatprep.subr.bf16.mxu0 0
  %6907 = vmatpush1.bf16.msra.mxu0 %v6132
  %6908 = vmatprep.subr.bf16.mxu0 0
  %6909 = vmatpush1.bf16.msra.mxu0 %v6131
  %6910 = vmatprep.subr.bf16.mxu0 0
  %6911 = vmatpush1.bf16.msra.mxu0 %v6130
  %6912 = vmatprep.subr.bf16.mxu0 0
  %6913 = vmatpush1.bf16.msra.mxu0 %v6129
  %6914 = vmatprep.subr.bf16.mxu0 0
  %6915 = vmatpush1.bf16.msra.mxu0 %v6128
  %6916 = vmatprep.subr.bf16.mxu0 0
  %6917 = vmatpush1.bf16.msra.mxu0 %v6127
  %6918 = vmatprep.subr.bf16.mxu0 0
  %6919 = vmatpush1.bf16.msra.mxu0 %v6126
  %6920 = vmatprep.subr.bf16.mxu0 0
  %6921 = vmatpush1.bf16.msra.mxu0 %v6125
  %6922 = vmatprep.subr.bf16.mxu0 0
  %6923 = vmatpush2.bf16.msra.mxu0 0
  %6924 = vmatprep.subr.bf16.mxu0 0
  %6925 = vmatpush2.bf16.msra.mxu0 0
  %6926 = vmatprep.subr.bf16.mxu0 0
  %6927 = vmatpush2.bf16.msra.mxu0 0
  %6928 = vmatprep.subr.bf16.mxu0 0
  %6929 = vmatpush2.bf16.msra.mxu0 0
  %6930 = vmatprep.subr.bf16.mxu0 0
  %6931 = vmatpush2.bf16.msra.mxu0 0
  %6932 = vmatprep.subr.bf16.mxu0 0
  %6933 = vmatpush2.bf16.msra.mxu0 0
  %6934 = vmatprep.subr.bf16.mxu0 0
  %6935 = vmatpush2.bf16.msra.mxu0 0
  %6936 = vmatprep.subr.bf16.mxu0 0
  %6937 = vmatpush2.bf16.msra.mxu0 0
  %6938 = vmatprep.mubr.bf16.mxu0 0
  %6939 = vmatmul.mubr.bf16.gmra.mxu0 %v5015
  %v6940 = vpop.f32.mrf.mxu0
  %v6941 = vadd.f32 0.0, %v6940
  %v6942 = vpop.f32.mrf.mxu0
  %v6943 = vpop.f32.mrf.mxu0
  %v6944 = vpop.f32.mrf.mxu0
  %6945 = vdwg.mxu0
  %v6946 = vadd.f32 %v6905, %v6941
  %v6947 = vadd.f32 %v6946, %v6187
  %vm6948 = vcmp.ge.f32.partialorder %v6947, 0.0
  %v6949 = vmul.f32 %v6947, 0.01
  %v6950 = vsel %vm6948, %v6947, %v6949
  %v6951 = vpack.c.bf16 %v6950, %v6950
  %v6952 = vld [vmem:[%s3] sm:$0xf]
  %v6953 = vld [vmem:[%s3 + $0x4] sm:$0xf]
  %v6954 = vld [vmem:[%s3 + $0x8] sm:$0xf]
  %v6955 = vld [vmem:[%s3 + $0xc] sm:$0xf]
  %v6956 = vld [vmem:[%s3 + $0x10] sm:$0xf]
  %v6957 = vld [vmem:[%s3 + $0x14] sm:$0xf]
  %v6958 = vld [vmem:[%s3 + $0x18] sm:$0xf]
  %v6959 = vld [vmem:[%s3 + $0x1c] sm:$0xf]
  %v6960 = vld [vmem:[%s3 + $0x20] sm:$0xf]
  %v6961 = vld [vmem:[%s3 + $0x24] sm:$0xf]
  %v6962 = vld [vmem:[%s3 + $0x28] sm:$0xf]
  %v6963 = vld [vmem:[%s3 + $0x2c] sm:$0xf]
  %v6964 = vld [vmem:[%s3 + $0x30] sm:$0xf]
  %v6965 = vld [vmem:[%s3 + $0x34] sm:$0xf]
  %v6966 = vld [vmem:[%s3 + $0x38] sm:$0xf]
  %v6967 = vld [vmem:[%s3 + $0x3c] sm:$0xf]
  %6968 = vmatprep.subr.bf16.mxu0 0
  %6969 = vmatpush1.bf16.msra.mxu0 %v6734
  %6970 = vmatprep.subr.bf16.mxu0 0
  %6971 = vmatpush1.bf16.msra.mxu0 %v6733
  %6972 = vmatprep.subr.bf16.mxu0 0
  %6973 = vmatpush1.bf16.msra.mxu0 %v6732
  %6974 = vmatprep.subr.bf16.mxu0 0
  %6975 = vmatpush1.bf16.msra.mxu0 %v6731
  %6976 = vmatprep.subr.bf16.mxu0 0
  %6977 = vmatpush1.bf16.msra.mxu0 %v6730
  %6978 = vmatprep.subr.bf16.mxu0 0
  %6979 = vmatpush1.bf16.msra.mxu0 %v6729
  %6980 = vmatprep.subr.bf16.mxu0 0
  %6981 = vmatpush1.bf16.msra.mxu0 %v6728
  %6982 = vmatprep.subr.bf16.mxu0 0
  %6983 = vmatpush1.bf16.msra.mxu0 %v6727
  %6984 = vmatprep.subr.bf16.mxu0 0
  %6985 = vmatpush2.bf16.msra.mxu0 0
  %6986 = vmatprep.subr.bf16.mxu0 0
  %6987 = vmatpush2.bf16.msra.mxu0 0
  %6988 = vmatprep.subr.bf16.mxu0 0
  %6989 = vmatpush2.bf16.msra.mxu0 0
  %6990 = vmatprep.subr.bf16.mxu0 0
  %6991 = vmatpush2.bf16.msra.mxu0 0
  %6992 = vmatprep.subr.bf16.mxu0 0
  %6993 = vmatpush2.bf16.msra.mxu0 0
  %6994 = vmatprep.subr.bf16.mxu0 0
  %6995 = vmatpush2.bf16.msra.mxu0 0
  %6996 = vmatprep.subr.bf16.mxu0 0
  %6997 = vmatpush2.bf16.msra.mxu0 0
  %6998 = vmatprep.subr.bf16.mxu0 0
  %6999 = vmatpush2.bf16.msra.mxu0 0
  %7000 = vmatprep.mubr.bf16.mxu0 0
  %7001 = vmatmul.mubr.bf16.gmra.mxu0 %v2657
  %v7002 = vpop.f32.mrf.mxu0
  %v7003 = vadd.f32 0.0, %v7002
  %v7004 = vpop.f32.mrf.mxu0
  %v7005 = vpop.f32.mrf.mxu0
  %v7006 = vpop.f32.mrf.mxu0
  %7007 = vdwg.mxu0
  %v7024 = vunpack.c.l.b16 %v6952
  %v7025 = vunpack.c.l.b16 %v6953
  %v7026 = vunpack.c.l.b16 %v6954
  %v7027 = vunpack.c.l.b16 %v6955
  %v7028 = vunpack.c.l.b16 %v6956
  %v7029 = vunpack.c.l.b16 %v6957
  %v7030 = vunpack.c.l.b16 %v6958
  %v7031 = vunpack.c.l.b16 %v6959
  %v7032 = vunpack.c.l.b16 %v6960
  %v7033 = vunpack.c.l.b16 %v6961
  %v7034 = vunpack.c.l.b16 %v6962
  %v7035 = vunpack.c.l.b16 %v6963
  %v7036 = vunpack.c.l.b16 %v6964
  %v7037 = vunpack.c.l.b16 %v6965
  %v7038 = vunpack.c.l.b16 %v6966
  %v7039 = vunpack.c.l.b16 %v6967
  %v7040 = vpack.c.b16 %v7025, %v7024
  %v7041 = vpack.c.b16 %v7027, %v7026
  %v7042 = vpack.c.b16 %v7029, %v7028
  %v7043 = vpack.c.b16 %v7031, %v7030
  %v7044 = vpack.c.b16 %v7033, %v7032
  %v7045 = vpack.c.b16 %v7035, %v7034
  %v7046 = vpack.c.b16 %v7037, %v7036
  %v7047 = vpack.c.b16 %v7039, %v7038
  %7056 = vmatprep.subr.bf16.mxu0 0
  %7057 = vmatpush1.bf16.msra.mxu0 %v7047
  %7058 = vmatprep.subr.bf16.mxu0 0
  %7059 = vmatpush1.bf16.msra.mxu0 %v7046
  %7060 = vmatprep.subr.bf16.mxu0 0
  %7061 = vmatpush1.bf16.msra.mxu0 %v7045
  %7062 = vmatprep.subr.bf16.mxu0 0
  %7063 = vmatpush1.bf16.msra.mxu0 %v7044
  %7064 = vmatprep.subr.bf16.mxu0 0
  %7065 = vmatpush1.bf16.msra.mxu0 %v7043
  %7066 = vmatprep.subr.bf16.mxu0 0
  %7067 = vmatpush1.bf16.msra.mxu0 %v7042
  %7068 = vmatprep.subr.bf16.mxu0 0
  %7069 = vmatpush1.bf16.msra.mxu0 %v7041
  %7070 = vmatprep.subr.bf16.mxu0 0
  %7071 = vmatpush1.bf16.msra.mxu0 %v7040
  %7072 = vmatprep.subr.bf16.mxu0 0
  %7073 = vmatpush2.bf16.msra.mxu0 0
  %7074 = vmatprep.subr.bf16.mxu0 0
  %7075 = vmatpush2.bf16.msra.mxu0 0
  %7076 = vmatprep.subr.bf16.mxu0 0
  %7077 = vmatpush2.bf16.msra.mxu0 0
  %7078 = vmatprep.subr.bf16.mxu0 0
  %7079 = vmatpush2.bf16.msra.mxu0 0
  %7080 = vmatprep.subr.bf16.mxu0 0
  %7081 = vmatpush2.bf16.msra.mxu0 0
  %7082 = vmatprep.subr.bf16.mxu0 0
  %7083 = vmatpush2.bf16.msra.mxu0 0
  %7084 = vmatprep.subr.bf16.mxu0 0
  %7085 = vmatpush2.bf16.msra.mxu0 0
  %7086 = vmatprep.subr.bf16.mxu0 0
  %7087 = vmatpush2.bf16.msra.mxu0 0
  %7088 = vmatprep.mubr.bf16.mxu0 0
  %7089 = vmatmul.mubr.bf16.gmra.mxu0 %v2285
  %v7090 = vpop.f32.mrf.mxu0
  %v7091 = vadd.f32 %v7003, %v7090
  %v7092 = vpop.f32.mrf.mxu0
  %v7093 = vpop.f32.mrf.mxu0
  %v7094 = vpop.f32.mrf.mxu0
  %7095 = vdwg.mxu0
  %7096 = vmatprep.subr.bf16.mxu0 0
  %7097 = vmatpush1.bf16.msra.mxu0 %v6646
  %7098 = vmatprep.subr.bf16.mxu0 0
  %7099 = vmatpush1.bf16.msra.mxu0 %v6645
  %7100 = vmatprep.subr.bf16.mxu0 0
  %7101 = vmatpush1.bf16.msra.mxu0 %v6644
  %7102 = vmatprep.subr.bf16.mxu0 0
  %7103 = vmatpush1.bf16.msra.mxu0 %v6643
  %7104 = vmatprep.subr.bf16.mxu0 0
  %7105 = vmatpush1.bf16.msra.mxu0 %v6642
  %7106 = vmatprep.subr.bf16.mxu0 0
  %7107 = vmatpush1.bf16.msra.mxu0 %v6641
  %7108 = vmatprep.subr.bf16.mxu0 0
  %7109 = vmatpush1.bf16.msra.mxu0 %v6640
  %7110 = vmatprep.subr.bf16.mxu0 0
  %7111 = vmatpush1.bf16.msra.mxu0 %v6639
  %7112 = vmatprep.subr.bf16.mxu0 0
  %7113 = vmatpush2.bf16.msra.mxu0 0
  %7114 = vmatprep.subr.bf16.mxu0 0
  %7115 = vmatpush2.bf16.msra.mxu0 0
  %7116 = vmatprep.subr.bf16.mxu0 0
  %7117 = vmatpush2.bf16.msra.mxu0 0
  %7118 = vmatprep.subr.bf16.mxu0 0
  %7119 = vmatpush2.bf16.msra.mxu0 0
  %7120 = vmatprep.subr.bf16.mxu0 0
  %7121 = vmatpush2.bf16.msra.mxu0 0
  %7122 = vmatprep.subr.bf16.mxu0 0
  %7123 = vmatpush2.bf16.msra.mxu0 0
  %7124 = vmatprep.subr.bf16.mxu0 0
  %7125 = vmatpush2.bf16.msra.mxu0 0
  %7126 = vmatprep.subr.bf16.mxu0 0
  %7127 = vmatpush2.bf16.msra.mxu0 0
  %7128 = vmatprep.mubr.bf16.mxu0 0
  %7129 = vmatmul.mubr.bf16.gmra.mxu0 %v3029
  %v7130 = vpop.f32.mrf.mxu0
  %v7131 = vadd.f32 0.0, %v7130
  %v7132 = vpop.f32.mrf.mxu0
  %v7133 = vpop.f32.mrf.mxu0
  %v7134 = vpop.f32.mrf.mxu0
  %7135 = vdwg.mxu0
  %v7136 = vadd.f32 %v7091, %v7131
  %7137 = vmatprep.subr.bf16.mxu0 0
  %7138 = vmatpush1.bf16.msra.mxu0 %v6290
  %7139 = vmatprep.subr.bf16.mxu0 0
  %7140 = vmatpush1.bf16.msra.mxu0 %v6289
  %7141 = vmatprep.subr.bf16.mxu0 0
  %7142 = vmatpush1.bf16.msra.mxu0 %v6288
  %7143 = vmatprep.subr.bf16.mxu0 0
  %7144 = vmatpush1.bf16.msra.mxu0 %v6287
  %7145 = vmatprep.subr.bf16.mxu0 0
  %7146 = vmatpush1.bf16.msra.mxu0 %v6286
  %7147 = vmatprep.subr.bf16.mxu0 0
  %7148 = vmatpush1.bf16.msra.mxu0 %v6285
  %7149 = vmatprep.subr.bf16.mxu0 0
  %7150 = vmatpush1.bf16.msra.mxu0 %v6284
  %7151 = vmatprep.subr.bf16.mxu0 0
  %7152 = vmatpush1.bf16.msra.mxu0 %v6283
  %7153 = vmatprep.subr.bf16.mxu0 0
  %7154 = vmatpush2.bf16.msra.mxu0 0
  %7155 = vmatprep.subr.bf16.mxu0 0
  %7156 = vmatpush2.bf16.msra.mxu0 0
  %7157 = vmatprep.subr.bf16.mxu0 0
  %7158 = vmatpush2.bf16.msra.mxu0 0
  %7159 = vmatprep.subr.bf16.mxu0 0
  %7160 = vmatpush2.bf16.msra.mxu0 0
  %7161 = vmatprep.subr.bf16.mxu0 0
  %7162 = vmatpush2.bf16.msra.mxu0 0
  %7163 = vmatprep.subr.bf16.mxu0 0
  %7164 = vmatpush2.bf16.msra.mxu0 0
  %7165 = vmatprep.subr.bf16.mxu0 0
  %7166 = vmatpush2.bf16.msra.mxu0 0
  %7167 = vmatprep.subr.bf16.mxu0 0
  %7168 = vmatpush2.bf16.msra.mxu0 0
  %7169 = vmatprep.mubr.bf16.mxu0 0
  %7170 = vmatmul.mubr.bf16.gmra.mxu0 %v3650
  %v7171 = vpop.f32.mrf.mxu0
  %v7172 = vadd.f32 0.0, %v7171
  %v7173 = vpop.f32.mrf.mxu0
  %v7174 = vpop.f32.mrf.mxu0
  %v7175 = vpop.f32.mrf.mxu0
  %7176 = vdwg.mxu0
  %v7177 = vadd.f32 %v7136, %v7172
  %7178 = vmatprep.subr.bf16.mxu0 0
  %7179 = vmatpush1.bf16.msra.mxu0 %v5921
  %7180 = vmatprep.subr.bf16.mxu0 0
  %7181 = vmatpush1.bf16.msra.mxu0 %v5920
  %7182 = vmatprep.subr.bf16.mxu0 0
  %7183 = vmatpush1.bf16.msra.mxu0 %v5919
  %7184 = vmatprep.subr.bf16.mxu0 0
  %7185 = vmatpush1.bf16.msra.mxu0 %v5918
  %7186 = vmatprep.subr.bf16.mxu0 0
  %7187 = vmatpush1.bf16.msra.mxu0 %v5917
  %7188 = vmatprep.subr.bf16.mxu0 0
  %7189 = vmatpush1.bf16.msra.mxu0 %v5916
  %7190 = vmatprep.subr.bf16.mxu0 0
  %7191 = vmatpush1.bf16.msra.mxu0 %v5915
  %7192 = vmatprep.subr.bf16.mxu0 0
  %7193 = vmatpush1.bf16.msra.mxu0 %v5914
  %7194 = vmatprep.subr.bf16.mxu0 0
  %7195 = vmatpush2.bf16.msra.mxu0 0
  %7196 = vmatprep.subr.bf16.mxu0 0
  %7197 = vmatpush2.bf16.msra.mxu0 0
  %7198 = vmatprep.subr.bf16.mxu0 0
  %7199 = vmatpush2.bf16.msra.mxu0 0
  %7200 = vmatprep.subr.bf16.mxu0 0
  %7201 = vmatpush2.bf16.msra.mxu0 0
  %7202 = vmatprep.subr.bf16.mxu0 0
  %7203 = vmatpush2.bf16.msra.mxu0 0
  %7204 = vmatprep.subr.bf16.mxu0 0
  %7205 = vmatpush2.bf16.msra.mxu0 0
  %7206 = vmatprep.subr.bf16.mxu0 0
  %7207 = vmatpush2.bf16.msra.mxu0 0
  %7208 = vmatprep.subr.bf16.mxu0 0
  %7209 = vmatpush2.bf16.msra.mxu0 0
  %7210 = vmatprep.mubr.bf16.mxu0 0
  %7211 = vmatmul.mubr.bf16.gmra.mxu0 %v4022
  %v7212 = vpop.f32.mrf.mxu0
  %v7213 = vadd.f32 0.0, %v7212
  %v7214 = vpop.f32.mrf.mxu0
  %v7215 = vpop.f32.mrf.mxu0
  %v7216 = vpop.f32.mrf.mxu0
  %7217 = vdwg.mxu0
  %v7218 = vadd.f32 %v7177, %v7213
  %7219 = vmatprep.subr.bf16.mxu0 0
  %7220 = vmatpush1.bf16.msra.mxu0 %v5833
  %7221 = vmatprep.subr.bf16.mxu0 0
  %7222 = vmatpush1.bf16.msra.mxu0 %v5832
  %7223 = vmatprep.subr.bf16.mxu0 0
  %7224 = vmatpush1.bf16.msra.mxu0 %v5831
  %7225 = vmatprep.subr.bf16.mxu0 0
  %7226 = vmatpush1.bf16.msra.mxu0 %v5830
  %7227 = vmatprep.subr.bf16.mxu0 0
  %7228 = vmatpush1.bf16.msra.mxu0 %v5829
  %7229 = vmatprep.subr.bf16.mxu0 0
  %7230 = vmatpush1.bf16.msra.mxu0 %v5828
  %7231 = vmatprep.subr.bf16.mxu0 0
  %7232 = vmatpush1.bf16.msra.mxu0 %v5827
  %7233 = vmatprep.subr.bf16.mxu0 0
  %7234 = vmatpush1.bf16.msra.mxu0 %v5826
  %7235 = vmatprep.subr.bf16.mxu0 0
  %7236 = vmatpush2.bf16.msra.mxu0 0
  %7237 = vmatprep.subr.bf16.mxu0 0
  %7238 = vmatpush2.bf16.msra.mxu0 0
  %7239 = vmatprep.subr.bf16.mxu0 0
  %7240 = vmatpush2.bf16.msra.mxu0 0
  %7241 = vmatprep.subr.bf16.mxu0 0
  %7242 = vmatpush2.bf16.msra.mxu0 0
  %7243 = vmatprep.subr.bf16.mxu0 0
  %7244 = vmatpush2.bf16.msra.mxu0 0
  %7245 = vmatprep.subr.bf16.mxu0 0
  %7246 = vmatpush2.bf16.msra.mxu0 0
  %7247 = vmatprep.subr.bf16.mxu0 0
  %7248 = vmatpush2.bf16.msra.mxu0 0
  %7249 = vmatprep.subr.bf16.mxu0 0
  %7250 = vmatpush2.bf16.msra.mxu0 0
  %7251 = vmatprep.mubr.bf16.mxu0 0
  %7252 = vmatmul.mubr.bf16.gmra.mxu0 %v4394
  %v7253 = vpop.f32.mrf.mxu0
  %v7254 = vadd.f32 0.0, %v7253
  %v7255 = vpop.f32.mrf.mxu0
  %v7256 = vpop.f32.mrf.mxu0
  %v7257 = vpop.f32.mrf.mxu0
  %7258 = vdwg.mxu0
  %v7259 = vadd.f32 %v7218, %v7254
  %7260 = vmatprep.subr.bf16.mxu0 0
  %7261 = vmatpush1.bf16.msra.mxu0 %v6436
  %7262 = vmatprep.subr.bf16.mxu0 0
  %7263 = vmatpush1.bf16.msra.mxu0 %v6435
  %7264 = vmatprep.subr.bf16.mxu0 0
  %7265 = vmatpush1.bf16.msra.mxu0 %v6434
  %7266 = vmatprep.subr.bf16.mxu0 0
  %7267 = vmatpush1.bf16.msra.mxu0 %v6433
  %7268 = vmatprep.subr.bf16.mxu0 0
  %7269 = vmatpush1.bf16.msra.mxu0 %v6432
  %7270 = vmatprep.subr.bf16.mxu0 0
  %7271 = vmatpush1.bf16.msra.mxu0 %v6431
  %7272 = vmatprep.subr.bf16.mxu0 0
  %7273 = vmatpush1.bf16.msra.mxu0 %v6430
  %7274 = vmatprep.subr.bf16.mxu0 0
  %7275 = vmatpush1.bf16.msra.mxu0 %v6429
  %7276 = vmatprep.subr.bf16.mxu0 0
  %7277 = vmatpush2.bf16.msra.mxu0 0
  %7278 = vmatprep.subr.bf16.mxu0 0
  %7279 = vmatpush2.bf16.msra.mxu0 0
  %7280 = vmatprep.subr.bf16.mxu0 0
  %7281 = vmatpush2.bf16.msra.mxu0 0
  %7282 = vmatprep.subr.bf16.mxu0 0
  %7283 = vmatpush2.bf16.msra.mxu0 0
  %7284 = vmatprep.subr.bf16.mxu0 0
  %7285 = vmatpush2.bf16.msra.mxu0 0
  %7286 = vmatprep.subr.bf16.mxu0 0
  %7287 = vmatpush2.bf16.msra.mxu0 0
  %7288 = vmatprep.subr.bf16.mxu0 0
  %7289 = vmatpush2.bf16.msra.mxu0 0
  %7290 = vmatprep.subr.bf16.mxu0 0
  %7291 = vmatpush2.bf16.msra.mxu0 0
  %7292 = vmatprep.mubr.bf16.mxu0 0
  %7293 = vmatmul.mubr.bf16.gmra.mxu0 %v5015
  %v7294 = vpop.f32.mrf.mxu0
  %v7295 = vadd.f32 0.0, %v7294
  %v7296 = vpop.f32.mrf.mxu0
  %v7297 = vpop.f32.mrf.mxu0
  %v7298 = vpop.f32.mrf.mxu0
  %7299 = vdwg.mxu0
  %v7300 = vadd.f32 %v7259, %v7295
  %7301 = vmatprep.subr.bf16.mxu0 0
  %7302 = vmatpush1.bf16.msra.mxu0 %v6026
  %7303 = vmatprep.subr.bf16.mxu0 0
  %7304 = vmatpush1.bf16.msra.mxu0 %v6025
  %7305 = vmatprep.subr.bf16.mxu0 0
  %7306 = vmatpush1.bf16.msra.mxu0 %v6024
  %7307 = vmatprep.subr.bf16.mxu0 0
  %7308 = vmatpush1.bf16.msra.mxu0 %v6023
  %7309 = vmatprep.subr.bf16.mxu0 0
  %7310 = vmatpush1.bf16.msra.mxu0 %v6022
  %7311 = vmatprep.subr.bf16.mxu0 0
  %7312 = vmatpush1.bf16.msra.mxu0 %v6021
  %7313 = vmatprep.subr.bf16.mxu0 0
  %7314 = vmatpush1.bf16.msra.mxu0 %v6020
  %7315 = vmatprep.subr.bf16.mxu0 0
  %7316 = vmatpush1.bf16.msra.mxu0 %v6019
  %7317 = vmatprep.subr.bf16.mxu0 0
  %7318 = vmatpush2.bf16.msra.mxu0 0
  %7319 = vmatprep.subr.bf16.mxu0 0
  %7320 = vmatpush2.bf16.msra.mxu0 0
  %7321 = vmatprep.subr.bf16.mxu0 0
  %7322 = vmatpush2.bf16.msra.mxu0 0
  %7323 = vmatprep.subr.bf16.mxu0 0
  %7324 = vmatpush2.bf16.msra.mxu0 0
  %7325 = vmatprep.subr.bf16.mxu0 0
  %7326 = vmatpush2.bf16.msra.mxu0 0
  %7327 = vmatprep.subr.bf16.mxu0 0
  %7328 = vmatpush2.bf16.msra.mxu0 0
  %7329 = vmatprep.subr.bf16.mxu0 0
  %7330 = vmatpush2.bf16.msra.mxu0 0
  %7331 = vmatprep.subr.bf16.mxu0 0
  %7332 = vmatpush2.bf16.msra.mxu0 0
  %7333 = vmatprep.mubr.bf16.mxu0 0
  %7334 = vmatmul.mubr.bf16.gmra.mxu0 %v5387
  %v7335 = vpop.f32.mrf.mxu0
  %v7336 = vadd.f32 0.0, %v7335
  %v7337 = vpop.f32.mrf.mxu0
  %v7338 = vpop.f32.mrf.mxu0
  %v7339 = vpop.f32.mrf.mxu0
  %7340 = vdwg.mxu0
  %v7341 = vadd.f32 %v7300, %v7336
  %7342 = vmatprep.subr.bf16.mxu0 0
  %7343 = vmatpush1.bf16.msra.mxu0 %v6132
  %7344 = vmatprep.subr.bf16.mxu0 0
  %7345 = vmatpush1.bf16.msra.mxu0 %v6131
  %7346 = vmatprep.subr.bf16.mxu0 0
  %7347 = vmatpush1.bf16.msra.mxu0 %v6130
  %7348 = vmatprep.subr.bf16.mxu0 0
  %7349 = vmatpush1.bf16.msra.mxu0 %v6129
  %7350 = vmatprep.subr.bf16.mxu0 0
  %7351 = vmatpush1.bf16.msra.mxu0 %v6128
  %7352 = vmatprep.subr.bf16.mxu0 0
  %7353 = vmatpush1.bf16.msra.mxu0 %v6127
  %7354 = vmatprep.subr.bf16.mxu0 0
  %7355 = vmatpush1.bf16.msra.mxu0 %v6126
  %7356 = vmatprep.subr.bf16.mxu0 0
  %7357 = vmatpush1.bf16.msra.mxu0 %v6125
  %7358 = vmatprep.subr.bf16.mxu0 0
  %7359 = vmatpush2.bf16.msra.mxu0 0
  %7360 = vmatprep.subr.bf16.mxu0 0
  %7361 = vmatpush2.bf16.msra.mxu0 0
  %7362 = vmatprep.subr.bf16.mxu0 0
  %7363 = vmatpush2.bf16.msra.mxu0 0
  %7364 = vmatprep.subr.bf16.mxu0 0
  %7365 = vmatpush2.bf16.msra.mxu0 0
  %7366 = vmatprep.subr.bf16.mxu0 0
  %7367 = vmatpush2.bf16.msra.mxu0 0
  %7368 = vmatprep.subr.bf16.mxu0 0
  %7369 = vmatpush2.bf16.msra.mxu0 0
  %7370 = vmatprep.subr.bf16.mxu0 0
  %7371 = vmatpush2.bf16.msra.mxu0 0
  %7372 = vmatprep.subr.bf16.mxu0 0
  %7373 = vmatpush2.bf16.msra.mxu0 0
  %7374 = vmatprep.mubr.bf16.mxu0 0
  %7375 = vmatmul.mubr.bf16.gmra.mxu0 %v5759
  %v7376 = vpop.f32.mrf.mxu0
  %v7377 = vadd.f32 0.0, %v7376
  %v7378 = vpop.f32.mrf.mxu0
  %v7379 = vpop.f32.mrf.mxu0
  %v7380 = vpop.f32.mrf.mxu0
  %7381 = vdwg.mxu0
  %v7382 = vadd.f32 %v7341, %v7377
  %v7383 = vadd.f32 %v7382, %v6187
  %vm7384 = vcmp.ge.f32.partialorder %v7383, 0.0
  %v7385 = vmul.f32 %v7383, 0.01
  %v7386 = vsel %vm7384, %v7383, %v7385
  %v7387 = vpack.c.bf16 %v7386, %v7386
  %s7388 = scalar_lea.vmem %s5, 256
  %v7389 = vld [vmem:[%s7388] sm:$0xf]
  %v7390 = vld [vmem:[%s7388 + $0x4] sm:$0xf]
  %v7391 = vld [vmem:[%s7388 + $0x8] sm:$0xf]
  %v7392 = vld [vmem:[%s7388 + $0xc] sm:$0xf]
  %v7393 = vld [vmem:[%s7388 + $0x10] sm:$0xf]
  %v7394 = vld [vmem:[%s7388 + $0x14] sm:$0xf]
  %v7395 = vld [vmem:[%s7388 + $0x18] sm:$0xf]
  %v7396 = vld [vmem:[%s7388 + $0x1c] sm:$0xf]
  %v7397 = vld [vmem:[%s7388 + $0x20] sm:$0xf]
  %v7398 = vld [vmem:[%s7388 + $0x24] sm:$0xf]
  %v7399 = vld [vmem:[%s7388 + $0x28] sm:$0xf]
  %v7400 = vld [vmem:[%s7388 + $0x2c] sm:$0xf]
  %v7401 = vld [vmem:[%s7388 + $0x30] sm:$0xf]
  %v7402 = vld [vmem:[%s7388 + $0x34] sm:$0xf]
  %v7403 = vld [vmem:[%s7388 + $0x38] sm:$0xf]
  %v7404 = vld [vmem:[%s7388 + $0x3c] sm:$0xf]
  %s7405 = scalar_lea.vmem %s5, 320
  %v7406 = vld [vmem:[%s7405] sm:$0xf]
  %v7407 = vld [vmem:[%s7405 + $0x4] sm:$0xf]
  %v7408 = vld [vmem:[%s7405 + $0x8] sm:$0xf]
  %v7409 = vld [vmem:[%s7405 + $0xc] sm:$0xf]
  %v7410 = vld [vmem:[%s7405 + $0x10] sm:$0xf]
  %v7411 = vld [vmem:[%s7405 + $0x14] sm:$0xf]
  %v7412 = vld [vmem:[%s7405 + $0x18] sm:$0xf]
  %v7413 = vld [vmem:[%s7405 + $0x1c] sm:$0xf]
  %v7414 = vld [vmem:[%s7405 + $0x20] sm:$0xf]
  %v7415 = vld [vmem:[%s7405 + $0x24] sm:$0xf]
  %v7416 = vld [vmem:[%s7405 + $0x28] sm:$0xf]
  %v7417 = vld [vmem:[%s7405 + $0x2c] sm:$0xf]
  %v7418 = vld [vmem:[%s7405 + $0x30] sm:$0xf]
  %v7419 = vld [vmem:[%s7405 + $0x34] sm:$0xf]
  %v7420 = vld [vmem:[%s7405 + $0x38] sm:$0xf]
  %v7421 = vld [vmem:[%s7405 + $0x3c] sm:$0xf]
  %v7438 = vunpack.c.l.b16 %v7406
  %v7439 = vunpack.c.l.b16 %v7407
  %v7440 = vunpack.c.l.b16 %v7408
  %v7441 = vunpack.c.l.b16 %v7409
  %v7442 = vunpack.c.l.b16 %v7410
  %v7443 = vunpack.c.l.b16 %v7411
  %v7444 = vunpack.c.l.b16 %v7412
  %v7445 = vunpack.c.l.b16 %v7413
  %v7446 = vunpack.c.l.b16 %v7414
  %v7447 = vunpack.c.l.b16 %v7415
  %v7448 = vunpack.c.l.b16 %v7416
  %v7449 = vunpack.c.l.b16 %v7417
  %v7450 = vunpack.c.l.b16 %v7418
  %v7451 = vunpack.c.l.b16 %v7419
  %v7452 = vunpack.c.l.b16 %v7420
  %v7453 = vunpack.c.l.b16 %v7421
  %v7454 = vpack.c.b16 %v7439, %v7438
  %v7455 = vpack.c.b16 %v7441, %v7440
  %v7456 = vpack.c.b16 %v7443, %v7442
  %v7457 = vpack.c.b16 %v7445, %v7444
  %v7458 = vpack.c.b16 %v7447, %v7446
  %v7459 = vpack.c.b16 %v7449, %v7448
  %v7460 = vpack.c.b16 %v7451, %v7450
  %v7461 = vpack.c.b16 %v7453, %v7452
  %7470 = vmatprep.subr.bf16.mxu0 0
  %7471 = vmatpush1.bf16.msra.mxu0 %v7461
  %7472 = vmatprep.subr.bf16.mxu0 0
  %7473 = vmatpush1.bf16.msra.mxu0 %v7460
  %7474 = vmatprep.subr.bf16.mxu0 0
  %7475 = vmatpush1.bf16.msra.mxu0 %v7459
  %7476 = vmatprep.subr.bf16.mxu0 0
  %7477 = vmatpush1.bf16.msra.mxu0 %v7458
  %7478 = vmatprep.subr.bf16.mxu0 0
  %7479 = vmatpush1.bf16.msra.mxu0 %v7457
  %7480 = vmatprep.subr.bf16.mxu0 0
  %7481 = vmatpush1.bf16.msra.mxu0 %v7456
  %7482 = vmatprep.subr.bf16.mxu0 0
  %7483 = vmatpush1.bf16.msra.mxu0 %v7455
  %7484 = vmatprep.subr.bf16.mxu0 0
  %7485 = vmatpush1.bf16.msra.mxu0 %v7454
  %7486 = vmatprep.subr.bf16.mxu0 0
  %7487 = vmatpush2.bf16.msra.mxu0 0
  %7488 = vmatprep.subr.bf16.mxu0 0
  %7489 = vmatpush2.bf16.msra.mxu0 0
  %7490 = vmatprep.subr.bf16.mxu0 0
  %7491 = vmatpush2.bf16.msra.mxu0 0
  %7492 = vmatprep.subr.bf16.mxu0 0
  %7493 = vmatpush2.bf16.msra.mxu0 0
  %7494 = vmatprep.subr.bf16.mxu0 0
  %7495 = vmatpush2.bf16.msra.mxu0 0
  %7496 = vmatprep.subr.bf16.mxu0 0
  %7497 = vmatpush2.bf16.msra.mxu0 0
  %7498 = vmatprep.subr.bf16.mxu0 0
  %7499 = vmatpush2.bf16.msra.mxu0 0
  %7500 = vmatprep.subr.bf16.mxu0 0
  %7501 = vmatpush2.bf16.msra.mxu0 0
  %7502 = vmatprep.mubr.bf16.mxu0 0
  %7503 = vmatmul.mubr.bf16.gmra.mxu0 %v6572
  %v7504 = vpop.f32.mrf.mxu0
  %v7505 = vadd.f32 0.0, %v7504
  %v7506 = vpop.f32.mrf.mxu0
  %v7507 = vpop.f32.mrf.mxu0
  %v7508 = vpop.f32.mrf.mxu0
  %7509 = vdwg.mxu0
  %v7526 = vunpack.c.l.b16 %v7389
  %v7527 = vunpack.c.l.b16 %v7390
  %v7528 = vunpack.c.l.b16 %v7391
  %v7529 = vunpack.c.l.b16 %v7392
  %v7530 = vunpack.c.l.b16 %v7393
  %v7531 = vunpack.c.l.b16 %v7394
  %v7532 = vunpack.c.l.b16 %v7395
  %v7533 = vunpack.c.l.b16 %v7396
  %v7534 = vunpack.c.l.b16 %v7397
  %v7535 = vunpack.c.l.b16 %v7398
  %v7536 = vunpack.c.l.b16 %v7399
  %v7537 = vunpack.c.l.b16 %v7400
  %v7538 = vunpack.c.l.b16 %v7401
  %v7539 = vunpack.c.l.b16 %v7402
  %v7540 = vunpack.c.l.b16 %v7403
  %v7541 = vunpack.c.l.b16 %v7404
  %v7542 = vpack.c.b16 %v7527, %v7526
  %v7543 = vpack.c.b16 %v7529, %v7528
  %v7544 = vpack.c.b16 %v7531, %v7530
  %v7545 = vpack.c.b16 %v7533, %v7532
  %v7546 = vpack.c.b16 %v7535, %v7534
  %v7547 = vpack.c.b16 %v7537, %v7536
  %v7548 = vpack.c.b16 %v7539, %v7538
  %v7549 = vpack.c.b16 %v7541, %v7540
  %7558 = vmatprep.subr.bf16.mxu0 0
  %7559 = vmatpush1.bf16.msra.mxu0 %v7549
  %7560 = vmatprep.subr.bf16.mxu0 0
  %7561 = vmatpush1.bf16.msra.mxu0 %v7548
  %7562 = vmatprep.subr.bf16.mxu0 0
  %7563 = vmatpush1.bf16.msra.mxu0 %v7547
  %7564 = vmatprep.subr.bf16.mxu0 0
  %7565 = vmatpush1.bf16.msra.mxu0 %v7546
  %7566 = vmatprep.subr.bf16.mxu0 0
  %7567 = vmatpush1.bf16.msra.mxu0 %v7545
  %7568 = vmatprep.subr.bf16.mxu0 0
  %7569 = vmatpush1.bf16.msra.mxu0 %v7544
  %7570 = vmatprep.subr.bf16.mxu0 0
  %7571 = vmatpush1.bf16.msra.mxu0 %v7543
  %7572 = vmatprep.subr.bf16.mxu0 0
  %7573 = vmatpush1.bf16.msra.mxu0 %v7542
  %7574 = vmatprep.subr.bf16.mxu0 0
  %7575 = vmatpush2.bf16.msra.mxu0 0
  %7576 = vmatprep.subr.bf16.mxu0 0
  %7577 = vmatpush2.bf16.msra.mxu0 0
  %7578 = vmatprep.subr.bf16.mxu0 0
  %7579 = vmatpush2.bf16.msra.mxu0 0
  %7580 = vmatprep.subr.bf16.mxu0 0
  %7581 = vmatpush2.bf16.msra.mxu0 0
  %7582 = vmatprep.subr.bf16.mxu0 0
  %7583 = vmatpush2.bf16.msra.mxu0 0
  %7584 = vmatprep.subr.bf16.mxu0 0
  %7585 = vmatpush2.bf16.msra.mxu0 0
  %7586 = vmatprep.subr.bf16.mxu0 0
  %7587 = vmatpush2.bf16.msra.mxu0 0
  %7588 = vmatprep.subr.bf16.mxu0 0
  %7589 = vmatpush2.bf16.msra.mxu0 0
  %7590 = vmatprep.mubr.bf16.mxu0 0
  %7591 = vmatmul.mubr.bf16.gmra.mxu0 %v6193
  %v7592 = vpop.f32.mrf.mxu0
  %v7593 = vadd.f32 %v7505, %v7592
  %v7594 = vpop.f32.mrf.mxu0
  %v7595 = vpop.f32.mrf.mxu0
  %v7596 = vpop.f32.mrf.mxu0
  %7597 = vdwg.mxu0
  %s7598 = scalar_lea.vmem %s5, 448
  %v7599 = vld [vmem:[%s7598] sm:$0xf]
  %v7600 = vld [vmem:[%s7598 + $0x4] sm:$0xf]
  %v7601 = vld [vmem:[%s7598 + $0x8] sm:$0xf]
  %v7602 = vld [vmem:[%s7598 + $0xc] sm:$0xf]
  %v7603 = vld [vmem:[%s7598 + $0x10] sm:$0xf]
  %v7604 = vld [vmem:[%s7598 + $0x14] sm:$0xf]
  %v7605 = vld [vmem:[%s7598 + $0x18] sm:$0xf]
  %v7606 = vld [vmem:[%s7598 + $0x1c] sm:$0xf]
  %v7607 = vld [vmem:[%s7598 + $0x20] sm:$0xf]
  %v7608 = vld [vmem:[%s7598 + $0x24] sm:$0xf]
  %v7609 = vld [vmem:[%s7598 + $0x28] sm:$0xf]
  %v7610 = vld [vmem:[%s7598 + $0x2c] sm:$0xf]
  %v7611 = vld [vmem:[%s7598 + $0x30] sm:$0xf]
  %v7612 = vld [vmem:[%s7598 + $0x34] sm:$0xf]
  %v7613 = vld [vmem:[%s7598 + $0x38] sm:$0xf]
  %v7614 = vld [vmem:[%s7598 + $0x3c] sm:$0xf]
  %v7631 = vunpack.c.l.b16 %v7599
  %v7632 = vunpack.c.l.b16 %v7600
  %v7633 = vunpack.c.l.b16 %v7601
  %v7634 = vunpack.c.l.b16 %v7602
  %v7635 = vunpack.c.l.b16 %v7603
  %v7636 = vunpack.c.l.b16 %v7604
  %v7637 = vunpack.c.l.b16 %v7605
  %v7638 = vunpack.c.l.b16 %v7606
  %v7639 = vunpack.c.l.b16 %v7607
  %v7640 = vunpack.c.l.b16 %v7608
  %v7641 = vunpack.c.l.b16 %v7609
  %v7642 = vunpack.c.l.b16 %v7610
  %v7643 = vunpack.c.l.b16 %v7611
  %v7644 = vunpack.c.l.b16 %v7612
  %v7645 = vunpack.c.l.b16 %v7613
  %v7646 = vunpack.c.l.b16 %v7614
  %v7647 = vpack.c.b16 %v7632, %v7631
  %v7648 = vpack.c.b16 %v7634, %v7633
  %v7649 = vpack.c.b16 %v7636, %v7635
  %v7650 = vpack.c.b16 %v7638, %v7637
  %v7651 = vpack.c.b16 %v7640, %v7639
  %v7652 = vpack.c.b16 %v7642, %v7641
  %v7653 = vpack.c.b16 %v7644, %v7643
  %v7654 = vpack.c.b16 %v7646, %v7645
  %7663 = vmatprep.subr.bf16.mxu0 0
  %7664 = vmatpush1.bf16.msra.mxu0 %v7654
  %7665 = vmatprep.subr.bf16.mxu0 0
  %7666 = vmatpush1.bf16.msra.mxu0 %v7653
  %7667 = vmatprep.subr.bf16.mxu0 0
  %7668 = vmatpush1.bf16.msra.mxu0 %v7652
  %7669 = vmatprep.subr.bf16.mxu0 0
  %7670 = vmatpush1.bf16.msra.mxu0 %v7651
  %7671 = vmatprep.subr.bf16.mxu0 0
  %7672 = vmatpush1.bf16.msra.mxu0 %v7650
  %7673 = vmatprep.subr.bf16.mxu0 0
  %7674 = vmatpush1.bf16.msra.mxu0 %v7649
  %7675 = vmatprep.subr.bf16.mxu0 0
  %7676 = vmatpush1.bf16.msra.mxu0 %v7648
  %7677 = vmatprep.subr.bf16.mxu0 0
  %7678 = vmatpush1.bf16.msra.mxu0 %v7647
  %7679 = vmatprep.subr.bf16.mxu0 0
  %7680 = vmatpush2.bf16.msra.mxu0 0
  %7681 = vmatprep.subr.bf16.mxu0 0
  %7682 = vmatpush2.bf16.msra.mxu0 0
  %7683 = vmatprep.subr.bf16.mxu0 0
  %7684 = vmatpush2.bf16.msra.mxu0 0
  %7685 = vmatprep.subr.bf16.mxu0 0
  %7686 = vmatpush2.bf16.msra.mxu0 0
  %7687 = vmatprep.subr.bf16.mxu0 0
  %7688 = vmatpush2.bf16.msra.mxu0 0
  %7689 = vmatprep.subr.bf16.mxu0 0
  %7690 = vmatpush2.bf16.msra.mxu0 0
  %7691 = vmatprep.subr.bf16.mxu0 0
  %7692 = vmatpush2.bf16.msra.mxu0 0
  %7693 = vmatprep.subr.bf16.mxu0 0
  %7694 = vmatpush2.bf16.msra.mxu0 0
  %7695 = vmatprep.mubr.bf16.mxu0 0
  %7696 = vmatmul.mubr.bf16.gmra.mxu0 %v6951
  %v7697 = vpop.f32.mrf.mxu0
  %v7698 = vadd.f32 0.0, %v7697
  %v7699 = vpop.f32.mrf.mxu0
  %v7700 = vpop.f32.mrf.mxu0
  %v7701 = vpop.f32.mrf.mxu0
  %7702 = vdwg.mxu0
  %v7703 = vadd.f32 %v7593, %v7698
  %s7704 = scalar_lea.vmem %s5, 512
  %v7705 = vld [vmem:[%s7704] sm:$0xf]
  %v7706 = vld [vmem:[%s7704 + $0x4] sm:$0xf]
  %v7707 = vld [vmem:[%s7704 + $0x8] sm:$0xf]
  %v7708 = vld [vmem:[%s7704 + $0xc] sm:$0xf]
  %v7709 = vld [vmem:[%s7704 + $0x10] sm:$0xf]
  %v7710 = vld [vmem:[%s7704 + $0x14] sm:$0xf]
  %v7711 = vld [vmem:[%s7704 + $0x18] sm:$0xf]
  %v7712 = vld [vmem:[%s7704 + $0x1c] sm:$0xf]
  %v7713 = vld [vmem:[%s7704 + $0x20] sm:$0xf]
  %v7714 = vld [vmem:[%s7704 + $0x24] sm:$0xf]
  %v7715 = vld [vmem:[%s7704 + $0x28] sm:$0xf]
  %v7716 = vld [vmem:[%s7704 + $0x2c] sm:$0xf]
  %v7717 = vld [vmem:[%s7704 + $0x30] sm:$0xf]
  %v7718 = vld [vmem:[%s7704 + $0x34] sm:$0xf]
  %v7719 = vld [vmem:[%s7704 + $0x38] sm:$0xf]
  %v7720 = vld [vmem:[%s7704 + $0x3c] sm:$0xf]
  %v7737 = vunpack.c.l.b16 %v7705
  %v7738 = vunpack.c.l.b16 %v7706
  %v7739 = vunpack.c.l.b16 %v7707
  %v7740 = vunpack.c.l.b16 %v7708
  %v7741 = vunpack.c.l.b16 %v7709
  %v7742 = vunpack.c.l.b16 %v7710
  %v7743 = vunpack.c.l.b16 %v7711
  %v7744 = vunpack.c.l.b16 %v7712
  %v7745 = vunpack.c.l.b16 %v7713
  %v7746 = vunpack.c.l.b16 %v7714
  %v7747 = vunpack.c.l.b16 %v7715
  %v7748 = vunpack.c.l.b16 %v7716
  %v7749 = vunpack.c.l.b16 %v7717
  %v7750 = vunpack.c.l.b16 %v7718
  %v7751 = vunpack.c.l.b16 %v7719
  %v7752 = vunpack.c.l.b16 %v7720
  %v7753 = vpack.c.b16 %v7738, %v7737
  %v7754 = vpack.c.b16 %v7740, %v7739
  %v7755 = vpack.c.b16 %v7742, %v7741
  %v7756 = vpack.c.b16 %v7744, %v7743
  %v7757 = vpack.c.b16 %v7746, %v7745
  %v7758 = vpack.c.b16 %v7748, %v7747
  %v7759 = vpack.c.b16 %v7750, %v7749
  %v7760 = vpack.c.b16 %v7752, %v7751
  %7769 = vmatprep.subr.bf16.mxu0 0
  %7770 = vmatpush1.bf16.msra.mxu0 %v7760
  %7771 = vmatprep.subr.bf16.mxu0 0
  %7772 = vmatpush1.bf16.msra.mxu0 %v7759
  %7773 = vmatprep.subr.bf16.mxu0 0
  %7774 = vmatpush1.bf16.msra.mxu0 %v7758
  %7775 = vmatprep.subr.bf16.mxu0 0
  %7776 = vmatpush1.bf16.msra.mxu0 %v7757
  %7777 = vmatprep.subr.bf16.mxu0 0
  %7778 = vmatpush1.bf16.msra.mxu0 %v7756
  %7779 = vmatprep.subr.bf16.mxu0 0
  %7780 = vmatpush1.bf16.msra.mxu0 %v7755
  %7781 = vmatprep.subr.bf16.mxu0 0
  %7782 = vmatpush1.bf16.msra.mxu0 %v7754
  %7783 = vmatprep.subr.bf16.mxu0 0
  %7784 = vmatpush1.bf16.msra.mxu0 %v7753
  %7785 = vmatprep.subr.bf16.mxu0 0
  %7786 = vmatpush2.bf16.msra.mxu0 0
  %7787 = vmatprep.subr.bf16.mxu0 0
  %7788 = vmatpush2.bf16.msra.mxu0 0
  %7789 = vmatprep.subr.bf16.mxu0 0
  %7790 = vmatpush2.bf16.msra.mxu0 0
  %7791 = vmatprep.subr.bf16.mxu0 0
  %7792 = vmatpush2.bf16.msra.mxu0 0
  %7793 = vmatprep.subr.bf16.mxu0 0
  %7794 = vmatpush2.bf16.msra.mxu0 0
  %7795 = vmatprep.subr.bf16.mxu0 0
  %7796 = vmatpush2.bf16.msra.mxu0 0
  %7797 = vmatprep.subr.bf16.mxu0 0
  %7798 = vmatpush2.bf16.msra.mxu0 0
  %7799 = vmatprep.subr.bf16.mxu0 0
  %7800 = vmatpush2.bf16.msra.mxu0 0
  %7801 = vmatprep.mubr.bf16.mxu0 0
  %7802 = vmatmul.mubr.bf16.gmra.mxu0 %v7387
  %v7803 = vpop.f32.mrf.mxu0
  %v7804 = vadd.f32 0.0, %v7803
  %v7805 = vpop.f32.mrf.mxu0
  %v7806 = vpop.f32.mrf.mxu0
  %v7807 = vpop.f32.mrf.mxu0
  %7808 = vdwg.mxu0
  %v7809 = vadd.f32 %v7703, %v7804
  %v7810 = vld [vmem:[%s6] sm:$0x1]
  %v7812 = vlaneseq
  %v7813 = vshrl.u32 %v7812, 7
  %v7814 = vsub.s32 0, %v7813
  %v7815 = vrot.slane %v7810, %v7814
  %v7817 = vadd.f32 %v7809, %v7815
  %vm7818 = vcmp.ge.f32.partialorder %v7817, 0.0
  %v7819 = vmul.f32 %v7817, 0.01
  %v7820 = vsel %vm7818, %v7817, %v7819
  %v7821 = vpack.c.bf16 %v7820, %v7820
  %v7822 = vld [vmem:[%s7] sm:$0xf]
  %v7823 = vld [vmem:[%s7 + $0x4] sm:$0xf]
  %v7824 = vld [vmem:[%s7 + $0x8] sm:$0xf]
  %v7825 = vld [vmem:[%s7 + $0xc] sm:$0xf]
  %v7826 = vld [vmem:[%s7 + $0x10] sm:$0xf]
  %v7827 = vld [vmem:[%s7 + $0x14] sm:$0xf]
  %v7828 = vld [vmem:[%s7 + $0x18] sm:$0xf]
  %v7829 = vld [vmem:[%s7 + $0x1c] sm:$0xf]
  %v7830 = vld [vmem:[%s7 + $0x20] sm:$0xf]
  %v7831 = vld [vmem:[%s7 + $0x24] sm:$0xf]
  %v7832 = vld [vmem:[%s7 + $0x28] sm:$0xf]
  %v7833 = vld [vmem:[%s7 + $0x2c] sm:$0xf]
  %v7834 = vld [vmem:[%s7 + $0x30] sm:$0xf]
  %v7835 = vld [vmem:[%s7 + $0x34] sm:$0xf]
  %v7836 = vld [vmem:[%s7 + $0x38] sm:$0xf]
  %v7837 = vld [vmem:[%s7 + $0x3c] sm:$0xf]
  %v7838 = vld [vmem:[%s8] sm:$0x1]
  %v7840 = vlaneseq
  %v7841 = vshrl.u32 %v7840, 7
  %v7842 = vsub.s32 0, %v7841
  %v7843 = vrot.slane %v7838, %v7842
  %v7861 = vunpack.c.l.b16 %v7822
  %v7862 = vunpack.c.l.b16 %v7823
  %v7863 = vunpack.c.l.b16 %v7824
  %v7864 = vunpack.c.l.b16 %v7825
  %v7865 = vunpack.c.l.b16 %v7826
  %v7866 = vunpack.c.l.b16 %v7827
  %v7867 = vunpack.c.l.b16 %v7828
  %v7868 = vunpack.c.l.b16 %v7829
  %v7869 = vunpack.c.l.b16 %v7830
  %v7870 = vunpack.c.l.b16 %v7831
  %v7871 = vunpack.c.l.b16 %v7832
  %v7872 = vunpack.c.l.b16 %v7833
  %v7873 = vunpack.c.l.b16 %v7834
  %v7874 = vunpack.c.l.b16 %v7835
  %v7875 = vunpack.c.l.b16 %v7836
  %v7876 = vunpack.c.l.b16 %v7837
  %v7877 = vpack.c.b16 %v7862, %v7861
  %v7878 = vpack.c.b16 %v7864, %v7863
  %v7879 = vpack.c.b16 %v7866, %v7865
  %v7880 = vpack.c.b16 %v7868, %v7867
  %v7881 = vpack.c.b16 %v7870, %v7869
  %v7882 = vpack.c.b16 %v7872, %v7871
  %v7883 = vpack.c.b16 %v7874, %v7873
  %v7884 = vpack.c.b16 %v7876, %v7875
  %7893 = vmatprep.subr.bf16.mxu0 0
  %7894 = vmatpush1.bf16.msra.mxu0 %v7884
  %7895 = vmatprep.subr.bf16.mxu0 0
  %7896 = vmatpush1.bf16.msra.mxu0 %v7883
  %7897 = vmatprep.subr.bf16.mxu0 0
  %7898 = vmatpush1.bf16.msra.mxu0 %v7882
  %7899 = vmatprep.subr.bf16.mxu0 0
  %7900 = vmatpush1.bf16.msra.mxu0 %v7881
  %7901 = vmatprep.subr.bf16.mxu0 0
  %7902 = vmatpush1.bf16.msra.mxu0 %v7880
  %7903 = vmatprep.subr.bf16.mxu0 0
  %7904 = vmatpush1.bf16.msra.mxu0 %v7879
  %7905 = vmatprep.subr.bf16.mxu0 0
  %7906 = vmatpush1.bf16.msra.mxu0 %v7878
  %7907 = vmatprep.subr.bf16.mxu0 0
  %7908 = vmatpush1.bf16.msra.mxu0 %v7877
  %7909 = vmatprep.subr.bf16.mxu0 0
  %7910 = vmatpush2.bf16.msra.mxu0 0
  %7911 = vmatprep.subr.bf16.mxu0 0
  %7912 = vmatpush2.bf16.msra.mxu0 0
  %7913 = vmatprep.subr.bf16.mxu0 0
  %7914 = vmatpush2.bf16.msra.mxu0 0
  %7915 = vmatprep.subr.bf16.mxu0 0
  %7916 = vmatpush2.bf16.msra.mxu0 0
  %7917 = vmatprep.subr.bf16.mxu0 0
  %7918 = vmatpush2.bf16.msra.mxu0 0
  %7919 = vmatprep.subr.bf16.mxu0 0
  %7920 = vmatpush2.bf16.msra.mxu0 0
  %7921 = vmatprep.subr.bf16.mxu0 0
  %7922 = vmatpush2.bf16.msra.mxu0 0
  %7923 = vmatprep.subr.bf16.mxu0 0
  %7924 = vmatpush2.bf16.msra.mxu0 0
  %7925 = vmatprep.mubr.bf16.mxu0 0
  %7926 = vmatmul.mubr.bf16.gmra.mxu0 %v7821
  %v7927 = vpop.f32.mrf.mxu0
  %v7928 = vadd.f32 %v7843, %v7927
  %v7929 = vpop.f32.mrf.mxu0
  %v7930 = vpop.f32.mrf.mxu0
  %v7931 = vpop.f32.mrf.mxu0
  %7932 = vdwg.mxu0
  %7933 = vst [vmem:[%s9] sm:$0xff] %v7928
  // Predicated region
  $region38: #{gradual_style_block_forward.3} parent=0 // pred_check
    _
  $region39: #{gradual_style_block_forward.3} parent=0 // pred_check_branch
    %7935 = sbr.rel (0) target = $region41
  $region40: #{gradual_style_block_forward.3} parent=0 // pred_region
    _
  $region41: #{gradual_style_block_forward.3} parent=0 // pred_fallthru
    _
  // Predicated region
  $region42: #{gradual_style_block_forward.3} parent=0 // pred_check
    _
  $region43: #{gradual_style_block_forward.3} parent=0 // pred_check_branch
    %7937 = sbr.rel (0) target = $region45
  $region44: #{gradual_style_block_forward.3} parent=0 // pred_region
    _
  $region45: #{gradual_style_block_forward.3} parent=0 // pred_fallthru
    _

</llo_original>
